<compile_context>
chip_gen: v5e
topology: v5e:2x2
jax: 0.10.0
libtpu: 0.0.40
codegen_flags: <defaults>
</compile_context>

<pallas_src>
import jax
import jax.numpy as jnp
import numpy as np
from jax.experimental import pallas as pl
from jax.experimental.pallas import tpu as pltpu

C_FEAT = 512            # channels per encoder feature map
C_IN = 3 * C_FEAT       # 1536, as in Regressor(1536, 512)
C_HID = 512
C_OUT = 1

DEFAULT_THW_CAP = 1024  # lane-tile cap; ~23 MiB VMEM, safe on v5e/v6e/v7x


def _choose_thw(hw, cap):
    """Pick a spatial tile: full HW if it fits, else the largest divisor of HW
    that is a multiple of 128 and <= cap (no padding ever)."""
    if hw <= cap:
        return hw
    t = (cap // 128) * 128
    while t >= 128:
        if hw % t == 0:
            return t
        t -= 128
    return hw  # fallback: single tile, still correct


def regressor_kernel(x11_ref, x12_ref, x2_ref,
                     wAT_ref, bA_ref, wBT_ref, bB_ref, wC_ref, bC_ref, o_ref):
    # x*_ref : [1, 512, THW] f32 (native NCHW block)
    # wAT    : [512, 1536] bf16  (= wA^T; K split by static lane-aligned slices)
    # wBT    : [512, 512]  bf16
    # bA/bB  : [512, 1] f32      wC: [512, 1] f32      bC: [1, 1] f32 (SMEM)
    # o_ref  : [1, 1, THW] f32

    # Cast activations to bf16 in-kernel (VPU; hidden under MXU work).
    x11 = x11_ref[0].astype(jnp.bfloat16)            # [512, THW]
    x12 = x12_ref[0].astype(jnp.bfloat16)
    x2 = x2_ref[0].astype(jnp.bfloat16)

    # convA (1x1): h = relu(wA^T @ concat(x) + bA), concat realized as K-split.
    acc = jnp.dot(wAT_ref[:, 0:C_FEAT], x11, preferred_element_type=jnp.float32)
    acc = acc + jnp.dot(wAT_ref[:, C_FEAT:2 * C_FEAT], x12,
                        preferred_element_type=jnp.float32)
    acc = acc + jnp.dot(wAT_ref[:, 2 * C_FEAT:3 * C_FEAT], x2,
                        preferred_element_type=jnp.float32)
    h = jnp.maximum(acc + bA_ref[...], 0.0).astype(jnp.bfloat16)   # [512, THW]

    # convB (1x1) + ReLU.
    h2 = jnp.dot(wBT_ref[...], h, preferred_element_type=jnp.float32) + bB_ref[...]
    h2 = jnp.maximum(h2, 0.0)                                       # [512, THW] f32

    # Dropout(p=0.5): identity in eval/test phase.

    # convC (1x1, Cout=1) off the MXU: per-channel scale + sublane reduce, + Tanh.
    y = jnp.sum(h2 * wC_ref[...], axis=0, keepdims=True)            # [1, THW]
    o_ref[0] = jnp.tanh(y + bC_ref[0, 0])


def global_regressor_test_phase(x_1_1, x_1_2, x_2, params, *, t_hw=None):
    """phase='test': inputs are NCHW feature maps with 512 channels each."""
    wA, bA, wB, bB, wC, bC = params

    N, Cf, H, W = x_1_1.shape
    assert Cf == C_FEAT
    assert x_1_2.shape == x_1_1.shape and x_2.shape == x_1_1.shape
    HW = H * W

    # Zero-cost views of the native NCHW f32 activations.
    x11 = x_1_1.reshape(N, Cf, HW)
    x12 = x_1_2.reshape(N, Cf, HW)
    x2r = x_2.reshape(N, Cf, HW)

    cap = DEFAULT_THW_CAP if t_hw is None else t_hw
    thw = _choose_thw(HW, cap)

    # Transpose/cast the (tiny) weights once in the wrapper.
    wAT = jnp.transpose(wA).astype(jnp.bfloat16)              # [512, 1536]
    wBT = jnp.transpose(wB).astype(jnp.bfloat16)              # [512, 512]
    bA_col = bA.reshape(C_HID, 1).astype(jnp.float32)         # [512, 1]
    bB_col = bB.reshape(C_HID, 1).astype(jnp.float32)         # [512, 1]
    wC_col = wC.reshape(C_HID, C_OUT).astype(jnp.float32)     # [512, 1]
    bC_sc = bC.reshape(1, 1).astype(jnp.float32)              # scalar in SMEM

    grid = (N, HW // thw)
    x_spec = pl.BlockSpec((1, C_FEAT, thw), lambda n, t: (n, 0, t))
    const = lambda shape: pl.BlockSpec(shape, lambda n, t: (0, 0))  # VMEM-resident

    out3d = pl.pallas_call(
        regressor_kernel,
        out_shape=jax.ShapeDtypeStruct((N, C_OUT, HW), jnp.float32),
        grid=grid,
        in_specs=[
            x_spec, x_spec, x_spec,                              # x11, x12, x2
            const((C_HID, C_IN)),                                # wAT
            const((C_HID, 1)),                                   # bA
            const((C_HID, C_HID)),                               # wBT
            const((C_HID, 1)),                                   # bB
            const((C_HID, C_OUT)),                               # wC
            pl.BlockSpec(memory_space=pltpu.MemorySpace.SMEM),   # bC scalar
        ],
        out_specs=pl.BlockSpec((1, C_OUT, thw), lambda n, t: (n, 0, t)),
        compiler_params=pltpu.CompilerParams(
            dimension_semantics=("parallel", "parallel"),
            vmem_limit_bytes=48 << 20,
        ),
    )(x11, x12, x2r, wAT, bA_col, wBT, bB_col, wC_col, bC_sc)

    # [N, 1, H*W] -> NCHW [N, 1, H, W] (zero-cost reshape, no transpose).
    return out3d.reshape(N, C_OUT, H, W)


def init_params(key):
    """Deterministic synthetic conv weights (1x1 convs presented as [Cin, Cout])."""
    k = jax.random.split(key, 6)

    def conv_init(kw, kb, cin, cout):
        bound = 1.0 / np.sqrt(cin)
        w = jax.random.uniform(kw, (cin, cout), jnp.float32, -bound, bound)
        b = jax.random.uniform(kb, (1, cout), jnp.float32, -bound, bound)
        return w, b

    wA, bA = conv_init(k[0], k[1], C_IN, C_HID)
    wB, bB = conv_init(k[2], k[3], C_HID, C_HID)
    wC, bC = conv_init(k[4], k[5], C_HID, C_OUT)
    return (wA, bA, wB, bB, wC, bC)


def reference(x_1_1, x_1_2, x_2, params):
    """Pure-JAX f32 reference of the PyTorch forward (test phase)."""
    wA, bA, wB, bB, wC, bC = params
    x = jnp.concatenate([x_1_1, x_1_2, x_2], axis=1)
    N, C, H, W = x.shape
    x2d = jnp.transpose(x, (0, 2, 3, 1)).reshape(N * H * W, C).astype(jnp.float32)
    h = jnp.maximum(x2d @ wA + bA, 0.0)
    h = jnp.maximum(h @ wB + bB, 0.0)
    y = jnp.tanh(h @ wC + bC)
    return jnp.transpose(y.reshape(N, H, W, C_OUT), (0, 3, 1, 2))


if __name__ == "__main__":
    key = jax.random.PRNGKey(0)
    kp, k1, k2, k3 = jax.random.split(key, 4)

    params = init_params(kp)

    # Small NCHW feature maps (512 channels each, as produced by the VGG stages
    # + avg-pool in the real pipeline; spatial kept small here).
    N, Cf, H, W = 2, 512, 16, 16                 # HW = 256 pixels per image
    x_1_1 = jax.random.normal(k1, (N, Cf, H, W), jnp.float32)
    x_1_2 = jax.random.normal(k2, (N, Cf, H, W), jnp.float32)
    x_2 = jax.random.normal(k3, (N, Cf, H, W), jnp.float32)

    # t_hw=128 -> grid (2, 2) = 4 steps, exercising the pipelined/parallel path.
    out = global_regressor_test_phase(x_1_1, x_1_2, x_2, params, t_hw=128)
    out = jax.block_until_ready(out)

    ref = jax.block_until_ready(reference(x_1_1, x_1_2, x_2, params))
    np.testing.assert_allclose(np.asarray(out), np.asarray(ref), rtol=2e-2, atol=2e-2)
    assert out.shape == (N, 1, H, W)

    print("KERNEL_OK")
</pallas_src>

<mosaic_0001>
module attributes {stable_mosaic.version = 11 : i64} {
  func.func @regressor_kernel(%arg0: i32, %arg1: i32, %arg2: memref<1x512x128xf32, #tpu.memory_space<vmem>>, %arg3: memref<1x512x128xf32, #tpu.memory_space<vmem>>, %arg4: memref<1x512x128xf32, #tpu.memory_space<vmem>>, %arg5: memref<512x1536xbf16, #tpu.memory_space<vmem>>, %arg6: memref<512x1xf32, #tpu.memory_space<vmem>>, %arg7: memref<512x512xbf16, #tpu.memory_space<vmem>>, %arg8: memref<512x1xf32, #tpu.memory_space<vmem>>, %arg9: memref<512x1xf32, #tpu.memory_space<vmem>>, %arg10: memref<1x1xf32, #tpu.memory_space<smem>>, %arg11: memref<1x1x128xf32, #tpu.memory_space<vmem>>) attributes {dimension_semantics = [#tpu.dimension_semantics<parallel>, #tpu.dimension_semantics<parallel>], iteration_bounds = array<i64: 2, 2>, scalar_prefetch = 0 : i64, scratch_operands = 0 : i64, tpu.core_type = #tpu.core_type<tc>, window_params = [{transform_indices = @transform_0, window_bounds = array<i64: 1, 512, 128>}, {transform_indices = @transform_1, window_bounds = array<i64: 1, 512, 128>}, {transform_indices = @transform_2, window_bounds = array<i64: 1, 512, 128>}, {pipeline_mode = #tpu.pipeline_mode<synchronous>, transform_indices = @transform_3, window_bounds = array<i64: 512, 1536>}, {pipeline_mode = #tpu.pipeline_mode<synchronous>, transform_indices = @transform_4, window_bounds = array<i64: 512, 1>}, {pipeline_mode = #tpu.pipeline_mode<synchronous>, transform_indices = @transform_5, window_bounds = array<i64: 512, 512>}, {pipeline_mode = #tpu.pipeline_mode<synchronous>, transform_indices = @transform_6, window_bounds = array<i64: 512, 1>}, {pipeline_mode = #tpu.pipeline_mode<synchronous>, transform_indices = @transform_7, window_bounds = array<i64: 512, 1>}, {transform_indices = @transform_8, window_bounds = array<i64: 1, 1>}, {transform_indices = @transform_9, window_bounds = array<i64: 1, 1, 128>}]} {
    %c0 = arith.constant 0 : index
    %c0_0 = arith.constant 0 : index
    %c0_1 = arith.constant 0 : index
    %0 = vector.load %arg2[%c0, %c0_0, %c0_1] : memref<1x512x128xf32, #tpu.memory_space<vmem>>, vector<1x512x128xf32>
    %1 = vector.shape_cast %0 : vector<1x512x128xf32> to vector<512x128xf32>
    %2 = arith.truncf %1 : vector<512x128xf32> to vector<512x128xbf16>
    %c0_2 = arith.constant 0 : index
    %c0_3 = arith.constant 0 : index
    %c0_4 = arith.constant 0 : index
    %3 = vector.load %arg3[%c0_2, %c0_3, %c0_4] : memref<1x512x128xf32, #tpu.memory_space<vmem>>, vector<1x512x128xf32>
    %4 = vector.shape_cast %3 : vector<1x512x128xf32> to vector<512x128xf32>
    %5 = arith.truncf %4 : vector<512x128xf32> to vector<512x128xbf16>
    %c0_5 = arith.constant 0 : index
    %c0_6 = arith.constant 0 : index
    %c0_7 = arith.constant 0 : index
    %6 = vector.load %arg4[%c0_5, %c0_6, %c0_7] : memref<1x512x128xf32, #tpu.memory_space<vmem>>, vector<1x512x128xf32>
    %7 = vector.shape_cast %6 : vector<1x512x128xf32> to vector<512x128xf32>
    %8 = arith.truncf %7 : vector<512x128xf32> to vector<512x128xbf16>
    %c0_8 = arith.constant 0 : index
    %c0_9 = arith.constant 0 : index
    %9 = vector.load %arg5[%c0_8, %c0_9] : memref<512x1536xbf16, #tpu.memory_space<vmem>>, vector<512x512xbf16>
    %cst = arith.constant dense<0.000000e+00> : vector<512x128xf32>
    %10 = tpu.matmul %9, %2, %cst {dimension_numbers = #tpu.dot_dimension_numbers<[1], [0], [0], [1], [0, 0, 1, 1], [], []>} : vector<512x512xbf16>, vector<512x128xbf16>, vector<512x128xf32> -> vector<512x128xf32>
    %c0_10 = arith.constant 0 : index
    %c512 = arith.constant 512 : index
    %11 = vector.load %arg5[%c0_10, %c512] : memref<512x1536xbf16, #tpu.memory_space<vmem>>, vector<512x512xbf16>
    %cst_11 = arith.constant dense<0.000000e+00> : vector<512x128xf32>
    %12 = tpu.matmul %11, %5, %cst_11 {dimension_numbers = #tpu.dot_dimension_numbers<[1], [0], [0], [1], [0, 0, 1, 1], [], []>} : vector<512x512xbf16>, vector<512x128xbf16>, vector<512x128xf32> -> vector<512x128xf32>
    %13 = arith.addf %10, %12 : vector<512x128xf32>
    %c0_12 = arith.constant 0 : index
    %c1024 = arith.constant 1024 : index
    %14 = vector.load %arg5[%c0_12, %c1024] : memref<512x1536xbf16, #tpu.memory_space<vmem>>, vector<512x512xbf16>
    %cst_13 = arith.constant dense<0.000000e+00> : vector<512x128xf32>
    %15 = tpu.matmul %14, %8, %cst_13 {dimension_numbers = #tpu.dot_dimension_numbers<[1], [0], [0], [1], [0, 0, 1, 1], [], []>} : vector<512x512xbf16>, vector<512x128xbf16>, vector<512x128xf32> -> vector<512x128xf32>
    %16 = arith.addf %13, %15 : vector<512x128xf32>
    %c0_14 = arith.constant 0 : index
    %c0_15 = arith.constant 0 : index
    %17 = vector.load %arg6[%c0_14, %c0_15] : memref<512x1xf32, #tpu.memory_space<vmem>>, vector<512x1xf32>
    %18 = vector.broadcast %17 : vector<512x1xf32> to vector<512x128xf32>
    %19 = arith.addf %16, %18 : vector<512x128xf32>
    %cst_16 = arith.constant 0.000000e+00 : f32
    %20 = vector.broadcast %cst_16 : f32 to vector<512x128xf32>
    %21 = arith.maximumf %19, %20 : vector<512x128xf32>
    %22 = arith.truncf %21 : vector<512x128xf32> to vector<512x128xbf16>
    %c0_17 = arith.constant 0 : index
    %c0_18 = arith.constant 0 : index
    %23 = vector.load %arg7[%c0_17, %c0_18] : memref<512x512xbf16, #tpu.memory_space<vmem>>, vector<512x512xbf16>
    %cst_19 = arith.constant dense<0.000000e+00> : vector<512x128xf32>
    %24 = tpu.matmul %23, %22, %cst_19 {dimension_numbers = #tpu.dot_dimension_numbers<[1], [0], [0], [1], [0, 0, 1, 1], [], []>} : vector<512x512xbf16>, vector<512x128xbf16>, vector<512x128xf32> -> vector<512x128xf32>
    %c0_20 = arith.constant 0 : index
    %c0_21 = arith.constant 0 : index
    %25 = vector.load %arg8[%c0_20, %c0_21] : memref<512x1xf32, #tpu.memory_space<vmem>>, vector<512x1xf32>
    %26 = vector.broadcast %25 : vector<512x1xf32> to vector<512x128xf32>
    %27 = arith.addf %24, %26 : vector<512x128xf32>
    %cst_22 = arith.constant 0.000000e+00 : f32
    %28 = vector.broadcast %cst_22 : f32 to vector<512x128xf32>
    %29 = arith.maximumf %27, %28 : vector<512x128xf32>
    %c0_23 = arith.constant 0 : index
    %c0_24 = arith.constant 0 : index
    %30 = vector.load %arg9[%c0_23, %c0_24] : memref<512x1xf32, #tpu.memory_space<vmem>>, vector<512x1xf32>
    %31 = vector.broadcast %30 : vector<512x1xf32> to vector<512x128xf32>
    %32 = arith.mulf %29, %31 : vector<512x128xf32>
    %cst_25 = arith.constant dense<0.000000e+00> : vector<128xf32>
    %33 = vector.multi_reduction <add>, %32, %cst_25 [0] : vector<512x128xf32> to vector<128xf32>
    %34 = vector.shape_cast %33 : vector<128xf32> to vector<1x128xf32>
    %c0_26 = arith.constant 0 : index
    %c0_27 = arith.constant 0 : index
    %35 = memref.load %arg10[%c0_26, %c0_27] : memref<1x1xf32, #tpu.memory_space<smem>>
    %36 = vector.broadcast %35 : f32 to vector<1x128xf32>
    %37 = arith.addf %34, %36 : vector<1x128xf32>
    %38 = math.tanh %37 : vector<1x128xf32>
    %c0_28 = arith.constant 0 : index
    %c0_29 = arith.constant 0 : index
    %c0_30 = arith.constant 0 : index
    %39 = vector.load %arg11[%c0_28, %c0_29, %c0_30] : memref<1x1x128xf32, #tpu.memory_space<vmem>>, vector<1x1x128xf32>
    %40 = vector.shape_cast %39 : vector<1x1x128xf32> to vector<1x128xf32>
    %41 = vector.shape_cast %38 : vector<1x128xf32> to vector<1x1x128xf32>
    tpu.vector_store %arg11[%c0_28, %c0_29, %c0_30], %41 {strides = array<i32>} : memref<1x1x128xf32, #tpu.memory_space<vmem>>, vector<1x1x128xf32>,
    return
  }
  func.func @transform_0(%arg0: i32, %arg1: i32) -> (i32, i32, i32) {
    %c0_i32 = arith.constant 0 : i32
    %c0_i32_0 = arith.constant 0 : i32
    return %arg0, %c0_i32, %arg1 : i32, i32, i32
  }
  func.func @transform_1(%arg0: i32, %arg1: i32) -> (i32, i32, i32) {
    %c0_i32 = arith.constant 0 : i32
    %c0_i32_0 = arith.constant 0 : i32
    return %arg0, %c0_i32, %arg1 : i32, i32, i32
  }
  func.func @transform_2(%arg0: i32, %arg1: i32) -> (i32, i32, i32) {
    %c0_i32 = arith.constant 0 : i32
    %c0_i32_0 = arith.constant 0 : i32
    return %arg0, %c0_i32, %arg1 : i32, i32, i32
  }
  func.func @transform_3(%arg0: i32, %arg1: i32) -> (i32, i32) {
    %c0_i32 = arith.constant 0 : i32
    %c0_i32_0 = arith.constant 0 : i32
    %c0_i32_1 = arith.constant 0 : i32
    return %c0_i32, %c0_i32_0 : i32, i32
  }
  func.func @transform_4(%arg0: i32, %arg1: i32) -> (i32, i32) {
    %c0_i32 = arith.constant 0 : i32
    %c0_i32_0 = arith.constant 0 : i32
    %c0_i32_1 = arith.constant 0 : i32
    return %c0_i32, %c0_i32_0 : i32, i32
  }
  func.func @transform_5(%arg0: i32, %arg1: i32) -> (i32, i32) {
    %c0_i32 = arith.constant 0 : i32
    %c0_i32_0 = arith.constant 0 : i32
    %c0_i32_1 = arith.constant 0 : i32
    return %c0_i32, %c0_i32_0 : i32, i32
  }
  func.func @transform_6(%arg0: i32, %arg1: i32) -> (i32, i32) {
    %c0_i32 = arith.constant 0 : i32
    %c0_i32_0 = arith.constant 0 : i32
    %c0_i32_1 = arith.constant 0 : i32
    return %c0_i32, %c0_i32_0 : i32, i32
  }
  func.func @transform_7(%arg0: i32, %arg1: i32) -> (i32, i32) {
    %c0_i32 = arith.constant 0 : i32
    %c0_i32_0 = arith.constant 0 : i32
    %c0_i32_1 = arith.constant 0 : i32
    return %c0_i32, %c0_i32_0 : i32, i32
  }
  func.func @transform_8(%arg0: i32, %arg1: i32) -> (i32, i32) {
    %c0_i32 = arith.constant 0 : i32
    %c0_i32_0 = arith.constant 0 : i32
    %c0_i32_1 = arith.constant 0 : i32
    return %c0_i32, %c0_i32_0 : i32, i32
  }
  func.func @transform_9(%arg0: i32, %arg1: i32) -> (i32, i32, i32) {
    %c0_i32 = arith.constant 0 : i32
    %c0_i32_0 = arith.constant 0 : i32
    return %arg0, %c0_i32, %arg1 : i32, i32, i32
  }
}

</mosaic_0001>

<llo_original>
// kernel: tpu_custom_call.1
$region0: #{tpu_custom_call.1}
  #allocation0 [shape = 'u32[]', space=smem, size = 0x4, offset = 0x4, fixed_abs, tag = 'smem constant byte address 0x4 - core index']
  #allocation1 [shape = 'u32[72,128]{1,0:T(1,128)}', space=vmem, size = 0x9000, scoped, tag = 'internal scratch']
  #allocation2 [shape = 'f32[1,1]{1,0:T(1,128)S(6)}', space=smem, size = 0x200, scoped, tag = 'scoped memory for tpu_custom_call.1']
  %s0 = inlined_call_operand.hbm [shape: f32[2,512,256], index: 0, kind: input, shape index: {}]
  %s1 = inlined_call_operand.hbm [shape: f32[2,512,256], index: 1, kind: input, shape index: {}]
  %s2 = inlined_call_operand.hbm [shape: f32[2,512,256], index: 2, kind: input, shape index: {}]
  %s3 = inlined_call_operand.hbm [shape: bf16[512,1536], index: 3, kind: input, shape index: {}]
  %s4 = inlined_call_operand.vmem [shape: f32[512,1], index: 4, kind: input, shape index: {}]
  %s5 = inlined_call_operand.hbm [shape: bf16[512,512], index: 5, kind: input, shape index: {}]
  %s6 = inlined_call_operand.vmem [shape: f32[512,1], index: 6, kind: input, shape index: {}]
  %s7 = inlined_call_operand.vmem [shape: f32[512,1], index: 7, kind: input, shape index: {}]
  %s8 = inlined_call_operand.<no memory space> [shape: f32[1,1], index: 8, kind: input, shape index: {}]
  %s9 = inlined_call_operand.hbm [shape: f32[2,1,256], index: 9, kind: output, shape index: {}]
  %s10 = sld [smem:[#allocation0]]
  $region89: #{tpu_custom_call.1} parent=0
    _
  %s12 = ssub.s32 1, %s10
  %s13 = scalar_select 0, %s12, %s10
  %14 = sst [smem:[#allocation2]] %s8
  $region1: #{tpu_custom_call.1} parent=0
    #allocation3 [shape = 'u8[524288]{0}', space=vmem, size = 0x80000, scoped, tag = 'input window, operand 0']
    #allocation4 [shape = 's32[2]{0}', space=sflag, size = 0x8, scoped, tag = 'scoped memory for tpu_custom_call.1']
    #allocation5 [shape = 's32[2]{0}', space=sflag, size = 0x8, scoped, tag = 'scoped memory for tpu_custom_call.1']
    #allocation6 [shape = 'u8[524288]{0}', space=vmem, size = 0x80000, scoped, tag = 'input window, operand 1']
    #allocation7 [shape = 's32[2]{0}', space=sflag, size = 0x8, scoped, tag = 'scoped memory for tpu_custom_call.1']
    #allocation8 [shape = 'u8[524288]{0}', space=vmem, size = 0x80000, scoped, tag = 'input window, operand 2']
    #allocation9 [shape = 'u8[1572864]{0}', space=vmem, size = 0x180000, scoped, tag = 'input window, operand 3, single buffered']
    #allocation10 [shape = 's32[1]{0}', space=sflag, size = 0x4, scoped, tag = 'scoped memory for tpu_custom_call.1']
    #allocation11 [shape = 'u8[524288]{0}', space=vmem, size = 0x80000, scoped, tag = 'input window, operand 5, single buffered']
    #allocation12 [shape = 'u8[1024]{0}', space=vmem, size = 0x400, scoped, tag = 'output window, operand 0']
    %15 = vsyncpa [#allocation4], 0
    %s16 = scalar_lea.sflag [#allocation4], 1
    %17 = vsyncpa %s16, 0
    %18 = vsyncpa [#allocation7], 0
    %s19 = scalar_lea.sflag [#allocation7], 1
    %20 = vsyncpa %s19, 0
    %21 = vsyncpa [#allocation10], 0
    %22 = vsyncpa [#allocation5], 0
    %s23 = scalar_lea.sflag [#allocation5], 1
    %24 = vsyncpa %s23, 0
    loop: start=0, step=1, limit=6
    $region2: #{tpu_custom_call.1} parent=1 // loop_pre_header
      _
    $region3: #{tpu_custom_call.1} parent=1 // loop_header
      %s26 = sphi 0, %s30
      %p27 = scmp.ge.s32.totalorder %s26, 6
      %s33 = sphi 0, %s45
      %s34 = sphi 0, %s41
      %s35 = sphi 0, %s33
      %s36 = sphi 0, %s34
      %s37 = sphi 0, %s35
      %s38 = sphi 0, %s36
      %s50 = sphi 0, %s52
      %s53 = sphi 0, %s50
      %s54 = sphi 0, %s53
      %s70 = sphi 0, %s54
      %s78 = sphi 0, %s80
      %s81 = sphi 0, %s78
      %s82 = sphi 0, %s81
      %s98 = sphi 0, %s82
      %s106 = sphi 0, %s108
      %s109 = sphi 0, %s106
      %s110 = sphi 0, %s109
      %s126 = sphi 0, %s110
      %s130 = sphi 0, %s130
      %s132 = sphi 0, %s130
      %s133 = sphi 0, %s132
      %s147 = sphi 0, %s133
      %s151 = sphi 0, %s151
      %s153 = sphi 0, %s151
      %s154 = sphi 0, %s153
      %s168 = sphi 0, %s154
      %s172 = sphi 0, %s172
      %s174 = sphi 0, %s172
      %s175 = sphi 0, %s174
      %s189 = sphi 0, %s175
      %s193 = sphi 0, %s193
      %s195 = sphi 0, %s193
      %s196 = sphi 0, %s195
      %s210 = sphi 0, %s196
      %s214 = sphi 0, %s214
      %s216 = sphi 0, %s214
      %s217 = sphi 0, %s216
      %s231 = sphi 0, %s217
      %s235 = sphi 0, %s235
      %s237 = sphi 0, %s235
      %s238 = sphi 0, %s237
      %s252 = sphi 0, %s238
      %s260 = sphi 0, %s262
      %s263 = sphi 0, %s260
      %s264 = sphi 0, %s263
      %s280 = sphi 0, %s264
    $region4: #{tpu_custom_call.1} parent=1 // loop_header_branch
      %29 = sbr.rel (%p27) target = $region8
    $region5: #{tpu_custom_call.1} parent=1 // loop_body
      %s31 = ssub.s32 %s26, 1
      %s32 = ssub.s32 %s26, 2
      %s39 = sadd.s32 1, %s34
      %p40 = scmp.ge.s32.totalorder %s39, 2
      %s41 = scalar_select %p40, 0, %s39
      %s42 = sadd.s32 1, %s33
      %s43 = scalar_select %p40, %s42, %s33
      %p44 = scmp.ge.s32.totalorder %s43, 2
      %s45 = scalar_select %p44, 0, %s43
      %s46 = ssub.s32 %s33, %s45
      %s47 = ssub.s32 %s34, %s41
      %s48 = sor.u32 %s46, %s47
      %p49 = scmp.eq.s32.totalorder %s48, 0
      %s51 = sadd.s32 %s50, 1
      %s52 = scalar_select %p49, %s50, %s51
      %p55 = pneg %p49
      %p56 = scmp.eq.s32.totalorder %s26, 3
      %p57 = por %p55, %p56
      %p58 = scmp.ne.s32.totalorder %s50, %s53
      %p59 = scmp.eq.s32.totalorder %s26, 0
      %p60 = por %p58, %p59
      %p61 = scmp.ne.s32.totalorder %s50, %s53
      %p62 = scmp.eq.s32.totalorder %s31, 3
      %p63 = por %p61, %p62
      %p64 = scmp.ne.s32.totalorder %s53, %s54
      %p65 = scmp.eq.s32.totalorder %s31, 0
      %p66 = por %p64, %p65
      %p67 = scmp.ne.s32.totalorder %s53, %s54
      %p68 = scmp.eq.s32.totalorder %s32, 3
      %p69 = por %p67, %p68
      %p71 = scmp.ne.s32.totalorder %s54, %s70
      %p72 = scmp.eq.s32.totalorder %s32, 0
      %p73 = por %p71, %p72
      %s74 = ssub.s32 %s33, %s45
      %s75 = ssub.s32 %s34, %s41
      %s76 = sor.u32 %s74, %s75
      %p77 = scmp.eq.s32.totalorder %s76, 0
      %s79 = sadd.s32 %s78, 1
      %s80 = scalar_select %p77, %s78, %s79
      %p83 = pneg %p77
      %p84 = scmp.eq.s32.totalorder %s26, 3
      %p85 = por %p83, %p84
      %p86 = scmp.ne.s32.totalorder %s78, %s81
      %p87 = scmp.eq.s32.totalorder %s26, 0
      %p88 = por %p86, %p87
      %p89 = scmp.ne.s32.totalorder %s78, %s81
      %p90 = scmp.eq.s32.totalorder %s31, 3
      %p91 = por %p89, %p90
      %p92 = scmp.ne.s32.totalorder %s81, %s82
      %p93 = scmp.eq.s32.totalorder %s31, 0
      %p94 = por %p92, %p93
      %p95 = scmp.ne.s32.totalorder %s81, %s82
      %p96 = scmp.eq.s32.totalorder %s32, 3
      %p97 = por %p95, %p96
      %p99 = scmp.ne.s32.totalorder %s82, %s98
      %p100 = scmp.eq.s32.totalorder %s32, 0
      %p101 = por %p99, %p100
      %s102 = ssub.s32 %s33, %s45
      %s103 = ssub.s32 %s34, %s41
      %s104 = sor.u32 %s102, %s103
      %p105 = scmp.eq.s32.totalorder %s104, 0
      %s107 = sadd.s32 %s106, 1
      %s108 = scalar_select %p105, %s106, %s107
      %p111 = pneg %p105
      %p112 = scmp.eq.s32.totalorder %s26, 3
      %p113 = por %p111, %p112
      %p114 = scmp.ne.s32.totalorder %s106, %s109
      %p115 = scmp.eq.s32.totalorder %s26, 0
      %p116 = por %p114, %p115
      %p117 = scmp.ne.s32.totalorder %s106, %s109
      %p118 = scmp.eq.s32.totalorder %s31, 3
      %p119 = por %p117, %p118
      %p120 = scmp.ne.s32.totalorder %s109, %s110
      %p121 = scmp.eq.s32.totalorder %s31, 0
      %p122 = por %p120, %p121
      %p123 = scmp.ne.s32.totalorder %s109, %s110
      %p124 = scmp.eq.s32.totalorder %s32, 3
      %p125 = por %p123, %p124
      %p127 = scmp.ne.s32.totalorder %s110, %s126
      %p128 = scmp.eq.s32.totalorder %s32, 0
      %p129 = por %p127, %p128
      %s131 = sadd.s32 %s130, 1
      %p134 = scmp.eq.s32.totalorder %s26, 3
      %p135 = scmp.ne.s32.totalorder %s130, %s132
      %p136 = scmp.eq.s32.totalorder %s26, 0
      %p137 = por %p135, %p136
      %p138 = scmp.ne.s32.totalorder %s130, %s132
      %p139 = scmp.eq.s32.totalorder %s31, 3
      %p140 = por %p138, %p139
      %p141 = scmp.ne.s32.totalorder %s132, %s133
      %p142 = scmp.eq.s32.totalorder %s31, 0
      %p143 = por %p141, %p142
      %p144 = scmp.ne.s32.totalorder %s132, %s133
      %p145 = scmp.eq.s32.totalorder %s32, 3
      %p146 = por %p144, %p145
      %p148 = scmp.ne.s32.totalorder %s133, %s147
      %p149 = scmp.eq.s32.totalorder %s32, 0
      %p150 = por %p148, %p149
      %s152 = sadd.s32 %s151, 1
      %p155 = scmp.eq.s32.totalorder %s26, 3
      %p156 = scmp.ne.s32.totalorder %s151, %s153
      %p157 = scmp.eq.s32.totalorder %s26, 0
      %p158 = por %p156, %p157
      %p159 = scmp.ne.s32.totalorder %s151, %s153
      %p160 = scmp.eq.s32.totalorder %s31, 3
      %p161 = por %p159, %p160
      %p162 = scmp.ne.s32.totalorder %s153, %s154
      %p163 = scmp.eq.s32.totalorder %s31, 0
      %p164 = por %p162, %p163
      %p165 = scmp.ne.s32.totalorder %s153, %s154
      %p166 = scmp.eq.s32.totalorder %s32, 3
      %p167 = por %p165, %p166
      %p169 = scmp.ne.s32.totalorder %s154, %s168
      %p170 = scmp.eq.s32.totalorder %s32, 0
      %p171 = por %p169, %p170
      %s173 = sadd.s32 %s172, 1
      %p176 = scmp.eq.s32.totalorder %s26, 3
      %p177 = scmp.ne.s32.totalorder %s172, %s174
      %p178 = scmp.eq.s32.totalorder %s26, 0
      %p179 = por %p177, %p178
      %p180 = scmp.ne.s32.totalorder %s172, %s174
      %p181 = scmp.eq.s32.totalorder %s31, 3
      %p182 = por %p180, %p181
      %p183 = scmp.ne.s32.totalorder %s174, %s175
      %p184 = scmp.eq.s32.totalorder %s31, 0
      %p185 = por %p183, %p184
      %p186 = scmp.ne.s32.totalorder %s174, %s175
      %p187 = scmp.eq.s32.totalorder %s32, 3
      %p188 = por %p186, %p187
      %p190 = scmp.ne.s32.totalorder %s175, %s189
      %p191 = scmp.eq.s32.totalorder %s32, 0
      %p192 = por %p190, %p191
      %s194 = sadd.s32 %s193, 1
      %p197 = scmp.eq.s32.totalorder %s26, 3
      %p198 = scmp.ne.s32.totalorder %s193, %s195
      %p199 = scmp.eq.s32.totalorder %s26, 0
      %p200 = por %p198, %p199
      %p201 = scmp.ne.s32.totalorder %s193, %s195
      %p202 = scmp.eq.s32.totalorder %s31, 3
      %p203 = por %p201, %p202
      %p204 = scmp.ne.s32.totalorder %s195, %s196
      %p205 = scmp.eq.s32.totalorder %s31, 0
      %p206 = por %p204, %p205
      %p207 = scmp.ne.s32.totalorder %s195, %s196
      %p208 = scmp.eq.s32.totalorder %s32, 3
      %p209 = por %p207, %p208
      %p211 = scmp.ne.s32.totalorder %s196, %s210
      %p212 = scmp.eq.s32.totalorder %s32, 0
      %p213 = por %p211, %p212
      %s215 = sadd.s32 %s214, 1
      %p218 = scmp.eq.s32.totalorder %s26, 3
      %p219 = scmp.ne.s32.totalorder %s214, %s216
      %p220 = scmp.eq.s32.totalorder %s26, 0
      %p221 = por %p219, %p220
      %p222 = scmp.ne.s32.totalorder %s214, %s216
      %p223 = scmp.eq.s32.totalorder %s31, 3
      %p224 = por %p222, %p223
      %p225 = scmp.ne.s32.totalorder %s216, %s217
      %p226 = scmp.eq.s32.totalorder %s31, 0
      %p227 = por %p225, %p226
      %p228 = scmp.ne.s32.totalorder %s216, %s217
      %p229 = scmp.eq.s32.totalorder %s32, 3
      %p230 = por %p228, %p229
      %p232 = scmp.ne.s32.totalorder %s217, %s231
      %p233 = scmp.eq.s32.totalorder %s32, 0
      %p234 = por %p232, %p233
      %s236 = sadd.s32 %s235, 1
      %p239 = scmp.eq.s32.totalorder %s26, 3
      %p240 = scmp.ne.s32.totalorder %s235, %s237
      %p241 = scmp.eq.s32.totalorder %s26, 0
      %p242 = por %p240, %p241
      %p243 = scmp.ne.s32.totalorder %s235, %s237
      %p244 = scmp.eq.s32.totalorder %s31, 3
      %p245 = por %p243, %p244
      %p246 = scmp.ne.s32.totalorder %s237, %s238
      %p247 = scmp.eq.s32.totalorder %s31, 0
      %p248 = por %p246, %p247
      %p249 = scmp.ne.s32.totalorder %s237, %s238
      %p250 = scmp.eq.s32.totalorder %s32, 3
      %p251 = por %p249, %p250
      %p253 = scmp.ne.s32.totalorder %s238, %s252
      %p254 = scmp.eq.s32.totalorder %s32, 0
      %p255 = por %p253, %p254
      %s256 = ssub.s32 %s33, %s45
      %s257 = ssub.s32 %s34, %s41
      %s258 = sor.u32 %s256, %s257
      %p259 = scmp.eq.s32.totalorder %s258, 0
      %s261 = sadd.s32 %s260, 1
      %s262 = scalar_select %p259, %s260, %s261
      %p265 = pneg %p259
      %p266 = scmp.eq.s32.totalorder %s26, 3
      %p267 = por %p265, %p266
      %p268 = scmp.ne.s32.totalorder %s260, %s263
      %p269 = scmp.eq.s32.totalorder %s26, 0
      %p270 = por %p268, %p269
      %p271 = scmp.ne.s32.totalorder %s260, %s263
      %p272 = scmp.eq.s32.totalorder %s31, 3
      %p273 = por %p271, %p272
      %p274 = scmp.ne.s32.totalorder %s263, %s264
      %p275 = scmp.eq.s32.totalorder %s31, 0
      %p276 = por %p274, %p275
      %p277 = scmp.ne.s32.totalorder %s263, %s264
      %p278 = scmp.eq.s32.totalorder %s32, 3
      %p279 = por %p277, %p278
      %p281 = scmp.ne.s32.totalorder %s264, %s280
      %p282 = scmp.eq.s32.totalorder %s32, 0
      %p283 = por %p281, %p282
      %p284 = scmp.le.s32.totalorder 1, %s26
      %p285 = scmp.lt.s32.totalorder %s26, 5
      %p286 = pnand %p284, %p285
      %p287 = pneg %p286
      // Predicated region
      $region9: #{tpu_custom_call.1} parent=5 // pred_check
        _
      $region10: #{tpu_custom_call.1} parent=5 // pred_check_branch
        %289 = sbr.rel (%p286) target = $region12
      $region11: #{tpu_custom_call.1} parent=5 // pred_region
        %s290 = ssub.s32 %s26, 1
        // Predicated region
        $region13: #{tpu_custom_call.1} parent=11 // pred_check
          %p291 = pneg %p143
        $region14: #{tpu_custom_call.1} parent=11 // pred_check_branch
          %293 = sbr.rel (%p291) target = $region16
        $region15: #{tpu_custom_call.1} parent=11 // pred_region
          %295 = vsyncadd [#allocation10], 0
          %s296 = sshll.u32 %s3, 4
          %s297 = int_to_ptr.hbm [resolvable:$true] %s296
          %s298 = sshll.u32 [#allocation9], 4
          %s299 = int_to_ptr.vmem [resolvable:$true] %s298
          %304 = dma.hbm_to_vmem [thread:$0]  %s297, 49152, %s299, [#allocation10], 768, 768, 48
        $region16: #{tpu_custom_call.1} parent=11 // pred_fallthru
          _
        // Predicated region
        $region17: #{tpu_custom_call.1} parent=11 // pred_check
          %p305 = pneg %p164
        $region18: #{tpu_custom_call.1} parent=11 // pred_check_branch
          %307 = sbr.rel (%p305) target = $region20
        $region19: #{tpu_custom_call.1} parent=11 // pred_region
          _
        $region20: #{tpu_custom_call.1} parent=11 // pred_fallthru
          _
        // Predicated region
        $region21: #{tpu_custom_call.1} parent=11 // pred_check
          %p308 = pneg %p185
        $region22: #{tpu_custom_call.1} parent=11 // pred_check_branch
          %310 = sbr.rel (%p308) target = $region24
        $region23: #{tpu_custom_call.1} parent=11 // pred_region
          %312 = vsyncadd [#allocation10], 0
          %s313 = sshll.u32 %s5, 4
          %s314 = int_to_ptr.hbm [resolvable:$true] %s313
          %s315 = sshll.u32 [#allocation11], 4
          %s316 = int_to_ptr.vmem [resolvable:$true] %s315
          %321 = dma.hbm_to_vmem [thread:$0]  %s314, 16384, %s316, [#allocation10], 256, 256, 16
        $region24: #{tpu_custom_call.1} parent=11 // pred_fallthru
          _
        // Predicated region
        $region25: #{tpu_custom_call.1} parent=11 // pred_check
          %p322 = pneg %p206
        $region26: #{tpu_custom_call.1} parent=11 // pred_check_branch
          %324 = sbr.rel (%p322) target = $region28
        $region27: #{tpu_custom_call.1} parent=11 // pred_region
          _
        $region28: #{tpu_custom_call.1} parent=11 // pred_fallthru
          _
        // Predicated region
        $region29: #{tpu_custom_call.1} parent=11 // pred_check
          %p325 = pneg %p227
        $region30: #{tpu_custom_call.1} parent=11 // pred_check_branch
          %327 = sbr.rel (%p325) target = $region32
        $region31: #{tpu_custom_call.1} parent=11 // pred_region
          _
        $region32: #{tpu_custom_call.1} parent=11 // pred_fallthru
          _
        // Predicated region
        $region33: #{tpu_custom_call.1} parent=11 // pred_check
          %p328 = pneg %p248
        $region34: #{tpu_custom_call.1} parent=11 // pred_check_branch
          %330 = sbr.rel (%p328) target = $region36
        $region35: #{tpu_custom_call.1} parent=11 // pred_region
          _
        $region36: #{tpu_custom_call.1} parent=11 // pred_fallthru
          _
      $region12: #{tpu_custom_call.1} parent=5 // pred_fallthru
        _
      %p331 = scmp.lt.s32.totalorder %s26, 4
      // Predicated region
      $region37: #{tpu_custom_call.1} parent=5 // pred_check
        %p332 = pneg %p331
      $region38: #{tpu_custom_call.1} parent=5 // pred_check_branch
        %334 = sbr.rel (%p332) target = $region40
      $region39: #{tpu_custom_call.1} parent=5 // pred_region
        // Predicated region
        $region41: #{tpu_custom_call.1} parent=39 // pred_check
          %p335 = pneg %p60
        $region42: #{tpu_custom_call.1} parent=39 // pred_check_branch
          %337 = sbr.rel (%p335) target = $region44
        $region43: #{tpu_custom_call.1} parent=39 // pred_region
          %s338 = sand.u32 %s50, 1
          %s339 = scalar_lea.sflag [#allocation4], %s338
          %s340 = sand.u32 %s50, 1
          %s341 = smul.addr %s340, 512
          %s342 = scalar_lea.vmem [#allocation3], %s341
          %344 = vsyncadd %s339, 0
          %s345 = smul.addr %s33, 128
          %s346 = sadd.s32 %s34, %s345
          %s347 = smul.addr %s346, 8
          %s348 = scalar_lea.hbm %s0, %s347
          %s349 = sshll.u32 %s348, 4
          %s350 = int_to_ptr.hbm [resolvable:$true] %s349
          %s351 = sshll.u32 %s342, 4
          %s352 = int_to_ptr.vmem [resolvable:$true] %s351
          %357 = dma.hbm_to_vmem [thread:$0]  %s350, 8192, %s352, %s339, 256, 128, 8
        $region44: #{tpu_custom_call.1} parent=39 // pred_fallthru
          _
        // Predicated region
        $region45: #{tpu_custom_call.1} parent=39 // pred_check
          %p358 = pneg %p88
        $region46: #{tpu_custom_call.1} parent=39 // pred_check_branch
          %360 = sbr.rel (%p358) target = $region48
        $region47: #{tpu_custom_call.1} parent=39 // pred_region
          %s361 = sand.u32 %s26, 1
          %s362 = scalar_lea.sflag [#allocation7], %s361
          %s363 = sand.u32 %s78, 1
          %s364 = smul.addr %s363, 512
          %s365 = scalar_lea.vmem [#allocation6], %s364
          %367 = vsyncadd %s362, 0
          %s368 = smul.addr %s33, 128
          %s369 = sadd.s32 %s34, %s368
          %s370 = smul.addr %s369, 8
          %s371 = scalar_lea.hbm %s1, %s370
          %s372 = sshll.u32 %s371, 4
          %s373 = int_to_ptr.hbm [resolvable:$true] %s372
          %s374 = sshll.u32 %s365, 4
          %s375 = int_to_ptr.vmem [resolvable:$true] %s374
          %380 = dma.hbm_to_vmem [thread:$0]  %s373, 8192, %s375, %s362, 256, 128, 8
        $region48: #{tpu_custom_call.1} parent=39 // pred_fallthru
          _
        // Predicated region
        $region49: #{tpu_custom_call.1} parent=39 // pred_check
          %p381 = pneg %p116
        $region50: #{tpu_custom_call.1} parent=39 // pred_check_branch
          %383 = sbr.rel (%p381) target = $region52
        $region51: #{tpu_custom_call.1} parent=39 // pred_region
          %s384 = sand.u32 %s26, 1
          %s385 = scalar_lea.sflag [#allocation7], %s384
          %s386 = sand.u32 %s106, 1
          %s387 = smul.addr %s386, 512
          %s388 = scalar_lea.vmem [#allocation8], %s387
          %390 = vsyncadd %s385, 0
          %s391 = smul.addr %s33, 128
          %s392 = sadd.s32 %s34, %s391
          %s393 = smul.addr %s392, 8
          %s394 = scalar_lea.hbm %s2, %s393
          %s395 = sshll.u32 %s394, 4
          %s396 = int_to_ptr.hbm [resolvable:$true] %s395
          %s397 = sshll.u32 %s388, 4
          %s398 = int_to_ptr.vmem [resolvable:$true] %s397
          %403 = dma.hbm_to_vmem [thread:$0]  %s396, 8192, %s398, %s385, 256, 128, 8
        $region52: #{tpu_custom_call.1} parent=39 // pred_fallthru
          _
      $region40: #{tpu_custom_call.1} parent=5 // pred_fallthru
        _
      %p404 = scmp.le.s32.totalorder 1, %s26
      %p405 = scmp.lt.s32.totalorder %s26, 5
      %p406 = pnand %p404, %p405
      %p407 = pneg %p406
      // Predicated region
      $region53: #{tpu_custom_call.1} parent=5 // pred_check
        _
      $region54: #{tpu_custom_call.1} parent=5 // pred_check_branch
        %409 = sbr.rel (%p406) target = $region56
      $region55: #{tpu_custom_call.1} parent=5 // pred_region
        %s410 = ssub.s32 %s26, 1
        %s411 = sand.u32 %s53, 1
        %s412 = scalar_lea.sflag [#allocation4], %s411
        %s413 = sand.u32 %s53, 1
        %s414 = smul.addr %s413, 512
        %s415 = scalar_lea.vmem [#allocation3], %s414
        // Predicated region
        $region57: #{tpu_custom_call.1} parent=55 // pred_check
          %p416 = pneg %p66
        $region58: #{tpu_custom_call.1} parent=55 // pred_check_branch
          %418 = sbr.rel (%p416) target = $region60
        $region59: #{tpu_custom_call.1} parent=55 // pred_region
          %420 = dma.done %s412, 8192
        $region60: #{tpu_custom_call.1} parent=55 // pred_fallthru
          _
        %s421 = sand.u32 %s31, 1
        %s422 = scalar_lea.sflag [#allocation7], %s421
        %s423 = sand.u32 %s81, 1
        %s424 = smul.addr %s423, 512
        %s425 = scalar_lea.vmem [#allocation6], %s424
        // Predicated region
        $region61: #{tpu_custom_call.1} parent=55 // pred_check
          %p426 = pneg %p94
        $region62: #{tpu_custom_call.1} parent=55 // pred_check_branch
          %428 = sbr.rel (%p426) target = $region64
        $region63: #{tpu_custom_call.1} parent=55 // pred_region
          %430 = dma.done %s422, 8192
        $region64: #{tpu_custom_call.1} parent=55 // pred_fallthru
          _
        %s431 = sand.u32 %s31, 1
        %s432 = scalar_lea.sflag [#allocation7], %s431
        %s433 = sand.u32 %s109, 1
        %s434 = smul.addr %s433, 512
        %s435 = scalar_lea.vmem [#allocation8], %s434
        // Predicated region
        $region65: #{tpu_custom_call.1} parent=55 // pred_check
          %p436 = pneg %p122
        $region66: #{tpu_custom_call.1} parent=55 // pred_check_branch
          %438 = sbr.rel (%p436) target = $region68
        $region67: #{tpu_custom_call.1} parent=55 // pred_region
          %440 = dma.done %s432, 8192
        $region68: #{tpu_custom_call.1} parent=55 // pred_fallthru
          _
        // Predicated region
        $region69: #{tpu_custom_call.1} parent=55 // pred_check
          %p441 = pneg %p143
        $region70: #{tpu_custom_call.1} parent=55 // pred_check_branch
          %443 = sbr.rel (%p441) target = $region72
        $region71: #{tpu_custom_call.1} parent=55 // pred_region
          %445 = dma.done [#allocation10], 49152
        $region72: #{tpu_custom_call.1} parent=55 // pred_fallthru
          _
        // Predicated region
        $region73: #{tpu_custom_call.1} parent=55 // pred_check
          %p446 = pneg %p185
        $region74: #{tpu_custom_call.1} parent=55 // pred_check_branch
          %448 = sbr.rel (%p446) target = $region76
        $region75: #{tpu_custom_call.1} parent=55 // pred_region
          %450 = dma.done [#allocation10], 16384
        $region76: #{tpu_custom_call.1} parent=55 // pred_fallthru
          _
        %s451 = sand.u32 %s53, 1
        %s452 = scalar_lea.sflag [#allocation4], %s451
        %s453 = sand.u32 %s53, 1
        %s454 = smul.addr %s453, 512
        %s455 = scalar_lea.vmem [#allocation3], %s454
        %p456 = pneg %p66
        %p457 = pneg %p63
        %s458 = sand.u32 %s31, 1
        %s459 = scalar_lea.sflag [#allocation7], %s458
        %s460 = sand.u32 %s81, 1
        %s461 = smul.addr %s460, 512
        %s462 = scalar_lea.vmem [#allocation6], %s461
        %p463 = pneg %p94
        %p464 = pneg %p91
        %s465 = sand.u32 %s31, 1
        %s466 = scalar_lea.sflag [#allocation7], %s465
        %s467 = sand.u32 %s109, 1
        %s468 = smul.addr %s467, 512
        %s469 = scalar_lea.vmem [#allocation8], %s468
        %p470 = pneg %p122
        %p471 = pneg %p119
        %p472 = pneg %p143
        %p473 = pneg %p140
        %p474 = pneg %p164
        %p475 = pneg %p161
        %p476 = pneg %p185
        %p477 = pneg %p182
        %p478 = pneg %p206
        %p479 = pneg %p203
        %p480 = pneg %p227
        %p481 = pneg %p224
        %p482 = pneg %p248
        %p483 = pneg %p245
        %p484 = pneg %p276
        %p485 = pneg %p273
        %s486 = sand.u32 %s263, 1
        %s487 = scalar_lea.sflag [#allocation5], %s486
        %s488 = sand.u32 %s263, 1
        %s489 = scalar_lea.vmem [#allocation12], %s488
        %v490 = vld [vmem:[%s415] sm:$0xff]
        %v491 = vld [vmem:[%s415 + $0x8] sm:$0xff]
        %v492 = vld [vmem:[%s415 + $0x10] sm:$0xff]
        %v493 = vld [vmem:[%s415 + $0x18] sm:$0xff]
        %v494 = vld [vmem:[%s415 + $0x20] sm:$0xff]
        %v495 = vld [vmem:[%s415 + $0x28] sm:$0xff]
        %v496 = vld [vmem:[%s415 + $0x30] sm:$0xff]
        %v497 = vld [vmem:[%s415 + $0x38] sm:$0xff]
        %v498 = vld [vmem:[%s415 + $0x40] sm:$0xff]
        %v499 = vld [vmem:[%s415 + $0x48] sm:$0xff]
        %v500 = vld [vmem:[%s415 + $0x50] sm:$0xff]
        %v501 = vld [vmem:[%s415 + $0x58] sm:$0xff]
        %v502 = vld [vmem:[%s415 + $0x60] sm:$0xff]
        %v503 = vld [vmem:[%s415 + $0x68] sm:$0xff]
        %v504 = vld [vmem:[%s415 + $0x70] sm:$0xff]
        %v505 = vld [vmem:[%s415 + $0x78] sm:$0xff]
        %v506 = vld [vmem:[%s415 + $0x80] sm:$0xff]
        %v507 = vld [vmem:[%s415 + $0x88] sm:$0xff]
        %v508 = vld [vmem:[%s415 + $0x90] sm:$0xff]
        %v509 = vld [vmem:[%s415 + $0x98] sm:$0xff]
        %v510 = vld [vmem:[%s415 + $0xa0] sm:$0xff]
        %v511 = vld [vmem:[%s415 + $0xa8] sm:$0xff]
        %v512 = vld [vmem:[%s415 + $0xb0] sm:$0xff]
        %v513 = vld [vmem:[%s415 + $0xb8] sm:$0xff]
        %v514 = vld [vmem:[%s415 + $0xc0] sm:$0xff]
        %v515 = vld [vmem:[%s415 + $0xc8] sm:$0xff]
        %v516 = vld [vmem:[%s415 + $0xd0] sm:$0xff]
        %v517 = vld [vmem:[%s415 + $0xd8] sm:$0xff]
        %v518 = vld [vmem:[%s415 + $0xe0] sm:$0xff]
        %v519 = vld [vmem:[%s415 + $0xe8] sm:$0xff]
        %v520 = vld [vmem:[%s415 + $0xf0] sm:$0xff]
        %v521 = vld [vmem:[%s415 + $0xf8] sm:$0xff]
        %v522 = vld [vmem:[%s415 + $0x100] sm:$0xff]
        %v523 = vld [vmem:[%s415 + $0x108] sm:$0xff]
        %v524 = vld [vmem:[%s415 + $0x110] sm:$0xff]
        %v525 = vld [vmem:[%s415 + $0x118] sm:$0xff]
        %v526 = vld [vmem:[%s415 + $0x120] sm:$0xff]
        %v527 = vld [vmem:[%s415 + $0x128] sm:$0xff]
        %v528 = vld [vmem:[%s415 + $0x130] sm:$0xff]
        %v529 = vld [vmem:[%s415 + $0x138] sm:$0xff]
        %v530 = vld [vmem:[%s415 + $0x140] sm:$0xff]
        %v531 = vld [vmem:[%s415 + $0x148] sm:$0xff]
        %v532 = vld [vmem:[%s415 + $0x150] sm:$0xff]
        %v533 = vld [vmem:[%s415 + $0x158] sm:$0xff]
        %v534 = vld [vmem:[%s415 + $0x160] sm:$0xff]
        %v535 = vld [vmem:[%s415 + $0x168] sm:$0xff]
        %v536 = vld [vmem:[%s415 + $0x170] sm:$0xff]
        %v537 = vld [vmem:[%s415 + $0x178] sm:$0xff]
        %v538 = vld [vmem:[%s415 + $0x180] sm:$0xff]
        %v539 = vld [vmem:[%s415 + $0x188] sm:$0xff]
        %v540 = vld [vmem:[%s415 + $0x190] sm:$0xff]
        %v541 = vld [vmem:[%s415 + $0x198] sm:$0xff]
        %v542 = vld [vmem:[%s415 + $0x1a0] sm:$0xff]
        %v543 = vld [vmem:[%s415 + $0x1a8] sm:$0xff]
        %v544 = vld [vmem:[%s415 + $0x1b0] sm:$0xff]
        %v545 = vld [vmem:[%s415 + $0x1b8] sm:$0xff]
        %v546 = vld [vmem:[%s415 + $0x1c0] sm:$0xff]
        %v547 = vld [vmem:[%s415 + $0x1c8] sm:$0xff]
        %v548 = vld [vmem:[%s415 + $0x1d0] sm:$0xff]
        %v549 = vld [vmem:[%s415 + $0x1d8] sm:$0xff]
        %v550 = vld [vmem:[%s415 + $0x1e0] sm:$0xff]
        %v551 = vld [vmem:[%s415 + $0x1e8] sm:$0xff]
        %v552 = vld [vmem:[%s415 + $0x1f0] sm:$0xff]
        %v553 = vld [vmem:[%s415 + $0x1f8] sm:$0xff]
        %v554 = vpack.c.bf16 %v491, %v490
        %v555 = vpack.c.bf16 %v493, %v492
        %v556 = vpack.c.bf16 %v495, %v494
        %v557 = vpack.c.bf16 %v497, %v496
        %v558 = vpack.c.bf16 %v499, %v498
        %v559 = vpack.c.bf16 %v501, %v500
        %v560 = vpack.c.bf16 %v503, %v502
        %v561 = vpack.c.bf16 %v505, %v504
        %v562 = vpack.c.bf16 %v507, %v506
        %v563 = vpack.c.bf16 %v509, %v508
        %v564 = vpack.c.bf16 %v511, %v510
        %v565 = vpack.c.bf16 %v513, %v512
        %v566 = vpack.c.bf16 %v515, %v514
        %v567 = vpack.c.bf16 %v517, %v516
        %v568 = vpack.c.bf16 %v519, %v518
        %v569 = vpack.c.bf16 %v521, %v520
        %v570 = vpack.c.bf16 %v523, %v522
        %v571 = vpack.c.bf16 %v525, %v524
        %v572 = vpack.c.bf16 %v527, %v526
        %v573 = vpack.c.bf16 %v529, %v528
        %v574 = vpack.c.bf16 %v531, %v530
        %v575 = vpack.c.bf16 %v533, %v532
        %v576 = vpack.c.bf16 %v535, %v534
        %v577 = vpack.c.bf16 %v537, %v536
        %v578 = vpack.c.bf16 %v539, %v538
        %v579 = vpack.c.bf16 %v541, %v540
        %v580 = vpack.c.bf16 %v543, %v542
        %v581 = vpack.c.bf16 %v545, %v544
        %v582 = vpack.c.bf16 %v547, %v546
        %v583 = vpack.c.bf16 %v549, %v548
        %v584 = vpack.c.bf16 %v551, %v550
        %v585 = vpack.c.bf16 %v553, %v552
        %v586 = vld [vmem:[%s425] sm:$0xff]
        %v587 = vld [vmem:[%s425 + $0x8] sm:$0xff]
        %v588 = vld [vmem:[%s425 + $0x10] sm:$0xff]
        %v589 = vld [vmem:[%s425 + $0x18] sm:$0xff]
        %v590 = vld [vmem:[%s425 + $0x20] sm:$0xff]
        %v591 = vld [vmem:[%s425 + $0x28] sm:$0xff]
        %v592 = vld [vmem:[%s425 + $0x30] sm:$0xff]
        %v593 = vld [vmem:[%s425 + $0x38] sm:$0xff]
        %v594 = vld [vmem:[%s425 + $0x40] sm:$0xff]
        %v595 = vld [vmem:[%s425 + $0x48] sm:$0xff]
        %v596 = vld [vmem:[%s425 + $0x50] sm:$0xff]
        %v597 = vld [vmem:[%s425 + $0x58] sm:$0xff]
        %v598 = vld [vmem:[%s425 + $0x60] sm:$0xff]
        %v599 = vld [vmem:[%s425 + $0x68] sm:$0xff]
        %v600 = vld [vmem:[%s425 + $0x70] sm:$0xff]
        %v601 = vld [vmem:[%s425 + $0x78] sm:$0xff]
        %v602 = vld [vmem:[%s425 + $0x80] sm:$0xff]
        %v603 = vld [vmem:[%s425 + $0x88] sm:$0xff]
        %v604 = vld [vmem:[%s425 + $0x90] sm:$0xff]
        %v605 = vld [vmem:[%s425 + $0x98] sm:$0xff]
        %v606 = vld [vmem:[%s425 + $0xa0] sm:$0xff]
        %v607 = vld [vmem:[%s425 + $0xa8] sm:$0xff]
        %v608 = vld [vmem:[%s425 + $0xb0] sm:$0xff]
        %v609 = vld [vmem:[%s425 + $0xb8] sm:$0xff]
        %v610 = vld [vmem:[%s425 + $0xc0] sm:$0xff]
        %v611 = vld [vmem:[%s425 + $0xc8] sm:$0xff]
        %v612 = vld [vmem:[%s425 + $0xd0] sm:$0xff]
        %v613 = vld [vmem:[%s425 + $0xd8] sm:$0xff]
        %v614 = vld [vmem:[%s425 + $0xe0] sm:$0xff]
        %v615 = vld [vmem:[%s425 + $0xe8] sm:$0xff]
        %v616 = vld [vmem:[%s425 + $0xf0] sm:$0xff]
        %v617 = vld [vmem:[%s425 + $0xf8] sm:$0xff]
        %v618 = vld [vmem:[%s425 + $0x100] sm:$0xff]
        %v619 = vld [vmem:[%s425 + $0x108] sm:$0xff]
        %v620 = vld [vmem:[%s425 + $0x110] sm:$0xff]
        %v621 = vld [vmem:[%s425 + $0x118] sm:$0xff]
        %v622 = vld [vmem:[%s425 + $0x120] sm:$0xff]
        %v623 = vld [vmem:[%s425 + $0x128] sm:$0xff]
        %v624 = vld [vmem:[%s425 + $0x130] sm:$0xff]
        %v625 = vld [vmem:[%s425 + $0x138] sm:$0xff]
        %v626 = vld [vmem:[%s425 + $0x140] sm:$0xff]
        %v627 = vld [vmem:[%s425 + $0x148] sm:$0xff]
        %v628 = vld [vmem:[%s425 + $0x150] sm:$0xff]
        %v629 = vld [vmem:[%s425 + $0x158] sm:$0xff]
        %v630 = vld [vmem:[%s425 + $0x160] sm:$0xff]
        %v631 = vld [vmem:[%s425 + $0x168] sm:$0xff]
        %v632 = vld [vmem:[%s425 + $0x170] sm:$0xff]
        %v633 = vld [vmem:[%s425 + $0x178] sm:$0xff]
        %v634 = vld [vmem:[%s425 + $0x180] sm:$0xff]
        %v635 = vld [vmem:[%s425 + $0x188] sm:$0xff]
        %v636 = vld [vmem:[%s425 + $0x190] sm:$0xff]
        %v637 = vld [vmem:[%s425 + $0x198] sm:$0xff]
        %v638 = vld [vmem:[%s425 + $0x1a0] sm:$0xff]
        %v639 = vld [vmem:[%s425 + $0x1a8] sm:$0xff]
        %v640 = vld [vmem:[%s425 + $0x1b0] sm:$0xff]
        %v641 = vld [vmem:[%s425 + $0x1b8] sm:$0xff]
        %v642 = vld [vmem:[%s425 + $0x1c0] sm:$0xff]
        %v643 = vld [vmem:[%s425 + $0x1c8] sm:$0xff]
        %v644 = vld [vmem:[%s425 + $0x1d0] sm:$0xff]
        %v645 = vld [vmem:[%s425 + $0x1d8] sm:$0xff]
        %v646 = vld [vmem:[%s425 + $0x1e0] sm:$0xff]
        %v647 = vld [vmem:[%s425 + $0x1e8] sm:$0xff]
        %v648 = vld [vmem:[%s425 + $0x1f0] sm:$0xff]
        %v649 = vld [vmem:[%s425 + $0x1f8] sm:$0xff]
        %v650 = vpack.c.bf16 %v587, %v586
        %v651 = vpack.c.bf16 %v589, %v588
        %v652 = vpack.c.bf16 %v591, %v590
        %v653 = vpack.c.bf16 %v593, %v592
        %v654 = vpack.c.bf16 %v595, %v594
        %v655 = vpack.c.bf16 %v597, %v596
        %v656 = vpack.c.bf16 %v599, %v598
        %v657 = vpack.c.bf16 %v601, %v600
        %v658 = vpack.c.bf16 %v603, %v602
        %v659 = vpack.c.bf16 %v605, %v604
        %v660 = vpack.c.bf16 %v607, %v606
        %v661 = vpack.c.bf16 %v609, %v608
        %v662 = vpack.c.bf16 %v611, %v610
        %v663 = vpack.c.bf16 %v613, %v612
        %v664 = vpack.c.bf16 %v615, %v614
        %v665 = vpack.c.bf16 %v617, %v616
        %v666 = vpack.c.bf16 %v619, %v618
        %v667 = vpack.c.bf16 %v621, %v620
        %v668 = vpack.c.bf16 %v623, %v622
        %v669 = vpack.c.bf16 %v625, %v624
        %v670 = vpack.c.bf16 %v627, %v626
        %v671 = vpack.c.bf16 %v629, %v628
        %v672 = vpack.c.bf16 %v631, %v630
        %v673 = vpack.c.bf16 %v633, %v632
        %v674 = vpack.c.bf16 %v635, %v634
        %v675 = vpack.c.bf16 %v637, %v636
        %v676 = vpack.c.bf16 %v639, %v638
        %v677 = vpack.c.bf16 %v641, %v640
        %v678 = vpack.c.bf16 %v643, %v642
        %v679 = vpack.c.bf16 %v645, %v644
        %v680 = vpack.c.bf16 %v647, %v646
        %v681 = vpack.c.bf16 %v649, %v648
        %v682 = vld [vmem:[%s435] sm:$0xff]
        %v683 = vld [vmem:[%s435 + $0x8] sm:$0xff]
        %v684 = vld [vmem:[%s435 + $0x10] sm:$0xff]
        %v685 = vld [vmem:[%s435 + $0x18] sm:$0xff]
        %v686 = vld [vmem:[%s435 + $0x20] sm:$0xff]
        %v687 = vld [vmem:[%s435 + $0x28] sm:$0xff]
        %v688 = vld [vmem:[%s435 + $0x30] sm:$0xff]
        %v689 = vld [vmem:[%s435 + $0x38] sm:$0xff]
        %v690 = vld [vmem:[%s435 + $0x40] sm:$0xff]
        %v691 = vld [vmem:[%s435 + $0x48] sm:$0xff]
        %v692 = vld [vmem:[%s435 + $0x50] sm:$0xff]
        %v693 = vld [vmem:[%s435 + $0x58] sm:$0xff]
        %v694 = vld [vmem:[%s435 + $0x60] sm:$0xff]
        %v695 = vld [vmem:[%s435 + $0x68] sm:$0xff]
        %v696 = vld [vmem:[%s435 + $0x70] sm:$0xff]
        %v697 = vld [vmem:[%s435 + $0x78] sm:$0xff]
        %v698 = vld [vmem:[%s435 + $0x80] sm:$0xff]
        %v699 = vld [vmem:[%s435 + $0x88] sm:$0xff]
        %v700 = vld [vmem:[%s435 + $0x90] sm:$0xff]
        %v701 = vld [vmem:[%s435 + $0x98] sm:$0xff]
        %v702 = vld [vmem:[%s435 + $0xa0] sm:$0xff]
        %v703 = vld [vmem:[%s435 + $0xa8] sm:$0xff]
        %v704 = vld [vmem:[%s435 + $0xb0] sm:$0xff]
        %v705 = vld [vmem:[%s435 + $0xb8] sm:$0xff]
        %v706 = vld [vmem:[%s435 + $0xc0] sm:$0xff]
        %v707 = vld [vmem:[%s435 + $0xc8] sm:$0xff]
        %v708 = vld [vmem:[%s435 + $0xd0] sm:$0xff]
        %v709 = vld [vmem:[%s435 + $0xd8] sm:$0xff]
        %v710 = vld [vmem:[%s435 + $0xe0] sm:$0xff]
        %v711 = vld [vmem:[%s435 + $0xe8] sm:$0xff]
        %v712 = vld [vmem:[%s435 + $0xf0] sm:$0xff]
        %v713 = vld [vmem:[%s435 + $0xf8] sm:$0xff]
        %v714 = vld [vmem:[%s435 + $0x100] sm:$0xff]
        %v715 = vld [vmem:[%s435 + $0x108] sm:$0xff]
        %v716 = vld [vmem:[%s435 + $0x110] sm:$0xff]
        %v717 = vld [vmem:[%s435 + $0x118] sm:$0xff]
        %v718 = vld [vmem:[%s435 + $0x120] sm:$0xff]
        %v719 = vld [vmem:[%s435 + $0x128] sm:$0xff]
        %v720 = vld [vmem:[%s435 + $0x130] sm:$0xff]
        %v721 = vld [vmem:[%s435 + $0x138] sm:$0xff]
        %v722 = vld [vmem:[%s435 + $0x140] sm:$0xff]
        %v723 = vld [vmem:[%s435 + $0x148] sm:$0xff]
        %v724 = vld [vmem:[%s435 + $0x150] sm:$0xff]
        %v725 = vld [vmem:[%s435 + $0x158] sm:$0xff]
        %v726 = vld [vmem:[%s435 + $0x160] sm:$0xff]
        %v727 = vld [vmem:[%s435 + $0x168] sm:$0xff]
        %v728 = vld [vmem:[%s435 + $0x170] sm:$0xff]
        %v729 = vld [vmem:[%s435 + $0x178] sm:$0xff]
        %v730 = vld [vmem:[%s435 + $0x180] sm:$0xff]
        %v731 = vld [vmem:[%s435 + $0x188] sm:$0xff]
        %v732 = vld [vmem:[%s435 + $0x190] sm:$0xff]
        %v733 = vld [vmem:[%s435 + $0x198] sm:$0xff]
        %v734 = vld [vmem:[%s435 + $0x1a0] sm:$0xff]
        %v735 = vld [vmem:[%s435 + $0x1a8] sm:$0xff]
        %v736 = vld [vmem:[%s435 + $0x1b0] sm:$0xff]
        %v737 = vld [vmem:[%s435 + $0x1b8] sm:$0xff]
        %v738 = vld [vmem:[%s435 + $0x1c0] sm:$0xff]
        %v739 = vld [vmem:[%s435 + $0x1c8] sm:$0xff]
        %v740 = vld [vmem:[%s435 + $0x1d0] sm:$0xff]
        %v741 = vld [vmem:[%s435 + $0x1d8] sm:$0xff]
        %v742 = vld [vmem:[%s435 + $0x1e0] sm:$0xff]
        %v743 = vld [vmem:[%s435 + $0x1e8] sm:$0xff]
        %v744 = vld [vmem:[%s435 + $0x1f0] sm:$0xff]
        %v745 = vld [vmem:[%s435 + $0x1f8] sm:$0xff]
        %v746 = vpack.c.bf16 %v683, %v682
        %v747 = vpack.c.bf16 %v685, %v684
        %v748 = vpack.c.bf16 %v687, %v686
        %v749 = vpack.c.bf16 %v689, %v688
        %v750 = vpack.c.bf16 %v691, %v690
        %v751 = vpack.c.bf16 %v693, %v692
        %v752 = vpack.c.bf16 %v695, %v694
        %v753 = vpack.c.bf16 %v697, %v696
        %v754 = vpack.c.bf16 %v699, %v698
        %v755 = vpack.c.bf16 %v701, %v700
        %v756 = vpack.c.bf16 %v703, %v702
        %v757 = vpack.c.bf16 %v705, %v704
        %v758 = vpack.c.bf16 %v707, %v706
        %v759 = vpack.c.bf16 %v709, %v708
        %v760 = vpack.c.bf16 %v711, %v710
        %v761 = vpack.c.bf16 %v713, %v712
        %v762 = vpack.c.bf16 %v715, %v714
        %v763 = vpack.c.bf16 %v717, %v716
        %v764 = vpack.c.bf16 %v719, %v718
        %v765 = vpack.c.bf16 %v721, %v720
        %v766 = vpack.c.bf16 %v723, %v722
        %v767 = vpack.c.bf16 %v725, %v724
        %v768 = vpack.c.bf16 %v727, %v726
        %v769 = vpack.c.bf16 %v729, %v728
        %v770 = vpack.c.bf16 %v731, %v730
        %v771 = vpack.c.bf16 %v733, %v732
        %v772 = vpack.c.bf16 %v735, %v734
        %v773 = vpack.c.bf16 %v737, %v736
        %v774 = vpack.c.bf16 %v739, %v738
        %v775 = vpack.c.bf16 %v741, %v740
        %v776 = vpack.c.bf16 %v743, %v742
        %v777 = vpack.c.bf16 %v745, %v744
        %v778 = vld [vmem:[#allocation9] sm:$0xff]
        %v779 = vld [vmem:[#allocation9 + $0x8] sm:$0xff]
        %v780 = vld [vmem:[#allocation9 + $0x30] sm:$0xff]
        %v781 = vld [vmem:[#allocation9 + $0x38] sm:$0xff]
        %v782 = vld [vmem:[#allocation9 + $0x60] sm:$0xff]
        %v783 = vld [vmem:[#allocation9 + $0x68] sm:$0xff]
        %v784 = vld [vmem:[#allocation9 + $0x90] sm:$0xff]
        %v785 = vld [vmem:[#allocation9 + $0x98] sm:$0xff]
        %v786 = vld [vmem:[#allocation9 + $0xc0] sm:$0xff]
        %v787 = vld [vmem:[#allocation9 + $0xc8] sm:$0xff]
        %v788 = vld [vmem:[#allocation9 + $0xf0] sm:$0xff]
        %v789 = vld [vmem:[#allocation9 + $0xf8] sm:$0xff]
        %v790 = vld [vmem:[#allocation9 + $0x120] sm:$0xff]
        %v791 = vld [vmem:[#allocation9 + $0x128] sm:$0xff]
        %v792 = vld [vmem:[#allocation9 + $0x150] sm:$0xff]
        %v793 = vld [vmem:[#allocation9 + $0x158] sm:$0xff]
        %v794 = vld [vmem:[#allocation9 + $0x180] sm:$0xff]
        %v795 = vld [vmem:[#allocation9 + $0x188] sm:$0xff]
        %v796 = vld [vmem:[#allocation9 + $0x1b0] sm:$0xff]
        %v797 = vld [vmem:[#allocation9 + $0x1b8] sm:$0xff]
        %v798 = vld [vmem:[#allocation9 + $0x1e0] sm:$0xff]
        %v799 = vld [vmem:[#allocation9 + $0x1e8] sm:$0xff]
        %v800 = vld [vmem:[#allocation9 + $0x210] sm:$0xff]
        %v801 = vld [vmem:[#allocation9 + $0x218] sm:$0xff]
        %v802 = vld [vmem:[#allocation9 + $0x240] sm:$0xff]
        %v803 = vld [vmem:[#allocation9 + $0x248] sm:$0xff]
        %v804 = vld [vmem:[#allocation9 + $0x270] sm:$0xff]
        %v805 = vld [vmem:[#allocation9 + $0x278] sm:$0xff]
        %v806 = vld [vmem:[#allocation9 + $0x2a0] sm:$0xff]
        %v807 = vld [vmem:[#allocation9 + $0x2a8] sm:$0xff]
        %v808 = vld [vmem:[#allocation9 + $0x2d0] sm:$0xff]
        %v809 = vld [vmem:[#allocation9 + $0x2d8] sm:$0xff]
        %v810 = vld [vmem:[#allocation9 + $0x300] sm:$0xff]
        %v811 = vld [vmem:[#allocation9 + $0x308] sm:$0xff]
        %v812 = vld [vmem:[#allocation9 + $0x330] sm:$0xff]
        %v813 = vld [vmem:[#allocation9 + $0x338] sm:$0xff]
        %v814 = vld [vmem:[#allocation9 + $0x360] sm:$0xff]
        %v815 = vld [vmem:[#allocation9 + $0x368] sm:$0xff]
        %v816 = vld [vmem:[#allocation9 + $0x390] sm:$0xff]
        %v817 = vld [vmem:[#allocation9 + $0x398] sm:$0xff]
        %v818 = vld [vmem:[#allocation9 + $0x3c0] sm:$0xff]
        %v819 = vld [vmem:[#allocation9 + $0x3c8] sm:$0xff]
        %v820 = vld [vmem:[#allocation9 + $0x3f0] sm:$0xff]
        %v821 = vld [vmem:[#allocation9 + $0x3f8] sm:$0xff]
        %v822 = vld [vmem:[#allocation9 + $0x420] sm:$0xff]
        %v823 = vld [vmem:[#allocation9 + $0x428] sm:$0xff]
        %v824 = vld [vmem:[#allocation9 + $0x450] sm:$0xff]
        %v825 = vld [vmem:[#allocation9 + $0x458] sm:$0xff]
        %v826 = vld [vmem:[#allocation9 + $0x480] sm:$0xff]
        %v827 = vld [vmem:[#allocation9 + $0x488] sm:$0xff]
        %v828 = vld [vmem:[#allocation9 + $0x4b0] sm:$0xff]
        %v829 = vld [vmem:[#allocation9 + $0x4b8] sm:$0xff]
        %v830 = vld [vmem:[#allocation9 + $0x4e0] sm:$0xff]
        %v831 = vld [vmem:[#allocation9 + $0x4e8] sm:$0xff]
        %v832 = vld [vmem:[#allocation9 + $0x510] sm:$0xff]
        %v833 = vld [vmem:[#allocation9 + $0x518] sm:$0xff]
        %v834 = vld [vmem:[#allocation9 + $0x540] sm:$0xff]
        %v835 = vld [vmem:[#allocation9 + $0x548] sm:$0xff]
        %v836 = vld [vmem:[#allocation9 + $0x570] sm:$0xff]
        %v837 = vld [vmem:[#allocation9 + $0x578] sm:$0xff]
        %v838 = vld [vmem:[#allocation9 + $0x5a0] sm:$0xff]
        %v839 = vld [vmem:[#allocation9 + $0x5a8] sm:$0xff]
        %v840 = vld [vmem:[#allocation9 + $0x5d0] sm:$0xff]
        %v841 = vld [vmem:[#allocation9 + $0x5d8] sm:$0xff]
        %v842 = vld [vmem:[#allocation9 + $0x600] sm:$0xff]
        %v843 = vld [vmem:[#allocation9 + $0x608] sm:$0xff]
        %v844 = vld [vmem:[#allocation9 + $0x630] sm:$0xff]
        %v845 = vld [vmem:[#allocation9 + $0x638] sm:$0xff]
        %v846 = vld [vmem:[#allocation9 + $0x660] sm:$0xff]
        %v847 = vld [vmem:[#allocation9 + $0x668] sm:$0xff]
        %v848 = vld [vmem:[#allocation9 + $0x690] sm:$0xff]
        %v849 = vld [vmem:[#allocation9 + $0x698] sm:$0xff]
        %v850 = vld [vmem:[#allocation9 + $0x6c0] sm:$0xff]
        %v851 = vld [vmem:[#allocation9 + $0x6c8] sm:$0xff]
        %v852 = vld [vmem:[#allocation9 + $0x6f0] sm:$0xff]
        %v853 = vld [vmem:[#allocation9 + $0x6f8] sm:$0xff]
        %v854 = vld [vmem:[#allocation9 + $0x720] sm:$0xff]
        %v855 = vld [vmem:[#allocation9 + $0x728] sm:$0xff]
        %v856 = vld [vmem:[#allocation9 + $0x750] sm:$0xff]
        %v857 = vld [vmem:[#allocation9 + $0x758] sm:$0xff]
        %v858 = vld [vmem:[#allocation9 + $0x780] sm:$0xff]
        %v859 = vld [vmem:[#allocation9 + $0x788] sm:$0xff]
        %v860 = vld [vmem:[#allocation9 + $0x7b0] sm:$0xff]
        %v861 = vld [vmem:[#allocation9 + $0x7b8] sm:$0xff]
        %v862 = vld [vmem:[#allocation9 + $0x7e0] sm:$0xff]
        %v863 = vld [vmem:[#allocation9 + $0x7e8] sm:$0xff]
        %v864 = vld [vmem:[#allocation9 + $0x810] sm:$0xff]
        %v865 = vld [vmem:[#allocation9 + $0x818] sm:$0xff]
        %v866 = vld [vmem:[#allocation9 + $0x840] sm:$0xff]
        %v867 = vld [vmem:[#allocation9 + $0x848] sm:$0xff]
        %v868 = vld [vmem:[#allocation9 + $0x870] sm:$0xff]
        %v869 = vld [vmem:[#allocation9 + $0x878] sm:$0xff]
        %v870 = vld [vmem:[#allocation9 + $0x8a0] sm:$0xff]
        %v871 = vld [vmem:[#allocation9 + $0x8a8] sm:$0xff]
        %v872 = vld [vmem:[#allocation9 + $0x8d0] sm:$0xff]
        %v873 = vld [vmem:[#allocation9 + $0x8d8] sm:$0xff]
        %v874 = vld [vmem:[#allocation9 + $0x900] sm:$0xff]
        %v875 = vld [vmem:[#allocation9 + $0x908] sm:$0xff]
        %v876 = vld [vmem:[#allocation9 + $0x930] sm:$0xff]
        %v877 = vld [vmem:[#allocation9 + $0x938] sm:$0xff]
        %v878 = vld [vmem:[#allocation9 + $0x960] sm:$0xff]
        %v879 = vld [vmem:[#allocation9 + $0x968] sm:$0xff]
        %v880 = vld [vmem:[#allocation9 + $0x990] sm:$0xff]
        %v881 = vld [vmem:[#allocation9 + $0x998] sm:$0xff]
        %v882 = vld [vmem:[#allocation9 + $0x9c0] sm:$0xff]
        %v883 = vld [vmem:[#allocation9 + $0x9c8] sm:$0xff]
        %v884 = vld [vmem:[#allocation9 + $0x9f0] sm:$0xff]
        %v885 = vld [vmem:[#allocation9 + $0x9f8] sm:$0xff]
        %v886 = vld [vmem:[#allocation9 + $0xa20] sm:$0xff]
        %v887 = vld [vmem:[#allocation9 + $0xa28] sm:$0xff]
        %v888 = vld [vmem:[#allocation9 + $0xa50] sm:$0xff]
        %v889 = vld [vmem:[#allocation9 + $0xa58] sm:$0xff]
        %v890 = vld [vmem:[#allocation9 + $0xa80] sm:$0xff]
        %v891 = vld [vmem:[#allocation9 + $0xa88] sm:$0xff]
        %v892 = vld [vmem:[#allocation9 + $0xab0] sm:$0xff]
        %v893 = vld [vmem:[#allocation9 + $0xab8] sm:$0xff]
        %v894 = vld [vmem:[#allocation9 + $0xae0] sm:$0xff]
        %v895 = vld [vmem:[#allocation9 + $0xae8] sm:$0xff]
        %v896 = vld [vmem:[#allocation9 + $0xb10] sm:$0xff]
        %v897 = vld [vmem:[#allocation9 + $0xb18] sm:$0xff]
        %v898 = vld [vmem:[#allocation9 + $0xb40] sm:$0xff]
        %v899 = vld [vmem:[#allocation9 + $0xb48] sm:$0xff]
        %v900 = vld [vmem:[#allocation9 + $0xb70] sm:$0xff]
        %v901 = vld [vmem:[#allocation9 + $0xb78] sm:$0xff]
        %v902 = vld [vmem:[#allocation9 + $0xba0] sm:$0xff]
        %v903 = vld [vmem:[#allocation9 + $0xba8] sm:$0xff]
        %v904 = vld [vmem:[#allocation9 + $0xbd0] sm:$0xff]
        %v905 = vld [vmem:[#allocation9 + $0xbd8] sm:$0xff]
        %v906 = vld [vmem:[#allocation9 + $0x10] sm:$0xff]
        %v907 = vld [vmem:[#allocation9 + $0x18] sm:$0xff]
        %v908 = vld [vmem:[#allocation9 + $0x40] sm:$0xff]
        %v909 = vld [vmem:[#allocation9 + $0x48] sm:$0xff]
        %v910 = vld [vmem:[#allocation9 + $0x70] sm:$0xff]
        %v911 = vld [vmem:[#allocation9 + $0x78] sm:$0xff]
        %v912 = vld [vmem:[#allocation9 + $0xa0] sm:$0xff]
        %v913 = vld [vmem:[#allocation9 + $0xa8] sm:$0xff]
        %v914 = vld [vmem:[#allocation9 + $0xd0] sm:$0xff]
        %v915 = vld [vmem:[#allocation9 + $0xd8] sm:$0xff]
        %v916 = vld [vmem:[#allocation9 + $0x100] sm:$0xff]
        %v917 = vld [vmem:[#allocation9 + $0x108] sm:$0xff]
        %v918 = vld [vmem:[#allocation9 + $0x130] sm:$0xff]
        %v919 = vld [vmem:[#allocation9 + $0x138] sm:$0xff]
        %v920 = vld [vmem:[#allocation9 + $0x160] sm:$0xff]
        %v921 = vld [vmem:[#allocation9 + $0x168] sm:$0xff]
        %v922 = vld [vmem:[#allocation9 + $0x190] sm:$0xff]
        %v923 = vld [vmem:[#allocation9 + $0x198] sm:$0xff]
        %v924 = vld [vmem:[#allocation9 + $0x1c0] sm:$0xff]
        %v925 = vld [vmem:[#allocation9 + $0x1c8] sm:$0xff]
        %v926 = vld [vmem:[#allocation9 + $0x1f0] sm:$0xff]
        %v927 = vld [vmem:[#allocation9 + $0x1f8] sm:$0xff]
        %v928 = vld [vmem:[#allocation9 + $0x220] sm:$0xff]
        %v929 = vld [vmem:[#allocation9 + $0x228] sm:$0xff]
        %v930 = vld [vmem:[#allocation9 + $0x250] sm:$0xff]
        %v931 = vld [vmem:[#allocation9 + $0x258] sm:$0xff]
        %v932 = vld [vmem:[#allocation9 + $0x280] sm:$0xff]
        %v933 = vld [vmem:[#allocation9 + $0x288] sm:$0xff]
        %v934 = vld [vmem:[#allocation9 + $0x2b0] sm:$0xff]
        %v935 = vld [vmem:[#allocation9 + $0x2b8] sm:$0xff]
        %v936 = vld [vmem:[#allocation9 + $0x2e0] sm:$0xff]
        %v937 = vld [vmem:[#allocation9 + $0x2e8] sm:$0xff]
        %v938 = vld [vmem:[#allocation9 + $0x310] sm:$0xff]
        %v939 = vld [vmem:[#allocation9 + $0x318] sm:$0xff]
        %v940 = vld [vmem:[#allocation9 + $0x340] sm:$0xff]
        %v941 = vld [vmem:[#allocation9 + $0x348] sm:$0xff]
        %v942 = vld [vmem:[#allocation9 + $0x370] sm:$0xff]
        %v943 = vld [vmem:[#allocation9 + $0x378] sm:$0xff]
        %v944 = vld [vmem:[#allocation9 + $0x3a0] sm:$0xff]
        %v945 = vld [vmem:[#allocation9 + $0x3a8] sm:$0xff]
        %v946 = vld [vmem:[#allocation9 + $0x3d0] sm:$0xff]
        %v947 = vld [vmem:[#allocation9 + $0x3d8] sm:$0xff]
        %v948 = vld [vmem:[#allocation9 + $0x400] sm:$0xff]
        %v949 = vld [vmem:[#allocation9 + $0x408] sm:$0xff]
        %v950 = vld [vmem:[#allocation9 + $0x430] sm:$0xff]
        %v951 = vld [vmem:[#allocation9 + $0x438] sm:$0xff]
        %v952 = vld [vmem:[#allocation9 + $0x460] sm:$0xff]
        %v953 = vld [vmem:[#allocation9 + $0x468] sm:$0xff]
        %v954 = vld [vmem:[#allocation9 + $0x490] sm:$0xff]
        %v955 = vld [vmem:[#allocation9 + $0x498] sm:$0xff]
        %v956 = vld [vmem:[#allocation9 + $0x4c0] sm:$0xff]
        %v957 = vld [vmem:[#allocation9 + $0x4c8] sm:$0xff]
        %v958 = vld [vmem:[#allocation9 + $0x4f0] sm:$0xff]
        %v959 = vld [vmem:[#allocation9 + $0x4f8] sm:$0xff]
        %v960 = vld [vmem:[#allocation9 + $0x520] sm:$0xff]
        %v961 = vld [vmem:[#allocation9 + $0x528] sm:$0xff]
        %v962 = vld [vmem:[#allocation9 + $0x550] sm:$0xff]
        %v963 = vld [vmem:[#allocation9 + $0x558] sm:$0xff]
        %v964 = vld [vmem:[#allocation9 + $0x580] sm:$0xff]
        %v965 = vld [vmem:[#allocation9 + $0x588] sm:$0xff]
        %v966 = vld [vmem:[#allocation9 + $0x5b0] sm:$0xff]
        %v967 = vld [vmem:[#allocation9 + $0x5b8] sm:$0xff]
        %v968 = vld [vmem:[#allocation9 + $0x5e0] sm:$0xff]
        %v969 = vld [vmem:[#allocation9 + $0x5e8] sm:$0xff]
        %v970 = vld [vmem:[#allocation9 + $0x610] sm:$0xff]
        %v971 = vld [vmem:[#allocation9 + $0x618] sm:$0xff]
        %v972 = vld [vmem:[#allocation9 + $0x640] sm:$0xff]
        %v973 = vld [vmem:[#allocation9 + $0x648] sm:$0xff]
        %v974 = vld [vmem:[#allocation9 + $0x670] sm:$0xff]
        %v975 = vld [vmem:[#allocation9 + $0x678] sm:$0xff]
        %v976 = vld [vmem:[#allocation9 + $0x6a0] sm:$0xff]
        %v977 = vld [vmem:[#allocation9 + $0x6a8] sm:$0xff]
        %v978 = vld [vmem:[#allocation9 + $0x6d0] sm:$0xff]
        %v979 = vld [vmem:[#allocation9 + $0x6d8] sm:$0xff]
        %v980 = vld [vmem:[#allocation9 + $0x700] sm:$0xff]
        %v981 = vld [vmem:[#allocation9 + $0x708] sm:$0xff]
        %v982 = vld [vmem:[#allocation9 + $0x730] sm:$0xff]
        %v983 = vld [vmem:[#allocation9 + $0x738] sm:$0xff]
        %v984 = vld [vmem:[#allocation9 + $0x760] sm:$0xff]
        %v985 = vld [vmem:[#allocation9 + $0x768] sm:$0xff]
        %v986 = vld [vmem:[#allocation9 + $0x790] sm:$0xff]
        %v987 = vld [vmem:[#allocation9 + $0x798] sm:$0xff]
        %v988 = vld [vmem:[#allocation9 + $0x7c0] sm:$0xff]
        %v989 = vld [vmem:[#allocation9 + $0x7c8] sm:$0xff]
        %v990 = vld [vmem:[#allocation9 + $0x7f0] sm:$0xff]
        %v991 = vld [vmem:[#allocation9 + $0x7f8] sm:$0xff]
        %v992 = vld [vmem:[#allocation9 + $0x820] sm:$0xff]
        %v993 = vld [vmem:[#allocation9 + $0x828] sm:$0xff]
        %v994 = vld [vmem:[#allocation9 + $0x850] sm:$0xff]
        %v995 = vld [vmem:[#allocation9 + $0x858] sm:$0xff]
        %v996 = vld [vmem:[#allocation9 + $0x880] sm:$0xff]
        %v997 = vld [vmem:[#allocation9 + $0x888] sm:$0xff]
        %v998 = vld [vmem:[#allocation9 + $0x8b0] sm:$0xff]
        %v999 = vld [vmem:[#allocation9 + $0x8b8] sm:$0xff]
        %v1000 = vld [vmem:[#allocation9 + $0x8e0] sm:$0xff]
        %v1001 = vld [vmem:[#allocation9 + $0x8e8] sm:$0xff]
        %v1002 = vld [vmem:[#allocation9 + $0x910] sm:$0xff]
        %v1003 = vld [vmem:[#allocation9 + $0x918] sm:$0xff]
        %v1004 = vld [vmem:[#allocation9 + $0x940] sm:$0xff]
        %v1005 = vld [vmem:[#allocation9 + $0x948] sm:$0xff]
        %v1006 = vld [vmem:[#allocation9 + $0x970] sm:$0xff]
        %v1007 = vld [vmem:[#allocation9 + $0x978] sm:$0xff]
        %v1008 = vld [vmem:[#allocation9 + $0x9a0] sm:$0xff]
        %v1009 = vld [vmem:[#allocation9 + $0x9a8] sm:$0xff]
        %v1010 = vld [vmem:[#allocation9 + $0x9d0] sm:$0xff]
        %v1011 = vld [vmem:[#allocation9 + $0x9d8] sm:$0xff]
        %v1012 = vld [vmem:[#allocation9 + $0xa00] sm:$0xff]
        %v1013 = vld [vmem:[#allocation9 + $0xa08] sm:$0xff]
        %v1014 = vld [vmem:[#allocation9 + $0xa30] sm:$0xff]
        %v1015 = vld [vmem:[#allocation9 + $0xa38] sm:$0xff]
        %v1016 = vld [vmem:[#allocation9 + $0xa60] sm:$0xff]
        %v1017 = vld [vmem:[#allocation9 + $0xa68] sm:$0xff]
        %v1018 = vld [vmem:[#allocation9 + $0xa90] sm:$0xff]
        %v1019 = vld [vmem:[#allocation9 + $0xa98] sm:$0xff]
        %v1020 = vld [vmem:[#allocation9 + $0xac0] sm:$0xff]
        %v1021 = vld [vmem:[#allocation9 + $0xac8] sm:$0xff]
        %v1022 = vld [vmem:[#allocation9 + $0xaf0] sm:$0xff]
        %v1023 = vld [vmem:[#allocation9 + $0xaf8] sm:$0xff]
        %v1024 = vld [vmem:[#allocation9 + $0xb20] sm:$0xff]
        %v1025 = vld [vmem:[#allocation9 + $0xb28] sm:$0xff]
        %v1026 = vld [vmem:[#allocation9 + $0xb50] sm:$0xff]
        %v1027 = vld [vmem:[#allocation9 + $0xb58] sm:$0xff]
        %v1028 = vld [vmem:[#allocation9 + $0xb80] sm:$0xff]
        %v1029 = vld [vmem:[#allocation9 + $0xb88] sm:$0xff]
        %v1030 = vld [vmem:[#allocation9 + $0xbb0] sm:$0xff]
        %v1031 = vld [vmem:[#allocation9 + $0xbb8] sm:$0xff]
        %v1032 = vld [vmem:[#allocation9 + $0xbe0] sm:$0xff]
        %v1033 = vld [vmem:[#allocation9 + $0xbe8] sm:$0xff]
        %v1162 = vunpack.c.l.b16 %v906
        %v1163 = vunpack.c.h.b16 %v906
        %v1164 = vunpack.c.l.b16 %v907
        %v1165 = vunpack.c.h.b16 %v907
        %v1166 = vunpack.c.l.b16 %v908
        %v1167 = vunpack.c.h.b16 %v908
        %v1168 = vunpack.c.l.b16 %v909
        %v1169 = vunpack.c.h.b16 %v909
        %v1170 = vunpack.c.l.b16 %v910
        %v1171 = vunpack.c.h.b16 %v910
        %v1172 = vunpack.c.l.b16 %v911
        %v1173 = vunpack.c.h.b16 %v911
        %v1174 = vunpack.c.l.b16 %v912
        %v1175 = vunpack.c.h.b16 %v912
        %v1176 = vunpack.c.l.b16 %v913
        %v1177 = vunpack.c.h.b16 %v913
        %v1178 = vunpack.c.l.b16 %v914
        %v1179 = vunpack.c.h.b16 %v914
        %v1180 = vunpack.c.l.b16 %v915
        %v1181 = vunpack.c.h.b16 %v915
        %v1182 = vunpack.c.l.b16 %v916
        %v1183 = vunpack.c.h.b16 %v916
        %v1184 = vunpack.c.l.b16 %v917
        %v1185 = vunpack.c.h.b16 %v917
        %v1186 = vunpack.c.l.b16 %v918
        %v1187 = vunpack.c.h.b16 %v918
        %v1188 = vunpack.c.l.b16 %v919
        %v1189 = vunpack.c.h.b16 %v919
        %v1190 = vunpack.c.l.b16 %v920
        %v1191 = vunpack.c.h.b16 %v920
        %v1192 = vunpack.c.l.b16 %v921
        %v1193 = vunpack.c.h.b16 %v921
        %v1194 = vunpack.c.l.b16 %v922
        %v1195 = vunpack.c.h.b16 %v922
        %v1196 = vunpack.c.l.b16 %v923
        %v1197 = vunpack.c.h.b16 %v923
        %v1198 = vunpack.c.l.b16 %v924
        %v1199 = vunpack.c.h.b16 %v924
        %v1200 = vunpack.c.l.b16 %v925
        %v1201 = vunpack.c.h.b16 %v925
        %v1202 = vunpack.c.l.b16 %v926
        %v1203 = vunpack.c.h.b16 %v926
        %v1204 = vunpack.c.l.b16 %v927
        %v1205 = vunpack.c.h.b16 %v927
        %v1206 = vunpack.c.l.b16 %v928
        %v1207 = vunpack.c.h.b16 %v928
        %v1208 = vunpack.c.l.b16 %v929
        %v1209 = vunpack.c.h.b16 %v929
        %v1210 = vunpack.c.l.b16 %v930
        %v1211 = vunpack.c.h.b16 %v930
        %v1212 = vunpack.c.l.b16 %v931
        %v1213 = vunpack.c.h.b16 %v931
        %v1214 = vunpack.c.l.b16 %v932
        %v1215 = vunpack.c.h.b16 %v932
        %v1216 = vunpack.c.l.b16 %v933
        %v1217 = vunpack.c.h.b16 %v933
        %v1218 = vunpack.c.l.b16 %v934
        %v1219 = vunpack.c.h.b16 %v934
        %v1220 = vunpack.c.l.b16 %v935
        %v1221 = vunpack.c.h.b16 %v935
        %v1222 = vunpack.c.l.b16 %v936
        %v1223 = vunpack.c.h.b16 %v936
        %v1224 = vunpack.c.l.b16 %v937
        %v1225 = vunpack.c.h.b16 %v937
        %v1226 = vunpack.c.l.b16 %v938
        %v1227 = vunpack.c.h.b16 %v938
        %v1228 = vunpack.c.l.b16 %v939
        %v1229 = vunpack.c.h.b16 %v939
        %v1230 = vunpack.c.l.b16 %v940
        %v1231 = vunpack.c.h.b16 %v940
        %v1232 = vunpack.c.l.b16 %v941
        %v1233 = vunpack.c.h.b16 %v941
        %v1234 = vunpack.c.l.b16 %v942
        %v1235 = vunpack.c.h.b16 %v942
        %v1236 = vunpack.c.l.b16 %v943
        %v1237 = vunpack.c.h.b16 %v943
        %v1238 = vunpack.c.l.b16 %v944
        %v1239 = vunpack.c.h.b16 %v944
        %v1240 = vunpack.c.l.b16 %v945
        %v1241 = vunpack.c.h.b16 %v945
        %v1242 = vunpack.c.l.b16 %v946
        %v1243 = vunpack.c.h.b16 %v946
        %v1244 = vunpack.c.l.b16 %v947
        %v1245 = vunpack.c.h.b16 %v947
        %v1246 = vunpack.c.l.b16 %v948
        %v1247 = vunpack.c.h.b16 %v948
        %v1248 = vunpack.c.l.b16 %v949
        %v1249 = vunpack.c.h.b16 %v949
        %v1250 = vunpack.c.l.b16 %v950
        %v1251 = vunpack.c.h.b16 %v950
        %v1252 = vunpack.c.l.b16 %v951
        %v1253 = vunpack.c.h.b16 %v951
        %v1254 = vunpack.c.l.b16 %v952
        %v1255 = vunpack.c.h.b16 %v952
        %v1256 = vunpack.c.l.b16 %v953
        %v1257 = vunpack.c.h.b16 %v953
        %v1258 = vunpack.c.l.b16 %v954
        %v1259 = vunpack.c.h.b16 %v954
        %v1260 = vunpack.c.l.b16 %v955
        %v1261 = vunpack.c.h.b16 %v955
        %v1262 = vunpack.c.l.b16 %v956
        %v1263 = vunpack.c.h.b16 %v956
        %v1264 = vunpack.c.l.b16 %v957
        %v1265 = vunpack.c.h.b16 %v957
        %v1266 = vunpack.c.l.b16 %v958
        %v1267 = vunpack.c.h.b16 %v958
        %v1268 = vunpack.c.l.b16 %v959
        %v1269 = vunpack.c.h.b16 %v959
        %v1270 = vunpack.c.l.b16 %v960
        %v1271 = vunpack.c.h.b16 %v960
        %v1272 = vunpack.c.l.b16 %v961
        %v1273 = vunpack.c.h.b16 %v961
        %v1274 = vunpack.c.l.b16 %v962
        %v1275 = vunpack.c.h.b16 %v962
        %v1276 = vunpack.c.l.b16 %v963
        %v1277 = vunpack.c.h.b16 %v963
        %v1278 = vunpack.c.l.b16 %v964
        %v1279 = vunpack.c.h.b16 %v964
        %v1280 = vunpack.c.l.b16 %v965
        %v1281 = vunpack.c.h.b16 %v965
        %v1282 = vunpack.c.l.b16 %v966
        %v1283 = vunpack.c.h.b16 %v966
        %v1284 = vunpack.c.l.b16 %v967
        %v1285 = vunpack.c.h.b16 %v967
        %v1286 = vunpack.c.l.b16 %v968
        %v1287 = vunpack.c.h.b16 %v968
        %v1288 = vunpack.c.l.b16 %v969
        %v1289 = vunpack.c.h.b16 %v969
        %v1290 = vunpack.c.l.b16 %v970
        %v1291 = vunpack.c.h.b16 %v970
        %v1292 = vunpack.c.l.b16 %v971
        %v1293 = vunpack.c.h.b16 %v971
        %v1294 = vunpack.c.l.b16 %v972
        %v1295 = vunpack.c.h.b16 %v972
        %v1296 = vunpack.c.l.b16 %v973
        %v1297 = vunpack.c.h.b16 %v973
        %v1298 = vunpack.c.l.b16 %v974
        %v1299 = vunpack.c.h.b16 %v974
        %v1300 = vunpack.c.l.b16 %v975
        %v1301 = vunpack.c.h.b16 %v975
        %v1302 = vunpack.c.l.b16 %v976
        %v1303 = vunpack.c.h.b16 %v976
        %v1304 = vunpack.c.l.b16 %v977
        %v1305 = vunpack.c.h.b16 %v977
        %v1306 = vunpack.c.l.b16 %v978
        %v1307 = vunpack.c.h.b16 %v978
        %v1308 = vunpack.c.l.b16 %v979
        %v1309 = vunpack.c.h.b16 %v979
        %v1310 = vunpack.c.l.b16 %v980
        %v1311 = vunpack.c.h.b16 %v980
        %v1312 = vunpack.c.l.b16 %v981
        %v1313 = vunpack.c.h.b16 %v981
        %v1314 = vunpack.c.l.b16 %v982
        %v1315 = vunpack.c.h.b16 %v982
        %v1316 = vunpack.c.l.b16 %v983
        %v1317 = vunpack.c.h.b16 %v983
        %v1318 = vunpack.c.l.b16 %v984
        %v1319 = vunpack.c.h.b16 %v984
        %v1320 = vunpack.c.l.b16 %v985
        %v1321 = vunpack.c.h.b16 %v985
        %v1322 = vunpack.c.l.b16 %v986
        %v1323 = vunpack.c.h.b16 %v986
        %v1324 = vunpack.c.l.b16 %v987
        %v1325 = vunpack.c.h.b16 %v987
        %v1326 = vunpack.c.l.b16 %v988
        %v1327 = vunpack.c.h.b16 %v988
        %v1328 = vunpack.c.l.b16 %v989
        %v1329 = vunpack.c.h.b16 %v989
        %v1330 = vunpack.c.l.b16 %v990
        %v1331 = vunpack.c.h.b16 %v990
        %v1332 = vunpack.c.l.b16 %v991
        %v1333 = vunpack.c.h.b16 %v991
        %v1334 = vunpack.c.l.b16 %v992
        %v1335 = vunpack.c.h.b16 %v992
        %v1336 = vunpack.c.l.b16 %v993
        %v1337 = vunpack.c.h.b16 %v993
        %v1338 = vunpack.c.l.b16 %v994
        %v1339 = vunpack.c.h.b16 %v994
        %v1340 = vunpack.c.l.b16 %v995
        %v1341 = vunpack.c.h.b16 %v995
        %v1342 = vunpack.c.l.b16 %v996
        %v1343 = vunpack.c.h.b16 %v996
        %v1344 = vunpack.c.l.b16 %v997
        %v1345 = vunpack.c.h.b16 %v997
        %v1346 = vunpack.c.l.b16 %v998
        %v1347 = vunpack.c.h.b16 %v998
        %v1348 = vunpack.c.l.b16 %v999
        %v1349 = vunpack.c.h.b16 %v999
        %v1350 = vunpack.c.l.b16 %v1000
        %v1351 = vunpack.c.h.b16 %v1000
        %v1352 = vunpack.c.l.b16 %v1001
        %v1353 = vunpack.c.h.b16 %v1001
        %v1354 = vunpack.c.l.b16 %v1002
        %v1355 = vunpack.c.h.b16 %v1002
        %v1356 = vunpack.c.l.b16 %v1003
        %v1357 = vunpack.c.h.b16 %v1003
        %v1358 = vunpack.c.l.b16 %v1004
        %v1359 = vunpack.c.h.b16 %v1004
        %v1360 = vunpack.c.l.b16 %v1005
        %v1361 = vunpack.c.h.b16 %v1005
        %v1362 = vunpack.c.l.b16 %v1006
        %v1363 = vunpack.c.h.b16 %v1006
        %v1364 = vunpack.c.l.b16 %v1007
        %v1365 = vunpack.c.h.b16 %v1007
        %v1366 = vunpack.c.l.b16 %v1008
        %v1367 = vunpack.c.h.b16 %v1008
        %v1368 = vunpack.c.l.b16 %v1009
        %v1369 = vunpack.c.h.b16 %v1009
        %v1370 = vunpack.c.l.b16 %v1010
        %v1371 = vunpack.c.h.b16 %v1010
        %v1372 = vunpack.c.l.b16 %v1011
        %v1373 = vunpack.c.h.b16 %v1011
        %v1374 = vunpack.c.l.b16 %v1012
        %v1375 = vunpack.c.h.b16 %v1012
        %v1376 = vunpack.c.l.b16 %v1013
        %v1377 = vunpack.c.h.b16 %v1013
        %v1378 = vunpack.c.l.b16 %v1014
        %v1379 = vunpack.c.h.b16 %v1014
        %v1380 = vunpack.c.l.b16 %v1015
        %v1381 = vunpack.c.h.b16 %v1015
        %v1382 = vunpack.c.l.b16 %v1016
        %v1383 = vunpack.c.h.b16 %v1016
        %v1384 = vunpack.c.l.b16 %v1017
        %v1385 = vunpack.c.h.b16 %v1017
        %v1386 = vunpack.c.l.b16 %v1018
        %v1387 = vunpack.c.h.b16 %v1018
        %v1388 = vunpack.c.l.b16 %v1019
        %v1389 = vunpack.c.h.b16 %v1019
        %v1390 = vunpack.c.l.b16 %v1020
        %v1391 = vunpack.c.h.b16 %v1020
        %v1392 = vunpack.c.l.b16 %v1021
        %v1393 = vunpack.c.h.b16 %v1021
        %v1394 = vunpack.c.l.b16 %v1022
        %v1395 = vunpack.c.h.b16 %v1022
        %v1396 = vunpack.c.l.b16 %v1023
        %v1397 = vunpack.c.h.b16 %v1023
        %v1398 = vunpack.c.l.b16 %v1024
        %v1399 = vunpack.c.h.b16 %v1024
        %v1400 = vunpack.c.l.b16 %v1025
        %v1401 = vunpack.c.h.b16 %v1025
        %v1402 = vunpack.c.l.b16 %v1026
        %v1403 = vunpack.c.h.b16 %v1026
        %v1404 = vunpack.c.l.b16 %v1027
        %v1405 = vunpack.c.h.b16 %v1027
        %v1406 = vunpack.c.l.b16 %v1028
        %v1407 = vunpack.c.h.b16 %v1028
        %v1408 = vunpack.c.l.b16 %v1029
        %v1409 = vunpack.c.h.b16 %v1029
        %v1410 = vunpack.c.l.b16 %v1030
        %v1411 = vunpack.c.h.b16 %v1030
        %v1412 = vunpack.c.l.b16 %v1031
        %v1413 = vunpack.c.h.b16 %v1031
        %v1414 = vunpack.c.l.b16 %v1032
        %v1415 = vunpack.c.h.b16 %v1032
        %v1416 = vunpack.c.l.b16 %v1033
        %v1417 = vunpack.c.h.b16 %v1033
        %v1418 = vpack.c.b16 %v1166, %v1162
        %v1419 = vpack.c.b16 %v1167, %v1163
        %v1420 = vpack.c.b16 %v1168, %v1164
        %v1421 = vpack.c.b16 %v1169, %v1165
        %v1422 = vpack.c.b16 %v1174, %v1170
        %v1423 = vpack.c.b16 %v1175, %v1171
        %v1424 = vpack.c.b16 %v1176, %v1172
        %v1425 = vpack.c.b16 %v1177, %v1173
        %v1426 = vpack.c.b16 %v1182, %v1178
        %v1427 = vpack.c.b16 %v1183, %v1179
        %v1428 = vpack.c.b16 %v1184, %v1180
        %v1429 = vpack.c.b16 %v1185, %v1181
        %v1430 = vpack.c.b16 %v1190, %v1186
        %v1431 = vpack.c.b16 %v1191, %v1187
        %v1432 = vpack.c.b16 %v1192, %v1188
        %v1433 = vpack.c.b16 %v1193, %v1189
        %v1434 = vpack.c.b16 %v1198, %v1194
        %v1435 = vpack.c.b16 %v1199, %v1195
        %v1436 = vpack.c.b16 %v1200, %v1196
        %v1437 = vpack.c.b16 %v1201, %v1197
        %v1438 = vpack.c.b16 %v1206, %v1202
        %v1439 = vpack.c.b16 %v1207, %v1203
        %v1440 = vpack.c.b16 %v1208, %v1204
        %v1441 = vpack.c.b16 %v1209, %v1205
        %v1442 = vpack.c.b16 %v1214, %v1210
        %v1443 = vpack.c.b16 %v1215, %v1211
        %v1444 = vpack.c.b16 %v1216, %v1212
        %v1445 = vpack.c.b16 %v1217, %v1213
        %v1446 = vpack.c.b16 %v1222, %v1218
        %v1447 = vpack.c.b16 %v1223, %v1219
        %v1448 = vpack.c.b16 %v1224, %v1220
        %v1449 = vpack.c.b16 %v1225, %v1221
        %v1450 = vpack.c.b16 %v1230, %v1226
        %v1451 = vpack.c.b16 %v1231, %v1227
        %v1452 = vpack.c.b16 %v1232, %v1228
        %v1453 = vpack.c.b16 %v1233, %v1229
        %v1454 = vpack.c.b16 %v1238, %v1234
        %v1455 = vpack.c.b16 %v1239, %v1235
        %v1456 = vpack.c.b16 %v1240, %v1236
        %v1457 = vpack.c.b16 %v1241, %v1237
        %v1458 = vpack.c.b16 %v1246, %v1242
        %v1459 = vpack.c.b16 %v1247, %v1243
        %v1460 = vpack.c.b16 %v1248, %v1244
        %v1461 = vpack.c.b16 %v1249, %v1245
        %v1462 = vpack.c.b16 %v1254, %v1250
        %v1463 = vpack.c.b16 %v1255, %v1251
        %v1464 = vpack.c.b16 %v1256, %v1252
        %v1465 = vpack.c.b16 %v1257, %v1253
        %v1466 = vpack.c.b16 %v1262, %v1258
        %v1467 = vpack.c.b16 %v1263, %v1259
        %v1468 = vpack.c.b16 %v1264, %v1260
        %v1469 = vpack.c.b16 %v1265, %v1261
        %v1470 = vpack.c.b16 %v1270, %v1266
        %v1471 = vpack.c.b16 %v1271, %v1267
        %v1472 = vpack.c.b16 %v1272, %v1268
        %v1473 = vpack.c.b16 %v1273, %v1269
        %v1474 = vpack.c.b16 %v1278, %v1274
        %v1475 = vpack.c.b16 %v1279, %v1275
        %v1476 = vpack.c.b16 %v1280, %v1276
        %v1477 = vpack.c.b16 %v1281, %v1277
        %v1478 = vpack.c.b16 %v1286, %v1282
        %v1479 = vpack.c.b16 %v1287, %v1283
        %v1480 = vpack.c.b16 %v1288, %v1284
        %v1481 = vpack.c.b16 %v1289, %v1285
        %v1482 = vpack.c.b16 %v1294, %v1290
        %v1483 = vpack.c.b16 %v1295, %v1291
        %v1484 = vpack.c.b16 %v1296, %v1292
        %v1485 = vpack.c.b16 %v1297, %v1293
        %v1486 = vpack.c.b16 %v1302, %v1298
        %v1487 = vpack.c.b16 %v1303, %v1299
        %v1488 = vpack.c.b16 %v1304, %v1300
        %v1489 = vpack.c.b16 %v1305, %v1301
        %v1490 = vpack.c.b16 %v1310, %v1306
        %v1491 = vpack.c.b16 %v1311, %v1307
        %v1492 = vpack.c.b16 %v1312, %v1308
        %v1493 = vpack.c.b16 %v1313, %v1309
        %v1494 = vpack.c.b16 %v1318, %v1314
        %v1495 = vpack.c.b16 %v1319, %v1315
        %v1496 = vpack.c.b16 %v1320, %v1316
        %v1497 = vpack.c.b16 %v1321, %v1317
        %v1498 = vpack.c.b16 %v1326, %v1322
        %v1499 = vpack.c.b16 %v1327, %v1323
        %v1500 = vpack.c.b16 %v1328, %v1324
        %v1501 = vpack.c.b16 %v1329, %v1325
        %v1502 = vpack.c.b16 %v1334, %v1330
        %v1503 = vpack.c.b16 %v1335, %v1331
        %v1504 = vpack.c.b16 %v1336, %v1332
        %v1505 = vpack.c.b16 %v1337, %v1333
        %v1506 = vpack.c.b16 %v1342, %v1338
        %v1507 = vpack.c.b16 %v1343, %v1339
        %v1508 = vpack.c.b16 %v1344, %v1340
        %v1509 = vpack.c.b16 %v1345, %v1341
        %v1510 = vpack.c.b16 %v1350, %v1346
        %v1511 = vpack.c.b16 %v1351, %v1347
        %v1512 = vpack.c.b16 %v1352, %v1348
        %v1513 = vpack.c.b16 %v1353, %v1349
        %v1514 = vpack.c.b16 %v1358, %v1354
        %v1515 = vpack.c.b16 %v1359, %v1355
        %v1516 = vpack.c.b16 %v1360, %v1356
        %v1517 = vpack.c.b16 %v1361, %v1357
        %v1518 = vpack.c.b16 %v1366, %v1362
        %v1519 = vpack.c.b16 %v1367, %v1363
        %v1520 = vpack.c.b16 %v1368, %v1364
        %v1521 = vpack.c.b16 %v1369, %v1365
        %v1522 = vpack.c.b16 %v1374, %v1370
        %v1523 = vpack.c.b16 %v1375, %v1371
        %v1524 = vpack.c.b16 %v1376, %v1372
        %v1525 = vpack.c.b16 %v1377, %v1373
        %v1526 = vpack.c.b16 %v1382, %v1378
        %v1527 = vpack.c.b16 %v1383, %v1379
        %v1528 = vpack.c.b16 %v1384, %v1380
        %v1529 = vpack.c.b16 %v1385, %v1381
        %v1530 = vpack.c.b16 %v1390, %v1386
        %v1531 = vpack.c.b16 %v1391, %v1387
        %v1532 = vpack.c.b16 %v1392, %v1388
        %v1533 = vpack.c.b16 %v1393, %v1389
        %v1534 = vpack.c.b16 %v1398, %v1394
        %v1535 = vpack.c.b16 %v1399, %v1395
        %v1536 = vpack.c.b16 %v1400, %v1396
        %v1537 = vpack.c.b16 %v1401, %v1397
        %v1538 = vpack.c.b16 %v1406, %v1402
        %v1539 = vpack.c.b16 %v1407, %v1403
        %v1540 = vpack.c.b16 %v1408, %v1404
        %v1541 = vpack.c.b16 %v1409, %v1405
        %v1542 = vpack.c.b16 %v1414, %v1410
        %v1543 = vpack.c.b16 %v1415, %v1411
        %v1544 = vpack.c.b16 %v1416, %v1412
        %v1545 = vpack.c.b16 %v1417, %v1413
        %1674 = vmatpush.bf16.msra.mxu0 %v657
        %1675 = vmatpush.bf16.msra.mxu0 %v656
        %1676 = vmatpush.bf16.msra.mxu0 %v655
        %1677 = vmatpush.bf16.msra.mxu0 %v654
        %1678 = vmatpush.bf16.msra.mxu0 %v653
        %1679 = vmatpush.bf16.msra.mxu0 %v652
        %1680 = vmatpush.bf16.msra.mxu0 %v651
        %1681 = vmatpush.bf16.msra.mxu0 %v650
        %1682 = vmatmul.bf16.gmra.mxu0 %v1418
        %v1683 = vpop.f32.mrf.mxu0
        %v1684 = vadd.f32 0.0, %v1683
        %v1685 = vpop.f32.mrf.mxu0
        %v1686 = vadd.f32 0.0, %v1685
        %1687 = vmatmul.bf16.gmra.mxu0 %v1422
        %v1688 = vpop.f32.mrf.mxu0
        %v1689 = vadd.f32 0.0, %v1688
        %v1690 = vpop.f32.mrf.mxu0
        %v1691 = vadd.f32 0.0, %v1690
        %1692 = vmatmul.bf16.gmra.mxu0 %v1426
        %v1693 = vpop.f32.mrf.mxu0
        %v1694 = vadd.f32 0.0, %v1693
        %v1695 = vpop.f32.mrf.mxu0
        %v1696 = vadd.f32 0.0, %v1695
        %1697 = vmatmul.bf16.gmra.mxu0 %v1430
        %v1698 = vpop.f32.mrf.mxu0
        %v1699 = vadd.f32 0.0, %v1698
        %v1700 = vpop.f32.mrf.mxu0
        %v1701 = vadd.f32 0.0, %v1700
        %1702 = vmatmul.bf16.gmra.mxu0 %v1434
        %v1703 = vpop.f32.mrf.mxu0
        %v1704 = vadd.f32 0.0, %v1703
        %v1705 = vpop.f32.mrf.mxu0
        %v1706 = vadd.f32 0.0, %v1705
        %1707 = vmatmul.bf16.gmra.mxu0 %v1438
        %v1708 = vpop.f32.mrf.mxu0
        %v1709 = vadd.f32 0.0, %v1708
        %v1710 = vpop.f32.mrf.mxu0
        %v1711 = vadd.f32 0.0, %v1710
        %1712 = vmatmul.bf16.gmra.mxu0 %v1442
        %v1713 = vpop.f32.mrf.mxu0
        %v1714 = vadd.f32 0.0, %v1713
        %v1715 = vpop.f32.mrf.mxu0
        %v1716 = vadd.f32 0.0, %v1715
        %1717 = vmatmul.bf16.gmra.mxu0 %v1446
        %v1718 = vpop.f32.mrf.mxu0
        %v1719 = vadd.f32 0.0, %v1718
        %v1720 = vpop.f32.mrf.mxu0
        %v1721 = vadd.f32 0.0, %v1720
        %1722 = vmatmul.bf16.gmra.mxu0 %v1450
        %v1723 = vpop.f32.mrf.mxu0
        %v1724 = vadd.f32 0.0, %v1723
        %v1725 = vpop.f32.mrf.mxu0
        %v1726 = vadd.f32 0.0, %v1725
        %1727 = vmatmul.bf16.gmra.mxu0 %v1454
        %v1728 = vpop.f32.mrf.mxu0
        %v1729 = vadd.f32 0.0, %v1728
        %v1730 = vpop.f32.mrf.mxu0
        %v1731 = vadd.f32 0.0, %v1730
        %1732 = vmatmul.bf16.gmra.mxu0 %v1458
        %v1733 = vpop.f32.mrf.mxu0
        %v1734 = vadd.f32 0.0, %v1733
        %v1735 = vpop.f32.mrf.mxu0
        %v1736 = vadd.f32 0.0, %v1735
        %1737 = vmatmul.bf16.gmra.mxu0 %v1462
        %v1738 = vpop.f32.mrf.mxu0
        %v1739 = vadd.f32 0.0, %v1738
        %v1740 = vpop.f32.mrf.mxu0
        %v1741 = vadd.f32 0.0, %v1740
        %1742 = vmatmul.bf16.gmra.mxu0 %v1466
        %v1743 = vpop.f32.mrf.mxu0
        %v1744 = vadd.f32 0.0, %v1743
        %v1745 = vpop.f32.mrf.mxu0
        %v1746 = vadd.f32 0.0, %v1745
        %1747 = vmatmul.bf16.gmra.mxu0 %v1470
        %v1748 = vpop.f32.mrf.mxu0
        %v1749 = vadd.f32 0.0, %v1748
        %v1750 = vpop.f32.mrf.mxu0
        %v1751 = vadd.f32 0.0, %v1750
        %1752 = vmatmul.bf16.gmra.mxu0 %v1474
        %v1753 = vpop.f32.mrf.mxu0
        %v1754 = vadd.f32 0.0, %v1753
        %v1755 = vpop.f32.mrf.mxu0
        %v1756 = vadd.f32 0.0, %v1755
        %1757 = vmatmul.bf16.gmra.mxu0 %v1478
        %v1758 = vpop.f32.mrf.mxu0
        %v1759 = vadd.f32 0.0, %v1758
        %v1760 = vpop.f32.mrf.mxu0
        %v1761 = vadd.f32 0.0, %v1760
        %1762 = vmatmul.bf16.gmra.mxu0 %v1482
        %v1763 = vpop.f32.mrf.mxu0
        %v1764 = vadd.f32 0.0, %v1763
        %v1765 = vpop.f32.mrf.mxu0
        %v1766 = vadd.f32 0.0, %v1765
        %1767 = vmatmul.bf16.gmra.mxu0 %v1486
        %v1768 = vpop.f32.mrf.mxu0
        %v1769 = vadd.f32 0.0, %v1768
        %v1770 = vpop.f32.mrf.mxu0
        %v1771 = vadd.f32 0.0, %v1770
        %1772 = vmatmul.bf16.gmra.mxu0 %v1490
        %v1773 = vpop.f32.mrf.mxu0
        %v1774 = vadd.f32 0.0, %v1773
        %v1775 = vpop.f32.mrf.mxu0
        %v1776 = vadd.f32 0.0, %v1775
        %1777 = vmatmul.bf16.gmra.mxu0 %v1494
        %v1778 = vpop.f32.mrf.mxu0
        %v1779 = vadd.f32 0.0, %v1778
        %v1780 = vpop.f32.mrf.mxu0
        %v1781 = vadd.f32 0.0, %v1780
        %1782 = vmatmul.bf16.gmra.mxu0 %v1498
        %v1783 = vpop.f32.mrf.mxu0
        %v1784 = vadd.f32 0.0, %v1783
        %v1785 = vpop.f32.mrf.mxu0
        %v1786 = vadd.f32 0.0, %v1785
        %1787 = vmatmul.bf16.gmra.mxu0 %v1502
        %v1788 = vpop.f32.mrf.mxu0
        %v1789 = vadd.f32 0.0, %v1788
        %v1790 = vpop.f32.mrf.mxu0
        %v1791 = vadd.f32 0.0, %v1790
        %1792 = vmatmul.bf16.gmra.mxu0 %v1506
        %v1793 = vpop.f32.mrf.mxu0
        %v1794 = vadd.f32 0.0, %v1793
        %v1795 = vpop.f32.mrf.mxu0
        %v1796 = vadd.f32 0.0, %v1795
        %1797 = vmatmul.bf16.gmra.mxu0 %v1510
        %v1798 = vpop.f32.mrf.mxu0
        %v1799 = vadd.f32 0.0, %v1798
        %v1800 = vpop.f32.mrf.mxu0
        %v1801 = vadd.f32 0.0, %v1800
        %1802 = vmatmul.bf16.gmra.mxu0 %v1514
        %v1803 = vpop.f32.mrf.mxu0
        %v1804 = vadd.f32 0.0, %v1803
        %v1805 = vpop.f32.mrf.mxu0
        %v1806 = vadd.f32 0.0, %v1805
        %1807 = vmatmul.bf16.gmra.mxu0 %v1518
        %v1808 = vpop.f32.mrf.mxu0
        %v1809 = vadd.f32 0.0, %v1808
        %v1810 = vpop.f32.mrf.mxu0
        %v1811 = vadd.f32 0.0, %v1810
        %1812 = vmatmul.bf16.gmra.mxu0 %v1522
        %v1813 = vpop.f32.mrf.mxu0
        %v1814 = vadd.f32 0.0, %v1813
        %v1815 = vpop.f32.mrf.mxu0
        %v1816 = vadd.f32 0.0, %v1815
        %1817 = vmatmul.bf16.gmra.mxu0 %v1526
        %v1818 = vpop.f32.mrf.mxu0
        %v1819 = vadd.f32 0.0, %v1818
        %v1820 = vpop.f32.mrf.mxu0
        %v1821 = vadd.f32 0.0, %v1820
        %1822 = vmatmul.bf16.gmra.mxu0 %v1530
        %v1823 = vpop.f32.mrf.mxu0
        %v1824 = vadd.f32 0.0, %v1823
        %v1825 = vpop.f32.mrf.mxu0
        %v1826 = vadd.f32 0.0, %v1825
        %1827 = vmatmul.bf16.gmra.mxu0 %v1534
        %v1828 = vpop.f32.mrf.mxu0
        %v1829 = vadd.f32 0.0, %v1828
        %v1830 = vpop.f32.mrf.mxu0
        %v1831 = vadd.f32 0.0, %v1830
        %1832 = vmatmul.bf16.gmra.mxu0 %v1538
        %v1833 = vpop.f32.mrf.mxu0
        %v1834 = vadd.f32 0.0, %v1833
        %v1835 = vpop.f32.mrf.mxu0
        %v1836 = vadd.f32 0.0, %v1835
        %1837 = vmatmul.bf16.gmra.mxu0 %v1542
        %v1838 = vpop.f32.mrf.mxu0
        %v1839 = vadd.f32 0.0, %v1838
        %v1840 = vpop.f32.mrf.mxu0
        %v1841 = vadd.f32 0.0, %v1840
        %1842 = vdwg.mxu0
        %1843 = vmatpush.bf16.msra.mxu0 %v665
        %1844 = vmatpush.bf16.msra.mxu0 %v664
        %1845 = vmatpush.bf16.msra.mxu0 %v663
        %1846 = vmatpush.bf16.msra.mxu0 %v662
        %1847 = vmatpush.bf16.msra.mxu0 %v661
        %1848 = vmatpush.bf16.msra.mxu0 %v660
        %1849 = vmatpush.bf16.msra.mxu0 %v659
        %1850 = vmatpush.bf16.msra.mxu0 %v658
        %1851 = vmatmul.bf16.gmra.mxu0 %v1419
        %v1852 = vpop.f32.mrf.mxu0
        %v1853 = vadd.f32 %v1684, %v1852
        %v1854 = vpop.f32.mrf.mxu0
        %v1855 = vadd.f32 %v1686, %v1854
        %1856 = vmatmul.bf16.gmra.mxu0 %v1423
        %v1857 = vpop.f32.mrf.mxu0
        %v1858 = vadd.f32 %v1689, %v1857
        %v1859 = vpop.f32.mrf.mxu0
        %v1860 = vadd.f32 %v1691, %v1859
        %1861 = vmatmul.bf16.gmra.mxu0 %v1427
        %v1862 = vpop.f32.mrf.mxu0
        %v1863 = vadd.f32 %v1694, %v1862
        %v1864 = vpop.f32.mrf.mxu0
        %v1865 = vadd.f32 %v1696, %v1864
        %1866 = vmatmul.bf16.gmra.mxu0 %v1431
        %v1867 = vpop.f32.mrf.mxu0
        %v1868 = vadd.f32 %v1699, %v1867
        %v1869 = vpop.f32.mrf.mxu0
        %v1870 = vadd.f32 %v1701, %v1869
        %1871 = vmatmul.bf16.gmra.mxu0 %v1435
        %v1872 = vpop.f32.mrf.mxu0
        %v1873 = vadd.f32 %v1704, %v1872
        %v1874 = vpop.f32.mrf.mxu0
        %v1875 = vadd.f32 %v1706, %v1874
        %1876 = vmatmul.bf16.gmra.mxu0 %v1439
        %v1877 = vpop.f32.mrf.mxu0
        %v1878 = vadd.f32 %v1709, %v1877
        %v1879 = vpop.f32.mrf.mxu0
        %v1880 = vadd.f32 %v1711, %v1879
        %1881 = vmatmul.bf16.gmra.mxu0 %v1443
        %v1882 = vpop.f32.mrf.mxu0
        %v1883 = vadd.f32 %v1714, %v1882
        %v1884 = vpop.f32.mrf.mxu0
        %v1885 = vadd.f32 %v1716, %v1884
        %1886 = vmatmul.bf16.gmra.mxu0 %v1447
        %v1887 = vpop.f32.mrf.mxu0
        %v1888 = vadd.f32 %v1719, %v1887
        %v1889 = vpop.f32.mrf.mxu0
        %v1890 = vadd.f32 %v1721, %v1889
        %1891 = vmatmul.bf16.gmra.mxu0 %v1451
        %v1892 = vpop.f32.mrf.mxu0
        %v1893 = vadd.f32 %v1724, %v1892
        %v1894 = vpop.f32.mrf.mxu0
        %v1895 = vadd.f32 %v1726, %v1894
        %1896 = vmatmul.bf16.gmra.mxu0 %v1455
        %v1897 = vpop.f32.mrf.mxu0
        %v1898 = vadd.f32 %v1729, %v1897
        %v1899 = vpop.f32.mrf.mxu0
        %v1900 = vadd.f32 %v1731, %v1899
        %1901 = vmatmul.bf16.gmra.mxu0 %v1459
        %v1902 = vpop.f32.mrf.mxu0
        %v1903 = vadd.f32 %v1734, %v1902
        %v1904 = vpop.f32.mrf.mxu0
        %v1905 = vadd.f32 %v1736, %v1904
        %1906 = vmatmul.bf16.gmra.mxu0 %v1463
        %v1907 = vpop.f32.mrf.mxu0
        %v1908 = vadd.f32 %v1739, %v1907
        %v1909 = vpop.f32.mrf.mxu0
        %v1910 = vadd.f32 %v1741, %v1909
        %1911 = vmatmul.bf16.gmra.mxu0 %v1467
        %v1912 = vpop.f32.mrf.mxu0
        %v1913 = vadd.f32 %v1744, %v1912
        %v1914 = vpop.f32.mrf.mxu0
        %v1915 = vadd.f32 %v1746, %v1914
        %1916 = vmatmul.bf16.gmra.mxu0 %v1471
        %v1917 = vpop.f32.mrf.mxu0
        %v1918 = vadd.f32 %v1749, %v1917
        %v1919 = vpop.f32.mrf.mxu0
        %v1920 = vadd.f32 %v1751, %v1919
        %1921 = vmatmul.bf16.gmra.mxu0 %v1475
        %v1922 = vpop.f32.mrf.mxu0
        %v1923 = vadd.f32 %v1754, %v1922
        %v1924 = vpop.f32.mrf.mxu0
        %v1925 = vadd.f32 %v1756, %v1924
        %1926 = vmatmul.bf16.gmra.mxu0 %v1479
        %v1927 = vpop.f32.mrf.mxu0
        %v1928 = vadd.f32 %v1759, %v1927
        %v1929 = vpop.f32.mrf.mxu0
        %v1930 = vadd.f32 %v1761, %v1929
        %1931 = vmatmul.bf16.gmra.mxu0 %v1483
        %v1932 = vpop.f32.mrf.mxu0
        %v1933 = vadd.f32 %v1764, %v1932
        %v1934 = vpop.f32.mrf.mxu0
        %v1935 = vadd.f32 %v1766, %v1934
        %1936 = vmatmul.bf16.gmra.mxu0 %v1487
        %v1937 = vpop.f32.mrf.mxu0
        %v1938 = vadd.f32 %v1769, %v1937
        %v1939 = vpop.f32.mrf.mxu0
        %v1940 = vadd.f32 %v1771, %v1939
        %1941 = vmatmul.bf16.gmra.mxu0 %v1491
        %v1942 = vpop.f32.mrf.mxu0
        %v1943 = vadd.f32 %v1774, %v1942
        %v1944 = vpop.f32.mrf.mxu0
        %v1945 = vadd.f32 %v1776, %v1944
        %1946 = vmatmul.bf16.gmra.mxu0 %v1495
        %v1947 = vpop.f32.mrf.mxu0
        %v1948 = vadd.f32 %v1779, %v1947
        %v1949 = vpop.f32.mrf.mxu0
        %v1950 = vadd.f32 %v1781, %v1949
        %1951 = vmatmul.bf16.gmra.mxu0 %v1499
        %v1952 = vpop.f32.mrf.mxu0
        %v1953 = vadd.f32 %v1784, %v1952
        %v1954 = vpop.f32.mrf.mxu0
        %v1955 = vadd.f32 %v1786, %v1954
        %1956 = vmatmul.bf16.gmra.mxu0 %v1503
        %v1957 = vpop.f32.mrf.mxu0
        %v1958 = vadd.f32 %v1789, %v1957
        %v1959 = vpop.f32.mrf.mxu0
        %v1960 = vadd.f32 %v1791, %v1959
        %1961 = vmatmul.bf16.gmra.mxu0 %v1507
        %v1962 = vpop.f32.mrf.mxu0
        %v1963 = vadd.f32 %v1794, %v1962
        %v1964 = vpop.f32.mrf.mxu0
        %v1965 = vadd.f32 %v1796, %v1964
        %1966 = vmatmul.bf16.gmra.mxu0 %v1511
        %v1967 = vpop.f32.mrf.mxu0
        %v1968 = vadd.f32 %v1799, %v1967
        %v1969 = vpop.f32.mrf.mxu0
        %v1970 = vadd.f32 %v1801, %v1969
        %1971 = vmatmul.bf16.gmra.mxu0 %v1515
        %v1972 = vpop.f32.mrf.mxu0
        %v1973 = vadd.f32 %v1804, %v1972
        %v1974 = vpop.f32.mrf.mxu0
        %v1975 = vadd.f32 %v1806, %v1974
        %1976 = vmatmul.bf16.gmra.mxu0 %v1519
        %v1977 = vpop.f32.mrf.mxu0
        %v1978 = vadd.f32 %v1809, %v1977
        %v1979 = vpop.f32.mrf.mxu0
        %v1980 = vadd.f32 %v1811, %v1979
        %1981 = vmatmul.bf16.gmra.mxu0 %v1523
        %v1982 = vpop.f32.mrf.mxu0
        %v1983 = vadd.f32 %v1814, %v1982
        %v1984 = vpop.f32.mrf.mxu0
        %v1985 = vadd.f32 %v1816, %v1984
        %1986 = vmatmul.bf16.gmra.mxu0 %v1527
        %v1987 = vpop.f32.mrf.mxu0
        %v1988 = vadd.f32 %v1819, %v1987
        %v1989 = vpop.f32.mrf.mxu0
        %v1990 = vadd.f32 %v1821, %v1989
        %1991 = vmatmul.bf16.gmra.mxu0 %v1531
        %v1992 = vpop.f32.mrf.mxu0
        %v1993 = vadd.f32 %v1824, %v1992
        %v1994 = vpop.f32.mrf.mxu0
        %v1995 = vadd.f32 %v1826, %v1994
        %1996 = vmatmul.bf16.gmra.mxu0 %v1535
        %v1997 = vpop.f32.mrf.mxu0
        %v1998 = vadd.f32 %v1829, %v1997
        %v1999 = vpop.f32.mrf.mxu0
        %v2000 = vadd.f32 %v1831, %v1999
        %2001 = vmatmul.bf16.gmra.mxu0 %v1539
        %v2002 = vpop.f32.mrf.mxu0
        %v2003 = vadd.f32 %v1834, %v2002
        %v2004 = vpop.f32.mrf.mxu0
        %v2005 = vadd.f32 %v1836, %v2004
        %2006 = vmatmul.bf16.gmra.mxu0 %v1543
        %v2007 = vpop.f32.mrf.mxu0
        %v2008 = vadd.f32 %v1839, %v2007
        %v2009 = vpop.f32.mrf.mxu0
        %v2010 = vadd.f32 %v1841, %v2009
        %2011 = vdwg.mxu0
        %2012 = vmatpush.bf16.msra.mxu0 %v673
        %2013 = vmatpush.bf16.msra.mxu0 %v672
        %2014 = vmatpush.bf16.msra.mxu0 %v671
        %2015 = vmatpush.bf16.msra.mxu0 %v670
        %2016 = vmatpush.bf16.msra.mxu0 %v669
        %2017 = vmatpush.bf16.msra.mxu0 %v668
        %2018 = vmatpush.bf16.msra.mxu0 %v667
        %2019 = vmatpush.bf16.msra.mxu0 %v666
        %2020 = vmatmul.bf16.gmra.mxu0 %v1420
        %v2021 = vpop.f32.mrf.mxu0
        %v2022 = vadd.f32 %v1853, %v2021
        %v2023 = vpop.f32.mrf.mxu0
        %v2024 = vadd.f32 %v1855, %v2023
        %2025 = vmatmul.bf16.gmra.mxu0 %v1424
        %v2026 = vpop.f32.mrf.mxu0
        %v2027 = vadd.f32 %v1858, %v2026
        %v2028 = vpop.f32.mrf.mxu0
        %v2029 = vadd.f32 %v1860, %v2028
        %2030 = vmatmul.bf16.gmra.mxu0 %v1428
        %v2031 = vpop.f32.mrf.mxu0
        %v2032 = vadd.f32 %v1863, %v2031
        %v2033 = vpop.f32.mrf.mxu0
        %v2034 = vadd.f32 %v1865, %v2033
        %2035 = vmatmul.bf16.gmra.mxu0 %v1432
        %v2036 = vpop.f32.mrf.mxu0
        %v2037 = vadd.f32 %v1868, %v2036
        %v2038 = vpop.f32.mrf.mxu0
        %v2039 = vadd.f32 %v1870, %v2038
        %2040 = vmatmul.bf16.gmra.mxu0 %v1436
        %v2041 = vpop.f32.mrf.mxu0
        %v2042 = vadd.f32 %v1873, %v2041
        %v2043 = vpop.f32.mrf.mxu0
        %v2044 = vadd.f32 %v1875, %v2043
        %2045 = vmatmul.bf16.gmra.mxu0 %v1440
        %v2046 = vpop.f32.mrf.mxu0
        %v2047 = vadd.f32 %v1878, %v2046
        %v2048 = vpop.f32.mrf.mxu0
        %v2049 = vadd.f32 %v1880, %v2048
        %2050 = vmatmul.bf16.gmra.mxu0 %v1444
        %v2051 = vpop.f32.mrf.mxu0
        %v2052 = vadd.f32 %v1883, %v2051
        %v2053 = vpop.f32.mrf.mxu0
        %v2054 = vadd.f32 %v1885, %v2053
        %2055 = vmatmul.bf16.gmra.mxu0 %v1448
        %v2056 = vpop.f32.mrf.mxu0
        %v2057 = vadd.f32 %v1888, %v2056
        %v2058 = vpop.f32.mrf.mxu0
        %v2059 = vadd.f32 %v1890, %v2058
        %2060 = vmatmul.bf16.gmra.mxu0 %v1452
        %v2061 = vpop.f32.mrf.mxu0
        %v2062 = vadd.f32 %v1893, %v2061
        %v2063 = vpop.f32.mrf.mxu0
        %v2064 = vadd.f32 %v1895, %v2063
        %2065 = vmatmul.bf16.gmra.mxu0 %v1456
        %v2066 = vpop.f32.mrf.mxu0
        %v2067 = vadd.f32 %v1898, %v2066
        %v2068 = vpop.f32.mrf.mxu0
        %v2069 = vadd.f32 %v1900, %v2068
        %2070 = vmatmul.bf16.gmra.mxu0 %v1460
        %v2071 = vpop.f32.mrf.mxu0
        %v2072 = vadd.f32 %v1903, %v2071
        %v2073 = vpop.f32.mrf.mxu0
        %v2074 = vadd.f32 %v1905, %v2073
        %2075 = vmatmul.bf16.gmra.mxu0 %v1464
        %v2076 = vpop.f32.mrf.mxu0
        %v2077 = vadd.f32 %v1908, %v2076
        %v2078 = vpop.f32.mrf.mxu0
        %v2079 = vadd.f32 %v1910, %v2078
        %2080 = vmatmul.bf16.gmra.mxu0 %v1468
        %v2081 = vpop.f32.mrf.mxu0
        %v2082 = vadd.f32 %v1913, %v2081
        %v2083 = vpop.f32.mrf.mxu0
        %v2084 = vadd.f32 %v1915, %v2083
        %2085 = vmatmul.bf16.gmra.mxu0 %v1472
        %v2086 = vpop.f32.mrf.mxu0
        %v2087 = vadd.f32 %v1918, %v2086
        %v2088 = vpop.f32.mrf.mxu0
        %v2089 = vadd.f32 %v1920, %v2088
        %2090 = vmatmul.bf16.gmra.mxu0 %v1476
        %v2091 = vpop.f32.mrf.mxu0
        %v2092 = vadd.f32 %v1923, %v2091
        %v2093 = vpop.f32.mrf.mxu0
        %v2094 = vadd.f32 %v1925, %v2093
        %2095 = vmatmul.bf16.gmra.mxu0 %v1480
        %v2096 = vpop.f32.mrf.mxu0
        %v2097 = vadd.f32 %v1928, %v2096
        %v2098 = vpop.f32.mrf.mxu0
        %v2099 = vadd.f32 %v1930, %v2098
        %2100 = vmatmul.bf16.gmra.mxu0 %v1484
        %v2101 = vpop.f32.mrf.mxu0
        %v2102 = vadd.f32 %v1933, %v2101
        %v2103 = vpop.f32.mrf.mxu0
        %v2104 = vadd.f32 %v1935, %v2103
        %2105 = vmatmul.bf16.gmra.mxu0 %v1488
        %v2106 = vpop.f32.mrf.mxu0
        %v2107 = vadd.f32 %v1938, %v2106
        %v2108 = vpop.f32.mrf.mxu0
        %v2109 = vadd.f32 %v1940, %v2108
        %2110 = vmatmul.bf16.gmra.mxu0 %v1492
        %v2111 = vpop.f32.mrf.mxu0
        %v2112 = vadd.f32 %v1943, %v2111
        %v2113 = vpop.f32.mrf.mxu0
        %v2114 = vadd.f32 %v1945, %v2113
        %2115 = vmatmul.bf16.gmra.mxu0 %v1496
        %v2116 = vpop.f32.mrf.mxu0
        %v2117 = vadd.f32 %v1948, %v2116
        %v2118 = vpop.f32.mrf.mxu0
        %v2119 = vadd.f32 %v1950, %v2118
        %2120 = vmatmul.bf16.gmra.mxu0 %v1500
        %v2121 = vpop.f32.mrf.mxu0
        %v2122 = vadd.f32 %v1953, %v2121
        %v2123 = vpop.f32.mrf.mxu0
        %v2124 = vadd.f32 %v1955, %v2123
        %2125 = vmatmul.bf16.gmra.mxu0 %v1504
        %v2126 = vpop.f32.mrf.mxu0
        %v2127 = vadd.f32 %v1958, %v2126
        %v2128 = vpop.f32.mrf.mxu0
        %v2129 = vadd.f32 %v1960, %v2128
        %2130 = vmatmul.bf16.gmra.mxu0 %v1508
        %v2131 = vpop.f32.mrf.mxu0
        %v2132 = vadd.f32 %v1963, %v2131
        %v2133 = vpop.f32.mrf.mxu0
        %v2134 = vadd.f32 %v1965, %v2133
        %2135 = vmatmul.bf16.gmra.mxu0 %v1512
        %v2136 = vpop.f32.mrf.mxu0
        %v2137 = vadd.f32 %v1968, %v2136
        %v2138 = vpop.f32.mrf.mxu0
        %v2139 = vadd.f32 %v1970, %v2138
        %2140 = vmatmul.bf16.gmra.mxu0 %v1516
        %v2141 = vpop.f32.mrf.mxu0
        %v2142 = vadd.f32 %v1973, %v2141
        %v2143 = vpop.f32.mrf.mxu0
        %v2144 = vadd.f32 %v1975, %v2143
        %2145 = vmatmul.bf16.gmra.mxu0 %v1520
        %v2146 = vpop.f32.mrf.mxu0
        %v2147 = vadd.f32 %v1978, %v2146
        %v2148 = vpop.f32.mrf.mxu0
        %v2149 = vadd.f32 %v1980, %v2148
        %2150 = vmatmul.bf16.gmra.mxu0 %v1524
        %v2151 = vpop.f32.mrf.mxu0
        %v2152 = vadd.f32 %v1983, %v2151
        %v2153 = vpop.f32.mrf.mxu0
        %v2154 = vadd.f32 %v1985, %v2153
        %2155 = vmatmul.bf16.gmra.mxu0 %v1528
        %v2156 = vpop.f32.mrf.mxu0
        %v2157 = vadd.f32 %v1988, %v2156
        %v2158 = vpop.f32.mrf.mxu0
        %v2159 = vadd.f32 %v1990, %v2158
        %2160 = vmatmul.bf16.gmra.mxu0 %v1532
        %v2161 = vpop.f32.mrf.mxu0
        %v2162 = vadd.f32 %v1993, %v2161
        %v2163 = vpop.f32.mrf.mxu0
        %v2164 = vadd.f32 %v1995, %v2163
        %2165 = vmatmul.bf16.gmra.mxu0 %v1536
        %v2166 = vpop.f32.mrf.mxu0
        %v2167 = vadd.f32 %v1998, %v2166
        %v2168 = vpop.f32.mrf.mxu0
        %v2169 = vadd.f32 %v2000, %v2168
        %2170 = vmatmul.bf16.gmra.mxu0 %v1540
        %v2171 = vpop.f32.mrf.mxu0
        %v2172 = vadd.f32 %v2003, %v2171
        %v2173 = vpop.f32.mrf.mxu0
        %v2174 = vadd.f32 %v2005, %v2173
        %2175 = vmatmul.bf16.gmra.mxu0 %v1544
        %v2176 = vpop.f32.mrf.mxu0
        %v2177 = vadd.f32 %v2008, %v2176
        %v2178 = vpop.f32.mrf.mxu0
        %v2179 = vadd.f32 %v2010, %v2178
        %2180 = vdwg.mxu0
        %2181 = vmatpush.bf16.msra.mxu0 %v681
        %2182 = vmatpush.bf16.msra.mxu0 %v680
        %2183 = vmatpush.bf16.msra.mxu0 %v679
        %2184 = vmatpush.bf16.msra.mxu0 %v678
        %2185 = vmatpush.bf16.msra.mxu0 %v677
        %2186 = vmatpush.bf16.msra.mxu0 %v676
        %2187 = vmatpush.bf16.msra.mxu0 %v675
        %2188 = vmatpush.bf16.msra.mxu0 %v674
        %2189 = vmatmul.bf16.gmra.mxu0 %v1421
        %v2190 = vpop.f32.mrf.mxu0
        %v2191 = vadd.f32 %v2022, %v2190
        %v2192 = vpop.f32.mrf.mxu0
        %v2193 = vadd.f32 %v2024, %v2192
        %2194 = vmatmul.bf16.gmra.mxu0 %v1425
        %v2195 = vpop.f32.mrf.mxu0
        %v2196 = vadd.f32 %v2027, %v2195
        %v2197 = vpop.f32.mrf.mxu0
        %v2198 = vadd.f32 %v2029, %v2197
        %2199 = vmatmul.bf16.gmra.mxu0 %v1429
        %v2200 = vpop.f32.mrf.mxu0
        %v2201 = vadd.f32 %v2032, %v2200
        %v2202 = vpop.f32.mrf.mxu0
        %v2203 = vadd.f32 %v2034, %v2202
        %2204 = vmatmul.bf16.gmra.mxu0 %v1433
        %v2205 = vpop.f32.mrf.mxu0
        %v2206 = vadd.f32 %v2037, %v2205
        %v2207 = vpop.f32.mrf.mxu0
        %v2208 = vadd.f32 %v2039, %v2207
        %2209 = vmatmul.bf16.gmra.mxu0 %v1437
        %v2210 = vpop.f32.mrf.mxu0
        %v2211 = vadd.f32 %v2042, %v2210
        %v2212 = vpop.f32.mrf.mxu0
        %v2213 = vadd.f32 %v2044, %v2212
        %2214 = vmatmul.bf16.gmra.mxu0 %v1441
        %v2215 = vpop.f32.mrf.mxu0
        %v2216 = vadd.f32 %v2047, %v2215
        %v2217 = vpop.f32.mrf.mxu0
        %v2218 = vadd.f32 %v2049, %v2217
        %2219 = vmatmul.bf16.gmra.mxu0 %v1445
        %v2220 = vpop.f32.mrf.mxu0
        %v2221 = vadd.f32 %v2052, %v2220
        %v2222 = vpop.f32.mrf.mxu0
        %v2223 = vadd.f32 %v2054, %v2222
        %2224 = vmatmul.bf16.gmra.mxu0 %v1449
        %v2225 = vpop.f32.mrf.mxu0
        %v2226 = vadd.f32 %v2057, %v2225
        %v2227 = vpop.f32.mrf.mxu0
        %v2228 = vadd.f32 %v2059, %v2227
        %2229 = vmatmul.bf16.gmra.mxu0 %v1453
        %v2230 = vpop.f32.mrf.mxu0
        %v2231 = vadd.f32 %v2062, %v2230
        %v2232 = vpop.f32.mrf.mxu0
        %v2233 = vadd.f32 %v2064, %v2232
        %2234 = vmatmul.bf16.gmra.mxu0 %v1457
        %v2235 = vpop.f32.mrf.mxu0
        %v2236 = vadd.f32 %v2067, %v2235
        %v2237 = vpop.f32.mrf.mxu0
        %v2238 = vadd.f32 %v2069, %v2237
        %2239 = vmatmul.bf16.gmra.mxu0 %v1461
        %v2240 = vpop.f32.mrf.mxu0
        %v2241 = vadd.f32 %v2072, %v2240
        %v2242 = vpop.f32.mrf.mxu0
        %v2243 = vadd.f32 %v2074, %v2242
        %2244 = vmatmul.bf16.gmra.mxu0 %v1465
        %v2245 = vpop.f32.mrf.mxu0
        %v2246 = vadd.f32 %v2077, %v2245
        %v2247 = vpop.f32.mrf.mxu0
        %v2248 = vadd.f32 %v2079, %v2247
        %2249 = vmatmul.bf16.gmra.mxu0 %v1469
        %v2250 = vpop.f32.mrf.mxu0
        %v2251 = vadd.f32 %v2082, %v2250
        %v2252 = vpop.f32.mrf.mxu0
        %v2253 = vadd.f32 %v2084, %v2252
        %2254 = vmatmul.bf16.gmra.mxu0 %v1473
        %v2255 = vpop.f32.mrf.mxu0
        %v2256 = vadd.f32 %v2087, %v2255
        %v2257 = vpop.f32.mrf.mxu0
        %v2258 = vadd.f32 %v2089, %v2257
        %2259 = vmatmul.bf16.gmra.mxu0 %v1477
        %v2260 = vpop.f32.mrf.mxu0
        %v2261 = vadd.f32 %v2092, %v2260
        %v2262 = vpop.f32.mrf.mxu0
        %v2263 = vadd.f32 %v2094, %v2262
        %2264 = vmatmul.bf16.gmra.mxu0 %v1481
        %v2265 = vpop.f32.mrf.mxu0
        %v2266 = vadd.f32 %v2097, %v2265
        %v2267 = vpop.f32.mrf.mxu0
        %v2268 = vadd.f32 %v2099, %v2267
        %2269 = vmatmul.bf16.gmra.mxu0 %v1485
        %v2270 = vpop.f32.mrf.mxu0
        %v2271 = vadd.f32 %v2102, %v2270
        %v2272 = vpop.f32.mrf.mxu0
        %v2273 = vadd.f32 %v2104, %v2272
        %2274 = vmatmul.bf16.gmra.mxu0 %v1489
        %v2275 = vpop.f32.mrf.mxu0
        %v2276 = vadd.f32 %v2107, %v2275
        %v2277 = vpop.f32.mrf.mxu0
        %v2278 = vadd.f32 %v2109, %v2277
        %2279 = vmatmul.bf16.gmra.mxu0 %v1493
        %v2280 = vpop.f32.mrf.mxu0
        %v2281 = vadd.f32 %v2112, %v2280
        %v2282 = vpop.f32.mrf.mxu0
        %v2283 = vadd.f32 %v2114, %v2282
        %2284 = vmatmul.bf16.gmra.mxu0 %v1497
        %v2285 = vpop.f32.mrf.mxu0
        %v2286 = vadd.f32 %v2117, %v2285
        %v2287 = vpop.f32.mrf.mxu0
        %v2288 = vadd.f32 %v2119, %v2287
        %2289 = vmatmul.bf16.gmra.mxu0 %v1501
        %v2290 = vpop.f32.mrf.mxu0
        %v2291 = vadd.f32 %v2122, %v2290
        %v2292 = vpop.f32.mrf.mxu0
        %v2293 = vadd.f32 %v2124, %v2292
        %2294 = vmatmul.bf16.gmra.mxu0 %v1505
        %v2295 = vpop.f32.mrf.mxu0
        %v2296 = vadd.f32 %v2127, %v2295
        %v2297 = vpop.f32.mrf.mxu0
        %v2298 = vadd.f32 %v2129, %v2297
        %2299 = vmatmul.bf16.gmra.mxu0 %v1509
        %v2300 = vpop.f32.mrf.mxu0
        %v2301 = vadd.f32 %v2132, %v2300
        %v2302 = vpop.f32.mrf.mxu0
        %v2303 = vadd.f32 %v2134, %v2302
        %2304 = vmatmul.bf16.gmra.mxu0 %v1513
        %v2305 = vpop.f32.mrf.mxu0
        %v2306 = vadd.f32 %v2137, %v2305
        %v2307 = vpop.f32.mrf.mxu0
        %v2308 = vadd.f32 %v2139, %v2307
        %2309 = vmatmul.bf16.gmra.mxu0 %v1517
        %v2310 = vpop.f32.mrf.mxu0
        %v2311 = vadd.f32 %v2142, %v2310
        %v2312 = vpop.f32.mrf.mxu0
        %v2313 = vadd.f32 %v2144, %v2312
        %2314 = vmatmul.bf16.gmra.mxu0 %v1521
        %v2315 = vpop.f32.mrf.mxu0
        %v2316 = vadd.f32 %v2147, %v2315
        %v2317 = vpop.f32.mrf.mxu0
        %v2318 = vadd.f32 %v2149, %v2317
        %2319 = vmatmul.bf16.gmra.mxu0 %v1525
        %v2320 = vpop.f32.mrf.mxu0
        %v2321 = vadd.f32 %v2152, %v2320
        %v2322 = vpop.f32.mrf.mxu0
        %v2323 = vadd.f32 %v2154, %v2322
        %2324 = vmatmul.bf16.gmra.mxu0 %v1529
        %v2325 = vpop.f32.mrf.mxu0
        %v2326 = vadd.f32 %v2157, %v2325
        %v2327 = vpop.f32.mrf.mxu0
        %v2328 = vadd.f32 %v2159, %v2327
        %2329 = vmatmul.bf16.gmra.mxu0 %v1533
        %v2330 = vpop.f32.mrf.mxu0
        %v2331 = vadd.f32 %v2162, %v2330
        %v2332 = vpop.f32.mrf.mxu0
        %v2333 = vadd.f32 %v2164, %v2332
        %2334 = vmatmul.bf16.gmra.mxu0 %v1537
        %v2335 = vpop.f32.mrf.mxu0
        %v2336 = vadd.f32 %v2167, %v2335
        %v2337 = vpop.f32.mrf.mxu0
        %v2338 = vadd.f32 %v2169, %v2337
        %2339 = vmatmul.bf16.gmra.mxu0 %v1541
        %v2340 = vpop.f32.mrf.mxu0
        %v2341 = vadd.f32 %v2172, %v2340
        %v2342 = vpop.f32.mrf.mxu0
        %v2343 = vadd.f32 %v2174, %v2342
        %2344 = vmatmul.bf16.gmra.mxu0 %v1545
        %v2345 = vpop.f32.mrf.mxu0
        %v2346 = vadd.f32 %v2177, %v2345
        %v2347 = vpop.f32.mrf.mxu0
        %v2348 = vadd.f32 %v2179, %v2347
        %2349 = vdwg.mxu0
        %v2478 = vunpack.c.l.b16 %v778
        %v2479 = vunpack.c.h.b16 %v778
        %v2480 = vunpack.c.l.b16 %v779
        %v2481 = vunpack.c.h.b16 %v779
        %v2482 = vunpack.c.l.b16 %v780
        %v2483 = vunpack.c.h.b16 %v780
        %v2484 = vunpack.c.l.b16 %v781
        %v2485 = vunpack.c.h.b16 %v781
        %v2486 = vunpack.c.l.b16 %v782
        %v2487 = vunpack.c.h.b16 %v782
        %v2488 = vunpack.c.l.b16 %v783
        %v2489 = vunpack.c.h.b16 %v783
        %v2490 = vunpack.c.l.b16 %v784
        %v2491 = vunpack.c.h.b16 %v784
        %v2492 = vunpack.c.l.b16 %v785
        %v2493 = vunpack.c.h.b16 %v785
        %v2494 = vunpack.c.l.b16 %v786
        %v2495 = vunpack.c.h.b16 %v786
        %v2496 = vunpack.c.l.b16 %v787
        %v2497 = vunpack.c.h.b16 %v787
        %v2498 = vunpack.c.l.b16 %v788
        %v2499 = vunpack.c.h.b16 %v788
        %v2500 = vunpack.c.l.b16 %v789
        %v2501 = vunpack.c.h.b16 %v789
        %v2502 = vunpack.c.l.b16 %v790
        %v2503 = vunpack.c.h.b16 %v790
        %v2504 = vunpack.c.l.b16 %v791
        %v2505 = vunpack.c.h.b16 %v791
        %v2506 = vunpack.c.l.b16 %v792
        %v2507 = vunpack.c.h.b16 %v792
        %v2508 = vunpack.c.l.b16 %v793
        %v2509 = vunpack.c.h.b16 %v793
        %v2510 = vunpack.c.l.b16 %v794
        %v2511 = vunpack.c.h.b16 %v794
        %v2512 = vunpack.c.l.b16 %v795
        %v2513 = vunpack.c.h.b16 %v795
        %v2514 = vunpack.c.l.b16 %v796
        %v2515 = vunpack.c.h.b16 %v796
        %v2516 = vunpack.c.l.b16 %v797
        %v2517 = vunpack.c.h.b16 %v797
        %v2518 = vunpack.c.l.b16 %v798
        %v2519 = vunpack.c.h.b16 %v798
        %v2520 = vunpack.c.l.b16 %v799
        %v2521 = vunpack.c.h.b16 %v799
        %v2522 = vunpack.c.l.b16 %v800
        %v2523 = vunpack.c.h.b16 %v800
        %v2524 = vunpack.c.l.b16 %v801
        %v2525 = vunpack.c.h.b16 %v801
        %v2526 = vunpack.c.l.b16 %v802
        %v2527 = vunpack.c.h.b16 %v802
        %v2528 = vunpack.c.l.b16 %v803
        %v2529 = vunpack.c.h.b16 %v803
        %v2530 = vunpack.c.l.b16 %v804
        %v2531 = vunpack.c.h.b16 %v804
        %v2532 = vunpack.c.l.b16 %v805
        %v2533 = vunpack.c.h.b16 %v805
        %v2534 = vunpack.c.l.b16 %v806
        %v2535 = vunpack.c.h.b16 %v806
        %v2536 = vunpack.c.l.b16 %v807
        %v2537 = vunpack.c.h.b16 %v807
        %v2538 = vunpack.c.l.b16 %v808
        %v2539 = vunpack.c.h.b16 %v808
        %v2540 = vunpack.c.l.b16 %v809
        %v2541 = vunpack.c.h.b16 %v809
        %v2542 = vunpack.c.l.b16 %v810
        %v2543 = vunpack.c.h.b16 %v810
        %v2544 = vunpack.c.l.b16 %v811
        %v2545 = vunpack.c.h.b16 %v811
        %v2546 = vunpack.c.l.b16 %v812
        %v2547 = vunpack.c.h.b16 %v812
        %v2548 = vunpack.c.l.b16 %v813
        %v2549 = vunpack.c.h.b16 %v813
        %v2550 = vunpack.c.l.b16 %v814
        %v2551 = vunpack.c.h.b16 %v814
        %v2552 = vunpack.c.l.b16 %v815
        %v2553 = vunpack.c.h.b16 %v815
        %v2554 = vunpack.c.l.b16 %v816
        %v2555 = vunpack.c.h.b16 %v816
        %v2556 = vunpack.c.l.b16 %v817
        %v2557 = vunpack.c.h.b16 %v817
        %v2558 = vunpack.c.l.b16 %v818
        %v2559 = vunpack.c.h.b16 %v818
        %v2560 = vunpack.c.l.b16 %v819
        %v2561 = vunpack.c.h.b16 %v819
        %v2562 = vunpack.c.l.b16 %v820
        %v2563 = vunpack.c.h.b16 %v820
        %v2564 = vunpack.c.l.b16 %v821
        %v2565 = vunpack.c.h.b16 %v821
        %v2566 = vunpack.c.l.b16 %v822
        %v2567 = vunpack.c.h.b16 %v822
        %v2568 = vunpack.c.l.b16 %v823
        %v2569 = vunpack.c.h.b16 %v823
        %v2570 = vunpack.c.l.b16 %v824
        %v2571 = vunpack.c.h.b16 %v824
        %v2572 = vunpack.c.l.b16 %v825
        %v2573 = vunpack.c.h.b16 %v825
        %v2574 = vunpack.c.l.b16 %v826
        %v2575 = vunpack.c.h.b16 %v826
        %v2576 = vunpack.c.l.b16 %v827
        %v2577 = vunpack.c.h.b16 %v827
        %v2578 = vunpack.c.l.b16 %v828
        %v2579 = vunpack.c.h.b16 %v828
        %v2580 = vunpack.c.l.b16 %v829
        %v2581 = vunpack.c.h.b16 %v829
        %v2582 = vunpack.c.l.b16 %v830
        %v2583 = vunpack.c.h.b16 %v830
        %v2584 = vunpack.c.l.b16 %v831
        %v2585 = vunpack.c.h.b16 %v831
        %v2586 = vunpack.c.l.b16 %v832
        %v2587 = vunpack.c.h.b16 %v832
        %v2588 = vunpack.c.l.b16 %v833
        %v2589 = vunpack.c.h.b16 %v833
        %v2590 = vunpack.c.l.b16 %v834
        %v2591 = vunpack.c.h.b16 %v834
        %v2592 = vunpack.c.l.b16 %v835
        %v2593 = vunpack.c.h.b16 %v835
        %v2594 = vunpack.c.l.b16 %v836
        %v2595 = vunpack.c.h.b16 %v836
        %v2596 = vunpack.c.l.b16 %v837
        %v2597 = vunpack.c.h.b16 %v837
        %v2598 = vunpack.c.l.b16 %v838
        %v2599 = vunpack.c.h.b16 %v838
        %v2600 = vunpack.c.l.b16 %v839
        %v2601 = vunpack.c.h.b16 %v839
        %v2602 = vunpack.c.l.b16 %v840
        %v2603 = vunpack.c.h.b16 %v840
        %v2604 = vunpack.c.l.b16 %v841
        %v2605 = vunpack.c.h.b16 %v841
        %v2606 = vunpack.c.l.b16 %v842
        %v2607 = vunpack.c.h.b16 %v842
        %v2608 = vunpack.c.l.b16 %v843
        %v2609 = vunpack.c.h.b16 %v843
        %v2610 = vunpack.c.l.b16 %v844
        %v2611 = vunpack.c.h.b16 %v844
        %v2612 = vunpack.c.l.b16 %v845
        %v2613 = vunpack.c.h.b16 %v845
        %v2614 = vunpack.c.l.b16 %v846
        %v2615 = vunpack.c.h.b16 %v846
        %v2616 = vunpack.c.l.b16 %v847
        %v2617 = vunpack.c.h.b16 %v847
        %v2618 = vunpack.c.l.b16 %v848
        %v2619 = vunpack.c.h.b16 %v848
        %v2620 = vunpack.c.l.b16 %v849
        %v2621 = vunpack.c.h.b16 %v849
        %v2622 = vunpack.c.l.b16 %v850
        %v2623 = vunpack.c.h.b16 %v850
        %v2624 = vunpack.c.l.b16 %v851
        %v2625 = vunpack.c.h.b16 %v851
        %v2626 = vunpack.c.l.b16 %v852
        %v2627 = vunpack.c.h.b16 %v852
        %v2628 = vunpack.c.l.b16 %v853
        %v2629 = vunpack.c.h.b16 %v853
        %v2630 = vunpack.c.l.b16 %v854
        %v2631 = vunpack.c.h.b16 %v854
        %v2632 = vunpack.c.l.b16 %v855
        %v2633 = vunpack.c.h.b16 %v855
        %v2634 = vunpack.c.l.b16 %v856
        %v2635 = vunpack.c.h.b16 %v856
        %v2636 = vunpack.c.l.b16 %v857
        %v2637 = vunpack.c.h.b16 %v857
        %v2638 = vunpack.c.l.b16 %v858
        %v2639 = vunpack.c.h.b16 %v858
        %v2640 = vunpack.c.l.b16 %v859
        %v2641 = vunpack.c.h.b16 %v859
        %v2642 = vunpack.c.l.b16 %v860
        %v2643 = vunpack.c.h.b16 %v860
        %v2644 = vunpack.c.l.b16 %v861
        %v2645 = vunpack.c.h.b16 %v861
        %v2646 = vunpack.c.l.b16 %v862
        %v2647 = vunpack.c.h.b16 %v862
        %v2648 = vunpack.c.l.b16 %v863
        %v2649 = vunpack.c.h.b16 %v863
        %v2650 = vunpack.c.l.b16 %v864
        %v2651 = vunpack.c.h.b16 %v864
        %v2652 = vunpack.c.l.b16 %v865
        %v2653 = vunpack.c.h.b16 %v865
        %v2654 = vunpack.c.l.b16 %v866
        %v2655 = vunpack.c.h.b16 %v866
        %v2656 = vunpack.c.l.b16 %v867
        %v2657 = vunpack.c.h.b16 %v867
        %v2658 = vunpack.c.l.b16 %v868
        %v2659 = vunpack.c.h.b16 %v868
        %v2660 = vunpack.c.l.b16 %v869
        %v2661 = vunpack.c.h.b16 %v869
        %v2662 = vunpack.c.l.b16 %v870
        %v2663 = vunpack.c.h.b16 %v870
        %v2664 = vunpack.c.l.b16 %v871
        %v2665 = vunpack.c.h.b16 %v871
        %v2666 = vunpack.c.l.b16 %v872
        %v2667 = vunpack.c.h.b16 %v872
        %v2668 = vunpack.c.l.b16 %v873
        %v2669 = vunpack.c.h.b16 %v873
        %v2670 = vunpack.c.l.b16 %v874
        %v2671 = vunpack.c.h.b16 %v874
        %v2672 = vunpack.c.l.b16 %v875
        %v2673 = vunpack.c.h.b16 %v875
        %v2674 = vunpack.c.l.b16 %v876
        %v2675 = vunpack.c.h.b16 %v876
        %v2676 = vunpack.c.l.b16 %v877
        %v2677 = vunpack.c.h.b16 %v877
        %v2678 = vunpack.c.l.b16 %v878
        %v2679 = vunpack.c.h.b16 %v878
        %v2680 = vunpack.c.l.b16 %v879
        %v2681 = vunpack.c.h.b16 %v879
        %v2682 = vunpack.c.l.b16 %v880
        %v2683 = vunpack.c.h.b16 %v880
        %v2684 = vunpack.c.l.b16 %v881
        %v2685 = vunpack.c.h.b16 %v881
        %v2686 = vunpack.c.l.b16 %v882
        %v2687 = vunpack.c.h.b16 %v882
        %v2688 = vunpack.c.l.b16 %v883
        %v2689 = vunpack.c.h.b16 %v883
        %v2690 = vunpack.c.l.b16 %v884
        %v2691 = vunpack.c.h.b16 %v884
        %v2692 = vunpack.c.l.b16 %v885
        %v2693 = vunpack.c.h.b16 %v885
        %v2694 = vunpack.c.l.b16 %v886
        %v2695 = vunpack.c.h.b16 %v886
        %v2696 = vunpack.c.l.b16 %v887
        %v2697 = vunpack.c.h.b16 %v887
        %v2698 = vunpack.c.l.b16 %v888
        %v2699 = vunpack.c.h.b16 %v888
        %v2700 = vunpack.c.l.b16 %v889
        %v2701 = vunpack.c.h.b16 %v889
        %v2702 = vunpack.c.l.b16 %v890
        %v2703 = vunpack.c.h.b16 %v890
        %v2704 = vunpack.c.l.b16 %v891
        %v2705 = vunpack.c.h.b16 %v891
        %v2706 = vunpack.c.l.b16 %v892
        %v2707 = vunpack.c.h.b16 %v892
        %v2708 = vunpack.c.l.b16 %v893
        %v2709 = vunpack.c.h.b16 %v893
        %v2710 = vunpack.c.l.b16 %v894
        %v2711 = vunpack.c.h.b16 %v894
        %v2712 = vunpack.c.l.b16 %v895
        %v2713 = vunpack.c.h.b16 %v895
        %v2714 = vunpack.c.l.b16 %v896
        %v2715 = vunpack.c.h.b16 %v896
        %v2716 = vunpack.c.l.b16 %v897
        %v2717 = vunpack.c.h.b16 %v897
        %v2718 = vunpack.c.l.b16 %v898
        %v2719 = vunpack.c.h.b16 %v898
        %v2720 = vunpack.c.l.b16 %v899
        %v2721 = vunpack.c.h.b16 %v899
        %v2722 = vunpack.c.l.b16 %v900
        %v2723 = vunpack.c.h.b16 %v900
        %v2724 = vunpack.c.l.b16 %v901
        %v2725 = vunpack.c.h.b16 %v901
        %v2726 = vunpack.c.l.b16 %v902
        %v2727 = vunpack.c.h.b16 %v902
        %v2728 = vunpack.c.l.b16 %v903
        %v2729 = vunpack.c.h.b16 %v903
        %v2730 = vunpack.c.l.b16 %v904
        %v2731 = vunpack.c.h.b16 %v904
        %v2732 = vunpack.c.l.b16 %v905
        %v2733 = vunpack.c.h.b16 %v905
        %v2734 = vpack.c.b16 %v2482, %v2478
        %v2735 = vpack.c.b16 %v2483, %v2479
        %v2736 = vpack.c.b16 %v2484, %v2480
        %v2737 = vpack.c.b16 %v2485, %v2481
        %v2738 = vpack.c.b16 %v2490, %v2486
        %v2739 = vpack.c.b16 %v2491, %v2487
        %v2740 = vpack.c.b16 %v2492, %v2488
        %v2741 = vpack.c.b16 %v2493, %v2489
        %v2742 = vpack.c.b16 %v2498, %v2494
        %v2743 = vpack.c.b16 %v2499, %v2495
        %v2744 = vpack.c.b16 %v2500, %v2496
        %v2745 = vpack.c.b16 %v2501, %v2497
        %v2746 = vpack.c.b16 %v2506, %v2502
        %v2747 = vpack.c.b16 %v2507, %v2503
        %v2748 = vpack.c.b16 %v2508, %v2504
        %v2749 = vpack.c.b16 %v2509, %v2505
        %v2750 = vpack.c.b16 %v2514, %v2510
        %v2751 = vpack.c.b16 %v2515, %v2511
        %v2752 = vpack.c.b16 %v2516, %v2512
        %v2753 = vpack.c.b16 %v2517, %v2513
        %v2754 = vpack.c.b16 %v2522, %v2518
        %v2755 = vpack.c.b16 %v2523, %v2519
        %v2756 = vpack.c.b16 %v2524, %v2520
        %v2757 = vpack.c.b16 %v2525, %v2521
        %v2758 = vpack.c.b16 %v2530, %v2526
        %v2759 = vpack.c.b16 %v2531, %v2527
        %v2760 = vpack.c.b16 %v2532, %v2528
        %v2761 = vpack.c.b16 %v2533, %v2529
        %v2762 = vpack.c.b16 %v2538, %v2534
        %v2763 = vpack.c.b16 %v2539, %v2535
        %v2764 = vpack.c.b16 %v2540, %v2536
        %v2765 = vpack.c.b16 %v2541, %v2537
        %v2766 = vpack.c.b16 %v2546, %v2542
        %v2767 = vpack.c.b16 %v2547, %v2543
        %v2768 = vpack.c.b16 %v2548, %v2544
        %v2769 = vpack.c.b16 %v2549, %v2545
        %v2770 = vpack.c.b16 %v2554, %v2550
        %v2771 = vpack.c.b16 %v2555, %v2551
        %v2772 = vpack.c.b16 %v2556, %v2552
        %v2773 = vpack.c.b16 %v2557, %v2553
        %v2774 = vpack.c.b16 %v2562, %v2558
        %v2775 = vpack.c.b16 %v2563, %v2559
        %v2776 = vpack.c.b16 %v2564, %v2560
        %v2777 = vpack.c.b16 %v2565, %v2561
        %v2778 = vpack.c.b16 %v2570, %v2566
        %v2779 = vpack.c.b16 %v2571, %v2567
        %v2780 = vpack.c.b16 %v2572, %v2568
        %v2781 = vpack.c.b16 %v2573, %v2569
        %v2782 = vpack.c.b16 %v2578, %v2574
        %v2783 = vpack.c.b16 %v2579, %v2575
        %v2784 = vpack.c.b16 %v2580, %v2576
        %v2785 = vpack.c.b16 %v2581, %v2577
        %v2786 = vpack.c.b16 %v2586, %v2582
        %v2787 = vpack.c.b16 %v2587, %v2583
        %v2788 = vpack.c.b16 %v2588, %v2584
        %v2789 = vpack.c.b16 %v2589, %v2585
        %v2790 = vpack.c.b16 %v2594, %v2590
        %v2791 = vpack.c.b16 %v2595, %v2591
        %v2792 = vpack.c.b16 %v2596, %v2592
        %v2793 = vpack.c.b16 %v2597, %v2593
        %v2794 = vpack.c.b16 %v2602, %v2598
        %v2795 = vpack.c.b16 %v2603, %v2599
        %v2796 = vpack.c.b16 %v2604, %v2600
        %v2797 = vpack.c.b16 %v2605, %v2601
        %v2798 = vpack.c.b16 %v2610, %v2606
        %v2799 = vpack.c.b16 %v2611, %v2607
        %v2800 = vpack.c.b16 %v2612, %v2608
        %v2801 = vpack.c.b16 %v2613, %v2609
        %v2802 = vpack.c.b16 %v2618, %v2614
        %v2803 = vpack.c.b16 %v2619, %v2615
        %v2804 = vpack.c.b16 %v2620, %v2616
        %v2805 = vpack.c.b16 %v2621, %v2617
        %v2806 = vpack.c.b16 %v2626, %v2622
        %v2807 = vpack.c.b16 %v2627, %v2623
        %v2808 = vpack.c.b16 %v2628, %v2624
        %v2809 = vpack.c.b16 %v2629, %v2625
        %v2810 = vpack.c.b16 %v2634, %v2630
        %v2811 = vpack.c.b16 %v2635, %v2631
        %v2812 = vpack.c.b16 %v2636, %v2632
        %v2813 = vpack.c.b16 %v2637, %v2633
        %v2814 = vpack.c.b16 %v2642, %v2638
        %v2815 = vpack.c.b16 %v2643, %v2639
        %v2816 = vpack.c.b16 %v2644, %v2640
        %v2817 = vpack.c.b16 %v2645, %v2641
        %v2818 = vpack.c.b16 %v2650, %v2646
        %v2819 = vpack.c.b16 %v2651, %v2647
        %v2820 = vpack.c.b16 %v2652, %v2648
        %v2821 = vpack.c.b16 %v2653, %v2649
        %v2822 = vpack.c.b16 %v2658, %v2654
        %v2823 = vpack.c.b16 %v2659, %v2655
        %v2824 = vpack.c.b16 %v2660, %v2656
        %v2825 = vpack.c.b16 %v2661, %v2657
        %v2826 = vpack.c.b16 %v2666, %v2662
        %v2827 = vpack.c.b16 %v2667, %v2663
        %v2828 = vpack.c.b16 %v2668, %v2664
        %v2829 = vpack.c.b16 %v2669, %v2665
        %v2830 = vpack.c.b16 %v2674, %v2670
        %v2831 = vpack.c.b16 %v2675, %v2671
        %v2832 = vpack.c.b16 %v2676, %v2672
        %v2833 = vpack.c.b16 %v2677, %v2673
        %v2834 = vpack.c.b16 %v2682, %v2678
        %v2835 = vpack.c.b16 %v2683, %v2679
        %v2836 = vpack.c.b16 %v2684, %v2680
        %v2837 = vpack.c.b16 %v2685, %v2681
        %v2838 = vpack.c.b16 %v2690, %v2686
        %v2839 = vpack.c.b16 %v2691, %v2687
        %v2840 = vpack.c.b16 %v2692, %v2688
        %v2841 = vpack.c.b16 %v2693, %v2689
        %v2842 = vpack.c.b16 %v2698, %v2694
        %v2843 = vpack.c.b16 %v2699, %v2695
        %v2844 = vpack.c.b16 %v2700, %v2696
        %v2845 = vpack.c.b16 %v2701, %v2697
        %v2846 = vpack.c.b16 %v2706, %v2702
        %v2847 = vpack.c.b16 %v2707, %v2703
        %v2848 = vpack.c.b16 %v2708, %v2704
        %v2849 = vpack.c.b16 %v2709, %v2705
        %v2850 = vpack.c.b16 %v2714, %v2710
        %v2851 = vpack.c.b16 %v2715, %v2711
        %v2852 = vpack.c.b16 %v2716, %v2712
        %v2853 = vpack.c.b16 %v2717, %v2713
        %v2854 = vpack.c.b16 %v2722, %v2718
        %v2855 = vpack.c.b16 %v2723, %v2719
        %v2856 = vpack.c.b16 %v2724, %v2720
        %v2857 = vpack.c.b16 %v2725, %v2721
        %v2858 = vpack.c.b16 %v2730, %v2726
        %v2859 = vpack.c.b16 %v2731, %v2727
        %v2860 = vpack.c.b16 %v2732, %v2728
        %v2861 = vpack.c.b16 %v2733, %v2729
        %2990 = vmatpush.bf16.msra.mxu0 %v561
        %2991 = vmatpush.bf16.msra.mxu0 %v560
        %2992 = vmatpush.bf16.msra.mxu0 %v559
        %2993 = vmatpush.bf16.msra.mxu0 %v558
        %2994 = vmatpush.bf16.msra.mxu0 %v557
        %2995 = vmatpush.bf16.msra.mxu0 %v556
        %2996 = vmatpush.bf16.msra.mxu0 %v555
        %2997 = vmatpush.bf16.msra.mxu0 %v554
        %2998 = vmatmul.bf16.gmra.mxu0 %v2734
        %v2999 = vpop.f32.mrf.mxu0
        %v3000 = vadd.f32 %v2191, %v2999
        %v3001 = vpop.f32.mrf.mxu0
        %v3002 = vadd.f32 %v2193, %v3001
        %3003 = vmatmul.bf16.gmra.mxu0 %v2738
        %v3004 = vpop.f32.mrf.mxu0
        %v3005 = vadd.f32 %v2196, %v3004
        %v3006 = vpop.f32.mrf.mxu0
        %v3007 = vadd.f32 %v2198, %v3006
        %3008 = vmatmul.bf16.gmra.mxu0 %v2742
        %v3009 = vpop.f32.mrf.mxu0
        %v3010 = vadd.f32 %v2201, %v3009
        %v3011 = vpop.f32.mrf.mxu0
        %v3012 = vadd.f32 %v2203, %v3011
        %3013 = vmatmul.bf16.gmra.mxu0 %v2746
        %v3014 = vpop.f32.mrf.mxu0
        %v3015 = vadd.f32 %v2206, %v3014
        %v3016 = vpop.f32.mrf.mxu0
        %v3017 = vadd.f32 %v2208, %v3016
        %3018 = vmatmul.bf16.gmra.mxu0 %v2750
        %v3019 = vpop.f32.mrf.mxu0
        %v3020 = vadd.f32 %v2211, %v3019
        %v3021 = vpop.f32.mrf.mxu0
        %v3022 = vadd.f32 %v2213, %v3021
        %3023 = vmatmul.bf16.gmra.mxu0 %v2754
        %v3024 = vpop.f32.mrf.mxu0
        %v3025 = vadd.f32 %v2216, %v3024
        %v3026 = vpop.f32.mrf.mxu0
        %v3027 = vadd.f32 %v2218, %v3026
        %3028 = vmatmul.bf16.gmra.mxu0 %v2758
        %v3029 = vpop.f32.mrf.mxu0
        %v3030 = vadd.f32 %v2221, %v3029
        %v3031 = vpop.f32.mrf.mxu0
        %v3032 = vadd.f32 %v2223, %v3031
        %3033 = vmatmul.bf16.gmra.mxu0 %v2762
        %v3034 = vpop.f32.mrf.mxu0
        %v3035 = vadd.f32 %v2226, %v3034
        %v3036 = vpop.f32.mrf.mxu0
        %v3037 = vadd.f32 %v2228, %v3036
        %3038 = vmatmul.bf16.gmra.mxu0 %v2766
        %v3039 = vpop.f32.mrf.mxu0
        %v3040 = vadd.f32 %v2231, %v3039
        %v3041 = vpop.f32.mrf.mxu0
        %v3042 = vadd.f32 %v2233, %v3041
        %3043 = vmatmul.bf16.gmra.mxu0 %v2770
        %v3044 = vpop.f32.mrf.mxu0
        %v3045 = vadd.f32 %v2236, %v3044
        %v3046 = vpop.f32.mrf.mxu0
        %v3047 = vadd.f32 %v2238, %v3046
        %3048 = vmatmul.bf16.gmra.mxu0 %v2774
        %v3049 = vpop.f32.mrf.mxu0
        %v3050 = vadd.f32 %v2241, %v3049
        %v3051 = vpop.f32.mrf.mxu0
        %v3052 = vadd.f32 %v2243, %v3051
        %3053 = vmatmul.bf16.gmra.mxu0 %v2778
        %v3054 = vpop.f32.mrf.mxu0
        %v3055 = vadd.f32 %v2246, %v3054
        %v3056 = vpop.f32.mrf.mxu0
        %v3057 = vadd.f32 %v2248, %v3056
        %3058 = vmatmul.bf16.gmra.mxu0 %v2782
        %v3059 = vpop.f32.mrf.mxu0
        %v3060 = vadd.f32 %v2251, %v3059
        %v3061 = vpop.f32.mrf.mxu0
        %v3062 = vadd.f32 %v2253, %v3061
        %3063 = vmatmul.bf16.gmra.mxu0 %v2786
        %v3064 = vpop.f32.mrf.mxu0
        %v3065 = vadd.f32 %v2256, %v3064
        %v3066 = vpop.f32.mrf.mxu0
        %v3067 = vadd.f32 %v2258, %v3066
        %3068 = vmatmul.bf16.gmra.mxu0 %v2790
        %v3069 = vpop.f32.mrf.mxu0
        %v3070 = vadd.f32 %v2261, %v3069
        %v3071 = vpop.f32.mrf.mxu0
        %v3072 = vadd.f32 %v2263, %v3071
        %3073 = vmatmul.bf16.gmra.mxu0 %v2794
        %v3074 = vpop.f32.mrf.mxu0
        %v3075 = vadd.f32 %v2266, %v3074
        %v3076 = vpop.f32.mrf.mxu0
        %v3077 = vadd.f32 %v2268, %v3076
        %3078 = vmatmul.bf16.gmra.mxu0 %v2798
        %v3079 = vpop.f32.mrf.mxu0
        %v3080 = vadd.f32 %v2271, %v3079
        %v3081 = vpop.f32.mrf.mxu0
        %v3082 = vadd.f32 %v2273, %v3081
        %3083 = vmatmul.bf16.gmra.mxu0 %v2802
        %v3084 = vpop.f32.mrf.mxu0
        %v3085 = vadd.f32 %v2276, %v3084
        %v3086 = vpop.f32.mrf.mxu0
        %v3087 = vadd.f32 %v2278, %v3086
        %3088 = vmatmul.bf16.gmra.mxu0 %v2806
        %v3089 = vpop.f32.mrf.mxu0
        %v3090 = vadd.f32 %v2281, %v3089
        %v3091 = vpop.f32.mrf.mxu0
        %v3092 = vadd.f32 %v2283, %v3091
        %3093 = vmatmul.bf16.gmra.mxu0 %v2810
        %v3094 = vpop.f32.mrf.mxu0
        %v3095 = vadd.f32 %v2286, %v3094
        %v3096 = vpop.f32.mrf.mxu0
        %v3097 = vadd.f32 %v2288, %v3096
        %3098 = vmatmul.bf16.gmra.mxu0 %v2814
        %v3099 = vpop.f32.mrf.mxu0
        %v3100 = vadd.f32 %v2291, %v3099
        %v3101 = vpop.f32.mrf.mxu0
        %v3102 = vadd.f32 %v2293, %v3101
        %3103 = vmatmul.bf16.gmra.mxu0 %v2818
        %v3104 = vpop.f32.mrf.mxu0
        %v3105 = vadd.f32 %v2296, %v3104
        %v3106 = vpop.f32.mrf.mxu0
        %v3107 = vadd.f32 %v2298, %v3106
        %3108 = vmatmul.bf16.gmra.mxu0 %v2822
        %v3109 = vpop.f32.mrf.mxu0
        %v3110 = vadd.f32 %v2301, %v3109
        %v3111 = vpop.f32.mrf.mxu0
        %v3112 = vadd.f32 %v2303, %v3111
        %3113 = vmatmul.bf16.gmra.mxu0 %v2826
        %v3114 = vpop.f32.mrf.mxu0
        %v3115 = vadd.f32 %v2306, %v3114
        %v3116 = vpop.f32.mrf.mxu0
        %v3117 = vadd.f32 %v2308, %v3116
        %3118 = vmatmul.bf16.gmra.mxu0 %v2830
        %v3119 = vpop.f32.mrf.mxu0
        %v3120 = vadd.f32 %v2311, %v3119
        %v3121 = vpop.f32.mrf.mxu0
        %v3122 = vadd.f32 %v2313, %v3121
        %3123 = vmatmul.bf16.gmra.mxu0 %v2834
        %v3124 = vpop.f32.mrf.mxu0
        %v3125 = vadd.f32 %v2316, %v3124
        %v3126 = vpop.f32.mrf.mxu0
        %v3127 = vadd.f32 %v2318, %v3126
        %3128 = vmatmul.bf16.gmra.mxu0 %v2838
        %v3129 = vpop.f32.mrf.mxu0
        %v3130 = vadd.f32 %v2321, %v3129
        %v3131 = vpop.f32.mrf.mxu0
        %v3132 = vadd.f32 %v2323, %v3131
        %3133 = vmatmul.bf16.gmra.mxu0 %v2842
        %v3134 = vpop.f32.mrf.mxu0
        %v3135 = vadd.f32 %v2326, %v3134
        %v3136 = vpop.f32.mrf.mxu0
        %v3137 = vadd.f32 %v2328, %v3136
        %3138 = vmatmul.bf16.gmra.mxu0 %v2846
        %v3139 = vpop.f32.mrf.mxu0
        %v3140 = vadd.f32 %v2331, %v3139
        %v3141 = vpop.f32.mrf.mxu0
        %v3142 = vadd.f32 %v2333, %v3141
        %3143 = vmatmul.bf16.gmra.mxu0 %v2850
        %v3144 = vpop.f32.mrf.mxu0
        %v3145 = vadd.f32 %v2336, %v3144
        %v3146 = vpop.f32.mrf.mxu0
        %v3147 = vadd.f32 %v2338, %v3146
        %3148 = vmatmul.bf16.gmra.mxu0 %v2854
        %v3149 = vpop.f32.mrf.mxu0
        %v3150 = vadd.f32 %v2341, %v3149
        %v3151 = vpop.f32.mrf.mxu0
        %v3152 = vadd.f32 %v2343, %v3151
        %3153 = vmatmul.bf16.gmra.mxu0 %v2858
        %v3154 = vpop.f32.mrf.mxu0
        %v3155 = vadd.f32 %v2346, %v3154
        %v3156 = vpop.f32.mrf.mxu0
        %v3157 = vadd.f32 %v2348, %v3156
        %3158 = vdwg.mxu0
        %3159 = vmatpush.bf16.msra.mxu0 %v569
        %3160 = vmatpush.bf16.msra.mxu0 %v568
        %3161 = vmatpush.bf16.msra.mxu0 %v567
        %3162 = vmatpush.bf16.msra.mxu0 %v566
        %3163 = vmatpush.bf16.msra.mxu0 %v565
        %3164 = vmatpush.bf16.msra.mxu0 %v564
        %3165 = vmatpush.bf16.msra.mxu0 %v563
        %3166 = vmatpush.bf16.msra.mxu0 %v562
        %3167 = vmatmul.bf16.gmra.mxu0 %v2735
        %v3168 = vpop.f32.mrf.mxu0
        %v3169 = vadd.f32 %v3000, %v3168
        %v3170 = vpop.f32.mrf.mxu0
        %v3171 = vadd.f32 %v3002, %v3170
        %3172 = vmatmul.bf16.gmra.mxu0 %v2739
        %v3173 = vpop.f32.mrf.mxu0
        %v3174 = vadd.f32 %v3005, %v3173
        %v3175 = vpop.f32.mrf.mxu0
        %v3176 = vadd.f32 %v3007, %v3175
        %3177 = vmatmul.bf16.gmra.mxu0 %v2743
        %v3178 = vpop.f32.mrf.mxu0
        %v3179 = vadd.f32 %v3010, %v3178
        %v3180 = vpop.f32.mrf.mxu0
        %v3181 = vadd.f32 %v3012, %v3180
        %3182 = vmatmul.bf16.gmra.mxu0 %v2747
        %v3183 = vpop.f32.mrf.mxu0
        %v3184 = vadd.f32 %v3015, %v3183
        %v3185 = vpop.f32.mrf.mxu0
        %v3186 = vadd.f32 %v3017, %v3185
        %3187 = vmatmul.bf16.gmra.mxu0 %v2751
        %v3188 = vpop.f32.mrf.mxu0
        %v3189 = vadd.f32 %v3020, %v3188
        %v3190 = vpop.f32.mrf.mxu0
        %v3191 = vadd.f32 %v3022, %v3190
        %3192 = vmatmul.bf16.gmra.mxu0 %v2755
        %v3193 = vpop.f32.mrf.mxu0
        %v3194 = vadd.f32 %v3025, %v3193
        %v3195 = vpop.f32.mrf.mxu0
        %v3196 = vadd.f32 %v3027, %v3195
        %3197 = vmatmul.bf16.gmra.mxu0 %v2759
        %v3198 = vpop.f32.mrf.mxu0
        %v3199 = vadd.f32 %v3030, %v3198
        %v3200 = vpop.f32.mrf.mxu0
        %v3201 = vadd.f32 %v3032, %v3200
        %3202 = vmatmul.bf16.gmra.mxu0 %v2763
        %v3203 = vpop.f32.mrf.mxu0
        %v3204 = vadd.f32 %v3035, %v3203
        %v3205 = vpop.f32.mrf.mxu0
        %v3206 = vadd.f32 %v3037, %v3205
        %3207 = vmatmul.bf16.gmra.mxu0 %v2767
        %v3208 = vpop.f32.mrf.mxu0
        %v3209 = vadd.f32 %v3040, %v3208
        %v3210 = vpop.f32.mrf.mxu0
        %v3211 = vadd.f32 %v3042, %v3210
        %3212 = vmatmul.bf16.gmra.mxu0 %v2771
        %v3213 = vpop.f32.mrf.mxu0
        %v3214 = vadd.f32 %v3045, %v3213
        %v3215 = vpop.f32.mrf.mxu0
        %v3216 = vadd.f32 %v3047, %v3215
        %3217 = vmatmul.bf16.gmra.mxu0 %v2775
        %v3218 = vpop.f32.mrf.mxu0
        %v3219 = vadd.f32 %v3050, %v3218
        %v3220 = vpop.f32.mrf.mxu0
        %v3221 = vadd.f32 %v3052, %v3220
        %3222 = vmatmul.bf16.gmra.mxu0 %v2779
        %v3223 = vpop.f32.mrf.mxu0
        %v3224 = vadd.f32 %v3055, %v3223
        %v3225 = vpop.f32.mrf.mxu0
        %v3226 = vadd.f32 %v3057, %v3225
        %3227 = vmatmul.bf16.gmra.mxu0 %v2783
        %v3228 = vpop.f32.mrf.mxu0
        %v3229 = vadd.f32 %v3060, %v3228
        %v3230 = vpop.f32.mrf.mxu0
        %v3231 = vadd.f32 %v3062, %v3230
        %3232 = vmatmul.bf16.gmra.mxu0 %v2787
        %v3233 = vpop.f32.mrf.mxu0
        %v3234 = vadd.f32 %v3065, %v3233
        %v3235 = vpop.f32.mrf.mxu0
        %v3236 = vadd.f32 %v3067, %v3235
        %3237 = vmatmul.bf16.gmra.mxu0 %v2791
        %v3238 = vpop.f32.mrf.mxu0
        %v3239 = vadd.f32 %v3070, %v3238
        %v3240 = vpop.f32.mrf.mxu0
        %v3241 = vadd.f32 %v3072, %v3240
        %3242 = vmatmul.bf16.gmra.mxu0 %v2795
        %v3243 = vpop.f32.mrf.mxu0
        %v3244 = vadd.f32 %v3075, %v3243
        %v3245 = vpop.f32.mrf.mxu0
        %v3246 = vadd.f32 %v3077, %v3245
        %3247 = vmatmul.bf16.gmra.mxu0 %v2799
        %v3248 = vpop.f32.mrf.mxu0
        %v3249 = vadd.f32 %v3080, %v3248
        %v3250 = vpop.f32.mrf.mxu0
        %v3251 = vadd.f32 %v3082, %v3250
        %3252 = vmatmul.bf16.gmra.mxu0 %v2803
        %v3253 = vpop.f32.mrf.mxu0
        %v3254 = vadd.f32 %v3085, %v3253
        %v3255 = vpop.f32.mrf.mxu0
        %v3256 = vadd.f32 %v3087, %v3255
        %3257 = vmatmul.bf16.gmra.mxu0 %v2807
        %v3258 = vpop.f32.mrf.mxu0
        %v3259 = vadd.f32 %v3090, %v3258
        %v3260 = vpop.f32.mrf.mxu0
        %v3261 = vadd.f32 %v3092, %v3260
        %3262 = vmatmul.bf16.gmra.mxu0 %v2811
        %v3263 = vpop.f32.mrf.mxu0
        %v3264 = vadd.f32 %v3095, %v3263
        %v3265 = vpop.f32.mrf.mxu0
        %v3266 = vadd.f32 %v3097, %v3265
        %3267 = vmatmul.bf16.gmra.mxu0 %v2815
        %v3268 = vpop.f32.mrf.mxu0
        %v3269 = vadd.f32 %v3100, %v3268
        %v3270 = vpop.f32.mrf.mxu0
        %v3271 = vadd.f32 %v3102, %v3270
        %3272 = vmatmul.bf16.gmra.mxu0 %v2819
        %v3273 = vpop.f32.mrf.mxu0
        %v3274 = vadd.f32 %v3105, %v3273
        %v3275 = vpop.f32.mrf.mxu0
        %v3276 = vadd.f32 %v3107, %v3275
        %3277 = vmatmul.bf16.gmra.mxu0 %v2823
        %v3278 = vpop.f32.mrf.mxu0
        %v3279 = vadd.f32 %v3110, %v3278
        %v3280 = vpop.f32.mrf.mxu0
        %v3281 = vadd.f32 %v3112, %v3280
        %3282 = vmatmul.bf16.gmra.mxu0 %v2827
        %v3283 = vpop.f32.mrf.mxu0
        %v3284 = vadd.f32 %v3115, %v3283
        %v3285 = vpop.f32.mrf.mxu0
        %v3286 = vadd.f32 %v3117, %v3285
        %3287 = vmatmul.bf16.gmra.mxu0 %v2831
        %v3288 = vpop.f32.mrf.mxu0
        %v3289 = vadd.f32 %v3120, %v3288
        %v3290 = vpop.f32.mrf.mxu0
        %v3291 = vadd.f32 %v3122, %v3290
        %3292 = vmatmul.bf16.gmra.mxu0 %v2835
        %v3293 = vpop.f32.mrf.mxu0
        %v3294 = vadd.f32 %v3125, %v3293
        %v3295 = vpop.f32.mrf.mxu0
        %v3296 = vadd.f32 %v3127, %v3295
        %3297 = vmatmul.bf16.gmra.mxu0 %v2839
        %v3298 = vpop.f32.mrf.mxu0
        %v3299 = vadd.f32 %v3130, %v3298
        %v3300 = vpop.f32.mrf.mxu0
        %v3301 = vadd.f32 %v3132, %v3300
        %3302 = vmatmul.bf16.gmra.mxu0 %v2843
        %v3303 = vpop.f32.mrf.mxu0
        %v3304 = vadd.f32 %v3135, %v3303
        %v3305 = vpop.f32.mrf.mxu0
        %v3306 = vadd.f32 %v3137, %v3305
        %3307 = vmatmul.bf16.gmra.mxu0 %v2847
        %v3308 = vpop.f32.mrf.mxu0
        %v3309 = vadd.f32 %v3140, %v3308
        %v3310 = vpop.f32.mrf.mxu0
        %v3311 = vadd.f32 %v3142, %v3310
        %3312 = vmatmul.bf16.gmra.mxu0 %v2851
        %v3313 = vpop.f32.mrf.mxu0
        %v3314 = vadd.f32 %v3145, %v3313
        %v3315 = vpop.f32.mrf.mxu0
        %v3316 = vadd.f32 %v3147, %v3315
        %3317 = vmatmul.bf16.gmra.mxu0 %v2855
        %v3318 = vpop.f32.mrf.mxu0
        %v3319 = vadd.f32 %v3150, %v3318
        %v3320 = vpop.f32.mrf.mxu0
        %v3321 = vadd.f32 %v3152, %v3320
        %3322 = vmatmul.bf16.gmra.mxu0 %v2859
        %v3323 = vpop.f32.mrf.mxu0
        %v3324 = vadd.f32 %v3155, %v3323
        %v3325 = vpop.f32.mrf.mxu0
        %v3326 = vadd.f32 %v3157, %v3325
        %3327 = vdwg.mxu0
        %3328 = vmatpush.bf16.msra.mxu0 %v577
        %3329 = vmatpush.bf16.msra.mxu0 %v576
        %3330 = vmatpush.bf16.msra.mxu0 %v575
        %3331 = vmatpush.bf16.msra.mxu0 %v574
        %3332 = vmatpush.bf16.msra.mxu0 %v573
        %3333 = vmatpush.bf16.msra.mxu0 %v572
        %3334 = vmatpush.bf16.msra.mxu0 %v571
        %3335 = vmatpush.bf16.msra.mxu0 %v570
        %3336 = vmatmul.bf16.gmra.mxu0 %v2736
        %v3337 = vpop.f32.mrf.mxu0
        %v3338 = vadd.f32 %v3169, %v3337
        %v3339 = vpop.f32.mrf.mxu0
        %v3340 = vadd.f32 %v3171, %v3339
        %3341 = vmatmul.bf16.gmra.mxu0 %v2740
        %v3342 = vpop.f32.mrf.mxu0
        %v3343 = vadd.f32 %v3174, %v3342
        %v3344 = vpop.f32.mrf.mxu0
        %v3345 = vadd.f32 %v3176, %v3344
        %3346 = vmatmul.bf16.gmra.mxu0 %v2744
        %v3347 = vpop.f32.mrf.mxu0
        %v3348 = vadd.f32 %v3179, %v3347
        %v3349 = vpop.f32.mrf.mxu0
        %v3350 = vadd.f32 %v3181, %v3349
        %3351 = vmatmul.bf16.gmra.mxu0 %v2748
        %v3352 = vpop.f32.mrf.mxu0
        %v3353 = vadd.f32 %v3184, %v3352
        %v3354 = vpop.f32.mrf.mxu0
        %v3355 = vadd.f32 %v3186, %v3354
        %3356 = vmatmul.bf16.gmra.mxu0 %v2752
        %v3357 = vpop.f32.mrf.mxu0
        %v3358 = vadd.f32 %v3189, %v3357
        %v3359 = vpop.f32.mrf.mxu0
        %v3360 = vadd.f32 %v3191, %v3359
        %3361 = vmatmul.bf16.gmra.mxu0 %v2756
        %v3362 = vpop.f32.mrf.mxu0
        %v3363 = vadd.f32 %v3194, %v3362
        %v3364 = vpop.f32.mrf.mxu0
        %v3365 = vadd.f32 %v3196, %v3364
        %3366 = vmatmul.bf16.gmra.mxu0 %v2760
        %v3367 = vpop.f32.mrf.mxu0
        %v3368 = vadd.f32 %v3199, %v3367
        %v3369 = vpop.f32.mrf.mxu0
        %v3370 = vadd.f32 %v3201, %v3369
        %3371 = vmatmul.bf16.gmra.mxu0 %v2764
        %v3372 = vpop.f32.mrf.mxu0
        %v3373 = vadd.f32 %v3204, %v3372
        %v3374 = vpop.f32.mrf.mxu0
        %v3375 = vadd.f32 %v3206, %v3374
        %3376 = vmatmul.bf16.gmra.mxu0 %v2768
        %v3377 = vpop.f32.mrf.mxu0
        %v3378 = vadd.f32 %v3209, %v3377
        %v3379 = vpop.f32.mrf.mxu0
        %v3380 = vadd.f32 %v3211, %v3379
        %3381 = vmatmul.bf16.gmra.mxu0 %v2772
        %v3382 = vpop.f32.mrf.mxu0
        %v3383 = vadd.f32 %v3214, %v3382
        %v3384 = vpop.f32.mrf.mxu0
        %v3385 = vadd.f32 %v3216, %v3384
        %3386 = vmatmul.bf16.gmra.mxu0 %v2776
        %v3387 = vpop.f32.mrf.mxu0
        %v3388 = vadd.f32 %v3219, %v3387
        %v3389 = vpop.f32.mrf.mxu0
        %v3390 = vadd.f32 %v3221, %v3389
        %3391 = vmatmul.bf16.gmra.mxu0 %v2780
        %v3392 = vpop.f32.mrf.mxu0
        %v3393 = vadd.f32 %v3224, %v3392
        %v3394 = vpop.f32.mrf.mxu0
        %v3395 = vadd.f32 %v3226, %v3394
        %3396 = vmatmul.bf16.gmra.mxu0 %v2784
        %v3397 = vpop.f32.mrf.mxu0
        %v3398 = vadd.f32 %v3229, %v3397
        %v3399 = vpop.f32.mrf.mxu0
        %v3400 = vadd.f32 %v3231, %v3399
        %3401 = vmatmul.bf16.gmra.mxu0 %v2788
        %v3402 = vpop.f32.mrf.mxu0
        %v3403 = vadd.f32 %v3234, %v3402
        %v3404 = vpop.f32.mrf.mxu0
        %v3405 = vadd.f32 %v3236, %v3404
        %3406 = vmatmul.bf16.gmra.mxu0 %v2792
        %v3407 = vpop.f32.mrf.mxu0
        %v3408 = vadd.f32 %v3239, %v3407
        %v3409 = vpop.f32.mrf.mxu0
        %v3410 = vadd.f32 %v3241, %v3409
        %3411 = vmatmul.bf16.gmra.mxu0 %v2796
        %v3412 = vpop.f32.mrf.mxu0
        %v3413 = vadd.f32 %v3244, %v3412
        %v3414 = vpop.f32.mrf.mxu0
        %v3415 = vadd.f32 %v3246, %v3414
        %3416 = vmatmul.bf16.gmra.mxu0 %v2800
        %v3417 = vpop.f32.mrf.mxu0
        %v3418 = vadd.f32 %v3249, %v3417
        %v3419 = vpop.f32.mrf.mxu0
        %v3420 = vadd.f32 %v3251, %v3419
        %3421 = vmatmul.bf16.gmra.mxu0 %v2804
        %v3422 = vpop.f32.mrf.mxu0
        %v3423 = vadd.f32 %v3254, %v3422
        %v3424 = vpop.f32.mrf.mxu0
        %v3425 = vadd.f32 %v3256, %v3424
        %3426 = vmatmul.bf16.gmra.mxu0 %v2808
        %v3427 = vpop.f32.mrf.mxu0
        %v3428 = vadd.f32 %v3259, %v3427
        %v3429 = vpop.f32.mrf.mxu0
        %v3430 = vadd.f32 %v3261, %v3429
        %3431 = vmatmul.bf16.gmra.mxu0 %v2812
        %v3432 = vpop.f32.mrf.mxu0
        %v3433 = vadd.f32 %v3264, %v3432
        %v3434 = vpop.f32.mrf.mxu0
        %v3435 = vadd.f32 %v3266, %v3434
        %3436 = vmatmul.bf16.gmra.mxu0 %v2816
        %v3437 = vpop.f32.mrf.mxu0
        %v3438 = vadd.f32 %v3269, %v3437
        %v3439 = vpop.f32.mrf.mxu0
        %v3440 = vadd.f32 %v3271, %v3439
        %3441 = vmatmul.bf16.gmra.mxu0 %v2820
        %v3442 = vpop.f32.mrf.mxu0
        %v3443 = vadd.f32 %v3274, %v3442
        %v3444 = vpop.f32.mrf.mxu0
        %v3445 = vadd.f32 %v3276, %v3444
        %3446 = vmatmul.bf16.gmra.mxu0 %v2824
        %v3447 = vpop.f32.mrf.mxu0
        %v3448 = vadd.f32 %v3279, %v3447
        %v3449 = vpop.f32.mrf.mxu0
        %v3450 = vadd.f32 %v3281, %v3449
        %3451 = vmatmul.bf16.gmra.mxu0 %v2828
        %v3452 = vpop.f32.mrf.mxu0
        %v3453 = vadd.f32 %v3284, %v3452
        %v3454 = vpop.f32.mrf.mxu0
        %v3455 = vadd.f32 %v3286, %v3454
        %3456 = vmatmul.bf16.gmra.mxu0 %v2832
        %v3457 = vpop.f32.mrf.mxu0
        %v3458 = vadd.f32 %v3289, %v3457
        %v3459 = vpop.f32.mrf.mxu0
        %v3460 = vadd.f32 %v3291, %v3459
        %3461 = vmatmul.bf16.gmra.mxu0 %v2836
        %v3462 = vpop.f32.mrf.mxu0
        %v3463 = vadd.f32 %v3294, %v3462
        %v3464 = vpop.f32.mrf.mxu0
        %v3465 = vadd.f32 %v3296, %v3464
        %3466 = vmatmul.bf16.gmra.mxu0 %v2840
        %v3467 = vpop.f32.mrf.mxu0
        %v3468 = vadd.f32 %v3299, %v3467
        %v3469 = vpop.f32.mrf.mxu0
        %v3470 = vadd.f32 %v3301, %v3469
        %3471 = vmatmul.bf16.gmra.mxu0 %v2844
        %v3472 = vpop.f32.mrf.mxu0
        %v3473 = vadd.f32 %v3304, %v3472
        %v3474 = vpop.f32.mrf.mxu0
        %v3475 = vadd.f32 %v3306, %v3474
        %3476 = vmatmul.bf16.gmra.mxu0 %v2848
        %v3477 = vpop.f32.mrf.mxu0
        %v3478 = vadd.f32 %v3309, %v3477
        %v3479 = vpop.f32.mrf.mxu0
        %v3480 = vadd.f32 %v3311, %v3479
        %3481 = vmatmul.bf16.gmra.mxu0 %v2852
        %v3482 = vpop.f32.mrf.mxu0
        %v3483 = vadd.f32 %v3314, %v3482
        %v3484 = vpop.f32.mrf.mxu0
        %v3485 = vadd.f32 %v3316, %v3484
        %3486 = vmatmul.bf16.gmra.mxu0 %v2856
        %v3487 = vpop.f32.mrf.mxu0
        %v3488 = vadd.f32 %v3319, %v3487
        %v3489 = vpop.f32.mrf.mxu0
        %v3490 = vadd.f32 %v3321, %v3489
        %3491 = vmatmul.bf16.gmra.mxu0 %v2860
        %v3492 = vpop.f32.mrf.mxu0
        %v3493 = vadd.f32 %v3324, %v3492
        %v3494 = vpop.f32.mrf.mxu0
        %v3495 = vadd.f32 %v3326, %v3494
        %3496 = vdwg.mxu0
        %3497 = vmatpush.bf16.msra.mxu0 %v585
        %3498 = vmatpush.bf16.msra.mxu0 %v584
        %3499 = vmatpush.bf16.msra.mxu0 %v583
        %3500 = vmatpush.bf16.msra.mxu0 %v582
        %3501 = vmatpush.bf16.msra.mxu0 %v581
        %3502 = vmatpush.bf16.msra.mxu0 %v580
        %3503 = vmatpush.bf16.msra.mxu0 %v579
        %3504 = vmatpush.bf16.msra.mxu0 %v578
        %3505 = vmatmul.bf16.gmra.mxu0 %v2737
        %v3506 = vpop.f32.mrf.mxu0
        %v3507 = vadd.f32 %v3338, %v3506
        %v3508 = vpop.f32.mrf.mxu0
        %v3509 = vadd.f32 %v3340, %v3508
        %3510 = vmatmul.bf16.gmra.mxu0 %v2741
        %v3511 = vpop.f32.mrf.mxu0
        %v3512 = vadd.f32 %v3343, %v3511
        %v3513 = vpop.f32.mrf.mxu0
        %v3514 = vadd.f32 %v3345, %v3513
        %3515 = vmatmul.bf16.gmra.mxu0 %v2745
        %v3516 = vpop.f32.mrf.mxu0
        %v3517 = vadd.f32 %v3348, %v3516
        %v3518 = vpop.f32.mrf.mxu0
        %v3519 = vadd.f32 %v3350, %v3518
        %3520 = vmatmul.bf16.gmra.mxu0 %v2749
        %v3521 = vpop.f32.mrf.mxu0
        %v3522 = vadd.f32 %v3353, %v3521
        %v3523 = vpop.f32.mrf.mxu0
        %v3524 = vadd.f32 %v3355, %v3523
        %3525 = vmatmul.bf16.gmra.mxu0 %v2753
        %v3526 = vpop.f32.mrf.mxu0
        %v3527 = vadd.f32 %v3358, %v3526
        %v3528 = vpop.f32.mrf.mxu0
        %v3529 = vadd.f32 %v3360, %v3528
        %3530 = vmatmul.bf16.gmra.mxu0 %v2757
        %v3531 = vpop.f32.mrf.mxu0
        %v3532 = vadd.f32 %v3363, %v3531
        %v3533 = vpop.f32.mrf.mxu0
        %v3534 = vadd.f32 %v3365, %v3533
        %3535 = vmatmul.bf16.gmra.mxu0 %v2761
        %v3536 = vpop.f32.mrf.mxu0
        %v3537 = vadd.f32 %v3368, %v3536
        %v3538 = vpop.f32.mrf.mxu0
        %v3539 = vadd.f32 %v3370, %v3538
        %3540 = vmatmul.bf16.gmra.mxu0 %v2765
        %v3541 = vpop.f32.mrf.mxu0
        %v3542 = vadd.f32 %v3373, %v3541
        %v3543 = vpop.f32.mrf.mxu0
        %v3544 = vadd.f32 %v3375, %v3543
        %3545 = vmatmul.bf16.gmra.mxu0 %v2769
        %v3546 = vpop.f32.mrf.mxu0
        %v3547 = vadd.f32 %v3378, %v3546
        %v3548 = vpop.f32.mrf.mxu0
        %v3549 = vadd.f32 %v3380, %v3548
        %3550 = vmatmul.bf16.gmra.mxu0 %v2773
        %v3551 = vpop.f32.mrf.mxu0
        %v3552 = vadd.f32 %v3383, %v3551
        %v3553 = vpop.f32.mrf.mxu0
        %v3554 = vadd.f32 %v3385, %v3553
        %3555 = vmatmul.bf16.gmra.mxu0 %v2777
        %v3556 = vpop.f32.mrf.mxu0
        %v3557 = vadd.f32 %v3388, %v3556
        %v3558 = vpop.f32.mrf.mxu0
        %v3559 = vadd.f32 %v3390, %v3558
        %3560 = vmatmul.bf16.gmra.mxu0 %v2781
        %v3561 = vpop.f32.mrf.mxu0
        %v3562 = vadd.f32 %v3393, %v3561
        %v3563 = vpop.f32.mrf.mxu0
        %v3564 = vadd.f32 %v3395, %v3563
        %3565 = vmatmul.bf16.gmra.mxu0 %v2785
        %v3566 = vpop.f32.mrf.mxu0
        %v3567 = vadd.f32 %v3398, %v3566
        %v3568 = vpop.f32.mrf.mxu0
        %v3569 = vadd.f32 %v3400, %v3568
        %3570 = vmatmul.bf16.gmra.mxu0 %v2789
        %v3571 = vpop.f32.mrf.mxu0
        %v3572 = vadd.f32 %v3403, %v3571
        %v3573 = vpop.f32.mrf.mxu0
        %v3574 = vadd.f32 %v3405, %v3573
        %3575 = vmatmul.bf16.gmra.mxu0 %v2793
        %v3576 = vpop.f32.mrf.mxu0
        %v3577 = vadd.f32 %v3408, %v3576
        %v3578 = vpop.f32.mrf.mxu0
        %v3579 = vadd.f32 %v3410, %v3578
        %3580 = vmatmul.bf16.gmra.mxu0 %v2797
        %v3581 = vpop.f32.mrf.mxu0
        %v3582 = vadd.f32 %v3413, %v3581
        %v3583 = vpop.f32.mrf.mxu0
        %v3584 = vadd.f32 %v3415, %v3583
        %3585 = vmatmul.bf16.gmra.mxu0 %v2801
        %v3586 = vpop.f32.mrf.mxu0
        %v3587 = vadd.f32 %v3418, %v3586
        %v3588 = vpop.f32.mrf.mxu0
        %v3589 = vadd.f32 %v3420, %v3588
        %3590 = vmatmul.bf16.gmra.mxu0 %v2805
        %v3591 = vpop.f32.mrf.mxu0
        %v3592 = vadd.f32 %v3423, %v3591
        %v3593 = vpop.f32.mrf.mxu0
        %v3594 = vadd.f32 %v3425, %v3593
        %3595 = vmatmul.bf16.gmra.mxu0 %v2809
        %v3596 = vpop.f32.mrf.mxu0
        %v3597 = vadd.f32 %v3428, %v3596
        %v3598 = vpop.f32.mrf.mxu0
        %v3599 = vadd.f32 %v3430, %v3598
        %3600 = vmatmul.bf16.gmra.mxu0 %v2813
        %v3601 = vpop.f32.mrf.mxu0
        %v3602 = vadd.f32 %v3433, %v3601
        %v3603 = vpop.f32.mrf.mxu0
        %v3604 = vadd.f32 %v3435, %v3603
        %3605 = vmatmul.bf16.gmra.mxu0 %v2817
        %v3606 = vpop.f32.mrf.mxu0
        %v3607 = vadd.f32 %v3438, %v3606
        %v3608 = vpop.f32.mrf.mxu0
        %v3609 = vadd.f32 %v3440, %v3608
        %3610 = vmatmul.bf16.gmra.mxu0 %v2821
        %v3611 = vpop.f32.mrf.mxu0
        %v3612 = vadd.f32 %v3443, %v3611
        %v3613 = vpop.f32.mrf.mxu0
        %v3614 = vadd.f32 %v3445, %v3613
        %3615 = vmatmul.bf16.gmra.mxu0 %v2825
        %v3616 = vpop.f32.mrf.mxu0
        %v3617 = vadd.f32 %v3448, %v3616
        %v3618 = vpop.f32.mrf.mxu0
        %v3619 = vadd.f32 %v3450, %v3618
        %3620 = vmatmul.bf16.gmra.mxu0 %v2829
        %v3621 = vpop.f32.mrf.mxu0
        %v3622 = vadd.f32 %v3453, %v3621
        %v3623 = vpop.f32.mrf.mxu0
        %v3624 = vadd.f32 %v3455, %v3623
        %3625 = vmatmul.bf16.gmra.mxu0 %v2833
        %v3626 = vpop.f32.mrf.mxu0
        %v3627 = vadd.f32 %v3458, %v3626
        %v3628 = vpop.f32.mrf.mxu0
        %v3629 = vadd.f32 %v3460, %v3628
        %3630 = vmatmul.bf16.gmra.mxu0 %v2837
        %v3631 = vpop.f32.mrf.mxu0
        %v3632 = vadd.f32 %v3463, %v3631
        %v3633 = vpop.f32.mrf.mxu0
        %v3634 = vadd.f32 %v3465, %v3633
        %3635 = vmatmul.bf16.gmra.mxu0 %v2841
        %v3636 = vpop.f32.mrf.mxu0
        %v3637 = vadd.f32 %v3468, %v3636
        %v3638 = vpop.f32.mrf.mxu0
        %v3639 = vadd.f32 %v3470, %v3638
        %3640 = vmatmul.bf16.gmra.mxu0 %v2845
        %v3641 = vpop.f32.mrf.mxu0
        %v3642 = vadd.f32 %v3473, %v3641
        %v3643 = vpop.f32.mrf.mxu0
        %v3644 = vadd.f32 %v3475, %v3643
        %3645 = vmatmul.bf16.gmra.mxu0 %v2849
        %v3646 = vpop.f32.mrf.mxu0
        %v3647 = vadd.f32 %v3478, %v3646
        %v3648 = vpop.f32.mrf.mxu0
        %v3649 = vadd.f32 %v3480, %v3648
        %3650 = vmatmul.bf16.gmra.mxu0 %v2853
        %v3651 = vpop.f32.mrf.mxu0
        %v3652 = vadd.f32 %v3483, %v3651
        %v3653 = vpop.f32.mrf.mxu0
        %v3654 = vadd.f32 %v3485, %v3653
        %3655 = vmatmul.bf16.gmra.mxu0 %v2857
        %v3656 = vpop.f32.mrf.mxu0
        %v3657 = vadd.f32 %v3488, %v3656
        %v3658 = vpop.f32.mrf.mxu0
        %v3659 = vadd.f32 %v3490, %v3658
        %3660 = vmatmul.bf16.gmra.mxu0 %v2861
        %v3661 = vpop.f32.mrf.mxu0
        %v3662 = vadd.f32 %v3493, %v3661
        %v3663 = vpop.f32.mrf.mxu0
        %v3664 = vadd.f32 %v3495, %v3663
        %3665 = vdwg.mxu0
        %v3666 = vld [vmem:[#allocation9 + $0x20] sm:$0xff]
        %v3667 = vld [vmem:[#allocation9 + $0x28] sm:$0xff]
        %v3668 = vld [vmem:[#allocation9 + $0x50] sm:$0xff]
        %v3669 = vld [vmem:[#allocation9 + $0x58] sm:$0xff]
        %v3670 = vld [vmem:[#allocation9 + $0x80] sm:$0xff]
        %v3671 = vld [vmem:[#allocation9 + $0x88] sm:$0xff]
        %v3672 = vld [vmem:[#allocation9 + $0xb0] sm:$0xff]
        %v3673 = vld [vmem:[#allocation9 + $0xb8] sm:$0xff]
        %v3674 = vld [vmem:[#allocation9 + $0xe0] sm:$0xff]
        %v3675 = vld [vmem:[#allocation9 + $0xe8] sm:$0xff]
        %v3676 = vld [vmem:[#allocation9 + $0x110] sm:$0xff]
        %v3677 = vld [vmem:[#allocation9 + $0x118] sm:$0xff]
        %v3678 = vld [vmem:[#allocation9 + $0x140] sm:$0xff]
        %v3679 = vld [vmem:[#allocation9 + $0x148] sm:$0xff]
        %v3680 = vld [vmem:[#allocation9 + $0x170] sm:$0xff]
        %v3681 = vld [vmem:[#allocation9 + $0x178] sm:$0xff]
        %v3682 = vld [vmem:[#allocation9 + $0x1a0] sm:$0xff]
        %v3683 = vld [vmem:[#allocation9 + $0x1a8] sm:$0xff]
        %v3684 = vld [vmem:[#allocation9 + $0x1d0] sm:$0xff]
        %v3685 = vld [vmem:[#allocation9 + $0x1d8] sm:$0xff]
        %v3686 = vld [vmem:[#allocation9 + $0x200] sm:$0xff]
        %v3687 = vld [vmem:[#allocation9 + $0x208] sm:$0xff]
        %v3688 = vld [vmem:[#allocation9 + $0x230] sm:$0xff]
        %v3689 = vld [vmem:[#allocation9 + $0x238] sm:$0xff]
        %v3690 = vld [vmem:[#allocation9 + $0x260] sm:$0xff]
        %v3691 = vld [vmem:[#allocation9 + $0x268] sm:$0xff]
        %v3692 = vld [vmem:[#allocation9 + $0x290] sm:$0xff]
        %v3693 = vld [vmem:[#allocation9 + $0x298] sm:$0xff]
        %v3694 = vld [vmem:[#allocation9 + $0x2c0] sm:$0xff]
        %v3695 = vld [vmem:[#allocation9 + $0x2c8] sm:$0xff]
        %v3696 = vld [vmem:[#allocation9 + $0x2f0] sm:$0xff]
        %v3697 = vld [vmem:[#allocation9 + $0x2f8] sm:$0xff]
        %v3698 = vld [vmem:[#allocation9 + $0x320] sm:$0xff]
        %v3699 = vld [vmem:[#allocation9 + $0x328] sm:$0xff]
        %v3700 = vld [vmem:[#allocation9 + $0x350] sm:$0xff]
        %v3701 = vld [vmem:[#allocation9 + $0x358] sm:$0xff]
        %v3702 = vld [vmem:[#allocation9 + $0x380] sm:$0xff]
        %v3703 = vld [vmem:[#allocation9 + $0x388] sm:$0xff]
        %v3704 = vld [vmem:[#allocation9 + $0x3b0] sm:$0xff]
        %v3705 = vld [vmem:[#allocation9 + $0x3b8] sm:$0xff]
        %v3706 = vld [vmem:[#allocation9 + $0x3e0] sm:$0xff]
        %v3707 = vld [vmem:[#allocation9 + $0x3e8] sm:$0xff]
        %v3708 = vld [vmem:[#allocation9 + $0x410] sm:$0xff]
        %v3709 = vld [vmem:[#allocation9 + $0x418] sm:$0xff]
        %v3710 = vld [vmem:[#allocation9 + $0x440] sm:$0xff]
        %v3711 = vld [vmem:[#allocation9 + $0x448] sm:$0xff]
        %v3712 = vld [vmem:[#allocation9 + $0x470] sm:$0xff]
        %v3713 = vld [vmem:[#allocation9 + $0x478] sm:$0xff]
        %v3714 = vld [vmem:[#allocation9 + $0x4a0] sm:$0xff]
        %v3715 = vld [vmem:[#allocation9 + $0x4a8] sm:$0xff]
        %v3716 = vld [vmem:[#allocation9 + $0x4d0] sm:$0xff]
        %v3717 = vld [vmem:[#allocation9 + $0x4d8] sm:$0xff]
        %v3718 = vld [vmem:[#allocation9 + $0x500] sm:$0xff]
        %v3719 = vld [vmem:[#allocation9 + $0x508] sm:$0xff]
        %v3720 = vld [vmem:[#allocation9 + $0x530] sm:$0xff]
        %v3721 = vld [vmem:[#allocation9 + $0x538] sm:$0xff]
        %v3722 = vld [vmem:[#allocation9 + $0x560] sm:$0xff]
        %v3723 = vld [vmem:[#allocation9 + $0x568] sm:$0xff]
        %v3724 = vld [vmem:[#allocation9 + $0x590] sm:$0xff]
        %v3725 = vld [vmem:[#allocation9 + $0x598] sm:$0xff]
        %v3726 = vld [vmem:[#allocation9 + $0x5c0] sm:$0xff]
        %v3727 = vld [vmem:[#allocation9 + $0x5c8] sm:$0xff]
        %v3728 = vld [vmem:[#allocation9 + $0x5f0] sm:$0xff]
        %v3729 = vld [vmem:[#allocation9 + $0x5f8] sm:$0xff]
        %v3730 = vld [vmem:[#allocation9 + $0x620] sm:$0xff]
        %v3731 = vld [vmem:[#allocation9 + $0x628] sm:$0xff]
        %v3732 = vld [vmem:[#allocation9 + $0x650] sm:$0xff]
        %v3733 = vld [vmem:[#allocation9 + $0x658] sm:$0xff]
        %v3734 = vld [vmem:[#allocation9 + $0x680] sm:$0xff]
        %v3735 = vld [vmem:[#allocation9 + $0x688] sm:$0xff]
        %v3736 = vld [vmem:[#allocation9 + $0x6b0] sm:$0xff]
        %v3737 = vld [vmem:[#allocation9 + $0x6b8] sm:$0xff]
        %v3738 = vld [vmem:[#allocation9 + $0x6e0] sm:$0xff]
        %v3739 = vld [vmem:[#allocation9 + $0x6e8] sm:$0xff]
        %v3740 = vld [vmem:[#allocation9 + $0x710] sm:$0xff]
        %v3741 = vld [vmem:[#allocation9 + $0x718] sm:$0xff]
        %v3742 = vld [vmem:[#allocation9 + $0x740] sm:$0xff]
        %v3743 = vld [vmem:[#allocation9 + $0x748] sm:$0xff]
        %v3744 = vld [vmem:[#allocation9 + $0x770] sm:$0xff]
        %v3745 = vld [vmem:[#allocation9 + $0x778] sm:$0xff]
        %v3746 = vld [vmem:[#allocation9 + $0x7a0] sm:$0xff]
        %v3747 = vld [vmem:[#allocation9 + $0x7a8] sm:$0xff]
        %v3748 = vld [vmem:[#allocation9 + $0x7d0] sm:$0xff]
        %v3749 = vld [vmem:[#allocation9 + $0x7d8] sm:$0xff]
        %v3750 = vld [vmem:[#allocation9 + $0x800] sm:$0xff]
        %v3751 = vld [vmem:[#allocation9 + $0x808] sm:$0xff]
        %v3752 = vld [vmem:[#allocation9 + $0x830] sm:$0xff]
        %v3753 = vld [vmem:[#allocation9 + $0x838] sm:$0xff]
        %v3754 = vld [vmem:[#allocation9 + $0x860] sm:$0xff]
        %v3755 = vld [vmem:[#allocation9 + $0x868] sm:$0xff]
        %v3756 = vld [vmem:[#allocation9 + $0x890] sm:$0xff]
        %v3757 = vld [vmem:[#allocation9 + $0x898] sm:$0xff]
        %v3758 = vld [vmem:[#allocation9 + $0x8c0] sm:$0xff]
        %v3759 = vld [vmem:[#allocation9 + $0x8c8] sm:$0xff]
        %v3760 = vld [vmem:[#allocation9 + $0x8f0] sm:$0xff]
        %v3761 = vld [vmem:[#allocation9 + $0x8f8] sm:$0xff]
        %v3762 = vld [vmem:[#allocation9 + $0x920] sm:$0xff]
        %v3763 = vld [vmem:[#allocation9 + $0x928] sm:$0xff]
        %v3764 = vld [vmem:[#allocation9 + $0x950] sm:$0xff]
        %v3765 = vld [vmem:[#allocation9 + $0x958] sm:$0xff]
        %v3766 = vld [vmem:[#allocation9 + $0x980] sm:$0xff]
        %v3767 = vld [vmem:[#allocation9 + $0x988] sm:$0xff]
        %v3768 = vld [vmem:[#allocation9 + $0x9b0] sm:$0xff]
        %v3769 = vld [vmem:[#allocation9 + $0x9b8] sm:$0xff]
        %v3770 = vld [vmem:[#allocation9 + $0x9e0] sm:$0xff]
        %v3771 = vld [vmem:[#allocation9 + $0x9e8] sm:$0xff]
        %v3772 = vld [vmem:[#allocation9 + $0xa10] sm:$0xff]
        %v3773 = vld [vmem:[#allocation9 + $0xa18] sm:$0xff]
        %v3774 = vld [vmem:[#allocation9 + $0xa40] sm:$0xff]
        %v3775 = vld [vmem:[#allocation9 + $0xa48] sm:$0xff]
        %v3776 = vld [vmem:[#allocation9 + $0xa70] sm:$0xff]
        %v3777 = vld [vmem:[#allocation9 + $0xa78] sm:$0xff]
        %v3778 = vld [vmem:[#allocation9 + $0xaa0] sm:$0xff]
        %v3779 = vld [vmem:[#allocation9 + $0xaa8] sm:$0xff]
        %v3780 = vld [vmem:[#allocation9 + $0xad0] sm:$0xff]
        %v3781 = vld [vmem:[#allocation9 + $0xad8] sm:$0xff]
        %v3782 = vld [vmem:[#allocation9 + $0xb00] sm:$0xff]
        %v3783 = vld [vmem:[#allocation9 + $0xb08] sm:$0xff]
        %v3784 = vld [vmem:[#allocation9 + $0xb30] sm:$0xff]
        %v3785 = vld [vmem:[#allocation9 + $0xb38] sm:$0xff]
        %v3786 = vld [vmem:[#allocation9 + $0xb60] sm:$0xff]
        %v3787 = vld [vmem:[#allocation9 + $0xb68] sm:$0xff]
        %v3788 = vld [vmem:[#allocation9 + $0xb90] sm:$0xff]
        %v3789 = vld [vmem:[#allocation9 + $0xb98] sm:$0xff]
        %v3790 = vld [vmem:[#allocation9 + $0xbc0] sm:$0xff]
        %v3791 = vld [vmem:[#allocation9 + $0xbc8] sm:$0xff]
        %v3792 = vld [vmem:[#allocation9 + $0xbf0] sm:$0xff]
        %v3793 = vld [vmem:[#allocation9 + $0xbf8] sm:$0xff]
        %v3922 = vunpack.c.l.b16 %v3666
        %v3923 = vunpack.c.h.b16 %v3666
        %v3924 = vunpack.c.l.b16 %v3667
        %v3925 = vunpack.c.h.b16 %v3667
        %v3926 = vunpack.c.l.b16 %v3668
        %v3927 = vunpack.c.h.b16 %v3668
        %v3928 = vunpack.c.l.b16 %v3669
        %v3929 = vunpack.c.h.b16 %v3669
        %v3930 = vunpack.c.l.b16 %v3670
        %v3931 = vunpack.c.h.b16 %v3670
        %v3932 = vunpack.c.l.b16 %v3671
        %v3933 = vunpack.c.h.b16 %v3671
        %v3934 = vunpack.c.l.b16 %v3672
        %v3935 = vunpack.c.h.b16 %v3672
        %v3936 = vunpack.c.l.b16 %v3673
        %v3937 = vunpack.c.h.b16 %v3673
        %v3938 = vunpack.c.l.b16 %v3674
        %v3939 = vunpack.c.h.b16 %v3674
        %v3940 = vunpack.c.l.b16 %v3675
        %v3941 = vunpack.c.h.b16 %v3675
        %v3942 = vunpack.c.l.b16 %v3676
        %v3943 = vunpack.c.h.b16 %v3676
        %v3944 = vunpack.c.l.b16 %v3677
        %v3945 = vunpack.c.h.b16 %v3677
        %v3946 = vunpack.c.l.b16 %v3678
        %v3947 = vunpack.c.h.b16 %v3678
        %v3948 = vunpack.c.l.b16 %v3679
        %v3949 = vunpack.c.h.b16 %v3679
        %v3950 = vunpack.c.l.b16 %v3680
        %v3951 = vunpack.c.h.b16 %v3680
        %v3952 = vunpack.c.l.b16 %v3681
        %v3953 = vunpack.c.h.b16 %v3681
        %v3954 = vunpack.c.l.b16 %v3682
        %v3955 = vunpack.c.h.b16 %v3682
        %v3956 = vunpack.c.l.b16 %v3683
        %v3957 = vunpack.c.h.b16 %v3683
        %v3958 = vunpack.c.l.b16 %v3684
        %v3959 = vunpack.c.h.b16 %v3684
        %v3960 = vunpack.c.l.b16 %v3685
        %v3961 = vunpack.c.h.b16 %v3685
        %v3962 = vunpack.c.l.b16 %v3686
        %v3963 = vunpack.c.h.b16 %v3686
        %v3964 = vunpack.c.l.b16 %v3687
        %v3965 = vunpack.c.h.b16 %v3687
        %v3966 = vunpack.c.l.b16 %v3688
        %v3967 = vunpack.c.h.b16 %v3688
        %v3968 = vunpack.c.l.b16 %v3689
        %v3969 = vunpack.c.h.b16 %v3689
        %v3970 = vunpack.c.l.b16 %v3690
        %v3971 = vunpack.c.h.b16 %v3690
        %v3972 = vunpack.c.l.b16 %v3691
        %v3973 = vunpack.c.h.b16 %v3691
        %v3974 = vunpack.c.l.b16 %v3692
        %v3975 = vunpack.c.h.b16 %v3692
        %v3976 = vunpack.c.l.b16 %v3693
        %v3977 = vunpack.c.h.b16 %v3693
        %v3978 = vunpack.c.l.b16 %v3694
        %v3979 = vunpack.c.h.b16 %v3694
        %v3980 = vunpack.c.l.b16 %v3695
        %v3981 = vunpack.c.h.b16 %v3695
        %v3982 = vunpack.c.l.b16 %v3696
        %v3983 = vunpack.c.h.b16 %v3696
        %v3984 = vunpack.c.l.b16 %v3697
        %v3985 = vunpack.c.h.b16 %v3697
        %v3986 = vunpack.c.l.b16 %v3698
        %v3987 = vunpack.c.h.b16 %v3698
        %v3988 = vunpack.c.l.b16 %v3699
        %v3989 = vunpack.c.h.b16 %v3699
        %v3990 = vunpack.c.l.b16 %v3700
        %v3991 = vunpack.c.h.b16 %v3700
        %v3992 = vunpack.c.l.b16 %v3701
        %v3993 = vunpack.c.h.b16 %v3701
        %v3994 = vunpack.c.l.b16 %v3702
        %v3995 = vunpack.c.h.b16 %v3702
        %v3996 = vunpack.c.l.b16 %v3703
        %v3997 = vunpack.c.h.b16 %v3703
        %v3998 = vunpack.c.l.b16 %v3704
        %v3999 = vunpack.c.h.b16 %v3704
        %v4000 = vunpack.c.l.b16 %v3705
        %v4001 = vunpack.c.h.b16 %v3705
        %v4002 = vunpack.c.l.b16 %v3706
        %v4003 = vunpack.c.h.b16 %v3706
        %v4004 = vunpack.c.l.b16 %v3707
        %v4005 = vunpack.c.h.b16 %v3707
        %v4006 = vunpack.c.l.b16 %v3708
        %v4007 = vunpack.c.h.b16 %v3708
        %v4008 = vunpack.c.l.b16 %v3709
        %v4009 = vunpack.c.h.b16 %v3709
        %v4010 = vunpack.c.l.b16 %v3710
        %v4011 = vunpack.c.h.b16 %v3710
        %v4012 = vunpack.c.l.b16 %v3711
        %v4013 = vunpack.c.h.b16 %v3711
        %v4014 = vunpack.c.l.b16 %v3712
        %v4015 = vunpack.c.h.b16 %v3712
        %v4016 = vunpack.c.l.b16 %v3713
        %v4017 = vunpack.c.h.b16 %v3713
        %v4018 = vunpack.c.l.b16 %v3714
        %v4019 = vunpack.c.h.b16 %v3714
        %v4020 = vunpack.c.l.b16 %v3715
        %v4021 = vunpack.c.h.b16 %v3715
        %v4022 = vunpack.c.l.b16 %v3716
        %v4023 = vunpack.c.h.b16 %v3716
        %v4024 = vunpack.c.l.b16 %v3717
        %v4025 = vunpack.c.h.b16 %v3717
        %v4026 = vunpack.c.l.b16 %v3718
        %v4027 = vunpack.c.h.b16 %v3718
        %v4028 = vunpack.c.l.b16 %v3719
        %v4029 = vunpack.c.h.b16 %v3719
        %v4030 = vunpack.c.l.b16 %v3720
        %v4031 = vunpack.c.h.b16 %v3720
        %v4032 = vunpack.c.l.b16 %v3721
        %v4033 = vunpack.c.h.b16 %v3721
        %v4034 = vunpack.c.l.b16 %v3722
        %v4035 = vunpack.c.h.b16 %v3722
        %v4036 = vunpack.c.l.b16 %v3723
        %v4037 = vunpack.c.h.b16 %v3723
        %v4038 = vunpack.c.l.b16 %v3724
        %v4039 = vunpack.c.h.b16 %v3724
        %v4040 = vunpack.c.l.b16 %v3725
        %v4041 = vunpack.c.h.b16 %v3725
        %v4042 = vunpack.c.l.b16 %v3726
        %v4043 = vunpack.c.h.b16 %v3726
        %v4044 = vunpack.c.l.b16 %v3727
        %v4045 = vunpack.c.h.b16 %v3727
        %v4046 = vunpack.c.l.b16 %v3728
        %v4047 = vunpack.c.h.b16 %v3728
        %v4048 = vunpack.c.l.b16 %v3729
        %v4049 = vunpack.c.h.b16 %v3729
        %v4050 = vunpack.c.l.b16 %v3730
        %v4051 = vunpack.c.h.b16 %v3730
        %v4052 = vunpack.c.l.b16 %v3731
        %v4053 = vunpack.c.h.b16 %v3731
        %v4054 = vunpack.c.l.b16 %v3732
        %v4055 = vunpack.c.h.b16 %v3732
        %v4056 = vunpack.c.l.b16 %v3733
        %v4057 = vunpack.c.h.b16 %v3733
        %v4058 = vunpack.c.l.b16 %v3734
        %v4059 = vunpack.c.h.b16 %v3734
        %v4060 = vunpack.c.l.b16 %v3735
        %v4061 = vunpack.c.h.b16 %v3735
        %v4062 = vunpack.c.l.b16 %v3736
        %v4063 = vunpack.c.h.b16 %v3736
        %v4064 = vunpack.c.l.b16 %v3737
        %v4065 = vunpack.c.h.b16 %v3737
        %v4066 = vunpack.c.l.b16 %v3738
        %v4067 = vunpack.c.h.b16 %v3738
        %v4068 = vunpack.c.l.b16 %v3739
        %v4069 = vunpack.c.h.b16 %v3739
        %v4070 = vunpack.c.l.b16 %v3740
        %v4071 = vunpack.c.h.b16 %v3740
        %v4072 = vunpack.c.l.b16 %v3741
        %v4073 = vunpack.c.h.b16 %v3741
        %v4074 = vunpack.c.l.b16 %v3742
        %v4075 = vunpack.c.h.b16 %v3742
        %v4076 = vunpack.c.l.b16 %v3743
        %v4077 = vunpack.c.h.b16 %v3743
        %v4078 = vunpack.c.l.b16 %v3744
        %v4079 = vunpack.c.h.b16 %v3744
        %v4080 = vunpack.c.l.b16 %v3745
        %v4081 = vunpack.c.h.b16 %v3745
        %v4082 = vunpack.c.l.b16 %v3746
        %v4083 = vunpack.c.h.b16 %v3746
        %v4084 = vunpack.c.l.b16 %v3747
        %v4085 = vunpack.c.h.b16 %v3747
        %v4086 = vunpack.c.l.b16 %v3748
        %v4087 = vunpack.c.h.b16 %v3748
        %v4088 = vunpack.c.l.b16 %v3749
        %v4089 = vunpack.c.h.b16 %v3749
        %v4090 = vunpack.c.l.b16 %v3750
        %v4091 = vunpack.c.h.b16 %v3750
        %v4092 = vunpack.c.l.b16 %v3751
        %v4093 = vunpack.c.h.b16 %v3751
        %v4094 = vunpack.c.l.b16 %v3752
        %v4095 = vunpack.c.h.b16 %v3752
        %v4096 = vunpack.c.l.b16 %v3753
        %v4097 = vunpack.c.h.b16 %v3753
        %v4098 = vunpack.c.l.b16 %v3754
        %v4099 = vunpack.c.h.b16 %v3754
        %v4100 = vunpack.c.l.b16 %v3755
        %v4101 = vunpack.c.h.b16 %v3755
        %v4102 = vunpack.c.l.b16 %v3756
        %v4103 = vunpack.c.h.b16 %v3756
        %v4104 = vunpack.c.l.b16 %v3757
        %v4105 = vunpack.c.h.b16 %v3757
        %v4106 = vunpack.c.l.b16 %v3758
        %v4107 = vunpack.c.h.b16 %v3758
        %v4108 = vunpack.c.l.b16 %v3759
        %v4109 = vunpack.c.h.b16 %v3759
        %v4110 = vunpack.c.l.b16 %v3760
        %v4111 = vunpack.c.h.b16 %v3760
        %v4112 = vunpack.c.l.b16 %v3761
        %v4113 = vunpack.c.h.b16 %v3761
        %v4114 = vunpack.c.l.b16 %v3762
        %v4115 = vunpack.c.h.b16 %v3762
        %v4116 = vunpack.c.l.b16 %v3763
        %v4117 = vunpack.c.h.b16 %v3763
        %v4118 = vunpack.c.l.b16 %v3764
        %v4119 = vunpack.c.h.b16 %v3764
        %v4120 = vunpack.c.l.b16 %v3765
        %v4121 = vunpack.c.h.b16 %v3765
        %v4122 = vunpack.c.l.b16 %v3766
        %v4123 = vunpack.c.h.b16 %v3766
        %v4124 = vunpack.c.l.b16 %v3767
        %v4125 = vunpack.c.h.b16 %v3767
        %v4126 = vunpack.c.l.b16 %v3768
        %v4127 = vunpack.c.h.b16 %v3768
        %v4128 = vunpack.c.l.b16 %v3769
        %v4129 = vunpack.c.h.b16 %v3769
        %v4130 = vunpack.c.l.b16 %v3770
        %v4131 = vunpack.c.h.b16 %v3770
        %v4132 = vunpack.c.l.b16 %v3771
        %v4133 = vunpack.c.h.b16 %v3771
        %v4134 = vunpack.c.l.b16 %v3772
        %v4135 = vunpack.c.h.b16 %v3772
        %v4136 = vunpack.c.l.b16 %v3773
        %v4137 = vunpack.c.h.b16 %v3773
        %v4138 = vunpack.c.l.b16 %v3774
        %v4139 = vunpack.c.h.b16 %v3774
        %v4140 = vunpack.c.l.b16 %v3775
        %v4141 = vunpack.c.h.b16 %v3775
        %v4142 = vunpack.c.l.b16 %v3776
        %v4143 = vunpack.c.h.b16 %v3776
        %v4144 = vunpack.c.l.b16 %v3777
        %v4145 = vunpack.c.h.b16 %v3777
        %v4146 = vunpack.c.l.b16 %v3778
        %v4147 = vunpack.c.h.b16 %v3778
        %v4148 = vunpack.c.l.b16 %v3779
        %v4149 = vunpack.c.h.b16 %v3779
        %v4150 = vunpack.c.l.b16 %v3780
        %v4151 = vunpack.c.h.b16 %v3780
        %v4152 = vunpack.c.l.b16 %v3781
        %v4153 = vunpack.c.h.b16 %v3781
        %v4154 = vunpack.c.l.b16 %v3782
        %v4155 = vunpack.c.h.b16 %v3782
        %v4156 = vunpack.c.l.b16 %v3783
        %v4157 = vunpack.c.h.b16 %v3783
        %v4158 = vunpack.c.l.b16 %v3784
        %v4159 = vunpack.c.h.b16 %v3784
        %v4160 = vunpack.c.l.b16 %v3785
        %v4161 = vunpack.c.h.b16 %v3785
        %v4162 = vunpack.c.l.b16 %v3786
        %v4163 = vunpack.c.h.b16 %v3786
        %v4164 = vunpack.c.l.b16 %v3787
        %v4165 = vunpack.c.h.b16 %v3787
        %v4166 = vunpack.c.l.b16 %v3788
        %v4167 = vunpack.c.h.b16 %v3788
        %v4168 = vunpack.c.l.b16 %v3789
        %v4169 = vunpack.c.h.b16 %v3789
        %v4170 = vunpack.c.l.b16 %v3790
        %v4171 = vunpack.c.h.b16 %v3790
        %v4172 = vunpack.c.l.b16 %v3791
        %v4173 = vunpack.c.h.b16 %v3791
        %v4174 = vunpack.c.l.b16 %v3792
        %v4175 = vunpack.c.h.b16 %v3792
        %v4176 = vunpack.c.l.b16 %v3793
        %v4177 = vunpack.c.h.b16 %v3793
        %v4178 = vpack.c.b16 %v3926, %v3922
        %v4179 = vpack.c.b16 %v3927, %v3923
        %v4180 = vpack.c.b16 %v3928, %v3924
        %v4181 = vpack.c.b16 %v3929, %v3925
        %v4182 = vpack.c.b16 %v3934, %v3930
        %v4183 = vpack.c.b16 %v3935, %v3931
        %v4184 = vpack.c.b16 %v3936, %v3932
        %v4185 = vpack.c.b16 %v3937, %v3933
        %v4186 = vpack.c.b16 %v3942, %v3938
        %v4187 = vpack.c.b16 %v3943, %v3939
        %v4188 = vpack.c.b16 %v3944, %v3940
        %v4189 = vpack.c.b16 %v3945, %v3941
        %v4190 = vpack.c.b16 %v3950, %v3946
        %v4191 = vpack.c.b16 %v3951, %v3947
        %v4192 = vpack.c.b16 %v3952, %v3948
        %v4193 = vpack.c.b16 %v3953, %v3949
        %v4194 = vpack.c.b16 %v3958, %v3954
        %v4195 = vpack.c.b16 %v3959, %v3955
        %v4196 = vpack.c.b16 %v3960, %v3956
        %v4197 = vpack.c.b16 %v3961, %v3957
        %v4198 = vpack.c.b16 %v3966, %v3962
        %v4199 = vpack.c.b16 %v3967, %v3963
        %v4200 = vpack.c.b16 %v3968, %v3964
        %v4201 = vpack.c.b16 %v3969, %v3965
        %v4202 = vpack.c.b16 %v3974, %v3970
        %v4203 = vpack.c.b16 %v3975, %v3971
        %v4204 = vpack.c.b16 %v3976, %v3972
        %v4205 = vpack.c.b16 %v3977, %v3973
        %v4206 = vpack.c.b16 %v3982, %v3978
        %v4207 = vpack.c.b16 %v3983, %v3979
        %v4208 = vpack.c.b16 %v3984, %v3980
        %v4209 = vpack.c.b16 %v3985, %v3981
        %v4210 = vpack.c.b16 %v3990, %v3986
        %v4211 = vpack.c.b16 %v3991, %v3987
        %v4212 = vpack.c.b16 %v3992, %v3988
        %v4213 = vpack.c.b16 %v3993, %v3989
        %v4214 = vpack.c.b16 %v3998, %v3994
        %v4215 = vpack.c.b16 %v3999, %v3995
        %v4216 = vpack.c.b16 %v4000, %v3996
        %v4217 = vpack.c.b16 %v4001, %v3997
        %v4218 = vpack.c.b16 %v4006, %v4002
        %v4219 = vpack.c.b16 %v4007, %v4003
        %v4220 = vpack.c.b16 %v4008, %v4004
        %v4221 = vpack.c.b16 %v4009, %v4005
        %v4222 = vpack.c.b16 %v4014, %v4010
        %v4223 = vpack.c.b16 %v4015, %v4011
        %v4224 = vpack.c.b16 %v4016, %v4012
        %v4225 = vpack.c.b16 %v4017, %v4013
        %v4226 = vpack.c.b16 %v4022, %v4018
        %v4227 = vpack.c.b16 %v4023, %v4019
        %v4228 = vpack.c.b16 %v4024, %v4020
        %v4229 = vpack.c.b16 %v4025, %v4021
        %v4230 = vpack.c.b16 %v4030, %v4026
        %v4231 = vpack.c.b16 %v4031, %v4027
        %v4232 = vpack.c.b16 %v4032, %v4028
        %v4233 = vpack.c.b16 %v4033, %v4029
        %v4234 = vpack.c.b16 %v4038, %v4034
        %v4235 = vpack.c.b16 %v4039, %v4035
        %v4236 = vpack.c.b16 %v4040, %v4036
        %v4237 = vpack.c.b16 %v4041, %v4037
        %v4238 = vpack.c.b16 %v4046, %v4042
        %v4239 = vpack.c.b16 %v4047, %v4043
        %v4240 = vpack.c.b16 %v4048, %v4044
        %v4241 = vpack.c.b16 %v4049, %v4045
        %v4242 = vpack.c.b16 %v4054, %v4050
        %v4243 = vpack.c.b16 %v4055, %v4051
        %v4244 = vpack.c.b16 %v4056, %v4052
        %v4245 = vpack.c.b16 %v4057, %v4053
        %v4246 = vpack.c.b16 %v4062, %v4058
        %v4247 = vpack.c.b16 %v4063, %v4059
        %v4248 = vpack.c.b16 %v4064, %v4060
        %v4249 = vpack.c.b16 %v4065, %v4061
        %v4250 = vpack.c.b16 %v4070, %v4066
        %v4251 = vpack.c.b16 %v4071, %v4067
        %v4252 = vpack.c.b16 %v4072, %v4068
        %v4253 = vpack.c.b16 %v4073, %v4069
        %v4254 = vpack.c.b16 %v4078, %v4074
        %v4255 = vpack.c.b16 %v4079, %v4075
        %v4256 = vpack.c.b16 %v4080, %v4076
        %v4257 = vpack.c.b16 %v4081, %v4077
        %v4258 = vpack.c.b16 %v4086, %v4082
        %v4259 = vpack.c.b16 %v4087, %v4083
        %v4260 = vpack.c.b16 %v4088, %v4084
        %v4261 = vpack.c.b16 %v4089, %v4085
        %v4262 = vpack.c.b16 %v4094, %v4090
        %v4263 = vpack.c.b16 %v4095, %v4091
        %v4264 = vpack.c.b16 %v4096, %v4092
        %v4265 = vpack.c.b16 %v4097, %v4093
        %v4266 = vpack.c.b16 %v4102, %v4098
        %v4267 = vpack.c.b16 %v4103, %v4099
        %v4268 = vpack.c.b16 %v4104, %v4100
        %v4269 = vpack.c.b16 %v4105, %v4101
        %v4270 = vpack.c.b16 %v4110, %v4106
        %v4271 = vpack.c.b16 %v4111, %v4107
        %v4272 = vpack.c.b16 %v4112, %v4108
        %v4273 = vpack.c.b16 %v4113, %v4109
        %v4274 = vpack.c.b16 %v4118, %v4114
        %v4275 = vpack.c.b16 %v4119, %v4115
        %v4276 = vpack.c.b16 %v4120, %v4116
        %v4277 = vpack.c.b16 %v4121, %v4117
        %v4278 = vpack.c.b16 %v4126, %v4122
        %v4279 = vpack.c.b16 %v4127, %v4123
        %v4280 = vpack.c.b16 %v4128, %v4124
        %v4281 = vpack.c.b16 %v4129, %v4125
        %v4282 = vpack.c.b16 %v4134, %v4130
        %v4283 = vpack.c.b16 %v4135, %v4131
        %v4284 = vpack.c.b16 %v4136, %v4132
        %v4285 = vpack.c.b16 %v4137, %v4133
        %v4286 = vpack.c.b16 %v4142, %v4138
        %v4287 = vpack.c.b16 %v4143, %v4139
        %v4288 = vpack.c.b16 %v4144, %v4140
        %v4289 = vpack.c.b16 %v4145, %v4141
        %v4290 = vpack.c.b16 %v4150, %v4146
        %v4291 = vpack.c.b16 %v4151, %v4147
        %v4292 = vpack.c.b16 %v4152, %v4148
        %v4293 = vpack.c.b16 %v4153, %v4149
        %v4294 = vpack.c.b16 %v4158, %v4154
        %v4295 = vpack.c.b16 %v4159, %v4155
        %v4296 = vpack.c.b16 %v4160, %v4156
        %v4297 = vpack.c.b16 %v4161, %v4157
        %v4298 = vpack.c.b16 %v4166, %v4162
        %v4299 = vpack.c.b16 %v4167, %v4163
        %v4300 = vpack.c.b16 %v4168, %v4164
        %v4301 = vpack.c.b16 %v4169, %v4165
        %v4302 = vpack.c.b16 %v4174, %v4170
        %v4303 = vpack.c.b16 %v4175, %v4171
        %v4304 = vpack.c.b16 %v4176, %v4172
        %v4305 = vpack.c.b16 %v4177, %v4173
        %4434 = vmatpush.bf16.msra.mxu0 %v753
        %4435 = vmatpush.bf16.msra.mxu0 %v752
        %4436 = vmatpush.bf16.msra.mxu0 %v751
        %4437 = vmatpush.bf16.msra.mxu0 %v750
        %4438 = vmatpush.bf16.msra.mxu0 %v749
        %4439 = vmatpush.bf16.msra.mxu0 %v748
        %4440 = vmatpush.bf16.msra.mxu0 %v747
        %4441 = vmatpush.bf16.msra.mxu0 %v746
        %4442 = vmatmul.bf16.gmra.mxu0 %v4178
        %v4443 = vpop.f32.mrf.mxu0
        %v4444 = vadd.f32 0.0, %v4443
        %v4445 = vpop.f32.mrf.mxu0
        %v4446 = vadd.f32 0.0, %v4445
        %4447 = vmatmul.bf16.gmra.mxu0 %v4182
        %v4448 = vpop.f32.mrf.mxu0
        %v4449 = vadd.f32 0.0, %v4448
        %v4450 = vpop.f32.mrf.mxu0
        %v4451 = vadd.f32 0.0, %v4450
        %4452 = vmatmul.bf16.gmra.mxu0 %v4186
        %v4453 = vpop.f32.mrf.mxu0
        %v4454 = vadd.f32 0.0, %v4453
        %v4455 = vpop.f32.mrf.mxu0
        %v4456 = vadd.f32 0.0, %v4455
        %4457 = vmatmul.bf16.gmra.mxu0 %v4190
        %v4458 = vpop.f32.mrf.mxu0
        %v4459 = vadd.f32 0.0, %v4458
        %v4460 = vpop.f32.mrf.mxu0
        %v4461 = vadd.f32 0.0, %v4460
        %4462 = vmatmul.bf16.gmra.mxu0 %v4194
        %v4463 = vpop.f32.mrf.mxu0
        %v4464 = vadd.f32 0.0, %v4463
        %v4465 = vpop.f32.mrf.mxu0
        %v4466 = vadd.f32 0.0, %v4465
        %4467 = vmatmul.bf16.gmra.mxu0 %v4198
        %v4468 = vpop.f32.mrf.mxu0
        %v4469 = vadd.f32 0.0, %v4468
        %v4470 = vpop.f32.mrf.mxu0
        %v4471 = vadd.f32 0.0, %v4470
        %4472 = vmatmul.bf16.gmra.mxu0 %v4202
        %v4473 = vpop.f32.mrf.mxu0
        %v4474 = vadd.f32 0.0, %v4473
        %v4475 = vpop.f32.mrf.mxu0
        %v4476 = vadd.f32 0.0, %v4475
        %4477 = vmatmul.bf16.gmra.mxu0 %v4206
        %v4478 = vpop.f32.mrf.mxu0
        %v4479 = vadd.f32 0.0, %v4478
        %v4480 = vpop.f32.mrf.mxu0
        %v4481 = vadd.f32 0.0, %v4480
        %4482 = vmatmul.bf16.gmra.mxu0 %v4210
        %v4483 = vpop.f32.mrf.mxu0
        %v4484 = vadd.f32 0.0, %v4483
        %v4485 = vpop.f32.mrf.mxu0
        %v4486 = vadd.f32 0.0, %v4485
        %4487 = vmatmul.bf16.gmra.mxu0 %v4214
        %v4488 = vpop.f32.mrf.mxu0
        %v4489 = vadd.f32 0.0, %v4488
        %v4490 = vpop.f32.mrf.mxu0
        %v4491 = vadd.f32 0.0, %v4490
        %4492 = vmatmul.bf16.gmra.mxu0 %v4218
        %v4493 = vpop.f32.mrf.mxu0
        %v4494 = vadd.f32 0.0, %v4493
        %v4495 = vpop.f32.mrf.mxu0
        %v4496 = vadd.f32 0.0, %v4495
        %4497 = vmatmul.bf16.gmra.mxu0 %v4222
        %v4498 = vpop.f32.mrf.mxu0
        %v4499 = vadd.f32 0.0, %v4498
        %v4500 = vpop.f32.mrf.mxu0
        %v4501 = vadd.f32 0.0, %v4500
        %4502 = vmatmul.bf16.gmra.mxu0 %v4226
        %v4503 = vpop.f32.mrf.mxu0
        %v4504 = vadd.f32 0.0, %v4503
        %v4505 = vpop.f32.mrf.mxu0
        %v4506 = vadd.f32 0.0, %v4505
        %4507 = vmatmul.bf16.gmra.mxu0 %v4230
        %v4508 = vpop.f32.mrf.mxu0
        %v4509 = vadd.f32 0.0, %v4508
        %v4510 = vpop.f32.mrf.mxu0
        %v4511 = vadd.f32 0.0, %v4510
        %4512 = vmatmul.bf16.gmra.mxu0 %v4234
        %v4513 = vpop.f32.mrf.mxu0
        %v4514 = vadd.f32 0.0, %v4513
        %v4515 = vpop.f32.mrf.mxu0
        %v4516 = vadd.f32 0.0, %v4515
        %4517 = vmatmul.bf16.gmra.mxu0 %v4238
        %v4518 = vpop.f32.mrf.mxu0
        %v4519 = vadd.f32 0.0, %v4518
        %v4520 = vpop.f32.mrf.mxu0
        %v4521 = vadd.f32 0.0, %v4520
        %4522 = vmatmul.bf16.gmra.mxu0 %v4242
        %v4523 = vpop.f32.mrf.mxu0
        %v4524 = vadd.f32 0.0, %v4523
        %v4525 = vpop.f32.mrf.mxu0
        %v4526 = vadd.f32 0.0, %v4525
        %4527 = vmatmul.bf16.gmra.mxu0 %v4246
        %v4528 = vpop.f32.mrf.mxu0
        %v4529 = vadd.f32 0.0, %v4528
        %v4530 = vpop.f32.mrf.mxu0
        %v4531 = vadd.f32 0.0, %v4530
        %4532 = vmatmul.bf16.gmra.mxu0 %v4250
        %v4533 = vpop.f32.mrf.mxu0
        %v4534 = vadd.f32 0.0, %v4533
        %v4535 = vpop.f32.mrf.mxu0
        %v4536 = vadd.f32 0.0, %v4535
        %4537 = vmatmul.bf16.gmra.mxu0 %v4254
        %v4538 = vpop.f32.mrf.mxu0
        %v4539 = vadd.f32 0.0, %v4538
        %v4540 = vpop.f32.mrf.mxu0
        %v4541 = vadd.f32 0.0, %v4540
        %4542 = vmatmul.bf16.gmra.mxu0 %v4258
        %v4543 = vpop.f32.mrf.mxu0
        %v4544 = vadd.f32 0.0, %v4543
        %v4545 = vpop.f32.mrf.mxu0
        %v4546 = vadd.f32 0.0, %v4545
        %4547 = vmatmul.bf16.gmra.mxu0 %v4262
        %v4548 = vpop.f32.mrf.mxu0
        %v4549 = vadd.f32 0.0, %v4548
        %v4550 = vpop.f32.mrf.mxu0
        %v4551 = vadd.f32 0.0, %v4550
        %4552 = vmatmul.bf16.gmra.mxu0 %v4266
        %v4553 = vpop.f32.mrf.mxu0
        %v4554 = vadd.f32 0.0, %v4553
        %v4555 = vpop.f32.mrf.mxu0
        %v4556 = vadd.f32 0.0, %v4555
        %4557 = vmatmul.bf16.gmra.mxu0 %v4270
        %v4558 = vpop.f32.mrf.mxu0
        %v4559 = vadd.f32 0.0, %v4558
        %v4560 = vpop.f32.mrf.mxu0
        %v4561 = vadd.f32 0.0, %v4560
        %4562 = vmatmul.bf16.gmra.mxu0 %v4274
        %v4563 = vpop.f32.mrf.mxu0
        %v4564 = vadd.f32 0.0, %v4563
        %v4565 = vpop.f32.mrf.mxu0
        %v4566 = vadd.f32 0.0, %v4565
        %4567 = vmatmul.bf16.gmra.mxu0 %v4278
        %v4568 = vpop.f32.mrf.mxu0
        %v4569 = vadd.f32 0.0, %v4568
        %v4570 = vpop.f32.mrf.mxu0
        %v4571 = vadd.f32 0.0, %v4570
        %4572 = vmatmul.bf16.gmra.mxu0 %v4282
        %v4573 = vpop.f32.mrf.mxu0
        %v4574 = vadd.f32 0.0, %v4573
        %v4575 = vpop.f32.mrf.mxu0
        %v4576 = vadd.f32 0.0, %v4575
        %4577 = vmatmul.bf16.gmra.mxu0 %v4286
        %v4578 = vpop.f32.mrf.mxu0
        %v4579 = vadd.f32 0.0, %v4578
        %v4580 = vpop.f32.mrf.mxu0
        %v4581 = vadd.f32 0.0, %v4580
        %4582 = vmatmul.bf16.gmra.mxu0 %v4290
        %v4583 = vpop.f32.mrf.mxu0
        %v4584 = vadd.f32 0.0, %v4583
        %v4585 = vpop.f32.mrf.mxu0
        %v4586 = vadd.f32 0.0, %v4585
        %4587 = vmatmul.bf16.gmra.mxu0 %v4294
        %v4588 = vpop.f32.mrf.mxu0
        %v4589 = vadd.f32 0.0, %v4588
        %v4590 = vpop.f32.mrf.mxu0
        %v4591 = vadd.f32 0.0, %v4590
        %4592 = vmatmul.bf16.gmra.mxu0 %v4298
        %v4593 = vpop.f32.mrf.mxu0
        %v4594 = vadd.f32 0.0, %v4593
        %v4595 = vpop.f32.mrf.mxu0
        %v4596 = vadd.f32 0.0, %v4595
        %4597 = vmatmul.bf16.gmra.mxu0 %v4302
        %v4598 = vpop.f32.mrf.mxu0
        %v4599 = vadd.f32 0.0, %v4598
        %v4600 = vpop.f32.mrf.mxu0
        %v4601 = vadd.f32 0.0, %v4600
        %4602 = vdwg.mxu0
        %4603 = vmatpush.bf16.msra.mxu0 %v761
        %4604 = vmatpush.bf16.msra.mxu0 %v760
        %4605 = vmatpush.bf16.msra.mxu0 %v759
        %4606 = vmatpush.bf16.msra.mxu0 %v758
        %4607 = vmatpush.bf16.msra.mxu0 %v757
        %4608 = vmatpush.bf16.msra.mxu0 %v756
        %4609 = vmatpush.bf16.msra.mxu0 %v755
        %4610 = vmatpush.bf16.msra.mxu0 %v754
        %4611 = vmatmul.bf16.gmra.mxu0 %v4179
        %v4612 = vpop.f32.mrf.mxu0
        %v4613 = vadd.f32 %v4444, %v4612
        %v4614 = vpop.f32.mrf.mxu0
        %v4615 = vadd.f32 %v4446, %v4614
        %4616 = vmatmul.bf16.gmra.mxu0 %v4183
        %v4617 = vpop.f32.mrf.mxu0
        %v4618 = vadd.f32 %v4449, %v4617
        %v4619 = vpop.f32.mrf.mxu0
        %v4620 = vadd.f32 %v4451, %v4619
        %4621 = vmatmul.bf16.gmra.mxu0 %v4187
        %v4622 = vpop.f32.mrf.mxu0
        %v4623 = vadd.f32 %v4454, %v4622
        %v4624 = vpop.f32.mrf.mxu0
        %v4625 = vadd.f32 %v4456, %v4624
        %4626 = vmatmul.bf16.gmra.mxu0 %v4191
        %v4627 = vpop.f32.mrf.mxu0
        %v4628 = vadd.f32 %v4459, %v4627
        %v4629 = vpop.f32.mrf.mxu0
        %v4630 = vadd.f32 %v4461, %v4629
        %4631 = vmatmul.bf16.gmra.mxu0 %v4195
        %v4632 = vpop.f32.mrf.mxu0
        %v4633 = vadd.f32 %v4464, %v4632
        %v4634 = vpop.f32.mrf.mxu0
        %v4635 = vadd.f32 %v4466, %v4634
        %4636 = vmatmul.bf16.gmra.mxu0 %v4199
        %v4637 = vpop.f32.mrf.mxu0
        %v4638 = vadd.f32 %v4469, %v4637
        %v4639 = vpop.f32.mrf.mxu0
        %v4640 = vadd.f32 %v4471, %v4639
        %4641 = vmatmul.bf16.gmra.mxu0 %v4203
        %v4642 = vpop.f32.mrf.mxu0
        %v4643 = vadd.f32 %v4474, %v4642
        %v4644 = vpop.f32.mrf.mxu0
        %v4645 = vadd.f32 %v4476, %v4644
        %4646 = vmatmul.bf16.gmra.mxu0 %v4207
        %v4647 = vpop.f32.mrf.mxu0
        %v4648 = vadd.f32 %v4479, %v4647
        %v4649 = vpop.f32.mrf.mxu0
        %v4650 = vadd.f32 %v4481, %v4649
        %4651 = vmatmul.bf16.gmra.mxu0 %v4211
        %v4652 = vpop.f32.mrf.mxu0
        %v4653 = vadd.f32 %v4484, %v4652
        %v4654 = vpop.f32.mrf.mxu0
        %v4655 = vadd.f32 %v4486, %v4654
        %4656 = vmatmul.bf16.gmra.mxu0 %v4215
        %v4657 = vpop.f32.mrf.mxu0
        %v4658 = vadd.f32 %v4489, %v4657
        %v4659 = vpop.f32.mrf.mxu0
        %v4660 = vadd.f32 %v4491, %v4659
        %4661 = vmatmul.bf16.gmra.mxu0 %v4219
        %v4662 = vpop.f32.mrf.mxu0
        %v4663 = vadd.f32 %v4494, %v4662
        %v4664 = vpop.f32.mrf.mxu0
        %v4665 = vadd.f32 %v4496, %v4664
        %4666 = vmatmul.bf16.gmra.mxu0 %v4223
        %v4667 = vpop.f32.mrf.mxu0
        %v4668 = vadd.f32 %v4499, %v4667
        %v4669 = vpop.f32.mrf.mxu0
        %v4670 = vadd.f32 %v4501, %v4669
        %4671 = vmatmul.bf16.gmra.mxu0 %v4227
        %v4672 = vpop.f32.mrf.mxu0
        %v4673 = vadd.f32 %v4504, %v4672
        %v4674 = vpop.f32.mrf.mxu0
        %v4675 = vadd.f32 %v4506, %v4674
        %4676 = vmatmul.bf16.gmra.mxu0 %v4231
        %v4677 = vpop.f32.mrf.mxu0
        %v4678 = vadd.f32 %v4509, %v4677
        %v4679 = vpop.f32.mrf.mxu0
        %v4680 = vadd.f32 %v4511, %v4679
        %4681 = vmatmul.bf16.gmra.mxu0 %v4235
        %v4682 = vpop.f32.mrf.mxu0
        %v4683 = vadd.f32 %v4514, %v4682
        %v4684 = vpop.f32.mrf.mxu0
        %v4685 = vadd.f32 %v4516, %v4684
        %4686 = vmatmul.bf16.gmra.mxu0 %v4239
        %v4687 = vpop.f32.mrf.mxu0
        %v4688 = vadd.f32 %v4519, %v4687
        %v4689 = vpop.f32.mrf.mxu0
        %v4690 = vadd.f32 %v4521, %v4689
        %4691 = vmatmul.bf16.gmra.mxu0 %v4243
        %v4692 = vpop.f32.mrf.mxu0
        %v4693 = vadd.f32 %v4524, %v4692
        %v4694 = vpop.f32.mrf.mxu0
        %v4695 = vadd.f32 %v4526, %v4694
        %4696 = vmatmul.bf16.gmra.mxu0 %v4247
        %v4697 = vpop.f32.mrf.mxu0
        %v4698 = vadd.f32 %v4529, %v4697
        %v4699 = vpop.f32.mrf.mxu0
        %v4700 = vadd.f32 %v4531, %v4699
        %4701 = vmatmul.bf16.gmra.mxu0 %v4251
        %v4702 = vpop.f32.mrf.mxu0
        %v4703 = vadd.f32 %v4534, %v4702
        %v4704 = vpop.f32.mrf.mxu0
        %v4705 = vadd.f32 %v4536, %v4704
        %4706 = vmatmul.bf16.gmra.mxu0 %v4255
        %v4707 = vpop.f32.mrf.mxu0
        %v4708 = vadd.f32 %v4539, %v4707
        %v4709 = vpop.f32.mrf.mxu0
        %v4710 = vadd.f32 %v4541, %v4709
        %4711 = vmatmul.bf16.gmra.mxu0 %v4259
        %v4712 = vpop.f32.mrf.mxu0
        %v4713 = vadd.f32 %v4544, %v4712
        %v4714 = vpop.f32.mrf.mxu0
        %v4715 = vadd.f32 %v4546, %v4714
        %4716 = vmatmul.bf16.gmra.mxu0 %v4263
        %v4717 = vpop.f32.mrf.mxu0
        %v4718 = vadd.f32 %v4549, %v4717
        %v4719 = vpop.f32.mrf.mxu0
        %v4720 = vadd.f32 %v4551, %v4719
        %4721 = vmatmul.bf16.gmra.mxu0 %v4267
        %v4722 = vpop.f32.mrf.mxu0
        %v4723 = vadd.f32 %v4554, %v4722
        %v4724 = vpop.f32.mrf.mxu0
        %v4725 = vadd.f32 %v4556, %v4724
        %4726 = vmatmul.bf16.gmra.mxu0 %v4271
        %v4727 = vpop.f32.mrf.mxu0
        %v4728 = vadd.f32 %v4559, %v4727
        %v4729 = vpop.f32.mrf.mxu0
        %v4730 = vadd.f32 %v4561, %v4729
        %4731 = vmatmul.bf16.gmra.mxu0 %v4275
        %v4732 = vpop.f32.mrf.mxu0
        %v4733 = vadd.f32 %v4564, %v4732
        %v4734 = vpop.f32.mrf.mxu0
        %v4735 = vadd.f32 %v4566, %v4734
        %4736 = vmatmul.bf16.gmra.mxu0 %v4279
        %v4737 = vpop.f32.mrf.mxu0
        %v4738 = vadd.f32 %v4569, %v4737
        %v4739 = vpop.f32.mrf.mxu0
        %v4740 = vadd.f32 %v4571, %v4739
        %4741 = vmatmul.bf16.gmra.mxu0 %v4283
        %v4742 = vpop.f32.mrf.mxu0
        %v4743 = vadd.f32 %v4574, %v4742
        %v4744 = vpop.f32.mrf.mxu0
        %v4745 = vadd.f32 %v4576, %v4744
        %4746 = vmatmul.bf16.gmra.mxu0 %v4287
        %v4747 = vpop.f32.mrf.mxu0
        %v4748 = vadd.f32 %v4579, %v4747
        %v4749 = vpop.f32.mrf.mxu0
        %v4750 = vadd.f32 %v4581, %v4749
        %4751 = vmatmul.bf16.gmra.mxu0 %v4291
        %v4752 = vpop.f32.mrf.mxu0
        %v4753 = vadd.f32 %v4584, %v4752
        %v4754 = vpop.f32.mrf.mxu0
        %v4755 = vadd.f32 %v4586, %v4754
        %4756 = vmatmul.bf16.gmra.mxu0 %v4295
        %v4757 = vpop.f32.mrf.mxu0
        %v4758 = vadd.f32 %v4589, %v4757
        %v4759 = vpop.f32.mrf.mxu0
        %v4760 = vadd.f32 %v4591, %v4759
        %4761 = vmatmul.bf16.gmra.mxu0 %v4299
        %v4762 = vpop.f32.mrf.mxu0
        %v4763 = vadd.f32 %v4594, %v4762
        %v4764 = vpop.f32.mrf.mxu0
        %v4765 = vadd.f32 %v4596, %v4764
        %4766 = vmatmul.bf16.gmra.mxu0 %v4303
        %v4767 = vpop.f32.mrf.mxu0
        %v4768 = vadd.f32 %v4599, %v4767
        %v4769 = vpop.f32.mrf.mxu0
        %v4770 = vadd.f32 %v4601, %v4769
        %4771 = vdwg.mxu0
        %4772 = vmatpush.bf16.msra.mxu0 %v769
        %4773 = vmatpush.bf16.msra.mxu0 %v768
        %4774 = vmatpush.bf16.msra.mxu0 %v767
        %4775 = vmatpush.bf16.msra.mxu0 %v766
        %4776 = vmatpush.bf16.msra.mxu0 %v765
        %4777 = vmatpush.bf16.msra.mxu0 %v764
        %4778 = vmatpush.bf16.msra.mxu0 %v763
        %4779 = vmatpush.bf16.msra.mxu0 %v762
        %4780 = vmatmul.bf16.gmra.mxu0 %v4180
        %v4781 = vpop.f32.mrf.mxu0
        %v4782 = vadd.f32 %v4613, %v4781
        %v4783 = vpop.f32.mrf.mxu0
        %v4784 = vadd.f32 %v4615, %v4783
        %4785 = vmatmul.bf16.gmra.mxu0 %v4184
        %v4786 = vpop.f32.mrf.mxu0
        %v4787 = vadd.f32 %v4618, %v4786
        %v4788 = vpop.f32.mrf.mxu0
        %v4789 = vadd.f32 %v4620, %v4788
        %4790 = vmatmul.bf16.gmra.mxu0 %v4188
        %v4791 = vpop.f32.mrf.mxu0
        %v4792 = vadd.f32 %v4623, %v4791
        %v4793 = vpop.f32.mrf.mxu0
        %v4794 = vadd.f32 %v4625, %v4793
        %4795 = vmatmul.bf16.gmra.mxu0 %v4192
        %v4796 = vpop.f32.mrf.mxu0
        %v4797 = vadd.f32 %v4628, %v4796
        %v4798 = vpop.f32.mrf.mxu0
        %v4799 = vadd.f32 %v4630, %v4798
        %4800 = vmatmul.bf16.gmra.mxu0 %v4196
        %v4801 = vpop.f32.mrf.mxu0
        %v4802 = vadd.f32 %v4633, %v4801
        %v4803 = vpop.f32.mrf.mxu0
        %v4804 = vadd.f32 %v4635, %v4803
        %4805 = vmatmul.bf16.gmra.mxu0 %v4200
        %v4806 = vpop.f32.mrf.mxu0
        %v4807 = vadd.f32 %v4638, %v4806
        %v4808 = vpop.f32.mrf.mxu0
        %v4809 = vadd.f32 %v4640, %v4808
        %4810 = vmatmul.bf16.gmra.mxu0 %v4204
        %v4811 = vpop.f32.mrf.mxu0
        %v4812 = vadd.f32 %v4643, %v4811
        %v4813 = vpop.f32.mrf.mxu0
        %v4814 = vadd.f32 %v4645, %v4813
        %4815 = vmatmul.bf16.gmra.mxu0 %v4208
        %v4816 = vpop.f32.mrf.mxu0
        %v4817 = vadd.f32 %v4648, %v4816
        %v4818 = vpop.f32.mrf.mxu0
        %v4819 = vadd.f32 %v4650, %v4818
        %4820 = vmatmul.bf16.gmra.mxu0 %v4212
        %v4821 = vpop.f32.mrf.mxu0
        %v4822 = vadd.f32 %v4653, %v4821
        %v4823 = vpop.f32.mrf.mxu0
        %v4824 = vadd.f32 %v4655, %v4823
        %4825 = vmatmul.bf16.gmra.mxu0 %v4216
        %v4826 = vpop.f32.mrf.mxu0
        %v4827 = vadd.f32 %v4658, %v4826
        %v4828 = vpop.f32.mrf.mxu0
        %v4829 = vadd.f32 %v4660, %v4828
        %4830 = vmatmul.bf16.gmra.mxu0 %v4220
        %v4831 = vpop.f32.mrf.mxu0
        %v4832 = vadd.f32 %v4663, %v4831
        %v4833 = vpop.f32.mrf.mxu0
        %v4834 = vadd.f32 %v4665, %v4833
        %4835 = vmatmul.bf16.gmra.mxu0 %v4224
        %v4836 = vpop.f32.mrf.mxu0
        %v4837 = vadd.f32 %v4668, %v4836
        %v4838 = vpop.f32.mrf.mxu0
        %v4839 = vadd.f32 %v4670, %v4838
        %4840 = vmatmul.bf16.gmra.mxu0 %v4228
        %v4841 = vpop.f32.mrf.mxu0
        %v4842 = vadd.f32 %v4673, %v4841
        %v4843 = vpop.f32.mrf.mxu0
        %v4844 = vadd.f32 %v4675, %v4843
        %4845 = vmatmul.bf16.gmra.mxu0 %v4232
        %v4846 = vpop.f32.mrf.mxu0
        %v4847 = vadd.f32 %v4678, %v4846
        %v4848 = vpop.f32.mrf.mxu0
        %v4849 = vadd.f32 %v4680, %v4848
        %4850 = vmatmul.bf16.gmra.mxu0 %v4236
        %v4851 = vpop.f32.mrf.mxu0
        %v4852 = vadd.f32 %v4683, %v4851
        %v4853 = vpop.f32.mrf.mxu0
        %v4854 = vadd.f32 %v4685, %v4853
        %4855 = vmatmul.bf16.gmra.mxu0 %v4240
        %v4856 = vpop.f32.mrf.mxu0
        %v4857 = vadd.f32 %v4688, %v4856
        %v4858 = vpop.f32.mrf.mxu0
        %v4859 = vadd.f32 %v4690, %v4858
        %4860 = vmatmul.bf16.gmra.mxu0 %v4244
        %v4861 = vpop.f32.mrf.mxu0
        %v4862 = vadd.f32 %v4693, %v4861
        %v4863 = vpop.f32.mrf.mxu0
        %v4864 = vadd.f32 %v4695, %v4863
        %4865 = vmatmul.bf16.gmra.mxu0 %v4248
        %v4866 = vpop.f32.mrf.mxu0
        %v4867 = vadd.f32 %v4698, %v4866
        %v4868 = vpop.f32.mrf.mxu0
        %v4869 = vadd.f32 %v4700, %v4868
        %4870 = vmatmul.bf16.gmra.mxu0 %v4252
        %v4871 = vpop.f32.mrf.mxu0
        %v4872 = vadd.f32 %v4703, %v4871
        %v4873 = vpop.f32.mrf.mxu0
        %v4874 = vadd.f32 %v4705, %v4873
        %4875 = vmatmul.bf16.gmra.mxu0 %v4256
        %v4876 = vpop.f32.mrf.mxu0
        %v4877 = vadd.f32 %v4708, %v4876
        %v4878 = vpop.f32.mrf.mxu0
        %v4879 = vadd.f32 %v4710, %v4878
        %4880 = vmatmul.bf16.gmra.mxu0 %v4260
        %v4881 = vpop.f32.mrf.mxu0
        %v4882 = vadd.f32 %v4713, %v4881
        %v4883 = vpop.f32.mrf.mxu0
        %v4884 = vadd.f32 %v4715, %v4883
        %4885 = vmatmul.bf16.gmra.mxu0 %v4264
        %v4886 = vpop.f32.mrf.mxu0
        %v4887 = vadd.f32 %v4718, %v4886
        %v4888 = vpop.f32.mrf.mxu0
        %v4889 = vadd.f32 %v4720, %v4888
        %4890 = vmatmul.bf16.gmra.mxu0 %v4268
        %v4891 = vpop.f32.mrf.mxu0
        %v4892 = vadd.f32 %v4723, %v4891
        %v4893 = vpop.f32.mrf.mxu0
        %v4894 = vadd.f32 %v4725, %v4893
        %4895 = vmatmul.bf16.gmra.mxu0 %v4272
        %v4896 = vpop.f32.mrf.mxu0
        %v4897 = vadd.f32 %v4728, %v4896
        %v4898 = vpop.f32.mrf.mxu0
        %v4899 = vadd.f32 %v4730, %v4898
        %4900 = vmatmul.bf16.gmra.mxu0 %v4276
        %v4901 = vpop.f32.mrf.mxu0
        %v4902 = vadd.f32 %v4733, %v4901
        %v4903 = vpop.f32.mrf.mxu0
        %v4904 = vadd.f32 %v4735, %v4903
        %4905 = vmatmul.bf16.gmra.mxu0 %v4280
        %v4906 = vpop.f32.mrf.mxu0
        %v4907 = vadd.f32 %v4738, %v4906
        %v4908 = vpop.f32.mrf.mxu0
        %v4909 = vadd.f32 %v4740, %v4908
        %4910 = vmatmul.bf16.gmra.mxu0 %v4284
        %v4911 = vpop.f32.mrf.mxu0
        %v4912 = vadd.f32 %v4743, %v4911
        %v4913 = vpop.f32.mrf.mxu0
        %v4914 = vadd.f32 %v4745, %v4913
        %4915 = vmatmul.bf16.gmra.mxu0 %v4288
        %v4916 = vpop.f32.mrf.mxu0
        %v4917 = vadd.f32 %v4748, %v4916
        %v4918 = vpop.f32.mrf.mxu0
        %v4919 = vadd.f32 %v4750, %v4918
        %4920 = vmatmul.bf16.gmra.mxu0 %v4292
        %v4921 = vpop.f32.mrf.mxu0
        %v4922 = vadd.f32 %v4753, %v4921
        %v4923 = vpop.f32.mrf.mxu0
        %v4924 = vadd.f32 %v4755, %v4923
        %4925 = vmatmul.bf16.gmra.mxu0 %v4296
        %v4926 = vpop.f32.mrf.mxu0
        %v4927 = vadd.f32 %v4758, %v4926
        %v4928 = vpop.f32.mrf.mxu0
        %v4929 = vadd.f32 %v4760, %v4928
        %4930 = vmatmul.bf16.gmra.mxu0 %v4300
        %v4931 = vpop.f32.mrf.mxu0
        %v4932 = vadd.f32 %v4763, %v4931
        %v4933 = vpop.f32.mrf.mxu0
        %v4934 = vadd.f32 %v4765, %v4933
        %4935 = vmatmul.bf16.gmra.mxu0 %v4304
        %v4936 = vpop.f32.mrf.mxu0
        %v4937 = vadd.f32 %v4768, %v4936
        %v4938 = vpop.f32.mrf.mxu0
        %v4939 = vadd.f32 %v4770, %v4938
        %4940 = vdwg.mxu0
        %4941 = vmatpush.bf16.msra.mxu0 %v777
        %4942 = vmatpush.bf16.msra.mxu0 %v776
        %4943 = vmatpush.bf16.msra.mxu0 %v775
        %4944 = vmatpush.bf16.msra.mxu0 %v774
        %4945 = vmatpush.bf16.msra.mxu0 %v773
        %4946 = vmatpush.bf16.msra.mxu0 %v772
        %4947 = vmatpush.bf16.msra.mxu0 %v771
        %4948 = vmatpush.bf16.msra.mxu0 %v770
        %4949 = vmatmul.bf16.gmra.mxu0 %v4181
        %v4950 = vpop.f32.mrf.mxu0
        %v4951 = vadd.f32 %v4782, %v4950
        %v4952 = vpop.f32.mrf.mxu0
        %v4953 = vadd.f32 %v4784, %v4952
        %4954 = vmatmul.bf16.gmra.mxu0 %v4185
        %v4955 = vpop.f32.mrf.mxu0
        %v4956 = vadd.f32 %v4787, %v4955
        %v4957 = vpop.f32.mrf.mxu0
        %v4958 = vadd.f32 %v4789, %v4957
        %4959 = vmatmul.bf16.gmra.mxu0 %v4189
        %v4960 = vpop.f32.mrf.mxu0
        %v4961 = vadd.f32 %v4792, %v4960
        %v4962 = vpop.f32.mrf.mxu0
        %v4963 = vadd.f32 %v4794, %v4962
        %4964 = vmatmul.bf16.gmra.mxu0 %v4193
        %v4965 = vpop.f32.mrf.mxu0
        %v4966 = vadd.f32 %v4797, %v4965
        %v4967 = vpop.f32.mrf.mxu0
        %v4968 = vadd.f32 %v4799, %v4967
        %4969 = vmatmul.bf16.gmra.mxu0 %v4197
        %v4970 = vpop.f32.mrf.mxu0
        %v4971 = vadd.f32 %v4802, %v4970
        %v4972 = vpop.f32.mrf.mxu0
        %v4973 = vadd.f32 %v4804, %v4972
        %4974 = vmatmul.bf16.gmra.mxu0 %v4201
        %v4975 = vpop.f32.mrf.mxu0
        %v4976 = vadd.f32 %v4807, %v4975
        %v4977 = vpop.f32.mrf.mxu0
        %v4978 = vadd.f32 %v4809, %v4977
        %4979 = vmatmul.bf16.gmra.mxu0 %v4205
        %v4980 = vpop.f32.mrf.mxu0
        %v4981 = vadd.f32 %v4812, %v4980
        %v4982 = vpop.f32.mrf.mxu0
        %v4983 = vadd.f32 %v4814, %v4982
        %4984 = vmatmul.bf16.gmra.mxu0 %v4209
        %v4985 = vpop.f32.mrf.mxu0
        %v4986 = vadd.f32 %v4817, %v4985
        %v4987 = vpop.f32.mrf.mxu0
        %v4988 = vadd.f32 %v4819, %v4987
        %4989 = vmatmul.bf16.gmra.mxu0 %v4213
        %v4990 = vpop.f32.mrf.mxu0
        %v4991 = vadd.f32 %v4822, %v4990
        %v4992 = vpop.f32.mrf.mxu0
        %v4993 = vadd.f32 %v4824, %v4992
        %4994 = vmatmul.bf16.gmra.mxu0 %v4217
        %v4995 = vpop.f32.mrf.mxu0
        %v4996 = vadd.f32 %v4827, %v4995
        %v4997 = vpop.f32.mrf.mxu0
        %v4998 = vadd.f32 %v4829, %v4997
        %4999 = vmatmul.bf16.gmra.mxu0 %v4221
        %v5000 = vpop.f32.mrf.mxu0
        %v5001 = vadd.f32 %v4832, %v5000
        %v5002 = vpop.f32.mrf.mxu0
        %v5003 = vadd.f32 %v4834, %v5002
        %5004 = vmatmul.bf16.gmra.mxu0 %v4225
        %v5005 = vpop.f32.mrf.mxu0
        %v5006 = vadd.f32 %v4837, %v5005
        %v5007 = vpop.f32.mrf.mxu0
        %v5008 = vadd.f32 %v4839, %v5007
        %5009 = vmatmul.bf16.gmra.mxu0 %v4229
        %v5010 = vpop.f32.mrf.mxu0
        %v5011 = vadd.f32 %v4842, %v5010
        %v5012 = vpop.f32.mrf.mxu0
        %v5013 = vadd.f32 %v4844, %v5012
        %5014 = vmatmul.bf16.gmra.mxu0 %v4233
        %v5015 = vpop.f32.mrf.mxu0
        %v5016 = vadd.f32 %v4847, %v5015
        %v5017 = vpop.f32.mrf.mxu0
        %v5018 = vadd.f32 %v4849, %v5017
        %5019 = vmatmul.bf16.gmra.mxu0 %v4237
        %v5020 = vpop.f32.mrf.mxu0
        %v5021 = vadd.f32 %v4852, %v5020
        %v5022 = vpop.f32.mrf.mxu0
        %v5023 = vadd.f32 %v4854, %v5022
        %5024 = vmatmul.bf16.gmra.mxu0 %v4241
        %v5025 = vpop.f32.mrf.mxu0
        %v5026 = vadd.f32 %v4857, %v5025
        %v5027 = vpop.f32.mrf.mxu0
        %v5028 = vadd.f32 %v4859, %v5027
        %5029 = vmatmul.bf16.gmra.mxu0 %v4245
        %v5030 = vpop.f32.mrf.mxu0
        %v5031 = vadd.f32 %v4862, %v5030
        %v5032 = vpop.f32.mrf.mxu0
        %v5033 = vadd.f32 %v4864, %v5032
        %5034 = vmatmul.bf16.gmra.mxu0 %v4249
        %v5035 = vpop.f32.mrf.mxu0
        %v5036 = vadd.f32 %v4867, %v5035
        %v5037 = vpop.f32.mrf.mxu0
        %v5038 = vadd.f32 %v4869, %v5037
        %5039 = vmatmul.bf16.gmra.mxu0 %v4253
        %v5040 = vpop.f32.mrf.mxu0
        %v5041 = vadd.f32 %v4872, %v5040
        %v5042 = vpop.f32.mrf.mxu0
        %v5043 = vadd.f32 %v4874, %v5042
        %5044 = vmatmul.bf16.gmra.mxu0 %v4257
        %v5045 = vpop.f32.mrf.mxu0
        %v5046 = vadd.f32 %v4877, %v5045
        %v5047 = vpop.f32.mrf.mxu0
        %v5048 = vadd.f32 %v4879, %v5047
        %5049 = vmatmul.bf16.gmra.mxu0 %v4261
        %v5050 = vpop.f32.mrf.mxu0
        %v5051 = vadd.f32 %v4882, %v5050
        %v5052 = vpop.f32.mrf.mxu0
        %v5053 = vadd.f32 %v4884, %v5052
        %5054 = vmatmul.bf16.gmra.mxu0 %v4265
        %v5055 = vpop.f32.mrf.mxu0
        %v5056 = vadd.f32 %v4887, %v5055
        %v5057 = vpop.f32.mrf.mxu0
        %v5058 = vadd.f32 %v4889, %v5057
        %5059 = vmatmul.bf16.gmra.mxu0 %v4269
        %v5060 = vpop.f32.mrf.mxu0
        %v5061 = vadd.f32 %v4892, %v5060
        %v5062 = vpop.f32.mrf.mxu0
        %v5063 = vadd.f32 %v4894, %v5062
        %5064 = vmatmul.bf16.gmra.mxu0 %v4273
        %v5065 = vpop.f32.mrf.mxu0
        %v5066 = vadd.f32 %v4897, %v5065
        %v5067 = vpop.f32.mrf.mxu0
        %v5068 = vadd.f32 %v4899, %v5067
        %5069 = vmatmul.bf16.gmra.mxu0 %v4277
        %v5070 = vpop.f32.mrf.mxu0
        %v5071 = vadd.f32 %v4902, %v5070
        %v5072 = vpop.f32.mrf.mxu0
        %v5073 = vadd.f32 %v4904, %v5072
        %5074 = vmatmul.bf16.gmra.mxu0 %v4281
        %v5075 = vpop.f32.mrf.mxu0
        %v5076 = vadd.f32 %v4907, %v5075
        %v5077 = vpop.f32.mrf.mxu0
        %v5078 = vadd.f32 %v4909, %v5077
        %5079 = vmatmul.bf16.gmra.mxu0 %v4285
        %v5080 = vpop.f32.mrf.mxu0
        %v5081 = vadd.f32 %v4912, %v5080
        %v5082 = vpop.f32.mrf.mxu0
        %v5083 = vadd.f32 %v4914, %v5082
        %5084 = vmatmul.bf16.gmra.mxu0 %v4289
        %v5085 = vpop.f32.mrf.mxu0
        %v5086 = vadd.f32 %v4917, %v5085
        %v5087 = vpop.f32.mrf.mxu0
        %v5088 = vadd.f32 %v4919, %v5087
        %5089 = vmatmul.bf16.gmra.mxu0 %v4293
        %v5090 = vpop.f32.mrf.mxu0
        %v5091 = vadd.f32 %v4922, %v5090
        %v5092 = vpop.f32.mrf.mxu0
        %v5093 = vadd.f32 %v4924, %v5092
        %5094 = vmatmul.bf16.gmra.mxu0 %v4297
        %v5095 = vpop.f32.mrf.mxu0
        %v5096 = vadd.f32 %v4927, %v5095
        %v5097 = vpop.f32.mrf.mxu0
        %v5098 = vadd.f32 %v4929, %v5097
        %5099 = vmatmul.bf16.gmra.mxu0 %v4301
        %v5100 = vpop.f32.mrf.mxu0
        %v5101 = vadd.f32 %v4932, %v5100
        %v5102 = vpop.f32.mrf.mxu0
        %v5103 = vadd.f32 %v4934, %v5102
        %5104 = vmatmul.bf16.gmra.mxu0 %v4305
        %v5105 = vpop.f32.mrf.mxu0
        %v5106 = vadd.f32 %v4937, %v5105
        %v5107 = vpop.f32.mrf.mxu0
        %v5108 = vadd.f32 %v4939, %v5107
        %5109 = vdwg.mxu0
        %v5110 = vadd.f32 %v3507, %v4951
        %v5111 = vadd.f32 %v3509, %v4953
        %v5112 = vadd.f32 %v3512, %v4956
        %v5113 = vadd.f32 %v3514, %v4958
        %v5114 = vadd.f32 %v3517, %v4961
        %v5115 = vadd.f32 %v3519, %v4963
        %v5116 = vadd.f32 %v3522, %v4966
        %v5117 = vadd.f32 %v3524, %v4968
        %v5118 = vadd.f32 %v3527, %v4971
        %v5119 = vadd.f32 %v3529, %v4973
        %v5120 = vadd.f32 %v3532, %v4976
        %v5121 = vadd.f32 %v3534, %v4978
        %v5122 = vadd.f32 %v3537, %v4981
        %v5123 = vadd.f32 %v3539, %v4983
        %v5124 = vadd.f32 %v3542, %v4986
        %v5125 = vadd.f32 %v3544, %v4988
        %v5126 = vadd.f32 %v3547, %v4991
        %v5127 = vadd.f32 %v3549, %v4993
        %v5128 = vadd.f32 %v3552, %v4996
        %v5129 = vadd.f32 %v3554, %v4998
        %v5130 = vadd.f32 %v3557, %v5001
        %v5131 = vadd.f32 %v3559, %v5003
        %v5132 = vadd.f32 %v3562, %v5006
        %v5133 = vadd.f32 %v3564, %v5008
        %v5134 = vadd.f32 %v3567, %v5011
        %v5135 = vadd.f32 %v3569, %v5013
        %v5136 = vadd.f32 %v3572, %v5016
        %v5137 = vadd.f32 %v3574, %v5018
        %v5138 = vadd.f32 %v3577, %v5021
        %v5139 = vadd.f32 %v3579, %v5023
        %v5140 = vadd.f32 %v3582, %v5026
        %v5141 = vadd.f32 %v3584, %v5028
        %v5142 = vadd.f32 %v3587, %v5031
        %v5143 = vadd.f32 %v3589, %v5033
        %v5144 = vadd.f32 %v3592, %v5036
        %v5145 = vadd.f32 %v3594, %v5038
        %v5146 = vadd.f32 %v3597, %v5041
        %v5147 = vadd.f32 %v3599, %v5043
        %v5148 = vadd.f32 %v3602, %v5046
        %v5149 = vadd.f32 %v3604, %v5048
        %v5150 = vadd.f32 %v3607, %v5051
        %v5151 = vadd.f32 %v3609, %v5053
        %v5152 = vadd.f32 %v3612, %v5056
        %v5153 = vadd.f32 %v3614, %v5058
        %v5154 = vadd.f32 %v3617, %v5061
        %v5155 = vadd.f32 %v3619, %v5063
        %v5156 = vadd.f32 %v3622, %v5066
        %v5157 = vadd.f32 %v3624, %v5068
        %v5158 = vadd.f32 %v3627, %v5071
        %v5159 = vadd.f32 %v3629, %v5073
        %v5160 = vadd.f32 %v3632, %v5076
        %v5161 = vadd.f32 %v3634, %v5078
        %v5162 = vadd.f32 %v3637, %v5081
        %v5163 = vadd.f32 %v3639, %v5083
        %v5164 = vadd.f32 %v3642, %v5086
        %v5165 = vadd.f32 %v3644, %v5088
        %v5166 = vadd.f32 %v3647, %v5091
        %v5167 = vadd.f32 %v3649, %v5093
        %v5168 = vadd.f32 %v3652, %v5096
        %v5169 = vadd.f32 %v3654, %v5098
        %v5170 = vadd.f32 %v3657, %v5101
        %v5171 = vadd.f32 %v3659, %v5103
        %v5172 = vadd.f32 %v3662, %v5106
        %v5173 = vadd.f32 %v3664, %v5108
        %v5174 = vld [vmem:[%s4] sm:$0xff]
        %v5175 = vld [vmem:[%s4 + $0x8] sm:$0xff]
        %v5176 = vld [vmem:[%s4 + $0x10] sm:$0xff]
        %v5177 = vld [vmem:[%s4 + $0x18] sm:$0xff]
        %v5178 = vld [vmem:[%s4 + $0x20] sm:$0xff]
        %v5179 = vld [vmem:[%s4 + $0x28] sm:$0xff]
        %v5180 = vld [vmem:[%s4 + $0x30] sm:$0xff]
        %v5181 = vld [vmem:[%s4 + $0x38] sm:$0xff]
        %v5182 = vld [vmem:[%s4 + $0x40] sm:$0xff]
        %v5183 = vld [vmem:[%s4 + $0x48] sm:$0xff]
        %v5184 = vld [vmem:[%s4 + $0x50] sm:$0xff]
        %v5185 = vld [vmem:[%s4 + $0x58] sm:$0xff]
        %v5186 = vld [vmem:[%s4 + $0x60] sm:$0xff]
        %v5187 = vld [vmem:[%s4 + $0x68] sm:$0xff]
        %v5188 = vld [vmem:[%s4 + $0x70] sm:$0xff]
        %v5189 = vld [vmem:[%s4 + $0x78] sm:$0xff]
        %v5190 = vld [vmem:[%s4 + $0x80] sm:$0xff]
        %v5191 = vld [vmem:[%s4 + $0x88] sm:$0xff]
        %v5192 = vld [vmem:[%s4 + $0x90] sm:$0xff]
        %v5193 = vld [vmem:[%s4 + $0x98] sm:$0xff]
        %v5194 = vld [vmem:[%s4 + $0xa0] sm:$0xff]
        %v5195 = vld [vmem:[%s4 + $0xa8] sm:$0xff]
        %v5196 = vld [vmem:[%s4 + $0xb0] sm:$0xff]
        %v5197 = vld [vmem:[%s4 + $0xb8] sm:$0xff]
        %v5198 = vld [vmem:[%s4 + $0xc0] sm:$0xff]
        %v5199 = vld [vmem:[%s4 + $0xc8] sm:$0xff]
        %v5200 = vld [vmem:[%s4 + $0xd0] sm:$0xff]
        %v5201 = vld [vmem:[%s4 + $0xd8] sm:$0xff]
        %v5202 = vld [vmem:[%s4 + $0xe0] sm:$0xff]
        %v5203 = vld [vmem:[%s4 + $0xe8] sm:$0xff]
        %v5204 = vld [vmem:[%s4 + $0xf0] sm:$0xff]
        %v5205 = vld [vmem:[%s4 + $0xf8] sm:$0xff]
        %v5206 = vld [vmem:[%s4 + $0x100] sm:$0xff]
        %v5207 = vld [vmem:[%s4 + $0x108] sm:$0xff]
        %v5208 = vld [vmem:[%s4 + $0x110] sm:$0xff]
        %v5209 = vld [vmem:[%s4 + $0x118] sm:$0xff]
        %v5210 = vld [vmem:[%s4 + $0x120] sm:$0xff]
        %v5211 = vld [vmem:[%s4 + $0x128] sm:$0xff]
        %v5212 = vld [vmem:[%s4 + $0x130] sm:$0xff]
        %v5213 = vld [vmem:[%s4 + $0x138] sm:$0xff]
        %v5214 = vld [vmem:[%s4 + $0x140] sm:$0xff]
        %v5215 = vld [vmem:[%s4 + $0x148] sm:$0xff]
        %v5216 = vld [vmem:[%s4 + $0x150] sm:$0xff]
        %v5217 = vld [vmem:[%s4 + $0x158] sm:$0xff]
        %v5218 = vld [vmem:[%s4 + $0x160] sm:$0xff]
        %v5219 = vld [vmem:[%s4 + $0x168] sm:$0xff]
        %v5220 = vld [vmem:[%s4 + $0x170] sm:$0xff]
        %v5221 = vld [vmem:[%s4 + $0x178] sm:$0xff]
        %v5222 = vld [vmem:[%s4 + $0x180] sm:$0xff]
        %v5223 = vld [vmem:[%s4 + $0x188] sm:$0xff]
        %v5224 = vld [vmem:[%s4 + $0x190] sm:$0xff]
        %v5225 = vld [vmem:[%s4 + $0x198] sm:$0xff]
        %v5226 = vld [vmem:[%s4 + $0x1a0] sm:$0xff]
        %v5227 = vld [vmem:[%s4 + $0x1a8] sm:$0xff]
        %v5228 = vld [vmem:[%s4 + $0x1b0] sm:$0xff]
        %v5229 = vld [vmem:[%s4 + $0x1b8] sm:$0xff]
        %v5230 = vld [vmem:[%s4 + $0x1c0] sm:$0xff]
        %v5231 = vld [vmem:[%s4 + $0x1c8] sm:$0xff]
        %v5232 = vld [vmem:[%s4 + $0x1d0] sm:$0xff]
        %v5233 = vld [vmem:[%s4 + $0x1d8] sm:$0xff]
        %v5234 = vld [vmem:[%s4 + $0x1e0] sm:$0xff]
        %v5235 = vld [vmem:[%s4 + $0x1e8] sm:$0xff]
        %v5236 = vld [vmem:[%s4 + $0x1f0] sm:$0xff]
        %v5237 = vld [vmem:[%s4 + $0x1f8] sm:$0xff]
        %5239 = vset.pattern.permute.xlu0 0
        %5240 = vperm.xlu0 %5239, %v5174
        %v5241 = vpop.permute.xlu0 %5240
        %5244 = vset.pattern.permute.xlu0 0
        %5245 = vperm.xlu0 %5244, %v5175
        %v5246 = vpop.permute.xlu0 %5245
        %5249 = vset.pattern.permute.xlu0 0
        %5250 = vperm.xlu0 %5249, %v5176
        %v5251 = vpop.permute.xlu0 %5250
        %5254 = vset.pattern.permute.xlu0 0
        %5255 = vperm.xlu0 %5254, %v5177
        %v5256 = vpop.permute.xlu0 %5255
        %5259 = vset.pattern.permute.xlu0 0
        %5260 = vperm.xlu0 %5259, %v5178
        %v5261 = vpop.permute.xlu0 %5260
        %5264 = vset.pattern.permute.xlu0 0
        %5265 = vperm.xlu0 %5264, %v5179
        %v5266 = vpop.permute.xlu0 %5265
        %5269 = vset.pattern.permute.xlu0 0
        %5270 = vperm.xlu0 %5269, %v5180
        %v5271 = vpop.permute.xlu0 %5270
        %5274 = vset.pattern.permute.xlu0 0
        %5275 = vperm.xlu0 %5274, %v5181
        %v5276 = vpop.permute.xlu0 %5275
        %5279 = vset.pattern.permute.xlu0 0
        %5280 = vperm.xlu0 %5279, %v5182
        %v5281 = vpop.permute.xlu0 %5280
        %5284 = vset.pattern.permute.xlu0 0
        %5285 = vperm.xlu0 %5284, %v5183
        %v5286 = vpop.permute.xlu0 %5285
        %5289 = vset.pattern.permute.xlu0 0
        %5290 = vperm.xlu0 %5289, %v5184
        %v5291 = vpop.permute.xlu0 %5290
        %5294 = vset.pattern.permute.xlu0 0
        %5295 = vperm.xlu0 %5294, %v5185
        %v5296 = vpop.permute.xlu0 %5295
        %5299 = vset.pattern.permute.xlu0 0
        %5300 = vperm.xlu0 %5299, %v5186
        %v5301 = vpop.permute.xlu0 %5300
        %5304 = vset.pattern.permute.xlu0 0
        %5305 = vperm.xlu0 %5304, %v5187
        %v5306 = vpop.permute.xlu0 %5305
        %5309 = vset.pattern.permute.xlu0 0
        %5310 = vperm.xlu0 %5309, %v5188
        %v5311 = vpop.permute.xlu0 %5310
        %5314 = vset.pattern.permute.xlu0 0
        %5315 = vperm.xlu0 %5314, %v5189
        %v5316 = vpop.permute.xlu0 %5315
        %5319 = vset.pattern.permute.xlu0 0
        %5320 = vperm.xlu0 %5319, %v5190
        %v5321 = vpop.permute.xlu0 %5320
        %5324 = vset.pattern.permute.xlu0 0
        %5325 = vperm.xlu0 %5324, %v5191
        %v5326 = vpop.permute.xlu0 %5325
        %5329 = vset.pattern.permute.xlu0 0
        %5330 = vperm.xlu0 %5329, %v5192
        %v5331 = vpop.permute.xlu0 %5330
        %5334 = vset.pattern.permute.xlu0 0
        %5335 = vperm.xlu0 %5334, %v5193
        %v5336 = vpop.permute.xlu0 %5335
        %5339 = vset.pattern.permute.xlu0 0
        %5340 = vperm.xlu0 %5339, %v5194
        %v5341 = vpop.permute.xlu0 %5340
        %5344 = vset.pattern.permute.xlu0 0
        %5345 = vperm.xlu0 %5344, %v5195
        %v5346 = vpop.permute.xlu0 %5345
        %5349 = vset.pattern.permute.xlu0 0
        %5350 = vperm.xlu0 %5349, %v5196
        %v5351 = vpop.permute.xlu0 %5350
        %5354 = vset.pattern.permute.xlu0 0
        %5355 = vperm.xlu0 %5354, %v5197
        %v5356 = vpop.permute.xlu0 %5355
        %5359 = vset.pattern.permute.xlu0 0
        %5360 = vperm.xlu0 %5359, %v5198
        %v5361 = vpop.permute.xlu0 %5360
        %5364 = vset.pattern.permute.xlu0 0
        %5365 = vperm.xlu0 %5364, %v5199
        %v5366 = vpop.permute.xlu0 %5365
        %5369 = vset.pattern.permute.xlu0 0
        %5370 = vperm.xlu0 %5369, %v5200
        %v5371 = vpop.permute.xlu0 %5370
        %5374 = vset.pattern.permute.xlu0 0
        %5375 = vperm.xlu0 %5374, %v5201
        %v5376 = vpop.permute.xlu0 %5375
        %5379 = vset.pattern.permute.xlu0 0
        %5380 = vperm.xlu0 %5379, %v5202
        %v5381 = vpop.permute.xlu0 %5380
        %5384 = vset.pattern.permute.xlu0 0
        %5385 = vperm.xlu0 %5384, %v5203
        %v5386 = vpop.permute.xlu0 %5385
        %5389 = vset.pattern.permute.xlu0 0
        %5390 = vperm.xlu0 %5389, %v5204
        %v5391 = vpop.permute.xlu0 %5390
        %5394 = vset.pattern.permute.xlu0 0
        %5395 = vperm.xlu0 %5394, %v5205
        %v5396 = vpop.permute.xlu0 %5395
        %5399 = vset.pattern.permute.xlu0 0
        %5400 = vperm.xlu0 %5399, %v5206
        %v5401 = vpop.permute.xlu0 %5400
        %5404 = vset.pattern.permute.xlu0 0
        %5405 = vperm.xlu0 %5404, %v5207
        %v5406 = vpop.permute.xlu0 %5405
        %5409 = vset.pattern.permute.xlu0 0
        %5410 = vperm.xlu0 %5409, %v5208
        %v5411 = vpop.permute.xlu0 %5410
        %5414 = vset.pattern.permute.xlu0 0
        %5415 = vperm.xlu0 %5414, %v5209
        %v5416 = vpop.permute.xlu0 %5415
        %5419 = vset.pattern.permute.xlu0 0
        %5420 = vperm.xlu0 %5419, %v5210
        %v5421 = vpop.permute.xlu0 %5420
        %5424 = vset.pattern.permute.xlu0 0
        %5425 = vperm.xlu0 %5424, %v5211
        %v5426 = vpop.permute.xlu0 %5425
        %5429 = vset.pattern.permute.xlu0 0
        %5430 = vperm.xlu0 %5429, %v5212
        %v5431 = vpop.permute.xlu0 %5430
        %5434 = vset.pattern.permute.xlu0 0
        %5435 = vperm.xlu0 %5434, %v5213
        %v5436 = vpop.permute.xlu0 %5435
        %5439 = vset.pattern.permute.xlu0 0
        %5440 = vperm.xlu0 %5439, %v5214
        %v5441 = vpop.permute.xlu0 %5440
        %5444 = vset.pattern.permute.xlu0 0
        %5445 = vperm.xlu0 %5444, %v5215
        %v5446 = vpop.permute.xlu0 %5445
        %5449 = vset.pattern.permute.xlu0 0
        %5450 = vperm.xlu0 %5449, %v5216
        %v5451 = vpop.permute.xlu0 %5450
        %5454 = vset.pattern.permute.xlu0 0
        %5455 = vperm.xlu0 %5454, %v5217
        %v5456 = vpop.permute.xlu0 %5455
        %5459 = vset.pattern.permute.xlu0 0
        %5460 = vperm.xlu0 %5459, %v5218
        %v5461 = vpop.permute.xlu0 %5460
        %5464 = vset.pattern.permute.xlu0 0
        %5465 = vperm.xlu0 %5464, %v5219
        %v5466 = vpop.permute.xlu0 %5465
        %5469 = vset.pattern.permute.xlu0 0
        %5470 = vperm.xlu0 %5469, %v5220
        %v5471 = vpop.permute.xlu0 %5470
        %5474 = vset.pattern.permute.xlu0 0
        %5475 = vperm.xlu0 %5474, %v5221
        %v5476 = vpop.permute.xlu0 %5475
        %5479 = vset.pattern.permute.xlu0 0
        %5480 = vperm.xlu0 %5479, %v5222
        %v5481 = vpop.permute.xlu0 %5480
        %5484 = vset.pattern.permute.xlu0 0
        %5485 = vperm.xlu0 %5484, %v5223
        %v5486 = vpop.permute.xlu0 %5485
        %5489 = vset.pattern.permute.xlu0 0
        %5490 = vperm.xlu0 %5489, %v5224
        %v5491 = vpop.permute.xlu0 %5490
        %5494 = vset.pattern.permute.xlu0 0
        %5495 = vperm.xlu0 %5494, %v5225
        %v5496 = vpop.permute.xlu0 %5495
        %5499 = vset.pattern.permute.xlu0 0
        %5500 = vperm.xlu0 %5499, %v5226
        %v5501 = vpop.permute.xlu0 %5500
        %5504 = vset.pattern.permute.xlu0 0
        %5505 = vperm.xlu0 %5504, %v5227
        %v5506 = vpop.permute.xlu0 %5505
        %5509 = vset.pattern.permute.xlu0 0
        %5510 = vperm.xlu0 %5509, %v5228
        %v5511 = vpop.permute.xlu0 %5510
        %5514 = vset.pattern.permute.xlu0 0
        %5515 = vperm.xlu0 %5514, %v5229
        %v5516 = vpop.permute.xlu0 %5515
        %5519 = vset.pattern.permute.xlu0 0
        %5520 = vperm.xlu0 %5519, %v5230
        %v5521 = vpop.permute.xlu0 %5520
        %5524 = vset.pattern.permute.xlu0 0
        %5525 = vperm.xlu0 %5524, %v5231
        %v5526 = vpop.permute.xlu0 %5525
        %5529 = vset.pattern.permute.xlu0 0
        %5530 = vperm.xlu0 %5529, %v5232
        %v5531 = vpop.permute.xlu0 %5530
        %5534 = vset.pattern.permute.xlu0 0
        %5535 = vperm.xlu0 %5534, %v5233
        %v5536 = vpop.permute.xlu0 %5535
        %5539 = vset.pattern.permute.xlu0 0
        %5540 = vperm.xlu0 %5539, %v5234
        %v5541 = vpop.permute.xlu0 %5540
        %5544 = vset.pattern.permute.xlu0 0
        %5545 = vperm.xlu0 %5544, %v5235
        %v5546 = vpop.permute.xlu0 %5545
        %5549 = vset.pattern.permute.xlu0 0
        %5550 = vperm.xlu0 %5549, %v5236
        %v5551 = vpop.permute.xlu0 %5550
        %5554 = vset.pattern.permute.xlu0 0
        %5555 = vperm.xlu0 %5554, %v5237
        %v5556 = vpop.permute.xlu0 %5555
        %v5558 = vadd.f32 %v5110, %v5241
        %v5559 = vadd.f32 %v5111, %v5246
        %v5560 = vadd.f32 %v5112, %v5251
        %v5561 = vadd.f32 %v5113, %v5256
        %v5562 = vadd.f32 %v5114, %v5261
        %v5563 = vadd.f32 %v5115, %v5266
        %v5564 = vadd.f32 %v5116, %v5271
        %v5565 = vadd.f32 %v5117, %v5276
        %v5566 = vadd.f32 %v5118, %v5281
        %v5567 = vadd.f32 %v5119, %v5286
        %v5568 = vadd.f32 %v5120, %v5291
        %v5569 = vadd.f32 %v5121, %v5296
        %v5570 = vadd.f32 %v5122, %v5301
        %v5571 = vadd.f32 %v5123, %v5306
        %v5572 = vadd.f32 %v5124, %v5311
        %v5573 = vadd.f32 %v5125, %v5316
        %v5574 = vadd.f32 %v5126, %v5321
        %v5575 = vadd.f32 %v5127, %v5326
        %v5576 = vadd.f32 %v5128, %v5331
        %v5577 = vadd.f32 %v5129, %v5336
        %v5578 = vadd.f32 %v5130, %v5341
        %v5579 = vadd.f32 %v5131, %v5346
        %v5580 = vadd.f32 %v5132, %v5351
        %v5581 = vadd.f32 %v5133, %v5356
        %v5582 = vadd.f32 %v5134, %v5361
        %v5583 = vadd.f32 %v5135, %v5366
        %v5584 = vadd.f32 %v5136, %v5371
        %v5585 = vadd.f32 %v5137, %v5376
        %v5586 = vadd.f32 %v5138, %v5381
        %v5587 = vadd.f32 %v5139, %v5386
        %v5588 = vadd.f32 %v5140, %v5391
        %v5589 = vadd.f32 %v5141, %v5396
        %v5590 = vadd.f32 %v5142, %v5401
        %v5591 = vadd.f32 %v5143, %v5406
        %v5592 = vadd.f32 %v5144, %v5411
        %v5593 = vadd.f32 %v5145, %v5416
        %v5594 = vadd.f32 %v5146, %v5421
        %v5595 = vadd.f32 %v5147, %v5426
        %v5596 = vadd.f32 %v5148, %v5431
        %v5597 = vadd.f32 %v5149, %v5436
        %v5598 = vadd.f32 %v5150, %v5441
        %v5599 = vadd.f32 %v5151, %v5446
        %v5600 = vadd.f32 %v5152, %v5451
        %v5601 = vadd.f32 %v5153, %v5456
        %v5602 = vadd.f32 %v5154, %v5461
        %v5603 = vadd.f32 %v5155, %v5466
        %v5604 = vadd.f32 %v5156, %v5471
        %v5605 = vadd.f32 %v5157, %v5476
        %v5606 = vadd.f32 %v5158, %v5481
        %v5607 = vadd.f32 %v5159, %v5486
        %v5608 = vadd.f32 %v5160, %v5491
        %v5609 = vadd.f32 %v5161, %v5496
        %v5610 = vadd.f32 %v5162, %v5501
        %v5611 = vadd.f32 %v5163, %v5506
        %v5612 = vadd.f32 %v5164, %v5511
        %v5613 = vadd.f32 %v5165, %v5516
        %v5614 = vadd.f32 %v5166, %v5521
        %v5615 = vadd.f32 %v5167, %v5526
        %v5616 = vadd.f32 %v5168, %v5531
        %v5617 = vadd.f32 %v5169, %v5536
        %v5618 = vadd.f32 %v5170, %v5541
        %v5619 = vadd.f32 %v5171, %v5546
        %v5620 = vadd.f32 %v5172, %v5551
        %v5621 = vadd.f32 %v5173, %v5556
        %v5622 = vmax.f32 %v5558, 0.0
        %v5623 = vmax.f32 %v5559, 0.0
        %v5624 = vmax.f32 %v5560, 0.0
        %v5625 = vmax.f32 %v5561, 0.0
        %v5626 = vmax.f32 %v5562, 0.0
        %v5627 = vmax.f32 %v5563, 0.0
        %v5628 = vmax.f32 %v5564, 0.0
        %v5629 = vmax.f32 %v5565, 0.0
        %v5630 = vmax.f32 %v5566, 0.0
        %v5631 = vmax.f32 %v5567, 0.0
        %v5632 = vmax.f32 %v5568, 0.0
        %v5633 = vmax.f32 %v5569, 0.0
        %v5634 = vmax.f32 %v5570, 0.0
        %v5635 = vmax.f32 %v5571, 0.0
        %v5636 = vmax.f32 %v5572, 0.0
        %v5637 = vmax.f32 %v5573, 0.0
        %v5638 = vmax.f32 %v5574, 0.0
        %v5639 = vmax.f32 %v5575, 0.0
        %v5640 = vmax.f32 %v5576, 0.0
        %v5641 = vmax.f32 %v5577, 0.0
        %v5642 = vmax.f32 %v5578, 0.0
        %v5643 = vmax.f32 %v5579, 0.0
        %v5644 = vmax.f32 %v5580, 0.0
        %v5645 = vmax.f32 %v5581, 0.0
        %v5646 = vmax.f32 %v5582, 0.0
        %v5647 = vmax.f32 %v5583, 0.0
        %v5648 = vmax.f32 %v5584, 0.0
        %v5649 = vmax.f32 %v5585, 0.0
        %v5650 = vmax.f32 %v5586, 0.0
        %v5651 = vmax.f32 %v5587, 0.0
        %v5652 = vmax.f32 %v5588, 0.0
        %v5653 = vmax.f32 %v5589, 0.0
        %v5654 = vmax.f32 %v5590, 0.0
        %v5655 = vmax.f32 %v5591, 0.0
        %v5656 = vmax.f32 %v5592, 0.0
        %v5657 = vmax.f32 %v5593, 0.0
        %v5658 = vmax.f32 %v5594, 0.0
        %v5659 = vmax.f32 %v5595, 0.0
        %v5660 = vmax.f32 %v5596, 0.0
        %v5661 = vmax.f32 %v5597, 0.0
        %v5662 = vmax.f32 %v5598, 0.0
        %v5663 = vmax.f32 %v5599, 0.0
        %v5664 = vmax.f32 %v5600, 0.0
        %v5665 = vmax.f32 %v5601, 0.0
        %v5666 = vmax.f32 %v5602, 0.0
        %v5667 = vmax.f32 %v5603, 0.0
        %v5668 = vmax.f32 %v5604, 0.0
        %v5669 = vmax.f32 %v5605, 0.0
        %v5670 = vmax.f32 %v5606, 0.0
        %v5671 = vmax.f32 %v5607, 0.0
        %v5672 = vmax.f32 %v5608, 0.0
        %v5673 = vmax.f32 %v5609, 0.0
        %v5674 = vmax.f32 %v5610, 0.0
        %v5675 = vmax.f32 %v5611, 0.0
        %v5676 = vmax.f32 %v5612, 0.0
        %v5677 = vmax.f32 %v5613, 0.0
        %v5678 = vmax.f32 %v5614, 0.0
        %v5679 = vmax.f32 %v5615, 0.0
        %v5680 = vmax.f32 %v5616, 0.0
        %v5681 = vmax.f32 %v5617, 0.0
        %v5682 = vmax.f32 %v5618, 0.0
        %v5683 = vmax.f32 %v5619, 0.0
        %v5684 = vmax.f32 %v5620, 0.0
        %v5685 = vmax.f32 %v5621, 0.0
        %v5686 = vpack.c.bf16 %v5623, %v5622
        %v5687 = vpack.c.bf16 %v5625, %v5624
        %v5688 = vpack.c.bf16 %v5627, %v5626
        %v5689 = vpack.c.bf16 %v5629, %v5628
        %v5690 = vpack.c.bf16 %v5631, %v5630
        %v5691 = vpack.c.bf16 %v5633, %v5632
        %v5692 = vpack.c.bf16 %v5635, %v5634
        %v5693 = vpack.c.bf16 %v5637, %v5636
        %v5694 = vpack.c.bf16 %v5639, %v5638
        %v5695 = vpack.c.bf16 %v5641, %v5640
        %v5696 = vpack.c.bf16 %v5643, %v5642
        %v5697 = vpack.c.bf16 %v5645, %v5644
        %v5698 = vpack.c.bf16 %v5647, %v5646
        %v5699 = vpack.c.bf16 %v5649, %v5648
        %v5700 = vpack.c.bf16 %v5651, %v5650
        %v5701 = vpack.c.bf16 %v5653, %v5652
        %v5702 = vpack.c.bf16 %v5655, %v5654
        %v5703 = vpack.c.bf16 %v5657, %v5656
        %v5704 = vpack.c.bf16 %v5659, %v5658
        %v5705 = vpack.c.bf16 %v5661, %v5660
        %v5706 = vpack.c.bf16 %v5663, %v5662
        %v5707 = vpack.c.bf16 %v5665, %v5664
        %v5708 = vpack.c.bf16 %v5667, %v5666
        %v5709 = vpack.c.bf16 %v5669, %v5668
        %v5710 = vpack.c.bf16 %v5671, %v5670
        %v5711 = vpack.c.bf16 %v5673, %v5672
        %v5712 = vpack.c.bf16 %v5675, %v5674
        %v5713 = vpack.c.bf16 %v5677, %v5676
        %v5714 = vpack.c.bf16 %v5679, %v5678
        %v5715 = vpack.c.bf16 %v5681, %v5680
        %v5716 = vpack.c.bf16 %v5683, %v5682
        %v5717 = vpack.c.bf16 %v5685, %v5684
        %v5718 = vld [vmem:[#allocation11] sm:$0xff]
        %v5719 = vld [vmem:[#allocation11 + $0x8] sm:$0xff]
        %v5720 = vld [vmem:[#allocation11 + $0x10] sm:$0xff]
        %v5721 = vld [vmem:[#allocation11 + $0x18] sm:$0xff]
        %v5722 = vld [vmem:[#allocation11 + $0x20] sm:$0xff]
        %v5723 = vld [vmem:[#allocation11 + $0x28] sm:$0xff]
        %v5724 = vld [vmem:[#allocation11 + $0x30] sm:$0xff]
        %v5725 = vld [vmem:[#allocation11 + $0x38] sm:$0xff]
        %v5726 = vld [vmem:[#allocation11 + $0x40] sm:$0xff]
        %v5727 = vld [vmem:[#allocation11 + $0x48] sm:$0xff]
        %v5728 = vld [vmem:[#allocation11 + $0x50] sm:$0xff]
        %v5729 = vld [vmem:[#allocation11 + $0x58] sm:$0xff]
        %v5730 = vld [vmem:[#allocation11 + $0x60] sm:$0xff]
        %v5731 = vld [vmem:[#allocation11 + $0x68] sm:$0xff]
        %v5732 = vld [vmem:[#allocation11 + $0x70] sm:$0xff]
        %v5733 = vld [vmem:[#allocation11 + $0x78] sm:$0xff]
        %v5734 = vld [vmem:[#allocation11 + $0x80] sm:$0xff]
        %v5735 = vld [vmem:[#allocation11 + $0x88] sm:$0xff]
        %v5736 = vld [vmem:[#allocation11 + $0x90] sm:$0xff]
        %v5737 = vld [vmem:[#allocation11 + $0x98] sm:$0xff]
        %v5738 = vld [vmem:[#allocation11 + $0xa0] sm:$0xff]
        %v5739 = vld [vmem:[#allocation11 + $0xa8] sm:$0xff]
        %v5740 = vld [vmem:[#allocation11 + $0xb0] sm:$0xff]
        %v5741 = vld [vmem:[#allocation11 + $0xb8] sm:$0xff]
        %v5742 = vld [vmem:[#allocation11 + $0xc0] sm:$0xff]
        %v5743 = vld [vmem:[#allocation11 + $0xc8] sm:$0xff]
        %v5744 = vld [vmem:[#allocation11 + $0xd0] sm:$0xff]
        %v5745 = vld [vmem:[#allocation11 + $0xd8] sm:$0xff]
        %v5746 = vld [vmem:[#allocation11 + $0xe0] sm:$0xff]
        %v5747 = vld [vmem:[#allocation11 + $0xe8] sm:$0xff]
        %v5748 = vld [vmem:[#allocation11 + $0xf0] sm:$0xff]
        %v5749 = vld [vmem:[#allocation11 + $0xf8] sm:$0xff]
        %v5750 = vld [vmem:[#allocation11 + $0x100] sm:$0xff]
        %v5751 = vld [vmem:[#allocation11 + $0x108] sm:$0xff]
        %v5752 = vld [vmem:[#allocation11 + $0x110] sm:$0xff]
        %v5753 = vld [vmem:[#allocation11 + $0x118] sm:$0xff]
        %v5754 = vld [vmem:[#allocation11 + $0x120] sm:$0xff]
        %v5755 = vld [vmem:[#allocation11 + $0x128] sm:$0xff]
        %v5756 = vld [vmem:[#allocation11 + $0x130] sm:$0xff]
        %v5757 = vld [vmem:[#allocation11 + $0x138] sm:$0xff]
        %v5758 = vld [vmem:[#allocation11 + $0x140] sm:$0xff]
        %v5759 = vld [vmem:[#allocation11 + $0x148] sm:$0xff]
        %v5760 = vld [vmem:[#allocation11 + $0x150] sm:$0xff]
        %v5761 = vld [vmem:[#allocation11 + $0x158] sm:$0xff]
        %v5762 = vld [vmem:[#allocation11 + $0x160] sm:$0xff]
        %v5763 = vld [vmem:[#allocation11 + $0x168] sm:$0xff]
        %v5764 = vld [vmem:[#allocation11 + $0x170] sm:$0xff]
        %v5765 = vld [vmem:[#allocation11 + $0x178] sm:$0xff]
        %v5766 = vld [vmem:[#allocation11 + $0x180] sm:$0xff]
        %v5767 = vld [vmem:[#allocation11 + $0x188] sm:$0xff]
        %v5768 = vld [vmem:[#allocation11 + $0x190] sm:$0xff]
        %v5769 = vld [vmem:[#allocation11 + $0x198] sm:$0xff]
        %v5770 = vld [vmem:[#allocation11 + $0x1a0] sm:$0xff]
        %v5771 = vld [vmem:[#allocation11 + $0x1a8] sm:$0xff]
        %v5772 = vld [vmem:[#allocation11 + $0x1b0] sm:$0xff]
        %v5773 = vld [vmem:[#allocation11 + $0x1b8] sm:$0xff]
        %v5774 = vld [vmem:[#allocation11 + $0x1c0] sm:$0xff]
        %v5775 = vld [vmem:[#allocation11 + $0x1c8] sm:$0xff]
        %v5776 = vld [vmem:[#allocation11 + $0x1d0] sm:$0xff]
        %v5777 = vld [vmem:[#allocation11 + $0x1d8] sm:$0xff]
        %v5778 = vld [vmem:[#allocation11 + $0x1e0] sm:$0xff]
        %v5779 = vld [vmem:[#allocation11 + $0x1e8] sm:$0xff]
        %v5780 = vld [vmem:[#allocation11 + $0x1f0] sm:$0xff]
        %v5781 = vld [vmem:[#allocation11 + $0x1f8] sm:$0xff]
        %v5782 = vld [vmem:[#allocation11 + $0x200] sm:$0xff]
        %v5783 = vld [vmem:[#allocation11 + $0x208] sm:$0xff]
        %v5784 = vld [vmem:[#allocation11 + $0x210] sm:$0xff]
        %v5785 = vld [vmem:[#allocation11 + $0x218] sm:$0xff]
        %v5786 = vld [vmem:[#allocation11 + $0x220] sm:$0xff]
        %v5787 = vld [vmem:[#allocation11 + $0x228] sm:$0xff]
        %v5788 = vld [vmem:[#allocation11 + $0x230] sm:$0xff]
        %v5789 = vld [vmem:[#allocation11 + $0x238] sm:$0xff]
        %v5790 = vld [vmem:[#allocation11 + $0x240] sm:$0xff]
        %v5791 = vld [vmem:[#allocation11 + $0x248] sm:$0xff]
        %v5792 = vld [vmem:[#allocation11 + $0x250] sm:$0xff]
        %v5793 = vld [vmem:[#allocation11 + $0x258] sm:$0xff]
        %v5794 = vld [vmem:[#allocation11 + $0x260] sm:$0xff]
        %v5795 = vld [vmem:[#allocation11 + $0x268] sm:$0xff]
        %v5796 = vld [vmem:[#allocation11 + $0x270] sm:$0xff]
        %v5797 = vld [vmem:[#allocation11 + $0x278] sm:$0xff]
        %v5798 = vld [vmem:[#allocation11 + $0x280] sm:$0xff]
        %v5799 = vld [vmem:[#allocation11 + $0x288] sm:$0xff]
        %v5800 = vld [vmem:[#allocation11 + $0x290] sm:$0xff]
        %v5801 = vld [vmem:[#allocation11 + $0x298] sm:$0xff]
        %v5802 = vld [vmem:[#allocation11 + $0x2a0] sm:$0xff]
        %v5803 = vld [vmem:[#allocation11 + $0x2a8] sm:$0xff]
        %v5804 = vld [vmem:[#allocation11 + $0x2b0] sm:$0xff]
        %v5805 = vld [vmem:[#allocation11 + $0x2b8] sm:$0xff]
        %v5806 = vld [vmem:[#allocation11 + $0x2c0] sm:$0xff]
        %v5807 = vld [vmem:[#allocation11 + $0x2c8] sm:$0xff]
        %v5808 = vld [vmem:[#allocation11 + $0x2d0] sm:$0xff]
        %v5809 = vld [vmem:[#allocation11 + $0x2d8] sm:$0xff]
        %v5810 = vld [vmem:[#allocation11 + $0x2e0] sm:$0xff]
        %v5811 = vld [vmem:[#allocation11 + $0x2e8] sm:$0xff]
        %v5812 = vld [vmem:[#allocation11 + $0x2f0] sm:$0xff]
        %v5813 = vld [vmem:[#allocation11 + $0x2f8] sm:$0xff]
        %v5814 = vld [vmem:[#allocation11 + $0x300] sm:$0xff]
        %v5815 = vld [vmem:[#allocation11 + $0x308] sm:$0xff]
        %v5816 = vld [vmem:[#allocation11 + $0x310] sm:$0xff]
        %v5817 = vld [vmem:[#allocation11 + $0x318] sm:$0xff]
        %v5818 = vld [vmem:[#allocation11 + $0x320] sm:$0xff]
        %v5819 = vld [vmem:[#allocation11 + $0x328] sm:$0xff]
        %v5820 = vld [vmem:[#allocation11 + $0x330] sm:$0xff]
        %v5821 = vld [vmem:[#allocation11 + $0x338] sm:$0xff]
        %v5822 = vld [vmem:[#allocation11 + $0x340] sm:$0xff]
        %v5823 = vld [vmem:[#allocation11 + $0x348] sm:$0xff]
        %v5824 = vld [vmem:[#allocation11 + $0x350] sm:$0xff]
        %v5825 = vld [vmem:[#allocation11 + $0x358] sm:$0xff]
        %v5826 = vld [vmem:[#allocation11 + $0x360] sm:$0xff]
        %v5827 = vld [vmem:[#allocation11 + $0x368] sm:$0xff]
        %v5828 = vld [vmem:[#allocation11 + $0x370] sm:$0xff]
        %v5829 = vld [vmem:[#allocation11 + $0x378] sm:$0xff]
        %v5830 = vld [vmem:[#allocation11 + $0x380] sm:$0xff]
        %v5831 = vld [vmem:[#allocation11 + $0x388] sm:$0xff]
        %v5832 = vld [vmem:[#allocation11 + $0x390] sm:$0xff]
        %v5833 = vld [vmem:[#allocation11 + $0x398] sm:$0xff]
        %v5834 = vld [vmem:[#allocation11 + $0x3a0] sm:$0xff]
        %v5835 = vld [vmem:[#allocation11 + $0x3a8] sm:$0xff]
        %v5836 = vld [vmem:[#allocation11 + $0x3b0] sm:$0xff]
        %v5837 = vld [vmem:[#allocation11 + $0x3b8] sm:$0xff]
        %v5838 = vld [vmem:[#allocation11 + $0x3c0] sm:$0xff]
        %v5839 = vld [vmem:[#allocation11 + $0x3c8] sm:$0xff]
        %v5840 = vld [vmem:[#allocation11 + $0x3d0] sm:$0xff]
        %v5841 = vld [vmem:[#allocation11 + $0x3d8] sm:$0xff]
        %v5842 = vld [vmem:[#allocation11 + $0x3e0] sm:$0xff]
        %v5843 = vld [vmem:[#allocation11 + $0x3e8] sm:$0xff]
        %v5844 = vld [vmem:[#allocation11 + $0x3f0] sm:$0xff]
        %v5845 = vld [vmem:[#allocation11 + $0x3f8] sm:$0xff]
        %v5846 = vld [vmem:[%s6] sm:$0xff]
        %v5847 = vld [vmem:[%s6 + $0x8] sm:$0xff]
        %v5848 = vld [vmem:[%s6 + $0x10] sm:$0xff]
        %v5849 = vld [vmem:[%s6 + $0x18] sm:$0xff]
        %v5850 = vld [vmem:[%s6 + $0x20] sm:$0xff]
        %v5851 = vld [vmem:[%s6 + $0x28] sm:$0xff]
        %v5852 = vld [vmem:[%s6 + $0x30] sm:$0xff]
        %v5853 = vld [vmem:[%s6 + $0x38] sm:$0xff]
        %v5854 = vld [vmem:[%s6 + $0x40] sm:$0xff]
        %v5855 = vld [vmem:[%s6 + $0x48] sm:$0xff]
        %v5856 = vld [vmem:[%s6 + $0x50] sm:$0xff]
        %v5857 = vld [vmem:[%s6 + $0x58] sm:$0xff]
        %v5858 = vld [vmem:[%s6 + $0x60] sm:$0xff]
        %v5859 = vld [vmem:[%s6 + $0x68] sm:$0xff]
        %v5860 = vld [vmem:[%s6 + $0x70] sm:$0xff]
        %v5861 = vld [vmem:[%s6 + $0x78] sm:$0xff]
        %v5862 = vld [vmem:[%s6 + $0x80] sm:$0xff]
        %v5863 = vld [vmem:[%s6 + $0x88] sm:$0xff]
        %v5864 = vld [vmem:[%s6 + $0x90] sm:$0xff]
        %v5865 = vld [vmem:[%s6 + $0x98] sm:$0xff]
        %v5866 = vld [vmem:[%s6 + $0xa0] sm:$0xff]
        %v5867 = vld [vmem:[%s6 + $0xa8] sm:$0xff]
        %v5868 = vld [vmem:[%s6 + $0xb0] sm:$0xff]
        %v5869 = vld [vmem:[%s6 + $0xb8] sm:$0xff]
        %v5870 = vld [vmem:[%s6 + $0xc0] sm:$0xff]
        %v5871 = vld [vmem:[%s6 + $0xc8] sm:$0xff]
        %v5872 = vld [vmem:[%s6 + $0xd0] sm:$0xff]
        %v5873 = vld [vmem:[%s6 + $0xd8] sm:$0xff]
        %v5874 = vld [vmem:[%s6 + $0xe0] sm:$0xff]
        %v5875 = vld [vmem:[%s6 + $0xe8] sm:$0xff]
        %v5876 = vld [vmem:[%s6 + $0xf0] sm:$0xff]
        %v5877 = vld [vmem:[%s6 + $0xf8] sm:$0xff]
        %v5878 = vld [vmem:[%s6 + $0x100] sm:$0xff]
        %v5879 = vld [vmem:[%s6 + $0x108] sm:$0xff]
        %v5880 = vld [vmem:[%s6 + $0x110] sm:$0xff]
        %v5881 = vld [vmem:[%s6 + $0x118] sm:$0xff]
        %v5882 = vld [vmem:[%s6 + $0x120] sm:$0xff]
        %v5883 = vld [vmem:[%s6 + $0x128] sm:$0xff]
        %v5884 = vld [vmem:[%s6 + $0x130] sm:$0xff]
        %v5885 = vld [vmem:[%s6 + $0x138] sm:$0xff]
        %v5886 = vld [vmem:[%s6 + $0x140] sm:$0xff]
        %v5887 = vld [vmem:[%s6 + $0x148] sm:$0xff]
        %v5888 = vld [vmem:[%s6 + $0x150] sm:$0xff]
        %v5889 = vld [vmem:[%s6 + $0x158] sm:$0xff]
        %v5890 = vld [vmem:[%s6 + $0x160] sm:$0xff]
        %v5891 = vld [vmem:[%s6 + $0x168] sm:$0xff]
        %v5892 = vld [vmem:[%s6 + $0x170] sm:$0xff]
        %v5893 = vld [vmem:[%s6 + $0x178] sm:$0xff]
        %v5894 = vld [vmem:[%s6 + $0x180] sm:$0xff]
        %v5895 = vld [vmem:[%s6 + $0x188] sm:$0xff]
        %v5896 = vld [vmem:[%s6 + $0x190] sm:$0xff]
        %v5897 = vld [vmem:[%s6 + $0x198] sm:$0xff]
        %v5898 = vld [vmem:[%s6 + $0x1a0] sm:$0xff]
        %v5899 = vld [vmem:[%s6 + $0x1a8] sm:$0xff]
        %v5900 = vld [vmem:[%s6 + $0x1b0] sm:$0xff]
        %v5901 = vld [vmem:[%s6 + $0x1b8] sm:$0xff]
        %v5902 = vld [vmem:[%s6 + $0x1c0] sm:$0xff]
        %v5903 = vld [vmem:[%s6 + $0x1c8] sm:$0xff]
        %v5904 = vld [vmem:[%s6 + $0x1d0] sm:$0xff]
        %v5905 = vld [vmem:[%s6 + $0x1d8] sm:$0xff]
        %v5906 = vld [vmem:[%s6 + $0x1e0] sm:$0xff]
        %v5907 = vld [vmem:[%s6 + $0x1e8] sm:$0xff]
        %v5908 = vld [vmem:[%s6 + $0x1f0] sm:$0xff]
        %v5909 = vld [vmem:[%s6 + $0x1f8] sm:$0xff]
        %5911 = vset.pattern.permute.xlu0 0
        %5912 = vperm.xlu0 %5911, %v5846
        %v5913 = vpop.permute.xlu0 %5912
        %5916 = vset.pattern.permute.xlu0 0
        %5917 = vperm.xlu0 %5916, %v5847
        %v5918 = vpop.permute.xlu0 %5917
        %5921 = vset.pattern.permute.xlu0 0
        %5922 = vperm.xlu0 %5921, %v5848
        %v5923 = vpop.permute.xlu0 %5922
        %5926 = vset.pattern.permute.xlu0 0
        %5927 = vperm.xlu0 %5926, %v5849
        %v5928 = vpop.permute.xlu0 %5927
        %5931 = vset.pattern.permute.xlu0 0
        %5932 = vperm.xlu0 %5931, %v5850
        %v5933 = vpop.permute.xlu0 %5932
        %5936 = vset.pattern.permute.xlu0 0
        %5937 = vperm.xlu0 %5936, %v5851
        %v5938 = vpop.permute.xlu0 %5937
        %5941 = vset.pattern.permute.xlu0 0
        %5942 = vperm.xlu0 %5941, %v5852
        %v5943 = vpop.permute.xlu0 %5942
        %5946 = vset.pattern.permute.xlu0 0
        %5947 = vperm.xlu0 %5946, %v5853
        %v5948 = vpop.permute.xlu0 %5947
        %5951 = vset.pattern.permute.xlu0 0
        %5952 = vperm.xlu0 %5951, %v5854
        %v5953 = vpop.permute.xlu0 %5952
        %5956 = vset.pattern.permute.xlu0 0
        %5957 = vperm.xlu0 %5956, %v5855
        %v5958 = vpop.permute.xlu0 %5957
        %5961 = vset.pattern.permute.xlu0 0
        %5962 = vperm.xlu0 %5961, %v5856
        %v5963 = vpop.permute.xlu0 %5962
        %5966 = vset.pattern.permute.xlu0 0
        %5967 = vperm.xlu0 %5966, %v5857
        %v5968 = vpop.permute.xlu0 %5967
        %5971 = vset.pattern.permute.xlu0 0
        %5972 = vperm.xlu0 %5971, %v5858
        %v5973 = vpop.permute.xlu0 %5972
        %5976 = vset.pattern.permute.xlu0 0
        %5977 = vperm.xlu0 %5976, %v5859
        %v5978 = vpop.permute.xlu0 %5977
        %5981 = vset.pattern.permute.xlu0 0
        %5982 = vperm.xlu0 %5981, %v5860
        %v5983 = vpop.permute.xlu0 %5982
        %5986 = vset.pattern.permute.xlu0 0
        %5987 = vperm.xlu0 %5986, %v5861
        %v5988 = vpop.permute.xlu0 %5987
        %5991 = vset.pattern.permute.xlu0 0
        %5992 = vperm.xlu0 %5991, %v5862
        %v5993 = vpop.permute.xlu0 %5992
        %5996 = vset.pattern.permute.xlu0 0
        %5997 = vperm.xlu0 %5996, %v5863
        %v5998 = vpop.permute.xlu0 %5997
        %6001 = vset.pattern.permute.xlu0 0
        %6002 = vperm.xlu0 %6001, %v5864
        %v6003 = vpop.permute.xlu0 %6002
        %6006 = vset.pattern.permute.xlu0 0
        %6007 = vperm.xlu0 %6006, %v5865
        %v6008 = vpop.permute.xlu0 %6007
        %6011 = vset.pattern.permute.xlu0 0
        %6012 = vperm.xlu0 %6011, %v5866
        %v6013 = vpop.permute.xlu0 %6012
        %6016 = vset.pattern.permute.xlu0 0
        %6017 = vperm.xlu0 %6016, %v5867
        %v6018 = vpop.permute.xlu0 %6017
        %6021 = vset.pattern.permute.xlu0 0
        %6022 = vperm.xlu0 %6021, %v5868
        %v6023 = vpop.permute.xlu0 %6022
        %6026 = vset.pattern.permute.xlu0 0
        %6027 = vperm.xlu0 %6026, %v5869
        %v6028 = vpop.permute.xlu0 %6027
        %6031 = vset.pattern.permute.xlu0 0
        %6032 = vperm.xlu0 %6031, %v5870
        %v6033 = vpop.permute.xlu0 %6032
        %6036 = vset.pattern.permute.xlu0 0
        %6037 = vperm.xlu0 %6036, %v5871
        %v6038 = vpop.permute.xlu0 %6037
        %6041 = vset.pattern.permute.xlu0 0
        %6042 = vperm.xlu0 %6041, %v5872
        %v6043 = vpop.permute.xlu0 %6042
        %6046 = vset.pattern.permute.xlu0 0
        %6047 = vperm.xlu0 %6046, %v5873
        %v6048 = vpop.permute.xlu0 %6047
        %6051 = vset.pattern.permute.xlu0 0
        %6052 = vperm.xlu0 %6051, %v5874
        %v6053 = vpop.permute.xlu0 %6052
        %6056 = vset.pattern.permute.xlu0 0
        %6057 = vperm.xlu0 %6056, %v5875
        %v6058 = vpop.permute.xlu0 %6057
        %6061 = vset.pattern.permute.xlu0 0
        %6062 = vperm.xlu0 %6061, %v5876
        %v6063 = vpop.permute.xlu0 %6062
        %6066 = vset.pattern.permute.xlu0 0
        %6067 = vperm.xlu0 %6066, %v5877
        %v6068 = vpop.permute.xlu0 %6067
        %6071 = vset.pattern.permute.xlu0 0
        %6072 = vperm.xlu0 %6071, %v5878
        %v6073 = vpop.permute.xlu0 %6072
        %6076 = vset.pattern.permute.xlu0 0
        %6077 = vperm.xlu0 %6076, %v5879
        %v6078 = vpop.permute.xlu0 %6077
        %6081 = vset.pattern.permute.xlu0 0
        %6082 = vperm.xlu0 %6081, %v5880
        %v6083 = vpop.permute.xlu0 %6082
        %6086 = vset.pattern.permute.xlu0 0
        %6087 = vperm.xlu0 %6086, %v5881
        %v6088 = vpop.permute.xlu0 %6087
        %6091 = vset.pattern.permute.xlu0 0
        %6092 = vperm.xlu0 %6091, %v5882
        %v6093 = vpop.permute.xlu0 %6092
        %6096 = vset.pattern.permute.xlu0 0
        %6097 = vperm.xlu0 %6096, %v5883
        %v6098 = vpop.permute.xlu0 %6097
        %6101 = vset.pattern.permute.xlu0 0
        %6102 = vperm.xlu0 %6101, %v5884
        %v6103 = vpop.permute.xlu0 %6102
        %6106 = vset.pattern.permute.xlu0 0
        %6107 = vperm.xlu0 %6106, %v5885
        %v6108 = vpop.permute.xlu0 %6107
        %6111 = vset.pattern.permute.xlu0 0
        %6112 = vperm.xlu0 %6111, %v5886
        %v6113 = vpop.permute.xlu0 %6112
        %6116 = vset.pattern.permute.xlu0 0
        %6117 = vperm.xlu0 %6116, %v5887
        %v6118 = vpop.permute.xlu0 %6117
        %6121 = vset.pattern.permute.xlu0 0
        %6122 = vperm.xlu0 %6121, %v5888
        %v6123 = vpop.permute.xlu0 %6122
        %6126 = vset.pattern.permute.xlu0 0
        %6127 = vperm.xlu0 %6126, %v5889
        %v6128 = vpop.permute.xlu0 %6127
        %6131 = vset.pattern.permute.xlu0 0
        %6132 = vperm.xlu0 %6131, %v5890
        %v6133 = vpop.permute.xlu0 %6132
        %6136 = vset.pattern.permute.xlu0 0
        %6137 = vperm.xlu0 %6136, %v5891
        %v6138 = vpop.permute.xlu0 %6137
        %6141 = vset.pattern.permute.xlu0 0
        %6142 = vperm.xlu0 %6141, %v5892
        %v6143 = vpop.permute.xlu0 %6142
        %6146 = vset.pattern.permute.xlu0 0
        %6147 = vperm.xlu0 %6146, %v5893
        %v6148 = vpop.permute.xlu0 %6147
        %6151 = vset.pattern.permute.xlu0 0
        %6152 = vperm.xlu0 %6151, %v5894
        %v6153 = vpop.permute.xlu0 %6152
        %6156 = vset.pattern.permute.xlu0 0
        %6157 = vperm.xlu0 %6156, %v5895
        %v6158 = vpop.permute.xlu0 %6157
        %6161 = vset.pattern.permute.xlu0 0
        %6162 = vperm.xlu0 %6161, %v5896
        %v6163 = vpop.permute.xlu0 %6162
        %6166 = vset.pattern.permute.xlu0 0
        %6167 = vperm.xlu0 %6166, %v5897
        %v6168 = vpop.permute.xlu0 %6167
        %6171 = vset.pattern.permute.xlu0 0
        %6172 = vperm.xlu0 %6171, %v5898
        %v6173 = vpop.permute.xlu0 %6172
        %6176 = vset.pattern.permute.xlu0 0
        %6177 = vperm.xlu0 %6176, %v5899
        %v6178 = vpop.permute.xlu0 %6177
        %6181 = vset.pattern.permute.xlu0 0
        %6182 = vperm.xlu0 %6181, %v5900
        %v6183 = vpop.permute.xlu0 %6182
        %6186 = vset.pattern.permute.xlu0 0
        %6187 = vperm.xlu0 %6186, %v5901
        %v6188 = vpop.permute.xlu0 %6187
        %6191 = vset.pattern.permute.xlu0 0
        %6192 = vperm.xlu0 %6191, %v5902
        %v6193 = vpop.permute.xlu0 %6192
        %6196 = vset.pattern.permute.xlu0 0
        %6197 = vperm.xlu0 %6196, %v5903
        %v6198 = vpop.permute.xlu0 %6197
        %6201 = vset.pattern.permute.xlu0 0
        %6202 = vperm.xlu0 %6201, %v5904
        %v6203 = vpop.permute.xlu0 %6202
        %6206 = vset.pattern.permute.xlu0 0
        %6207 = vperm.xlu0 %6206, %v5905
        %v6208 = vpop.permute.xlu0 %6207
        %6211 = vset.pattern.permute.xlu0 0
        %6212 = vperm.xlu0 %6211, %v5906
        %v6213 = vpop.permute.xlu0 %6212
        %6216 = vset.pattern.permute.xlu0 0
        %6217 = vperm.xlu0 %6216, %v5907
        %v6218 = vpop.permute.xlu0 %6217
        %6221 = vset.pattern.permute.xlu0 0
        %6222 = vperm.xlu0 %6221, %v5908
        %v6223 = vpop.permute.xlu0 %6222
        %6226 = vset.pattern.permute.xlu0 0
        %6227 = vperm.xlu0 %6226, %v5909
        %v6228 = vpop.permute.xlu0 %6227
        %v6358 = vunpack.c.l.b16 %v5718
        %v6359 = vunpack.c.h.b16 %v5718
        %v6360 = vunpack.c.l.b16 %v5719
        %v6361 = vunpack.c.h.b16 %v5719
        %v6362 = vunpack.c.l.b16 %v5720
        %v6363 = vunpack.c.h.b16 %v5720
        %v6364 = vunpack.c.l.b16 %v5721
        %v6365 = vunpack.c.h.b16 %v5721
        %v6366 = vunpack.c.l.b16 %v5722
        %v6367 = vunpack.c.h.b16 %v5722
        %v6368 = vunpack.c.l.b16 %v5723
        %v6369 = vunpack.c.h.b16 %v5723
        %v6370 = vunpack.c.l.b16 %v5724
        %v6371 = vunpack.c.h.b16 %v5724
        %v6372 = vunpack.c.l.b16 %v5725
        %v6373 = vunpack.c.h.b16 %v5725
        %v6374 = vunpack.c.l.b16 %v5726
        %v6375 = vunpack.c.h.b16 %v5726
        %v6376 = vunpack.c.l.b16 %v5727
        %v6377 = vunpack.c.h.b16 %v5727
        %v6378 = vunpack.c.l.b16 %v5728
        %v6379 = vunpack.c.h.b16 %v5728
        %v6380 = vunpack.c.l.b16 %v5729
        %v6381 = vunpack.c.h.b16 %v5729
        %v6382 = vunpack.c.l.b16 %v5730
        %v6383 = vunpack.c.h.b16 %v5730
        %v6384 = vunpack.c.l.b16 %v5731
        %v6385 = vunpack.c.h.b16 %v5731
        %v6386 = vunpack.c.l.b16 %v5732
        %v6387 = vunpack.c.h.b16 %v5732
        %v6388 = vunpack.c.l.b16 %v5733
        %v6389 = vunpack.c.h.b16 %v5733
        %v6390 = vunpack.c.l.b16 %v5734
        %v6391 = vunpack.c.h.b16 %v5734
        %v6392 = vunpack.c.l.b16 %v5735
        %v6393 = vunpack.c.h.b16 %v5735
        %v6394 = vunpack.c.l.b16 %v5736
        %v6395 = vunpack.c.h.b16 %v5736
        %v6396 = vunpack.c.l.b16 %v5737
        %v6397 = vunpack.c.h.b16 %v5737
        %v6398 = vunpack.c.l.b16 %v5738
        %v6399 = vunpack.c.h.b16 %v5738
        %v6400 = vunpack.c.l.b16 %v5739
        %v6401 = vunpack.c.h.b16 %v5739
        %v6402 = vunpack.c.l.b16 %v5740
        %v6403 = vunpack.c.h.b16 %v5740
        %v6404 = vunpack.c.l.b16 %v5741
        %v6405 = vunpack.c.h.b16 %v5741
        %v6406 = vunpack.c.l.b16 %v5742
        %v6407 = vunpack.c.h.b16 %v5742
        %v6408 = vunpack.c.l.b16 %v5743
        %v6409 = vunpack.c.h.b16 %v5743
        %v6410 = vunpack.c.l.b16 %v5744
        %v6411 = vunpack.c.h.b16 %v5744
        %v6412 = vunpack.c.l.b16 %v5745
        %v6413 = vunpack.c.h.b16 %v5745
        %v6414 = vunpack.c.l.b16 %v5746
        %v6415 = vunpack.c.h.b16 %v5746
        %v6416 = vunpack.c.l.b16 %v5747
        %v6417 = vunpack.c.h.b16 %v5747
        %v6418 = vunpack.c.l.b16 %v5748
        %v6419 = vunpack.c.h.b16 %v5748
        %v6420 = vunpack.c.l.b16 %v5749
        %v6421 = vunpack.c.h.b16 %v5749
        %v6422 = vunpack.c.l.b16 %v5750
        %v6423 = vunpack.c.h.b16 %v5750
        %v6424 = vunpack.c.l.b16 %v5751
        %v6425 = vunpack.c.h.b16 %v5751
        %v6426 = vunpack.c.l.b16 %v5752
        %v6427 = vunpack.c.h.b16 %v5752
        %v6428 = vunpack.c.l.b16 %v5753
        %v6429 = vunpack.c.h.b16 %v5753
        %v6430 = vunpack.c.l.b16 %v5754
        %v6431 = vunpack.c.h.b16 %v5754
        %v6432 = vunpack.c.l.b16 %v5755
        %v6433 = vunpack.c.h.b16 %v5755
        %v6434 = vunpack.c.l.b16 %v5756
        %v6435 = vunpack.c.h.b16 %v5756
        %v6436 = vunpack.c.l.b16 %v5757
        %v6437 = vunpack.c.h.b16 %v5757
        %v6438 = vunpack.c.l.b16 %v5758
        %v6439 = vunpack.c.h.b16 %v5758
        %v6440 = vunpack.c.l.b16 %v5759
        %v6441 = vunpack.c.h.b16 %v5759
        %v6442 = vunpack.c.l.b16 %v5760
        %v6443 = vunpack.c.h.b16 %v5760
        %v6444 = vunpack.c.l.b16 %v5761
        %v6445 = vunpack.c.h.b16 %v5761
        %v6446 = vunpack.c.l.b16 %v5762
        %v6447 = vunpack.c.h.b16 %v5762
        %v6448 = vunpack.c.l.b16 %v5763
        %v6449 = vunpack.c.h.b16 %v5763
        %v6450 = vunpack.c.l.b16 %v5764
        %v6451 = vunpack.c.h.b16 %v5764
        %v6452 = vunpack.c.l.b16 %v5765
        %v6453 = vunpack.c.h.b16 %v5765
        %v6454 = vunpack.c.l.b16 %v5766
        %v6455 = vunpack.c.h.b16 %v5766
        %v6456 = vunpack.c.l.b16 %v5767
        %v6457 = vunpack.c.h.b16 %v5767
        %v6458 = vunpack.c.l.b16 %v5768
        %v6459 = vunpack.c.h.b16 %v5768
        %v6460 = vunpack.c.l.b16 %v5769
        %v6461 = vunpack.c.h.b16 %v5769
        %v6462 = vunpack.c.l.b16 %v5770
        %v6463 = vunpack.c.h.b16 %v5770
        %v6464 = vunpack.c.l.b16 %v5771
        %v6465 = vunpack.c.h.b16 %v5771
        %v6466 = vunpack.c.l.b16 %v5772
        %v6467 = vunpack.c.h.b16 %v5772
        %v6468 = vunpack.c.l.b16 %v5773
        %v6469 = vunpack.c.h.b16 %v5773
        %v6470 = vunpack.c.l.b16 %v5774
        %v6471 = vunpack.c.h.b16 %v5774
        %v6472 = vunpack.c.l.b16 %v5775
        %v6473 = vunpack.c.h.b16 %v5775
        %v6474 = vunpack.c.l.b16 %v5776
        %v6475 = vunpack.c.h.b16 %v5776
        %v6476 = vunpack.c.l.b16 %v5777
        %v6477 = vunpack.c.h.b16 %v5777
        %v6478 = vunpack.c.l.b16 %v5778
        %v6479 = vunpack.c.h.b16 %v5778
        %v6480 = vunpack.c.l.b16 %v5779
        %v6481 = vunpack.c.h.b16 %v5779
        %v6482 = vunpack.c.l.b16 %v5780
        %v6483 = vunpack.c.h.b16 %v5780
        %v6484 = vunpack.c.l.b16 %v5781
        %v6485 = vunpack.c.h.b16 %v5781
        %v6486 = vunpack.c.l.b16 %v5782
        %v6487 = vunpack.c.h.b16 %v5782
        %v6488 = vunpack.c.l.b16 %v5783
        %v6489 = vunpack.c.h.b16 %v5783
        %v6490 = vunpack.c.l.b16 %v5784
        %v6491 = vunpack.c.h.b16 %v5784
        %v6492 = vunpack.c.l.b16 %v5785
        %v6493 = vunpack.c.h.b16 %v5785
        %v6494 = vunpack.c.l.b16 %v5786
        %v6495 = vunpack.c.h.b16 %v5786
        %v6496 = vunpack.c.l.b16 %v5787
        %v6497 = vunpack.c.h.b16 %v5787
        %v6498 = vunpack.c.l.b16 %v5788
        %v6499 = vunpack.c.h.b16 %v5788
        %v6500 = vunpack.c.l.b16 %v5789
        %v6501 = vunpack.c.h.b16 %v5789
        %v6502 = vunpack.c.l.b16 %v5790
        %v6503 = vunpack.c.h.b16 %v5790
        %v6504 = vunpack.c.l.b16 %v5791
        %v6505 = vunpack.c.h.b16 %v5791
        %v6506 = vunpack.c.l.b16 %v5792
        %v6507 = vunpack.c.h.b16 %v5792
        %v6508 = vunpack.c.l.b16 %v5793
        %v6509 = vunpack.c.h.b16 %v5793
        %v6510 = vunpack.c.l.b16 %v5794
        %v6511 = vunpack.c.h.b16 %v5794
        %v6512 = vunpack.c.l.b16 %v5795
        %v6513 = vunpack.c.h.b16 %v5795
        %v6514 = vunpack.c.l.b16 %v5796
        %v6515 = vunpack.c.h.b16 %v5796
        %v6516 = vunpack.c.l.b16 %v5797
        %v6517 = vunpack.c.h.b16 %v5797
        %v6518 = vunpack.c.l.b16 %v5798
        %v6519 = vunpack.c.h.b16 %v5798
        %v6520 = vunpack.c.l.b16 %v5799
        %v6521 = vunpack.c.h.b16 %v5799
        %v6522 = vunpack.c.l.b16 %v5800
        %v6523 = vunpack.c.h.b16 %v5800
        %v6524 = vunpack.c.l.b16 %v5801
        %v6525 = vunpack.c.h.b16 %v5801
        %v6526 = vunpack.c.l.b16 %v5802
        %v6527 = vunpack.c.h.b16 %v5802
        %v6528 = vunpack.c.l.b16 %v5803
        %v6529 = vunpack.c.h.b16 %v5803
        %v6530 = vunpack.c.l.b16 %v5804
        %v6531 = vunpack.c.h.b16 %v5804
        %v6532 = vunpack.c.l.b16 %v5805
        %v6533 = vunpack.c.h.b16 %v5805
        %v6534 = vunpack.c.l.b16 %v5806
        %v6535 = vunpack.c.h.b16 %v5806
        %v6536 = vunpack.c.l.b16 %v5807
        %v6537 = vunpack.c.h.b16 %v5807
        %v6538 = vunpack.c.l.b16 %v5808
        %v6539 = vunpack.c.h.b16 %v5808
        %v6540 = vunpack.c.l.b16 %v5809
        %v6541 = vunpack.c.h.b16 %v5809
        %v6542 = vunpack.c.l.b16 %v5810
        %v6543 = vunpack.c.h.b16 %v5810
        %v6544 = vunpack.c.l.b16 %v5811
        %v6545 = vunpack.c.h.b16 %v5811
        %v6546 = vunpack.c.l.b16 %v5812
        %v6547 = vunpack.c.h.b16 %v5812
        %v6548 = vunpack.c.l.b16 %v5813
        %v6549 = vunpack.c.h.b16 %v5813
        %v6550 = vunpack.c.l.b16 %v5814
        %v6551 = vunpack.c.h.b16 %v5814
        %v6552 = vunpack.c.l.b16 %v5815
        %v6553 = vunpack.c.h.b16 %v5815
        %v6554 = vunpack.c.l.b16 %v5816
        %v6555 = vunpack.c.h.b16 %v5816
        %v6556 = vunpack.c.l.b16 %v5817
        %v6557 = vunpack.c.h.b16 %v5817
        %v6558 = vunpack.c.l.b16 %v5818
        %v6559 = vunpack.c.h.b16 %v5818
        %v6560 = vunpack.c.l.b16 %v5819
        %v6561 = vunpack.c.h.b16 %v5819
        %v6562 = vunpack.c.l.b16 %v5820
        %v6563 = vunpack.c.h.b16 %v5820
        %v6564 = vunpack.c.l.b16 %v5821
        %v6565 = vunpack.c.h.b16 %v5821
        %v6566 = vunpack.c.l.b16 %v5822
        %v6567 = vunpack.c.h.b16 %v5822
        %v6568 = vunpack.c.l.b16 %v5823
        %v6569 = vunpack.c.h.b16 %v5823
        %v6570 = vunpack.c.l.b16 %v5824
        %v6571 = vunpack.c.h.b16 %v5824
        %v6572 = vunpack.c.l.b16 %v5825
        %v6573 = vunpack.c.h.b16 %v5825
        %v6574 = vunpack.c.l.b16 %v5826
        %v6575 = vunpack.c.h.b16 %v5826
        %v6576 = vunpack.c.l.b16 %v5827
        %v6577 = vunpack.c.h.b16 %v5827
        %v6578 = vunpack.c.l.b16 %v5828
        %v6579 = vunpack.c.h.b16 %v5828
        %v6580 = vunpack.c.l.b16 %v5829
        %v6581 = vunpack.c.h.b16 %v5829
        %v6582 = vunpack.c.l.b16 %v5830
        %v6583 = vunpack.c.h.b16 %v5830
        %v6584 = vunpack.c.l.b16 %v5831
        %v6585 = vunpack.c.h.b16 %v5831
        %v6586 = vunpack.c.l.b16 %v5832
        %v6587 = vunpack.c.h.b16 %v5832
        %v6588 = vunpack.c.l.b16 %v5833
        %v6589 = vunpack.c.h.b16 %v5833
        %v6590 = vunpack.c.l.b16 %v5834
        %v6591 = vunpack.c.h.b16 %v5834
        %v6592 = vunpack.c.l.b16 %v5835
        %v6593 = vunpack.c.h.b16 %v5835
        %v6594 = vunpack.c.l.b16 %v5836
        %v6595 = vunpack.c.h.b16 %v5836
        %v6596 = vunpack.c.l.b16 %v5837
        %v6597 = vunpack.c.h.b16 %v5837
        %v6598 = vunpack.c.l.b16 %v5838
        %v6599 = vunpack.c.h.b16 %v5838
        %v6600 = vunpack.c.l.b16 %v5839
        %v6601 = vunpack.c.h.b16 %v5839
        %v6602 = vunpack.c.l.b16 %v5840
        %v6603 = vunpack.c.h.b16 %v5840
        %v6604 = vunpack.c.l.b16 %v5841
        %v6605 = vunpack.c.h.b16 %v5841
        %v6606 = vunpack.c.l.b16 %v5842
        %v6607 = vunpack.c.h.b16 %v5842
        %v6608 = vunpack.c.l.b16 %v5843
        %v6609 = vunpack.c.h.b16 %v5843
        %v6610 = vunpack.c.l.b16 %v5844
        %v6611 = vunpack.c.h.b16 %v5844
        %v6612 = vunpack.c.l.b16 %v5845
        %v6613 = vunpack.c.h.b16 %v5845
        %v6614 = vpack.c.b16 %v6362, %v6358
        %v6615 = vpack.c.b16 %v6363, %v6359
        %v6616 = vpack.c.b16 %v6364, %v6360
        %v6617 = vpack.c.b16 %v6365, %v6361
        %v6618 = vpack.c.b16 %v6370, %v6366
        %v6619 = vpack.c.b16 %v6371, %v6367
        %v6620 = vpack.c.b16 %v6372, %v6368
        %v6621 = vpack.c.b16 %v6373, %v6369
        %v6622 = vpack.c.b16 %v6378, %v6374
        %v6623 = vpack.c.b16 %v6379, %v6375
        %v6624 = vpack.c.b16 %v6380, %v6376
        %v6625 = vpack.c.b16 %v6381, %v6377
        %v6626 = vpack.c.b16 %v6386, %v6382
        %v6627 = vpack.c.b16 %v6387, %v6383
        %v6628 = vpack.c.b16 %v6388, %v6384
        %v6629 = vpack.c.b16 %v6389, %v6385
        %v6630 = vpack.c.b16 %v6394, %v6390
        %v6631 = vpack.c.b16 %v6395, %v6391
        %v6632 = vpack.c.b16 %v6396, %v6392
        %v6633 = vpack.c.b16 %v6397, %v6393
        %v6634 = vpack.c.b16 %v6402, %v6398
        %v6635 = vpack.c.b16 %v6403, %v6399
        %v6636 = vpack.c.b16 %v6404, %v6400
        %v6637 = vpack.c.b16 %v6405, %v6401
        %v6638 = vpack.c.b16 %v6410, %v6406
        %v6639 = vpack.c.b16 %v6411, %v6407
        %v6640 = vpack.c.b16 %v6412, %v6408
        %v6641 = vpack.c.b16 %v6413, %v6409
        %v6642 = vpack.c.b16 %v6418, %v6414
        %v6643 = vpack.c.b16 %v6419, %v6415
        %v6644 = vpack.c.b16 %v6420, %v6416
        %v6645 = vpack.c.b16 %v6421, %v6417
        %v6646 = vpack.c.b16 %v6426, %v6422
        %v6647 = vpack.c.b16 %v6427, %v6423
        %v6648 = vpack.c.b16 %v6428, %v6424
        %v6649 = vpack.c.b16 %v6429, %v6425
        %v6650 = vpack.c.b16 %v6434, %v6430
        %v6651 = vpack.c.b16 %v6435, %v6431
        %v6652 = vpack.c.b16 %v6436, %v6432
        %v6653 = vpack.c.b16 %v6437, %v6433
        %v6654 = vpack.c.b16 %v6442, %v6438
        %v6655 = vpack.c.b16 %v6443, %v6439
        %v6656 = vpack.c.b16 %v6444, %v6440
        %v6657 = vpack.c.b16 %v6445, %v6441
        %v6658 = vpack.c.b16 %v6450, %v6446
        %v6659 = vpack.c.b16 %v6451, %v6447
        %v6660 = vpack.c.b16 %v6452, %v6448
        %v6661 = vpack.c.b16 %v6453, %v6449
        %v6662 = vpack.c.b16 %v6458, %v6454
        %v6663 = vpack.c.b16 %v6459, %v6455
        %v6664 = vpack.c.b16 %v6460, %v6456
        %v6665 = vpack.c.b16 %v6461, %v6457
        %v6666 = vpack.c.b16 %v6466, %v6462
        %v6667 = vpack.c.b16 %v6467, %v6463
        %v6668 = vpack.c.b16 %v6468, %v6464
        %v6669 = vpack.c.b16 %v6469, %v6465
        %v6670 = vpack.c.b16 %v6474, %v6470
        %v6671 = vpack.c.b16 %v6475, %v6471
        %v6672 = vpack.c.b16 %v6476, %v6472
        %v6673 = vpack.c.b16 %v6477, %v6473
        %v6674 = vpack.c.b16 %v6482, %v6478
        %v6675 = vpack.c.b16 %v6483, %v6479
        %v6676 = vpack.c.b16 %v6484, %v6480
        %v6677 = vpack.c.b16 %v6485, %v6481
        %v6678 = vpack.c.b16 %v6490, %v6486
        %v6679 = vpack.c.b16 %v6491, %v6487
        %v6680 = vpack.c.b16 %v6492, %v6488
        %v6681 = vpack.c.b16 %v6493, %v6489
        %v6682 = vpack.c.b16 %v6498, %v6494
        %v6683 = vpack.c.b16 %v6499, %v6495
        %v6684 = vpack.c.b16 %v6500, %v6496
        %v6685 = vpack.c.b16 %v6501, %v6497
        %v6686 = vpack.c.b16 %v6506, %v6502
        %v6687 = vpack.c.b16 %v6507, %v6503
        %v6688 = vpack.c.b16 %v6508, %v6504
        %v6689 = vpack.c.b16 %v6509, %v6505
        %v6690 = vpack.c.b16 %v6514, %v6510
        %v6691 = vpack.c.b16 %v6515, %v6511
        %v6692 = vpack.c.b16 %v6516, %v6512
        %v6693 = vpack.c.b16 %v6517, %v6513
        %v6694 = vpack.c.b16 %v6522, %v6518
        %v6695 = vpack.c.b16 %v6523, %v6519
        %v6696 = vpack.c.b16 %v6524, %v6520
        %v6697 = vpack.c.b16 %v6525, %v6521
        %v6698 = vpack.c.b16 %v6530, %v6526
        %v6699 = vpack.c.b16 %v6531, %v6527
        %v6700 = vpack.c.b16 %v6532, %v6528
        %v6701 = vpack.c.b16 %v6533, %v6529
        %v6702 = vpack.c.b16 %v6538, %v6534
        %v6703 = vpack.c.b16 %v6539, %v6535
        %v6704 = vpack.c.b16 %v6540, %v6536
        %v6705 = vpack.c.b16 %v6541, %v6537
        %v6706 = vpack.c.b16 %v6546, %v6542
        %v6707 = vpack.c.b16 %v6547, %v6543
        %v6708 = vpack.c.b16 %v6548, %v6544
        %v6709 = vpack.c.b16 %v6549, %v6545
        %v6710 = vpack.c.b16 %v6554, %v6550
        %v6711 = vpack.c.b16 %v6555, %v6551
        %v6712 = vpack.c.b16 %v6556, %v6552
        %v6713 = vpack.c.b16 %v6557, %v6553
        %v6714 = vpack.c.b16 %v6562, %v6558
        %v6715 = vpack.c.b16 %v6563, %v6559
        %v6716 = vpack.c.b16 %v6564, %v6560
        %v6717 = vpack.c.b16 %v6565, %v6561
        %v6718 = vpack.c.b16 %v6570, %v6566
        %v6719 = vpack.c.b16 %v6571, %v6567
        %v6720 = vpack.c.b16 %v6572, %v6568
        %v6721 = vpack.c.b16 %v6573, %v6569
        %v6722 = vpack.c.b16 %v6578, %v6574
        %v6723 = vpack.c.b16 %v6579, %v6575
        %v6724 = vpack.c.b16 %v6580, %v6576
        %v6725 = vpack.c.b16 %v6581, %v6577
        %v6726 = vpack.c.b16 %v6586, %v6582
        %v6727 = vpack.c.b16 %v6587, %v6583
        %v6728 = vpack.c.b16 %v6588, %v6584
        %v6729 = vpack.c.b16 %v6589, %v6585
        %v6730 = vpack.c.b16 %v6594, %v6590
        %v6731 = vpack.c.b16 %v6595, %v6591
        %v6732 = vpack.c.b16 %v6596, %v6592
        %v6733 = vpack.c.b16 %v6597, %v6593
        %v6734 = vpack.c.b16 %v6602, %v6598
        %v6735 = vpack.c.b16 %v6603, %v6599
        %v6736 = vpack.c.b16 %v6604, %v6600
        %v6737 = vpack.c.b16 %v6605, %v6601
        %v6738 = vpack.c.b16 %v6610, %v6606
        %v6739 = vpack.c.b16 %v6611, %v6607
        %v6740 = vpack.c.b16 %v6612, %v6608
        %v6741 = vpack.c.b16 %v6613, %v6609
        %6870 = vmatpush.bf16.msra.mxu0 %v5693
        %6871 = vmatpush.bf16.msra.mxu0 %v5692
        %6872 = vmatpush.bf16.msra.mxu0 %v5691
        %6873 = vmatpush.bf16.msra.mxu0 %v5690
        %6874 = vmatpush.bf16.msra.mxu0 %v5689
        %6875 = vmatpush.bf16.msra.mxu0 %v5688
        %6876 = vmatpush.bf16.msra.mxu0 %v5687
        %6877 = vmatpush.bf16.msra.mxu0 %v5686
        %6878 = vmatmul.bf16.gmra.mxu0 %v6614
        %v6879 = vpop.f32.mrf.mxu0
        %v6880 = vadd.f32 %v5913, %v6879
        %v6881 = vpop.f32.mrf.mxu0
        %v6882 = vadd.f32 %v5918, %v6881
        %6883 = vmatmul.bf16.gmra.mxu0 %v6618
        %v6884 = vpop.f32.mrf.mxu0
        %v6885 = vadd.f32 %v5923, %v6884
        %v6886 = vpop.f32.mrf.mxu0
        %v6887 = vadd.f32 %v5928, %v6886
        %6888 = vmatmul.bf16.gmra.mxu0 %v6622
        %v6889 = vpop.f32.mrf.mxu0
        %v6890 = vadd.f32 %v5933, %v6889
        %v6891 = vpop.f32.mrf.mxu0
        %v6892 = vadd.f32 %v5938, %v6891
        %6893 = vmatmul.bf16.gmra.mxu0 %v6626
        %v6894 = vpop.f32.mrf.mxu0
        %v6895 = vadd.f32 %v5943, %v6894
        %v6896 = vpop.f32.mrf.mxu0
        %v6897 = vadd.f32 %v5948, %v6896
        %6898 = vmatmul.bf16.gmra.mxu0 %v6630
        %v6899 = vpop.f32.mrf.mxu0
        %v6900 = vadd.f32 %v5953, %v6899
        %v6901 = vpop.f32.mrf.mxu0
        %v6902 = vadd.f32 %v5958, %v6901
        %6903 = vmatmul.bf16.gmra.mxu0 %v6634
        %v6904 = vpop.f32.mrf.mxu0
        %v6905 = vadd.f32 %v5963, %v6904
        %v6906 = vpop.f32.mrf.mxu0
        %v6907 = vadd.f32 %v5968, %v6906
        %6908 = vmatmul.bf16.gmra.mxu0 %v6638
        %v6909 = vpop.f32.mrf.mxu0
        %v6910 = vadd.f32 %v5973, %v6909
        %v6911 = vpop.f32.mrf.mxu0
        %v6912 = vadd.f32 %v5978, %v6911
        %6913 = vmatmul.bf16.gmra.mxu0 %v6642
        %v6914 = vpop.f32.mrf.mxu0
        %v6915 = vadd.f32 %v5983, %v6914
        %v6916 = vpop.f32.mrf.mxu0
        %v6917 = vadd.f32 %v5988, %v6916
        %6918 = vmatmul.bf16.gmra.mxu0 %v6646
        %v6919 = vpop.f32.mrf.mxu0
        %v6920 = vadd.f32 %v5993, %v6919
        %v6921 = vpop.f32.mrf.mxu0
        %v6922 = vadd.f32 %v5998, %v6921
        %6923 = vmatmul.bf16.gmra.mxu0 %v6650
        %v6924 = vpop.f32.mrf.mxu0
        %v6925 = vadd.f32 %v6003, %v6924
        %v6926 = vpop.f32.mrf.mxu0
        %v6927 = vadd.f32 %v6008, %v6926
        %6928 = vmatmul.bf16.gmra.mxu0 %v6654
        %v6929 = vpop.f32.mrf.mxu0
        %v6930 = vadd.f32 %v6013, %v6929
        %v6931 = vpop.f32.mrf.mxu0
        %v6932 = vadd.f32 %v6018, %v6931
        %6933 = vmatmul.bf16.gmra.mxu0 %v6658
        %v6934 = vpop.f32.mrf.mxu0
        %v6935 = vadd.f32 %v6023, %v6934
        %v6936 = vpop.f32.mrf.mxu0
        %v6937 = vadd.f32 %v6028, %v6936
        %6938 = vmatmul.bf16.gmra.mxu0 %v6662
        %v6939 = vpop.f32.mrf.mxu0
        %v6940 = vadd.f32 %v6033, %v6939
        %v6941 = vpop.f32.mrf.mxu0
        %v6942 = vadd.f32 %v6038, %v6941
        %6943 = vmatmul.bf16.gmra.mxu0 %v6666
        %v6944 = vpop.f32.mrf.mxu0
        %v6945 = vadd.f32 %v6043, %v6944
        %v6946 = vpop.f32.mrf.mxu0
        %v6947 = vadd.f32 %v6048, %v6946
        %6948 = vmatmul.bf16.gmra.mxu0 %v6670
        %v6949 = vpop.f32.mrf.mxu0
        %v6950 = vadd.f32 %v6053, %v6949
        %v6951 = vpop.f32.mrf.mxu0
        %v6952 = vadd.f32 %v6058, %v6951
        %6953 = vmatmul.bf16.gmra.mxu0 %v6674
        %v6954 = vpop.f32.mrf.mxu0
        %v6955 = vadd.f32 %v6063, %v6954
        %v6956 = vpop.f32.mrf.mxu0
        %v6957 = vadd.f32 %v6068, %v6956
        %6958 = vmatmul.bf16.gmra.mxu0 %v6678
        %v6959 = vpop.f32.mrf.mxu0
        %v6960 = vadd.f32 %v6073, %v6959
        %v6961 = vpop.f32.mrf.mxu0
        %v6962 = vadd.f32 %v6078, %v6961
        %6963 = vmatmul.bf16.gmra.mxu0 %v6682
        %v6964 = vpop.f32.mrf.mxu0
        %v6965 = vadd.f32 %v6083, %v6964
        %v6966 = vpop.f32.mrf.mxu0
        %v6967 = vadd.f32 %v6088, %v6966
        %6968 = vmatmul.bf16.gmra.mxu0 %v6686
        %v6969 = vpop.f32.mrf.mxu0
        %v6970 = vadd.f32 %v6093, %v6969
        %v6971 = vpop.f32.mrf.mxu0
        %v6972 = vadd.f32 %v6098, %v6971
        %6973 = vmatmul.bf16.gmra.mxu0 %v6690
        %v6974 = vpop.f32.mrf.mxu0
        %v6975 = vadd.f32 %v6103, %v6974
        %v6976 = vpop.f32.mrf.mxu0
        %v6977 = vadd.f32 %v6108, %v6976
        %6978 = vmatmul.bf16.gmra.mxu0 %v6694
        %v6979 = vpop.f32.mrf.mxu0
        %v6980 = vadd.f32 %v6113, %v6979
        %v6981 = vpop.f32.mrf.mxu0
        %v6982 = vadd.f32 %v6118, %v6981
        %6983 = vmatmul.bf16.gmra.mxu0 %v6698
        %v6984 = vpop.f32.mrf.mxu0
        %v6985 = vadd.f32 %v6123, %v6984
        %v6986 = vpop.f32.mrf.mxu0
        %v6987 = vadd.f32 %v6128, %v6986
        %6988 = vmatmul.bf16.gmra.mxu0 %v6702
        %v6989 = vpop.f32.mrf.mxu0
        %v6990 = vadd.f32 %v6133, %v6989
        %v6991 = vpop.f32.mrf.mxu0
        %v6992 = vadd.f32 %v6138, %v6991
        %6993 = vmatmul.bf16.gmra.mxu0 %v6706
        %v6994 = vpop.f32.mrf.mxu0
        %v6995 = vadd.f32 %v6143, %v6994
        %v6996 = vpop.f32.mrf.mxu0
        %v6997 = vadd.f32 %v6148, %v6996
        %6998 = vmatmul.bf16.gmra.mxu0 %v6710
        %v6999 = vpop.f32.mrf.mxu0
        %v7000 = vadd.f32 %v6153, %v6999
        %v7001 = vpop.f32.mrf.mxu0
        %v7002 = vadd.f32 %v6158, %v7001
        %7003 = vmatmul.bf16.gmra.mxu0 %v6714
        %v7004 = vpop.f32.mrf.mxu0
        %v7005 = vadd.f32 %v6163, %v7004
        %v7006 = vpop.f32.mrf.mxu0
        %v7007 = vadd.f32 %v6168, %v7006
        %7008 = vmatmul.bf16.gmra.mxu0 %v6718
        %v7009 = vpop.f32.mrf.mxu0
        %v7010 = vadd.f32 %v6173, %v7009
        %v7011 = vpop.f32.mrf.mxu0
        %v7012 = vadd.f32 %v6178, %v7011
        %7013 = vmatmul.bf16.gmra.mxu0 %v6722
        %v7014 = vpop.f32.mrf.mxu0
        %v7015 = vadd.f32 %v6183, %v7014
        %v7016 = vpop.f32.mrf.mxu0
        %v7017 = vadd.f32 %v6188, %v7016
        %7018 = vmatmul.bf16.gmra.mxu0 %v6726
        %v7019 = vpop.f32.mrf.mxu0
        %v7020 = vadd.f32 %v6193, %v7019
        %v7021 = vpop.f32.mrf.mxu0
        %v7022 = vadd.f32 %v6198, %v7021
        %7023 = vmatmul.bf16.gmra.mxu0 %v6730
        %v7024 = vpop.f32.mrf.mxu0
        %v7025 = vadd.f32 %v6203, %v7024
        %v7026 = vpop.f32.mrf.mxu0
        %v7027 = vadd.f32 %v6208, %v7026
        %7028 = vmatmul.bf16.gmra.mxu0 %v6734
        %v7029 = vpop.f32.mrf.mxu0
        %v7030 = vadd.f32 %v6213, %v7029
        %v7031 = vpop.f32.mrf.mxu0
        %v7032 = vadd.f32 %v6218, %v7031
        %7033 = vmatmul.bf16.gmra.mxu0 %v6738
        %v7034 = vpop.f32.mrf.mxu0
        %v7035 = vadd.f32 %v6223, %v7034
        %v7036 = vpop.f32.mrf.mxu0
        %v7037 = vadd.f32 %v6228, %v7036
        %7038 = vdwg.mxu0
        %7039 = vmatpush.bf16.msra.mxu0 %v5701
        %7040 = vmatpush.bf16.msra.mxu0 %v5700
        %7041 = vmatpush.bf16.msra.mxu0 %v5699
        %7042 = vmatpush.bf16.msra.mxu0 %v5698
        %7043 = vmatpush.bf16.msra.mxu0 %v5697
        %7044 = vmatpush.bf16.msra.mxu0 %v5696
        %7045 = vmatpush.bf16.msra.mxu0 %v5695
        %7046 = vmatpush.bf16.msra.mxu0 %v5694
        %7047 = vmatmul.bf16.gmra.mxu0 %v6615
        %v7048 = vpop.f32.mrf.mxu0
        %v7049 = vadd.f32 %v6880, %v7048
        %v7050 = vpop.f32.mrf.mxu0
        %v7051 = vadd.f32 %v6882, %v7050
        %7052 = vmatmul.bf16.gmra.mxu0 %v6619
        %v7053 = vpop.f32.mrf.mxu0
        %v7054 = vadd.f32 %v6885, %v7053
        %v7055 = vpop.f32.mrf.mxu0
        %v7056 = vadd.f32 %v6887, %v7055
        %7057 = vmatmul.bf16.gmra.mxu0 %v6623
        %v7058 = vpop.f32.mrf.mxu0
        %v7059 = vadd.f32 %v6890, %v7058
        %v7060 = vpop.f32.mrf.mxu0
        %v7061 = vadd.f32 %v6892, %v7060
        %7062 = vmatmul.bf16.gmra.mxu0 %v6627
        %v7063 = vpop.f32.mrf.mxu0
        %v7064 = vadd.f32 %v6895, %v7063
        %v7065 = vpop.f32.mrf.mxu0
        %v7066 = vadd.f32 %v6897, %v7065
        %7067 = vmatmul.bf16.gmra.mxu0 %v6631
        %v7068 = vpop.f32.mrf.mxu0
        %v7069 = vadd.f32 %v6900, %v7068
        %v7070 = vpop.f32.mrf.mxu0
        %v7071 = vadd.f32 %v6902, %v7070
        %7072 = vmatmul.bf16.gmra.mxu0 %v6635
        %v7073 = vpop.f32.mrf.mxu0
        %v7074 = vadd.f32 %v6905, %v7073
        %v7075 = vpop.f32.mrf.mxu0
        %v7076 = vadd.f32 %v6907, %v7075
        %7077 = vmatmul.bf16.gmra.mxu0 %v6639
        %v7078 = vpop.f32.mrf.mxu0
        %v7079 = vadd.f32 %v6910, %v7078
        %v7080 = vpop.f32.mrf.mxu0
        %v7081 = vadd.f32 %v6912, %v7080
        %7082 = vmatmul.bf16.gmra.mxu0 %v6643
        %v7083 = vpop.f32.mrf.mxu0
        %v7084 = vadd.f32 %v6915, %v7083
        %v7085 = vpop.f32.mrf.mxu0
        %v7086 = vadd.f32 %v6917, %v7085
        %7087 = vmatmul.bf16.gmra.mxu0 %v6647
        %v7088 = vpop.f32.mrf.mxu0
        %v7089 = vadd.f32 %v6920, %v7088
        %v7090 = vpop.f32.mrf.mxu0
        %v7091 = vadd.f32 %v6922, %v7090
        %7092 = vmatmul.bf16.gmra.mxu0 %v6651
        %v7093 = vpop.f32.mrf.mxu0
        %v7094 = vadd.f32 %v6925, %v7093
        %v7095 = vpop.f32.mrf.mxu0
        %v7096 = vadd.f32 %v6927, %v7095
        %7097 = vmatmul.bf16.gmra.mxu0 %v6655
        %v7098 = vpop.f32.mrf.mxu0
        %v7099 = vadd.f32 %v6930, %v7098
        %v7100 = vpop.f32.mrf.mxu0
        %v7101 = vadd.f32 %v6932, %v7100
        %7102 = vmatmul.bf16.gmra.mxu0 %v6659
        %v7103 = vpop.f32.mrf.mxu0
        %v7104 = vadd.f32 %v6935, %v7103
        %v7105 = vpop.f32.mrf.mxu0
        %v7106 = vadd.f32 %v6937, %v7105
        %7107 = vmatmul.bf16.gmra.mxu0 %v6663
        %v7108 = vpop.f32.mrf.mxu0
        %v7109 = vadd.f32 %v6940, %v7108
        %v7110 = vpop.f32.mrf.mxu0
        %v7111 = vadd.f32 %v6942, %v7110
        %7112 = vmatmul.bf16.gmra.mxu0 %v6667
        %v7113 = vpop.f32.mrf.mxu0
        %v7114 = vadd.f32 %v6945, %v7113
        %v7115 = vpop.f32.mrf.mxu0
        %v7116 = vadd.f32 %v6947, %v7115
        %7117 = vmatmul.bf16.gmra.mxu0 %v6671
        %v7118 = vpop.f32.mrf.mxu0
        %v7119 = vadd.f32 %v6950, %v7118
        %v7120 = vpop.f32.mrf.mxu0
        %v7121 = vadd.f32 %v6952, %v7120
        %7122 = vmatmul.bf16.gmra.mxu0 %v6675
        %v7123 = vpop.f32.mrf.mxu0
        %v7124 = vadd.f32 %v6955, %v7123
        %v7125 = vpop.f32.mrf.mxu0
        %v7126 = vadd.f32 %v6957, %v7125
        %7127 = vmatmul.bf16.gmra.mxu0 %v6679
        %v7128 = vpop.f32.mrf.mxu0
        %v7129 = vadd.f32 %v6960, %v7128
        %v7130 = vpop.f32.mrf.mxu0
        %v7131 = vadd.f32 %v6962, %v7130
        %7132 = vmatmul.bf16.gmra.mxu0 %v6683
        %v7133 = vpop.f32.mrf.mxu0
        %v7134 = vadd.f32 %v6965, %v7133
        %v7135 = vpop.f32.mrf.mxu0
        %v7136 = vadd.f32 %v6967, %v7135
        %7137 = vmatmul.bf16.gmra.mxu0 %v6687
        %v7138 = vpop.f32.mrf.mxu0
        %v7139 = vadd.f32 %v6970, %v7138
        %v7140 = vpop.f32.mrf.mxu0
        %v7141 = vadd.f32 %v6972, %v7140
        %7142 = vmatmul.bf16.gmra.mxu0 %v6691
        %v7143 = vpop.f32.mrf.mxu0
        %v7144 = vadd.f32 %v6975, %v7143
        %v7145 = vpop.f32.mrf.mxu0
        %v7146 = vadd.f32 %v6977, %v7145
        %7147 = vmatmul.bf16.gmra.mxu0 %v6695
        %v7148 = vpop.f32.mrf.mxu0
        %v7149 = vadd.f32 %v6980, %v7148
        %v7150 = vpop.f32.mrf.mxu0
        %v7151 = vadd.f32 %v6982, %v7150
        %7152 = vmatmul.bf16.gmra.mxu0 %v6699
        %v7153 = vpop.f32.mrf.mxu0
        %v7154 = vadd.f32 %v6985, %v7153
        %v7155 = vpop.f32.mrf.mxu0
        %v7156 = vadd.f32 %v6987, %v7155
        %7157 = vmatmul.bf16.gmra.mxu0 %v6703
        %v7158 = vpop.f32.mrf.mxu0
        %v7159 = vadd.f32 %v6990, %v7158
        %v7160 = vpop.f32.mrf.mxu0
        %v7161 = vadd.f32 %v6992, %v7160
        %7162 = vmatmul.bf16.gmra.mxu0 %v6707
        %v7163 = vpop.f32.mrf.mxu0
        %v7164 = vadd.f32 %v6995, %v7163
        %v7165 = vpop.f32.mrf.mxu0
        %v7166 = vadd.f32 %v6997, %v7165
        %7167 = vmatmul.bf16.gmra.mxu0 %v6711
        %v7168 = vpop.f32.mrf.mxu0
        %v7169 = vadd.f32 %v7000, %v7168
        %v7170 = vpop.f32.mrf.mxu0
        %v7171 = vadd.f32 %v7002, %v7170
        %7172 = vmatmul.bf16.gmra.mxu0 %v6715
        %v7173 = vpop.f32.mrf.mxu0
        %v7174 = vadd.f32 %v7005, %v7173
        %v7175 = vpop.f32.mrf.mxu0
        %v7176 = vadd.f32 %v7007, %v7175
        %7177 = vmatmul.bf16.gmra.mxu0 %v6719
        %v7178 = vpop.f32.mrf.mxu0
        %v7179 = vadd.f32 %v7010, %v7178
        %v7180 = vpop.f32.mrf.mxu0
        %v7181 = vadd.f32 %v7012, %v7180
        %7182 = vmatmul.bf16.gmra.mxu0 %v6723
        %v7183 = vpop.f32.mrf.mxu0
        %v7184 = vadd.f32 %v7015, %v7183
        %v7185 = vpop.f32.mrf.mxu0
        %v7186 = vadd.f32 %v7017, %v7185
        %7187 = vmatmul.bf16.gmra.mxu0 %v6727
        %v7188 = vpop.f32.mrf.mxu0
        %v7189 = vadd.f32 %v7020, %v7188
        %v7190 = vpop.f32.mrf.mxu0
        %v7191 = vadd.f32 %v7022, %v7190
        %7192 = vmatmul.bf16.gmra.mxu0 %v6731
        %v7193 = vpop.f32.mrf.mxu0
        %v7194 = vadd.f32 %v7025, %v7193
        %v7195 = vpop.f32.mrf.mxu0
        %v7196 = vadd.f32 %v7027, %v7195
        %7197 = vmatmul.bf16.gmra.mxu0 %v6735
        %v7198 = vpop.f32.mrf.mxu0
        %v7199 = vadd.f32 %v7030, %v7198
        %v7200 = vpop.f32.mrf.mxu0
        %v7201 = vadd.f32 %v7032, %v7200
        %7202 = vmatmul.bf16.gmra.mxu0 %v6739
        %v7203 = vpop.f32.mrf.mxu0
        %v7204 = vadd.f32 %v7035, %v7203
        %v7205 = vpop.f32.mrf.mxu0
        %v7206 = vadd.f32 %v7037, %v7205
        %7207 = vdwg.mxu0
        %7208 = vmatpush.bf16.msra.mxu0 %v5709
        %7209 = vmatpush.bf16.msra.mxu0 %v5708
        %7210 = vmatpush.bf16.msra.mxu0 %v5707
        %7211 = vmatpush.bf16.msra.mxu0 %v5706
        %7212 = vmatpush.bf16.msra.mxu0 %v5705
        %7213 = vmatpush.bf16.msra.mxu0 %v5704
        %7214 = vmatpush.bf16.msra.mxu0 %v5703
        %7215 = vmatpush.bf16.msra.mxu0 %v5702
        %7216 = vmatmul.bf16.gmra.mxu0 %v6616
        %v7217 = vpop.f32.mrf.mxu0
        %v7218 = vadd.f32 %v7049, %v7217
        %v7219 = vpop.f32.mrf.mxu0
        %v7220 = vadd.f32 %v7051, %v7219
        %7221 = vmatmul.bf16.gmra.mxu0 %v6620
        %v7222 = vpop.f32.mrf.mxu0
        %v7223 = vadd.f32 %v7054, %v7222
        %v7224 = vpop.f32.mrf.mxu0
        %v7225 = vadd.f32 %v7056, %v7224
        %7226 = vmatmul.bf16.gmra.mxu0 %v6624
        %v7227 = vpop.f32.mrf.mxu0
        %v7228 = vadd.f32 %v7059, %v7227
        %v7229 = vpop.f32.mrf.mxu0
        %v7230 = vadd.f32 %v7061, %v7229
        %7231 = vmatmul.bf16.gmra.mxu0 %v6628
        %v7232 = vpop.f32.mrf.mxu0
        %v7233 = vadd.f32 %v7064, %v7232
        %v7234 = vpop.f32.mrf.mxu0
        %v7235 = vadd.f32 %v7066, %v7234
        %7236 = vmatmul.bf16.gmra.mxu0 %v6632
        %v7237 = vpop.f32.mrf.mxu0
        %v7238 = vadd.f32 %v7069, %v7237
        %v7239 = vpop.f32.mrf.mxu0
        %v7240 = vadd.f32 %v7071, %v7239
        %7241 = vmatmul.bf16.gmra.mxu0 %v6636
        %v7242 = vpop.f32.mrf.mxu0
        %v7243 = vadd.f32 %v7074, %v7242
        %v7244 = vpop.f32.mrf.mxu0
        %v7245 = vadd.f32 %v7076, %v7244
        %7246 = vmatmul.bf16.gmra.mxu0 %v6640
        %v7247 = vpop.f32.mrf.mxu0
        %v7248 = vadd.f32 %v7079, %v7247
        %v7249 = vpop.f32.mrf.mxu0
        %v7250 = vadd.f32 %v7081, %v7249
        %7251 = vmatmul.bf16.gmra.mxu0 %v6644
        %v7252 = vpop.f32.mrf.mxu0
        %v7253 = vadd.f32 %v7084, %v7252
        %v7254 = vpop.f32.mrf.mxu0
        %v7255 = vadd.f32 %v7086, %v7254
        %7256 = vmatmul.bf16.gmra.mxu0 %v6648
        %v7257 = vpop.f32.mrf.mxu0
        %v7258 = vadd.f32 %v7089, %v7257
        %v7259 = vpop.f32.mrf.mxu0
        %v7260 = vadd.f32 %v7091, %v7259
        %7261 = vmatmul.bf16.gmra.mxu0 %v6652
        %v7262 = vpop.f32.mrf.mxu0
        %v7263 = vadd.f32 %v7094, %v7262
        %v7264 = vpop.f32.mrf.mxu0
        %v7265 = vadd.f32 %v7096, %v7264
        %7266 = vmatmul.bf16.gmra.mxu0 %v6656
        %v7267 = vpop.f32.mrf.mxu0
        %v7268 = vadd.f32 %v7099, %v7267
        %v7269 = vpop.f32.mrf.mxu0
        %v7270 = vadd.f32 %v7101, %v7269
        %7271 = vmatmul.bf16.gmra.mxu0 %v6660
        %v7272 = vpop.f32.mrf.mxu0
        %v7273 = vadd.f32 %v7104, %v7272
        %v7274 = vpop.f32.mrf.mxu0
        %v7275 = vadd.f32 %v7106, %v7274
        %7276 = vmatmul.bf16.gmra.mxu0 %v6664
        %v7277 = vpop.f32.mrf.mxu0
        %v7278 = vadd.f32 %v7109, %v7277
        %v7279 = vpop.f32.mrf.mxu0
        %v7280 = vadd.f32 %v7111, %v7279
        %7281 = vmatmul.bf16.gmra.mxu0 %v6668
        %v7282 = vpop.f32.mrf.mxu0
        %v7283 = vadd.f32 %v7114, %v7282
        %v7284 = vpop.f32.mrf.mxu0
        %v7285 = vadd.f32 %v7116, %v7284
        %7286 = vmatmul.bf16.gmra.mxu0 %v6672
        %v7287 = vpop.f32.mrf.mxu0
        %v7288 = vadd.f32 %v7119, %v7287
        %v7289 = vpop.f32.mrf.mxu0
        %v7290 = vadd.f32 %v7121, %v7289
        %7291 = vmatmul.bf16.gmra.mxu0 %v6676
        %v7292 = vpop.f32.mrf.mxu0
        %v7293 = vadd.f32 %v7124, %v7292
        %v7294 = vpop.f32.mrf.mxu0
        %v7295 = vadd.f32 %v7126, %v7294
        %7296 = vmatmul.bf16.gmra.mxu0 %v6680
        %v7297 = vpop.f32.mrf.mxu0
        %v7298 = vadd.f32 %v7129, %v7297
        %v7299 = vpop.f32.mrf.mxu0
        %v7300 = vadd.f32 %v7131, %v7299
        %7301 = vmatmul.bf16.gmra.mxu0 %v6684
        %v7302 = vpop.f32.mrf.mxu0
        %v7303 = vadd.f32 %v7134, %v7302
        %v7304 = vpop.f32.mrf.mxu0
        %v7305 = vadd.f32 %v7136, %v7304
        %7306 = vmatmul.bf16.gmra.mxu0 %v6688
        %v7307 = vpop.f32.mrf.mxu0
        %v7308 = vadd.f32 %v7139, %v7307
        %v7309 = vpop.f32.mrf.mxu0
        %v7310 = vadd.f32 %v7141, %v7309
        %7311 = vmatmul.bf16.gmra.mxu0 %v6692
        %v7312 = vpop.f32.mrf.mxu0
        %v7313 = vadd.f32 %v7144, %v7312
        %v7314 = vpop.f32.mrf.mxu0
        %v7315 = vadd.f32 %v7146, %v7314
        %7316 = vmatmul.bf16.gmra.mxu0 %v6696
        %v7317 = vpop.f32.mrf.mxu0
        %v7318 = vadd.f32 %v7149, %v7317
        %v7319 = vpop.f32.mrf.mxu0
        %v7320 = vadd.f32 %v7151, %v7319
        %7321 = vmatmul.bf16.gmra.mxu0 %v6700
        %v7322 = vpop.f32.mrf.mxu0
        %v7323 = vadd.f32 %v7154, %v7322
        %v7324 = vpop.f32.mrf.mxu0
        %v7325 = vadd.f32 %v7156, %v7324
        %7326 = vmatmul.bf16.gmra.mxu0 %v6704
        %v7327 = vpop.f32.mrf.mxu0
        %v7328 = vadd.f32 %v7159, %v7327
        %v7329 = vpop.f32.mrf.mxu0
        %v7330 = vadd.f32 %v7161, %v7329
        %7331 = vmatmul.bf16.gmra.mxu0 %v6708
        %v7332 = vpop.f32.mrf.mxu0
        %v7333 = vadd.f32 %v7164, %v7332
        %v7334 = vpop.f32.mrf.mxu0
        %v7335 = vadd.f32 %v7166, %v7334
        %7336 = vmatmul.bf16.gmra.mxu0 %v6712
        %v7337 = vpop.f32.mrf.mxu0
        %v7338 = vadd.f32 %v7169, %v7337
        %v7339 = vpop.f32.mrf.mxu0
        %v7340 = vadd.f32 %v7171, %v7339
        %7341 = vmatmul.bf16.gmra.mxu0 %v6716
        %v7342 = vpop.f32.mrf.mxu0
        %v7343 = vadd.f32 %v7174, %v7342
        %v7344 = vpop.f32.mrf.mxu0
        %v7345 = vadd.f32 %v7176, %v7344
        %7346 = vmatmul.bf16.gmra.mxu0 %v6720
        %v7347 = vpop.f32.mrf.mxu0
        %v7348 = vadd.f32 %v7179, %v7347
        %v7349 = vpop.f32.mrf.mxu0
        %v7350 = vadd.f32 %v7181, %v7349
        %7351 = vmatmul.bf16.gmra.mxu0 %v6724
        %v7352 = vpop.f32.mrf.mxu0
        %v7353 = vadd.f32 %v7184, %v7352
        %v7354 = vpop.f32.mrf.mxu0
        %v7355 = vadd.f32 %v7186, %v7354
        %7356 = vmatmul.bf16.gmra.mxu0 %v6728
        %v7357 = vpop.f32.mrf.mxu0
        %v7358 = vadd.f32 %v7189, %v7357
        %v7359 = vpop.f32.mrf.mxu0
        %v7360 = vadd.f32 %v7191, %v7359
        %7361 = vmatmul.bf16.gmra.mxu0 %v6732
        %v7362 = vpop.f32.mrf.mxu0
        %v7363 = vadd.f32 %v7194, %v7362
        %v7364 = vpop.f32.mrf.mxu0
        %v7365 = vadd.f32 %v7196, %v7364
        %7366 = vmatmul.bf16.gmra.mxu0 %v6736
        %v7367 = vpop.f32.mrf.mxu0
        %v7368 = vadd.f32 %v7199, %v7367
        %v7369 = vpop.f32.mrf.mxu0
        %v7370 = vadd.f32 %v7201, %v7369
        %7371 = vmatmul.bf16.gmra.mxu0 %v6740
        %v7372 = vpop.f32.mrf.mxu0
        %v7373 = vadd.f32 %v7204, %v7372
        %v7374 = vpop.f32.mrf.mxu0
        %v7375 = vadd.f32 %v7206, %v7374
        %7376 = vdwg.mxu0
        %7377 = vmatpush.bf16.msra.mxu0 %v5717
        %7378 = vmatpush.bf16.msra.mxu0 %v5716
        %7379 = vmatpush.bf16.msra.mxu0 %v5715
        %7380 = vmatpush.bf16.msra.mxu0 %v5714
        %7381 = vmatpush.bf16.msra.mxu0 %v5713
        %7382 = vmatpush.bf16.msra.mxu0 %v5712
        %7383 = vmatpush.bf16.msra.mxu0 %v5711
        %7384 = vmatpush.bf16.msra.mxu0 %v5710
        %7385 = vmatmul.bf16.gmra.mxu0 %v6617
        %v7386 = vpop.f32.mrf.mxu0
        %v7387 = vadd.f32 %v7218, %v7386
        %v7388 = vpop.f32.mrf.mxu0
        %v7389 = vadd.f32 %v7220, %v7388
        %7390 = vmatmul.bf16.gmra.mxu0 %v6621
        %v7391 = vpop.f32.mrf.mxu0
        %v7392 = vadd.f32 %v7223, %v7391
        %v7393 = vpop.f32.mrf.mxu0
        %v7394 = vadd.f32 %v7225, %v7393
        %7395 = vmatmul.bf16.gmra.mxu0 %v6625
        %v7396 = vpop.f32.mrf.mxu0
        %v7397 = vadd.f32 %v7228, %v7396
        %v7398 = vpop.f32.mrf.mxu0
        %v7399 = vadd.f32 %v7230, %v7398
        %7400 = vmatmul.bf16.gmra.mxu0 %v6629
        %v7401 = vpop.f32.mrf.mxu0
        %v7402 = vadd.f32 %v7233, %v7401
        %v7403 = vpop.f32.mrf.mxu0
        %v7404 = vadd.f32 %v7235, %v7403
        %7405 = vmatmul.bf16.gmra.mxu0 %v6633
        %v7406 = vpop.f32.mrf.mxu0
        %v7407 = vadd.f32 %v7238, %v7406
        %v7408 = vpop.f32.mrf.mxu0
        %v7409 = vadd.f32 %v7240, %v7408
        %7410 = vmatmul.bf16.gmra.mxu0 %v6637
        %v7411 = vpop.f32.mrf.mxu0
        %v7412 = vadd.f32 %v7243, %v7411
        %v7413 = vpop.f32.mrf.mxu0
        %v7414 = vadd.f32 %v7245, %v7413
        %7415 = vmatmul.bf16.gmra.mxu0 %v6641
        %v7416 = vpop.f32.mrf.mxu0
        %v7417 = vadd.f32 %v7248, %v7416
        %v7418 = vpop.f32.mrf.mxu0
        %v7419 = vadd.f32 %v7250, %v7418
        %7420 = vmatmul.bf16.gmra.mxu0 %v6645
        %v7421 = vpop.f32.mrf.mxu0
        %v7422 = vadd.f32 %v7253, %v7421
        %v7423 = vpop.f32.mrf.mxu0
        %v7424 = vadd.f32 %v7255, %v7423
        %7425 = vmatmul.bf16.gmra.mxu0 %v6649
        %v7426 = vpop.f32.mrf.mxu0
        %v7427 = vadd.f32 %v7258, %v7426
        %v7428 = vpop.f32.mrf.mxu0
        %v7429 = vadd.f32 %v7260, %v7428
        %7430 = vmatmul.bf16.gmra.mxu0 %v6653
        %v7431 = vpop.f32.mrf.mxu0
        %v7432 = vadd.f32 %v7263, %v7431
        %v7433 = vpop.f32.mrf.mxu0
        %v7434 = vadd.f32 %v7265, %v7433
        %7435 = vmatmul.bf16.gmra.mxu0 %v6657
        %v7436 = vpop.f32.mrf.mxu0
        %v7437 = vadd.f32 %v7268, %v7436
        %v7438 = vpop.f32.mrf.mxu0
        %v7439 = vadd.f32 %v7270, %v7438
        %7440 = vmatmul.bf16.gmra.mxu0 %v6661
        %v7441 = vpop.f32.mrf.mxu0
        %v7442 = vadd.f32 %v7273, %v7441
        %v7443 = vpop.f32.mrf.mxu0
        %v7444 = vadd.f32 %v7275, %v7443
        %7445 = vmatmul.bf16.gmra.mxu0 %v6665
        %v7446 = vpop.f32.mrf.mxu0
        %v7447 = vadd.f32 %v7278, %v7446
        %v7448 = vpop.f32.mrf.mxu0
        %v7449 = vadd.f32 %v7280, %v7448
        %7450 = vmatmul.bf16.gmra.mxu0 %v6669
        %v7451 = vpop.f32.mrf.mxu0
        %v7452 = vadd.f32 %v7283, %v7451
        %v7453 = vpop.f32.mrf.mxu0
        %v7454 = vadd.f32 %v7285, %v7453
        %7455 = vmatmul.bf16.gmra.mxu0 %v6673
        %v7456 = vpop.f32.mrf.mxu0
        %v7457 = vadd.f32 %v7288, %v7456
        %v7458 = vpop.f32.mrf.mxu0
        %v7459 = vadd.f32 %v7290, %v7458
        %7460 = vmatmul.bf16.gmra.mxu0 %v6677
        %v7461 = vpop.f32.mrf.mxu0
        %v7462 = vadd.f32 %v7293, %v7461
        %v7463 = vpop.f32.mrf.mxu0
        %v7464 = vadd.f32 %v7295, %v7463
        %7465 = vmatmul.bf16.gmra.mxu0 %v6681
        %v7466 = vpop.f32.mrf.mxu0
        %v7467 = vadd.f32 %v7298, %v7466
        %v7468 = vpop.f32.mrf.mxu0
        %v7469 = vadd.f32 %v7300, %v7468
        %7470 = vmatmul.bf16.gmra.mxu0 %v6685
        %v7471 = vpop.f32.mrf.mxu0
        %v7472 = vadd.f32 %v7303, %v7471
        %v7473 = vpop.f32.mrf.mxu0
        %v7474 = vadd.f32 %v7305, %v7473
        %7475 = vmatmul.bf16.gmra.mxu0 %v6689
        %v7476 = vpop.f32.mrf.mxu0
        %v7477 = vadd.f32 %v7308, %v7476
        %v7478 = vpop.f32.mrf.mxu0
        %v7479 = vadd.f32 %v7310, %v7478
        %7480 = vmatmul.bf16.gmra.mxu0 %v6693
        %v7481 = vpop.f32.mrf.mxu0
        %v7482 = vadd.f32 %v7313, %v7481
        %v7483 = vpop.f32.mrf.mxu0
        %v7484 = vadd.f32 %v7315, %v7483
        %7485 = vmatmul.bf16.gmra.mxu0 %v6697
        %v7486 = vpop.f32.mrf.mxu0
        %v7487 = vadd.f32 %v7318, %v7486
        %v7488 = vpop.f32.mrf.mxu0
        %v7489 = vadd.f32 %v7320, %v7488
        %7490 = vmatmul.bf16.gmra.mxu0 %v6701
        %v7491 = vpop.f32.mrf.mxu0
        %v7492 = vadd.f32 %v7323, %v7491
        %v7493 = vpop.f32.mrf.mxu0
        %v7494 = vadd.f32 %v7325, %v7493
        %7495 = vmatmul.bf16.gmra.mxu0 %v6705
        %v7496 = vpop.f32.mrf.mxu0
        %v7497 = vadd.f32 %v7328, %v7496
        %v7498 = vpop.f32.mrf.mxu0
        %v7499 = vadd.f32 %v7330, %v7498
        %7500 = vmatmul.bf16.gmra.mxu0 %v6709
        %v7501 = vpop.f32.mrf.mxu0
        %v7502 = vadd.f32 %v7333, %v7501
        %v7503 = vpop.f32.mrf.mxu0
        %v7504 = vadd.f32 %v7335, %v7503
        %7505 = vmatmul.bf16.gmra.mxu0 %v6713
        %v7506 = vpop.f32.mrf.mxu0
        %v7507 = vadd.f32 %v7338, %v7506
        %v7508 = vpop.f32.mrf.mxu0
        %v7509 = vadd.f32 %v7340, %v7508
        %7510 = vmatmul.bf16.gmra.mxu0 %v6717
        %v7511 = vpop.f32.mrf.mxu0
        %v7512 = vadd.f32 %v7343, %v7511
        %v7513 = vpop.f32.mrf.mxu0
        %v7514 = vadd.f32 %v7345, %v7513
        %7515 = vmatmul.bf16.gmra.mxu0 %v6721
        %v7516 = vpop.f32.mrf.mxu0
        %v7517 = vadd.f32 %v7348, %v7516
        %v7518 = vpop.f32.mrf.mxu0
        %v7519 = vadd.f32 %v7350, %v7518
        %7520 = vmatmul.bf16.gmra.mxu0 %v6725
        %v7521 = vpop.f32.mrf.mxu0
        %v7522 = vadd.f32 %v7353, %v7521
        %v7523 = vpop.f32.mrf.mxu0
        %v7524 = vadd.f32 %v7355, %v7523
        %7525 = vmatmul.bf16.gmra.mxu0 %v6729
        %v7526 = vpop.f32.mrf.mxu0
        %v7527 = vadd.f32 %v7358, %v7526
        %v7528 = vpop.f32.mrf.mxu0
        %v7529 = vadd.f32 %v7360, %v7528
        %7530 = vmatmul.bf16.gmra.mxu0 %v6733
        %v7531 = vpop.f32.mrf.mxu0
        %v7532 = vadd.f32 %v7363, %v7531
        %v7533 = vpop.f32.mrf.mxu0
        %v7534 = vadd.f32 %v7365, %v7533
        %7535 = vmatmul.bf16.gmra.mxu0 %v6737
        %v7536 = vpop.f32.mrf.mxu0
        %v7537 = vadd.f32 %v7368, %v7536
        %v7538 = vpop.f32.mrf.mxu0
        %v7539 = vadd.f32 %v7370, %v7538
        %7540 = vmatmul.bf16.gmra.mxu0 %v6741
        %v7541 = vpop.f32.mrf.mxu0
        %v7542 = vadd.f32 %v7373, %v7541
        %v7543 = vpop.f32.mrf.mxu0
        %v7544 = vadd.f32 %v7375, %v7543
        %7545 = vdwg.mxu0
        %v7546 = vmax.f32 %v7387, 0.0
        %v7547 = vmax.f32 %v7389, 0.0
        %v7548 = vmax.f32 %v7392, 0.0
        %v7549 = vmax.f32 %v7394, 0.0
        %v7550 = vmax.f32 %v7397, 0.0
        %v7551 = vmax.f32 %v7399, 0.0
        %v7552 = vmax.f32 %v7402, 0.0
        %v7553 = vmax.f32 %v7404, 0.0
        %v7554 = vmax.f32 %v7407, 0.0
        %v7555 = vmax.f32 %v7409, 0.0
        %v7556 = vmax.f32 %v7412, 0.0
        %v7557 = vmax.f32 %v7414, 0.0
        %v7558 = vmax.f32 %v7417, 0.0
        %v7559 = vmax.f32 %v7419, 0.0
        %v7560 = vmax.f32 %v7422, 0.0
        %v7561 = vmax.f32 %v7424, 0.0
        %v7562 = vmax.f32 %v7427, 0.0
        %v7563 = vmax.f32 %v7429, 0.0
        %v7564 = vmax.f32 %v7432, 0.0
        %v7565 = vmax.f32 %v7434, 0.0
        %v7566 = vmax.f32 %v7437, 0.0
        %v7567 = vmax.f32 %v7439, 0.0
        %v7568 = vmax.f32 %v7442, 0.0
        %v7569 = vmax.f32 %v7444, 0.0
        %v7570 = vmax.f32 %v7447, 0.0
        %v7571 = vmax.f32 %v7449, 0.0
        %v7572 = vmax.f32 %v7452, 0.0
        %v7573 = vmax.f32 %v7454, 0.0
        %v7574 = vmax.f32 %v7457, 0.0
        %v7575 = vmax.f32 %v7459, 0.0
        %v7576 = vmax.f32 %v7462, 0.0
        %v7577 = vmax.f32 %v7464, 0.0
        %v7578 = vmax.f32 %v7467, 0.0
        %v7579 = vmax.f32 %v7469, 0.0
        %v7580 = vmax.f32 %v7472, 0.0
        %v7581 = vmax.f32 %v7474, 0.0
        %v7582 = vmax.f32 %v7477, 0.0
        %v7583 = vmax.f32 %v7479, 0.0
        %v7584 = vmax.f32 %v7482, 0.0
        %v7585 = vmax.f32 %v7484, 0.0
        %v7586 = vmax.f32 %v7487, 0.0
        %v7587 = vmax.f32 %v7489, 0.0
        %v7588 = vmax.f32 %v7492, 0.0
        %v7589 = vmax.f32 %v7494, 0.0
        %v7590 = vmax.f32 %v7497, 0.0
        %v7591 = vmax.f32 %v7499, 0.0
        %v7592 = vmax.f32 %v7502, 0.0
        %v7593 = vmax.f32 %v7504, 0.0
        %v7594 = vmax.f32 %v7507, 0.0
        %v7595 = vmax.f32 %v7509, 0.0
        %v7596 = vmax.f32 %v7512, 0.0
        %v7597 = vmax.f32 %v7514, 0.0
        %v7598 = vmax.f32 %v7517, 0.0
        %v7599 = vmax.f32 %v7519, 0.0
        %v7600 = vmax.f32 %v7522, 0.0
        %v7601 = vmax.f32 %v7524, 0.0
        %v7602 = vmax.f32 %v7527, 0.0
        %v7603 = vmax.f32 %v7529, 0.0
        %v7604 = vmax.f32 %v7532, 0.0
        %v7605 = vmax.f32 %v7534, 0.0
        %v7606 = vmax.f32 %v7537, 0.0
        %v7607 = vmax.f32 %v7539, 0.0
        %v7608 = vmax.f32 %v7542, 0.0
        %v7609 = vmax.f32 %v7544, 0.0
        %v7610 = vld [vmem:[%s7] sm:$0xff]
        %v7611 = vld [vmem:[%s7 + $0x8] sm:$0xff]
        %v7612 = vld [vmem:[%s7 + $0x10] sm:$0xff]
        %v7613 = vld [vmem:[%s7 + $0x18] sm:$0xff]
        %v7614 = vld [vmem:[%s7 + $0x20] sm:$0xff]
        %v7615 = vld [vmem:[%s7 + $0x28] sm:$0xff]
        %v7616 = vld [vmem:[%s7 + $0x30] sm:$0xff]
        %v7617 = vld [vmem:[%s7 + $0x38] sm:$0xff]
        %v7618 = vld [vmem:[%s7 + $0x40] sm:$0xff]
        %v7619 = vld [vmem:[%s7 + $0x48] sm:$0xff]
        %v7620 = vld [vmem:[%s7 + $0x50] sm:$0xff]
        %v7621 = vld [vmem:[%s7 + $0x58] sm:$0xff]
        %v7622 = vld [vmem:[%s7 + $0x60] sm:$0xff]
        %v7623 = vld [vmem:[%s7 + $0x68] sm:$0xff]
        %v7624 = vld [vmem:[%s7 + $0x70] sm:$0xff]
        %v7625 = vld [vmem:[%s7 + $0x78] sm:$0xff]
        %v7626 = vld [vmem:[%s7 + $0x80] sm:$0xff]
        %v7627 = vld [vmem:[%s7 + $0x88] sm:$0xff]
        %v7628 = vld [vmem:[%s7 + $0x90] sm:$0xff]
        %v7629 = vld [vmem:[%s7 + $0x98] sm:$0xff]
        %v7630 = vld [vmem:[%s7 + $0xa0] sm:$0xff]
        %v7631 = vld [vmem:[%s7 + $0xa8] sm:$0xff]
        %v7632 = vld [vmem:[%s7 + $0xb0] sm:$0xff]
        %v7633 = vld [vmem:[%s7 + $0xb8] sm:$0xff]
        %v7634 = vld [vmem:[%s7 + $0xc0] sm:$0xff]
        %v7635 = vld [vmem:[%s7 + $0xc8] sm:$0xff]
        %v7636 = vld [vmem:[%s7 + $0xd0] sm:$0xff]
        %v7637 = vld [vmem:[%s7 + $0xd8] sm:$0xff]
        %v7638 = vld [vmem:[%s7 + $0xe0] sm:$0xff]
        %v7639 = vld [vmem:[%s7 + $0xe8] sm:$0xff]
        %v7640 = vld [vmem:[%s7 + $0xf0] sm:$0xff]
        %v7641 = vld [vmem:[%s7 + $0xf8] sm:$0xff]
        %v7642 = vld [vmem:[%s7 + $0x100] sm:$0xff]
        %v7643 = vld [vmem:[%s7 + $0x108] sm:$0xff]
        %v7644 = vld [vmem:[%s7 + $0x110] sm:$0xff]
        %v7645 = vld [vmem:[%s7 + $0x118] sm:$0xff]
        %v7646 = vld [vmem:[%s7 + $0x120] sm:$0xff]
        %v7647 = vld [vmem:[%s7 + $0x128] sm:$0xff]
        %v7648 = vld [vmem:[%s7 + $0x130] sm:$0xff]
        %v7649 = vld [vmem:[%s7 + $0x138] sm:$0xff]
        %v7650 = vld [vmem:[%s7 + $0x140] sm:$0xff]
        %v7651 = vld [vmem:[%s7 + $0x148] sm:$0xff]
        %v7652 = vld [vmem:[%s7 + $0x150] sm:$0xff]
        %v7653 = vld [vmem:[%s7 + $0x158] sm:$0xff]
        %v7654 = vld [vmem:[%s7 + $0x160] sm:$0xff]
        %v7655 = vld [vmem:[%s7 + $0x168] sm:$0xff]
        %v7656 = vld [vmem:[%s7 + $0x170] sm:$0xff]
        %v7657 = vld [vmem:[%s7 + $0x178] sm:$0xff]
        %v7658 = vld [vmem:[%s7 + $0x180] sm:$0xff]
        %v7659 = vld [vmem:[%s7 + $0x188] sm:$0xff]
        %v7660 = vld [vmem:[%s7 + $0x190] sm:$0xff]
        %v7661 = vld [vmem:[%s7 + $0x198] sm:$0xff]
        %v7662 = vld [vmem:[%s7 + $0x1a0] sm:$0xff]
        %v7663 = vld [vmem:[%s7 + $0x1a8] sm:$0xff]
        %v7664 = vld [vmem:[%s7 + $0x1b0] sm:$0xff]
        %v7665 = vld [vmem:[%s7 + $0x1b8] sm:$0xff]
        %v7666 = vld [vmem:[%s7 + $0x1c0] sm:$0xff]
        %v7667 = vld [vmem:[%s7 + $0x1c8] sm:$0xff]
        %v7668 = vld [vmem:[%s7 + $0x1d0] sm:$0xff]
        %v7669 = vld [vmem:[%s7 + $0x1d8] sm:$0xff]
        %v7670 = vld [vmem:[%s7 + $0x1e0] sm:$0xff]
        %v7671 = vld [vmem:[%s7 + $0x1e8] sm:$0xff]
        %v7672 = vld [vmem:[%s7 + $0x1f0] sm:$0xff]
        %v7673 = vld [vmem:[%s7 + $0x1f8] sm:$0xff]
        %7675 = vset.pattern.permute.xlu0 0
        %7676 = vperm.xlu0 %7675, %v7610
        %v7677 = vpop.permute.xlu0 %7676
        %7680 = vset.pattern.permute.xlu0 0
        %7681 = vperm.xlu0 %7680, %v7611
        %v7682 = vpop.permute.xlu0 %7681
        %7685 = vset.pattern.permute.xlu0 0
        %7686 = vperm.xlu0 %7685, %v7612
        %v7687 = vpop.permute.xlu0 %7686
        %7690 = vset.pattern.permute.xlu0 0
        %7691 = vperm.xlu0 %7690, %v7613
        %v7692 = vpop.permute.xlu0 %7691
        %7695 = vset.pattern.permute.xlu0 0
        %7696 = vperm.xlu0 %7695, %v7614
        %v7697 = vpop.permute.xlu0 %7696
        %7700 = vset.pattern.permute.xlu0 0
        %7701 = vperm.xlu0 %7700, %v7615
        %v7702 = vpop.permute.xlu0 %7701
        %7705 = vset.pattern.permute.xlu0 0
        %7706 = vperm.xlu0 %7705, %v7616
        %v7707 = vpop.permute.xlu0 %7706
        %7710 = vset.pattern.permute.xlu0 0
        %7711 = vperm.xlu0 %7710, %v7617
        %v7712 = vpop.permute.xlu0 %7711
        %7715 = vset.pattern.permute.xlu0 0
        %7716 = vperm.xlu0 %7715, %v7618
        %v7717 = vpop.permute.xlu0 %7716
        %7720 = vset.pattern.permute.xlu0 0
        %7721 = vperm.xlu0 %7720, %v7619
        %v7722 = vpop.permute.xlu0 %7721
        %7725 = vset.pattern.permute.xlu0 0
        %7726 = vperm.xlu0 %7725, %v7620
        %v7727 = vpop.permute.xlu0 %7726
        %7730 = vset.pattern.permute.xlu0 0
        %7731 = vperm.xlu0 %7730, %v7621
        %v7732 = vpop.permute.xlu0 %7731
        %7735 = vset.pattern.permute.xlu0 0
        %7736 = vperm.xlu0 %7735, %v7622
        %v7737 = vpop.permute.xlu0 %7736
        %7740 = vset.pattern.permute.xlu0 0
        %7741 = vperm.xlu0 %7740, %v7623
        %v7742 = vpop.permute.xlu0 %7741
        %7745 = vset.pattern.permute.xlu0 0
        %7746 = vperm.xlu0 %7745, %v7624
        %v7747 = vpop.permute.xlu0 %7746
        %7750 = vset.pattern.permute.xlu0 0
        %7751 = vperm.xlu0 %7750, %v7625
        %v7752 = vpop.permute.xlu0 %7751
        %7755 = vset.pattern.permute.xlu0 0
        %7756 = vperm.xlu0 %7755, %v7626
        %v7757 = vpop.permute.xlu0 %7756
        %7760 = vset.pattern.permute.xlu0 0
        %7761 = vperm.xlu0 %7760, %v7627
        %v7762 = vpop.permute.xlu0 %7761
        %7765 = vset.pattern.permute.xlu0 0
        %7766 = vperm.xlu0 %7765, %v7628
        %v7767 = vpop.permute.xlu0 %7766
        %7770 = vset.pattern.permute.xlu0 0
        %7771 = vperm.xlu0 %7770, %v7629
        %v7772 = vpop.permute.xlu0 %7771
        %7775 = vset.pattern.permute.xlu0 0
        %7776 = vperm.xlu0 %7775, %v7630
        %v7777 = vpop.permute.xlu0 %7776
        %7780 = vset.pattern.permute.xlu0 0
        %7781 = vperm.xlu0 %7780, %v7631
        %v7782 = vpop.permute.xlu0 %7781
        %7785 = vset.pattern.permute.xlu0 0
        %7786 = vperm.xlu0 %7785, %v7632
        %v7787 = vpop.permute.xlu0 %7786
        %7790 = vset.pattern.permute.xlu0 0
        %7791 = vperm.xlu0 %7790, %v7633
        %v7792 = vpop.permute.xlu0 %7791
        %7795 = vset.pattern.permute.xlu0 0
        %7796 = vperm.xlu0 %7795, %v7634
        %v7797 = vpop.permute.xlu0 %7796
        %7800 = vset.pattern.permute.xlu0 0
        %7801 = vperm.xlu0 %7800, %v7635
        %v7802 = vpop.permute.xlu0 %7801
        %7805 = vset.pattern.permute.xlu0 0
        %7806 = vperm.xlu0 %7805, %v7636
        %v7807 = vpop.permute.xlu0 %7806
        %7810 = vset.pattern.permute.xlu0 0
        %7811 = vperm.xlu0 %7810, %v7637
        %v7812 = vpop.permute.xlu0 %7811
        %7815 = vset.pattern.permute.xlu0 0
        %7816 = vperm.xlu0 %7815, %v7638
        %v7817 = vpop.permute.xlu0 %7816
        %7820 = vset.pattern.permute.xlu0 0
        %7821 = vperm.xlu0 %7820, %v7639
        %v7822 = vpop.permute.xlu0 %7821
        %7825 = vset.pattern.permute.xlu0 0
        %7826 = vperm.xlu0 %7825, %v7640
        %v7827 = vpop.permute.xlu0 %7826
        %7830 = vset.pattern.permute.xlu0 0
        %7831 = vperm.xlu0 %7830, %v7641
        %v7832 = vpop.permute.xlu0 %7831
        %7835 = vset.pattern.permute.xlu0 0
        %7836 = vperm.xlu0 %7835, %v7642
        %v7837 = vpop.permute.xlu0 %7836
        %7840 = vset.pattern.permute.xlu0 0
        %7841 = vperm.xlu0 %7840, %v7643
        %v7842 = vpop.permute.xlu0 %7841
        %7845 = vset.pattern.permute.xlu0 0
        %7846 = vperm.xlu0 %7845, %v7644
        %v7847 = vpop.permute.xlu0 %7846
        %7850 = vset.pattern.permute.xlu0 0
        %7851 = vperm.xlu0 %7850, %v7645
        %v7852 = vpop.permute.xlu0 %7851
        %7855 = vset.pattern.permute.xlu0 0
        %7856 = vperm.xlu0 %7855, %v7646
        %v7857 = vpop.permute.xlu0 %7856
        %7860 = vset.pattern.permute.xlu0 0
        %7861 = vperm.xlu0 %7860, %v7647
        %v7862 = vpop.permute.xlu0 %7861
        %7865 = vset.pattern.permute.xlu0 0
        %7866 = vperm.xlu0 %7865, %v7648
        %v7867 = vpop.permute.xlu0 %7866
        %7870 = vset.pattern.permute.xlu0 0
        %7871 = vperm.xlu0 %7870, %v7649
        %v7872 = vpop.permute.xlu0 %7871
        %7875 = vset.pattern.permute.xlu0 0
        %7876 = vperm.xlu0 %7875, %v7650
        %v7877 = vpop.permute.xlu0 %7876
        %7880 = vset.pattern.permute.xlu0 0
        %7881 = vperm.xlu0 %7880, %v7651
        %v7882 = vpop.permute.xlu0 %7881
        %7885 = vset.pattern.permute.xlu0 0
        %7886 = vperm.xlu0 %7885, %v7652
        %v7887 = vpop.permute.xlu0 %7886
        %7890 = vset.pattern.permute.xlu0 0
        %7891 = vperm.xlu0 %7890, %v7653
        %v7892 = vpop.permute.xlu0 %7891
        %7895 = vset.pattern.permute.xlu0 0
        %7896 = vperm.xlu0 %7895, %v7654
        %v7897 = vpop.permute.xlu0 %7896
        %7900 = vset.pattern.permute.xlu0 0
        %7901 = vperm.xlu0 %7900, %v7655
        %v7902 = vpop.permute.xlu0 %7901
        %7905 = vset.pattern.permute.xlu0 0
        %7906 = vperm.xlu0 %7905, %v7656
        %v7907 = vpop.permute.xlu0 %7906
        %7910 = vset.pattern.permute.xlu0 0
        %7911 = vperm.xlu0 %7910, %v7657
        %v7912 = vpop.permute.xlu0 %7911
        %7915 = vset.pattern.permute.xlu0 0
        %7916 = vperm.xlu0 %7915, %v7658
        %v7917 = vpop.permute.xlu0 %7916
        %7920 = vset.pattern.permute.xlu0 0
        %7921 = vperm.xlu0 %7920, %v7659
        %v7922 = vpop.permute.xlu0 %7921
        %7925 = vset.pattern.permute.xlu0 0
        %7926 = vperm.xlu0 %7925, %v7660
        %v7927 = vpop.permute.xlu0 %7926
        %7930 = vset.pattern.permute.xlu0 0
        %7931 = vperm.xlu0 %7930, %v7661
        %v7932 = vpop.permute.xlu0 %7931
        %7935 = vset.pattern.permute.xlu0 0
        %7936 = vperm.xlu0 %7935, %v7662
        %v7937 = vpop.permute.xlu0 %7936
        %7940 = vset.pattern.permute.xlu0 0
        %7941 = vperm.xlu0 %7940, %v7663
        %v7942 = vpop.permute.xlu0 %7941
        %7945 = vset.pattern.permute.xlu0 0
        %7946 = vperm.xlu0 %7945, %v7664
        %v7947 = vpop.permute.xlu0 %7946
        %7950 = vset.pattern.permute.xlu0 0
        %7951 = vperm.xlu0 %7950, %v7665
        %v7952 = vpop.permute.xlu0 %7951
        %7955 = vset.pattern.permute.xlu0 0
        %7956 = vperm.xlu0 %7955, %v7666
        %v7957 = vpop.permute.xlu0 %7956
        %7960 = vset.pattern.permute.xlu0 0
        %7961 = vperm.xlu0 %7960, %v7667
        %v7962 = vpop.permute.xlu0 %7961
        %7965 = vset.pattern.permute.xlu0 0
        %7966 = vperm.xlu0 %7965, %v7668
        %v7967 = vpop.permute.xlu0 %7966
        %7970 = vset.pattern.permute.xlu0 0
        %7971 = vperm.xlu0 %7970, %v7669
        %v7972 = vpop.permute.xlu0 %7971
        %7975 = vset.pattern.permute.xlu0 0
        %7976 = vperm.xlu0 %7975, %v7670
        %v7977 = vpop.permute.xlu0 %7976
        %7980 = vset.pattern.permute.xlu0 0
        %7981 = vperm.xlu0 %7980, %v7671
        %v7982 = vpop.permute.xlu0 %7981
        %7985 = vset.pattern.permute.xlu0 0
        %7986 = vperm.xlu0 %7985, %v7672
        %v7987 = vpop.permute.xlu0 %7986
        %7990 = vset.pattern.permute.xlu0 0
        %7991 = vperm.xlu0 %7990, %v7673
        %v7992 = vpop.permute.xlu0 %7991
        %v7994 = vmul.f32 %v7546, %v7677
        %v7995 = vmul.f32 %v7547, %v7682
        %v7996 = vmul.f32 %v7548, %v7687
        %v7997 = vmul.f32 %v7549, %v7692
        %v7998 = vmul.f32 %v7550, %v7697
        %v7999 = vmul.f32 %v7551, %v7702
        %v8000 = vmul.f32 %v7552, %v7707
        %v8001 = vmul.f32 %v7553, %v7712
        %v8002 = vmul.f32 %v7554, %v7717
        %v8003 = vmul.f32 %v7555, %v7722
        %v8004 = vmul.f32 %v7556, %v7727
        %v8005 = vmul.f32 %v7557, %v7732
        %v8006 = vmul.f32 %v7558, %v7737
        %v8007 = vmul.f32 %v7559, %v7742
        %v8008 = vmul.f32 %v7560, %v7747
        %v8009 = vmul.f32 %v7561, %v7752
        %v8010 = vmul.f32 %v7562, %v7757
        %v8011 = vmul.f32 %v7563, %v7762
        %v8012 = vmul.f32 %v7564, %v7767
        %v8013 = vmul.f32 %v7565, %v7772
        %v8014 = vmul.f32 %v7566, %v7777
        %v8015 = vmul.f32 %v7567, %v7782
        %v8016 = vmul.f32 %v7568, %v7787
        %v8017 = vmul.f32 %v7569, %v7792
        %v8018 = vmul.f32 %v7570, %v7797
        %v8019 = vmul.f32 %v7571, %v7802
        %v8020 = vmul.f32 %v7572, %v7807
        %v8021 = vmul.f32 %v7573, %v7812
        %v8022 = vmul.f32 %v7574, %v7817
        %v8023 = vmul.f32 %v7575, %v7822
        %v8024 = vmul.f32 %v7576, %v7827
        %v8025 = vmul.f32 %v7577, %v7832
        %v8026 = vmul.f32 %v7578, %v7837
        %v8027 = vmul.f32 %v7579, %v7842
        %v8028 = vmul.f32 %v7580, %v7847
        %v8029 = vmul.f32 %v7581, %v7852
        %v8030 = vmul.f32 %v7582, %v7857
        %v8031 = vmul.f32 %v7583, %v7862
        %v8032 = vmul.f32 %v7584, %v7867
        %v8033 = vmul.f32 %v7585, %v7872
        %v8034 = vmul.f32 %v7586, %v7877
        %v8035 = vmul.f32 %v7587, %v7882
        %v8036 = vmul.f32 %v7588, %v7887
        %v8037 = vmul.f32 %v7589, %v7892
        %v8038 = vmul.f32 %v7590, %v7897
        %v8039 = vmul.f32 %v7591, %v7902
        %v8040 = vmul.f32 %v7592, %v7907
        %v8041 = vmul.f32 %v7593, %v7912
        %v8042 = vmul.f32 %v7594, %v7917
        %v8043 = vmul.f32 %v7595, %v7922
        %v8044 = vmul.f32 %v7596, %v7927
        %v8045 = vmul.f32 %v7597, %v7932
        %v8046 = vmul.f32 %v7598, %v7937
        %v8047 = vmul.f32 %v7599, %v7942
        %v8048 = vmul.f32 %v7600, %v7947
        %v8049 = vmul.f32 %v7601, %v7952
        %v8050 = vmul.f32 %v7602, %v7957
        %v8051 = vmul.f32 %v7603, %v7962
        %v8052 = vmul.f32 %v7604, %v7967
        %v8053 = vmul.f32 %v7605, %v7972
        %v8054 = vmul.f32 %v7606, %v7977
        %v8055 = vmul.f32 %v7607, %v7982
        %v8056 = vmul.f32 %v7608, %v7987
        %v8057 = vmul.f32 %v7609, %v7992
        %v8058 = vadd.f32 %v7994, %v7995
        %v8059 = vadd.f32 %v8058, %v7996
        %v8060 = vadd.f32 %v8059, %v7997
        %v8061 = vadd.f32 %v8060, %v7998
        %v8062 = vadd.f32 %v8061, %v7999
        %v8063 = vadd.f32 %v8062, %v8000
        %v8064 = vadd.f32 %v8063, %v8001
        %v8065 = vadd.f32 %v8064, %v8002
        %v8066 = vadd.f32 %v8065, %v8003
        %v8067 = vadd.f32 %v8066, %v8004
        %v8068 = vadd.f32 %v8067, %v8005
        %v8069 = vadd.f32 %v8068, %v8006
        %v8070 = vadd.f32 %v8069, %v8007
        %v8071 = vadd.f32 %v8070, %v8008
        %v8072 = vadd.f32 %v8071, %v8009
        %v8073 = vadd.f32 %v8072, %v8010
        %v8074 = vadd.f32 %v8073, %v8011
        %v8075 = vadd.f32 %v8074, %v8012
        %v8076 = vadd.f32 %v8075, %v8013
        %v8077 = vadd.f32 %v8076, %v8014
        %v8078 = vadd.f32 %v8077, %v8015
        %v8079 = vadd.f32 %v8078, %v8016
        %v8080 = vadd.f32 %v8079, %v8017
        %v8081 = vadd.f32 %v8080, %v8018
        %v8082 = vadd.f32 %v8081, %v8019
        %v8083 = vadd.f32 %v8082, %v8020
        %v8084 = vadd.f32 %v8083, %v8021
        %v8085 = vadd.f32 %v8084, %v8022
        %v8086 = vadd.f32 %v8085, %v8023
        %v8087 = vadd.f32 %v8086, %v8024
        %v8088 = vadd.f32 %v8087, %v8025
        %v8089 = vadd.f32 %v8088, %v8026
        %v8090 = vadd.f32 %v8089, %v8027
        %v8091 = vadd.f32 %v8090, %v8028
        %v8092 = vadd.f32 %v8091, %v8029
        %v8093 = vadd.f32 %v8092, %v8030
        %v8094 = vadd.f32 %v8093, %v8031
        %v8095 = vadd.f32 %v8094, %v8032
        %v8096 = vadd.f32 %v8095, %v8033
        %v8097 = vadd.f32 %v8096, %v8034
        %v8098 = vadd.f32 %v8097, %v8035
        %v8099 = vadd.f32 %v8098, %v8036
        %v8100 = vadd.f32 %v8099, %v8037
        %v8101 = vadd.f32 %v8100, %v8038
        %v8102 = vadd.f32 %v8101, %v8039
        %v8103 = vadd.f32 %v8102, %v8040
        %v8104 = vadd.f32 %v8103, %v8041
        %v8105 = vadd.f32 %v8104, %v8042
        %v8106 = vadd.f32 %v8105, %v8043
        %v8107 = vadd.f32 %v8106, %v8044
        %v8108 = vadd.f32 %v8107, %v8045
        %v8109 = vadd.f32 %v8108, %v8046
        %v8110 = vadd.f32 %v8109, %v8047
        %v8111 = vadd.f32 %v8110, %v8048
        %v8112 = vadd.f32 %v8111, %v8049
        %v8113 = vadd.f32 %v8112, %v8050
        %v8114 = vadd.f32 %v8113, %v8051
        %v8115 = vadd.f32 %v8114, %v8052
        %v8116 = vadd.f32 %v8115, %v8053
        %v8117 = vadd.f32 %v8116, %v8054
        %v8118 = vadd.f32 %v8117, %v8055
        %v8119 = vadd.f32 %v8118, %v8056
        %v8120 = vadd.f32 %v8119, %v8057
        %v8121 = vrot.slane %v8120, 4
        %v8122 = vadd.f32 %v8120, %v8121
        %v8123 = vrot.slane %v8122, 2
        %v8124 = vadd.f32 %v8122, %v8123
        %v8125 = vrot.slane %v8124, 1
        %v8126 = vadd.f32 %v8124, %v8125
        %s8127 = sld [smem:[#allocation2]]
        %v8128 = vstv %s8127
        %v8129 = vadd.f32 %v8126, %v8128
        %v8130 = vtanh.pop %v8129
        %8131 = vst [vmem:[%s489] sm:$0x1] %v8130
        %s8132 = sand.u32 %s263, 1
        %s8133 = scalar_lea.sflag [#allocation5], %s8132
        %s8134 = sand.u32 %s263, 1
        %s8135 = scalar_lea.vmem [#allocation12], %s8134
        // Predicated region
        $region77: #{tpu_custom_call.1} parent=55 // pred_check
          %p8136 = pneg %p273
        $region78: #{tpu_custom_call.1} parent=55 // pred_check_branch
          %8138 = sbr.rel (%p8136) target = $region80
        $region79: #{tpu_custom_call.1} parent=55 // pred_region
          %8140 = vsyncadd %s8133, 0
          %s8141 = smul.addr %s35, 2
          %s8142 = sadd.s32 %s36, %s8141
          %s8143 = scalar_lea.hbm %s9, %s8142
          %s8145 = sshll.u32 %s8135, 4
          %s8146 = int_to_ptr.vmem [resolvable:$true] %s8145
          %s8147 = sshll.u32 %s8143, 4
          %s8148 = int_to_ptr.hbm [resolvable:$true] %s8147
          %8150 = dma.vmem_to_hbm [thread:$0]  %s8146, 16, %s8148, %s8133
        $region80: #{tpu_custom_call.1} parent=55 // pred_fallthru
          _
      $region56: #{tpu_custom_call.1} parent=5 // pred_fallthru
        _
      %p8151 = scmp.le.s32.totalorder 2, %s26
      // Predicated region
      $region81: #{tpu_custom_call.1} parent=5 // pred_check
        %p8152 = pneg %p8151
      $region82: #{tpu_custom_call.1} parent=5 // pred_check_branch
        %8154 = sbr.rel (%p8152) target = $region84
      $region83: #{tpu_custom_call.1} parent=5 // pred_region
        %s8155 = ssub.s32 %s26, 2
        // Predicated region
        $region85: #{tpu_custom_call.1} parent=83 // pred_check
          %p8156 = pneg %p279
        $region86: #{tpu_custom_call.1} parent=83 // pred_check_branch
          %8158 = sbr.rel (%p8156) target = $region88
        $region87: #{tpu_custom_call.1} parent=83 // pred_region
          %s8159 = sand.u32 %s264, 1
          %s8160 = scalar_lea.sflag [#allocation5], %s8159
          %s8161 = sand.u32 %s264, 1
          %s8162 = scalar_lea.vmem [#allocation12], %s8161
          %8164 = dma.done %s8160, 16
        $region88: #{tpu_custom_call.1} parent=83 // pred_fallthru
          _
      $region84: #{tpu_custom_call.1} parent=5 // pred_fallthru
        _
    $region6: #{tpu_custom_call.1} parent=1 // loop_footer
      %s30 = sadd.s32 1, %s26
    $region7: #{tpu_custom_call.1} parent=1 // loop_footer_branch
      %25 = sbr.rel target = $region3
    $region8: #{tpu_custom_call.1} parent=1 // loop_exit
      _
    %8165 = vsyncpa [#allocation4], 1
    %s8166 = scalar_lea.sflag [#allocation4], 1
    %8167 = vsyncpa %s8166, 1
    %8168 = vsyncpa [#allocation7], 1
    %s8169 = scalar_lea.sflag [#allocation7], 1
    %8170 = vsyncpa %s8169, 1
    %8171 = vsyncpa [#allocation10], 1
    %8172 = vsyncpa [#allocation5], 1
    %s8173 = scalar_lea.sflag [#allocation5], 1
    %8174 = vsyncpa %s8173, 1

</llo_original>
